<compile_context>
chip_gen: v6e
topology: v6e:2x2x1
jax: 0.10.0
libtpu: 0.0.40
codegen_flags: <defaults>
</compile_context>

<pallas_src>
import functools

import numpy as np

import jax
import jax.numpy as jnp
from jax.experimental import pallas as pl
from jax.experimental.pallas import tpu as pltpu

# ----------------------------- configuration --------------------------------
DICT_SIZE = 10                 # vocabulary; embedding table has DICT_SIZE + 1 rows
EMBED_DIM = 32
N_PRENET_CONVS = 3
CONV_KERNEL = 5
DEPTH = 2                      # reformer depth
HEADS = 4
HEAD_DIM = EMBED_DIM // HEADS
FF_MULT = 4
FF_DIM = FF_MULT * EMBED_DIM
BATCH = 2
SEQ = 8
MAX_LEN = 64


def vmem():
    return pl.BlockSpec(memory_space=pltpu.MemorySpace.VMEM)


def smem():
    return pl.BlockSpec(memory_space=pltpu.MemorySpace.SMEM)


# ------------------------------- fused kernel --------------------------------
def _encoder_kernel(
    # activations / masks / scalars
    tok_ref, kmask_ref, alpha_ref,
    # prenet params + constants
    embed_ref, convw_ref, convmask_ref, convscale_ref, convshift_ref,
    projw_ref, projb_ref, pe_ref, headones_ref,
    # reformer params (stacked over depth)
    ln1g_ref, ln1b_ref, wqkv_ref, wo_ref, bo_ref,
    ln2g_ref, ln2b_ref, w1_ref, b1_ref, w2_ref, b2_ref,
    # output
    o_ref,
    *, B, L,
):
    E = EMBED_DIM
    K = CONV_KERNEL
    PAD = K // 2
    Dh = HEAD_DIM
    BL = B * L
    f32 = jnp.float32
    bf16 = jnp.bfloat16

    # -------- embedding: scalar-indexed row gather (exact, no MXU) ----------
    # tok ids live in SMEM; each row of the (V, 1, E) table is read with a
    # dynamic leading-dim index and placed with an iota-select (register only).
    row_ids = jax.lax.broadcasted_iota(jnp.int32, (BL, E), 0)
    h = jnp.zeros((BL, E), f32)
    for i in range(BL):
        row = embed_ref[tok_ref[i]]                               # (1, E) f32
        h = jnp.where(row_ids == i, jnp.broadcast_to(row, (BL, E)), h)

    # -------- prenet convs: shifted-matmul accumulation (no scratch) --------
    # Conv1d(k=5, pad=2) + eval-mode BatchNorm folded into scale/shift + ReLU.
    # y[t] = sum_k x[t - PAD + k] @ W[c, k]; the roll supplies the shift on the
    # XLU, conv_mask[k] zeroes rows whose source falls outside the sequence
    # (handles both the zero padding and the batch boundary).
    for c in range(N_PRENET_CONVS):
        y = None
        for k in range(K):
            off = PAD - k
            if off == 0:
                xk = h
            else:
                xk = pltpu.roll(h, shift=off % BL, axis=0) * convmask_ref[k]
            t = jnp.dot(xk.astype(bf16), convw_ref[c, k],
                        preferred_element_type=f32)               # (BL, E)
            y = t if y is None else y + t
        h = jnp.maximum(y * convscale_ref[c] + convshift_ref[c], 0.0)

    # -------- prenet output projection ---------------------------------------
    h = jnp.dot(h.astype(bf16), projw_ref[...],
                preferred_element_type=f32) + projb_ref[...]

    # -------- scaled positional encoding (dropout = identity) ----------------
    pe = pe_ref[0:L, :]                                           # (L, E)
    h = h + alpha_ref[0, 0] * jnp.concatenate([pe] * B, axis=0)   # broadcast per batch

    # -------- masks / constants, hoisted out of the depth loop ---------------
    qi = jax.lax.broadcasted_iota(jnp.int32, (L, L), 0)
    ki = jax.lax.broadcasted_iota(jnp.int32, (L, L), 1)
    self_add = jnp.where(qi == ki, -5e4, 0.0).astype(f32)         # shared-QK: no self-attn
    key_add = (kmask_ref[...] - 1.0) * 1e9                        # (B, L): 0 valid, -1e9 pad
    head_ones = headones_ref[...]                                 # (E, E) block-diag ones

    def layer_norm(x, g, b):
        mu = jnp.mean(x, axis=-1, keepdims=True)
        xc = x - mu
        var = jnp.mean(xc * xc, axis=-1, keepdims=True)
        return xc * jax.lax.rsqrt(var + 1e-5) * g + b

    scale = float(Dh) ** -0.5

    # -------- reversible reformer blocks -------------------------------------
    x1, x2 = h, h
    for d in range(DEPTH):
        # f: pre-norm shared-QK multi-head full attention
        n = layer_norm(x2, ln1g_ref[d], ln1b_ref[d]).astype(bf16)
        qkv = jnp.dot(n, wqkv_ref[d], preferred_element_type=f32)  # (BL, 2E)
        qk = qkv[:, 0:E]
        v = qkv[:, E:2 * E]
        # shared-QK keys: per-head L2 normalization, all heads at once
        ssum = jnp.dot(qk * qk, head_ones, preferred_element_type=f32)
        kn = qk * jax.lax.rsqrt(ssum + 1e-12)
        wo_d = wo_ref[d]                                           # (E, E) bf16
        a_parts = []
        for b in range(B):
            r0, r1 = b * L, (b + 1) * L
            kadd = key_add[b:b + 1, :]                             # (1, L)
            a_b = None
            for hh in range(HEADS):
                c0, c1 = hh * Dh, (hh + 1) * Dh
                q_bh = qk[r0:r1, c0:c1]                            # (L, Dh)
                k_bh = kn[r0:r1, c0:c1]
                v_bh = v[r0:r1, c0:c1]
                dots = jnp.einsum("qd,kd->qk", q_bh, k_bh,
                                  preferred_element_type=f32) * scale
                dots = dots + self_add + kadd
                dots = dots - jnp.max(dots, axis=-1, keepdims=True)
                p = jnp.exp(dots)
                p = p * pl.reciprocal(jnp.sum(p, axis=-1, keepdims=True),
                                      approx=True)
                o_bh = jnp.dot(p, v_bh, preferred_element_type=f32)  # (L, Dh)
                # distribute W_o over heads: no lane-concat, no scratch store
                t = jnp.dot(o_bh.astype(bf16), wo_d[c0:c1, :],
                            preferred_element_type=f32)              # (L, E)
                a_b = t if a_b is None else a_b + t
            a_parts.append(a_b)
        a = jnp.concatenate(a_parts, axis=0) + bo_ref[d]              # (BL, E)
        y1 = x1 + a
        # g: pre-norm GELU feed-forward
        n2 = layer_norm(y1, ln2g_ref[d], ln2b_ref[d]).astype(bf16)
        f = jax.nn.gelu(jnp.dot(n2, w1_ref[d], preferred_element_type=f32)
                        + b1_ref[d], approximate=True)
        f = jnp.dot(f.astype(bf16), w2_ref[d], preferred_element_type=f32) + b2_ref[d]
        y2 = x2 + f
        x1, x2 = y1, y2

    # reformer_pytorch: output = mean of the two reversible streams
    o_ref[...] = (0.5 * (x1 + x2)).astype(o_ref.dtype)


# ----------------------------- parameters ------------------------------------
def init_params(key):
    keys = iter(jax.random.split(key, 64))

    def nrm(shape, scale=0.1):
        return (scale * jax.random.normal(next(keys), shape)).astype(jnp.float32)

    E = EMBED_DIM

    # (V, 1, E): each row its own leading-dim tile -> cheap dynamic row gather
    embed = nrm((DICT_SIZE + 1, 1, E), 1.0)

    conv_w, conv_scale, conv_shift = [], [], []
    for _ in range(N_PRENET_CONVS):
        w = nrm((CONV_KERNEL, E, E), 0.08)                  # (K, E_in, E_out)
        bias = nrm((E,), 0.05)
        gamma = 1.0 + nrm((E,), 0.05)
        beta = nrm((E,), 0.05)
        r_mean = nrm((E,), 0.05)
        r_var = 1.0 + jnp.abs(nrm((E,), 0.05))
        scale = gamma * jax.lax.rsqrt(r_var + 1e-5)         # eval-mode BN fold
        shift = beta + (bias - r_mean) * scale
        conv_w.append(w)
        conv_scale.append(scale.reshape(1, E))
        conv_shift.append(shift.reshape(1, E))

    # sinusoidal positional encoding + learned scalar alpha (init = 1.0)
    pos = jnp.arange(MAX_LEN, dtype=jnp.float32)[:, None]
    i2 = jnp.arange(0, E, 2, dtype=jnp.float32)[None, :]
    angles = pos / jnp.power(10000.0, i2 / E)
    pe = jnp.zeros((MAX_LEN, E), jnp.float32)
    pe = pe.at[:, 0::2].set(jnp.sin(angles))
    pe = pe.at[:, 1::2].set(jnp.cos(angles))

    ln1_g, ln1_b, wqkv, wo, bo = [], [], [], [], []
    ln2_g, ln2_b, w1, b1, w2, b2 = [], [], [], [], [], []
    for _ in range(DEPTH):
        ln1_g.append(jnp.ones((1, E), jnp.float32))
        ln1_b.append(jnp.zeros((1, E), jnp.float32))
        wqk = nrm((E, E), 0.1)                              # to_qk (no bias)
        wv = nrm((E, E), 0.1)                               # to_v  (no bias)
        wqkv.append(jnp.concatenate([wqk, wv], axis=1))     # fused (E, 2E)
        wo.append(nrm((E, E), 0.1))
        bo.append(nrm((1, E), 0.05))
        ln2_g.append(jnp.ones((1, E), jnp.float32))
        ln2_b.append(jnp.zeros((1, E), jnp.float32))
        w1.append(nrm((E, FF_DIM), 0.1))
        b1.append(nrm((1, FF_DIM), 0.05))
        w2.append(nrm((FF_DIM, E), 0.1))
        b2.append(nrm((1, E), 0.05))

    bf16 = jnp.bfloat16
    return {
        "embed": embed,                                     # f32 (exact lookup)
        "conv_w": jnp.stack(conv_w).astype(bf16),           # (3, K, E, E)
        "conv_scale": jnp.stack(conv_scale),                # (3, 1, E)
        "conv_shift": jnp.stack(conv_shift),                # (3, 1, E)
        "proj_w": nrm((E, E), 0.1).astype(bf16),
        "proj_b": nrm((1, E), 0.05),
        "pe": pe,                                           # (MAX_LEN, E)
        "alpha": jnp.ones((1, 1), jnp.float32),
        "ln1_g": jnp.stack(ln1_g), "ln1_b": jnp.stack(ln1_b),   # (D, 1, E)
        "wqkv": jnp.stack(wqkv).astype(bf16),               # (D, E, 2E)
        "wo": jnp.stack(wo).astype(bf16),                   # (D, E, E)
        "bo": jnp.stack(bo),
        "ln2_g": jnp.stack(ln2_g), "ln2_b": jnp.stack(ln2_b),
        "w1": jnp.stack(w1).astype(bf16), "b1": jnp.stack(b1),  # (D, E, 4E), (D, 1, 4E)
        "w2": jnp.stack(w2).astype(bf16), "b2": jnp.stack(b2),  # (D, 4E, E), (D, 1, E)
    }


# ------------------------------ forward --------------------------------------
def encoder_forward(params, tokens, input_mask=None):
    B, L = tokens.shape
    E = EMBED_DIM
    PAD = CONV_KERNEL // 2
    assert L <= MAX_LEN
    if input_mask is None:
        input_mask = jnp.ones((B, L), jnp.float32)
    kmask = input_mask.astype(jnp.float32)                  # 1.0 = valid key

    tok = tokens.reshape(B * L).astype(jnp.int32)           # SMEM token ids

    # trace-time constants (numpy -> folded into the program, DMA'd once)
    cm = np.zeros((CONV_KERNEL, B * L, 1), np.float32)
    for k in range(CONV_KERNEL):
        off = PAD - k
        for t in range(B * L):
            if 0 <= (t % L) - off < L:
                cm[k, t, 0] = 1.0
    conv_masks = jnp.asarray(cm)                            # (K, B*L, 1)
    hid = np.arange(E) // HEAD_DIM
    head_ones = jnp.asarray((hid[:, None] == hid[None, :]).astype(np.float32))

    kernel = functools.partial(_encoder_kernel, B=B, L=L)
    out = pl.pallas_call(
        kernel,
        in_specs=[smem(), vmem(), smem()] + [vmem()] * 20,
        out_specs=vmem(),
        out_shape=jax.ShapeDtypeStruct((B * L, E), jnp.float32),
    )(
        tok, kmask, params["alpha"],
        params["embed"], params["conv_w"], conv_masks,
        params["conv_scale"], params["conv_shift"],
        params["proj_w"], params["proj_b"], params["pe"], head_ones,
        params["ln1_g"], params["ln1_b"], params["wqkv"], params["wo"], params["bo"],
        params["ln2_g"], params["ln2_b"], params["w1"], params["b1"],
        params["w2"], params["b2"],
    )
    return out.reshape(B, L, E)


# -------------------------------- main ----------------------------------------
if __name__ == "__main__":
    root = jax.random.PRNGKey(0)
    pkey, tkey = jax.random.split(root)
    params = init_params(pkey)

    tokens = jax.random.randint(tkey, (BATCH, SEQ), 1, DICT_SIZE + 1, dtype=jnp.int32)
    input_mask = jnp.array([[1.0] * SEQ,
                            [1.0] * (SEQ - 2) + [0.0] * 2], dtype=jnp.float32)
    tokens = tokens * input_mask.astype(jnp.int32)          # padded positions -> token 0

    out = jax.jit(encoder_forward)(params, tokens, input_mask)
    out = jax.block_until_ready(out)
    assert out.shape == (BATCH, SEQ, EMBED_DIM)
    assert bool(jnp.all(jnp.isfinite(out)))
    print("KERNEL_OK")
</pallas_src>

<mosaic_0001>
module attributes {stable_mosaic.version = 11 : i64} {
  func.func @_encoder_kernel(%arg0: memref<16xi32, #tpu.memory_space<smem>>, %arg1: memref<2x8xf32, #tpu.memory_space<vmem>>, %arg2: memref<1x1xf32, #tpu.memory_space<smem>>, %arg3: memref<11x1x32xf32, #tpu.memory_space<vmem>>, %arg4: memref<3x5x32x32xbf16, #tpu.memory_space<vmem>>, %arg5: memref<5x16x1xf32, #tpu.memory_space<vmem>>, %arg6: memref<3x1x32xf32, #tpu.memory_space<vmem>>, %arg7: memref<3x1x32xf32, #tpu.memory_space<vmem>>, %arg8: memref<32x32xbf16, #tpu.memory_space<vmem>>, %arg9: memref<1x32xf32, #tpu.memory_space<vmem>>, %arg10: memref<64x32xf32, #tpu.memory_space<vmem>>, %arg11: memref<32x32xf32, #tpu.memory_space<vmem>>, %arg12: memref<2x1x32xf32, #tpu.memory_space<vmem>>, %arg13: memref<2x1x32xf32, #tpu.memory_space<vmem>>, %arg14: memref<2x32x64xbf16, #tpu.memory_space<vmem>>, %arg15: memref<2x32x32xbf16, #tpu.memory_space<vmem>>, %arg16: memref<2x1x32xf32, #tpu.memory_space<vmem>>, %arg17: memref<2x1x32xf32, #tpu.memory_space<vmem>>, %arg18: memref<2x1x32xf32, #tpu.memory_space<vmem>>, %arg19: memref<2x32x128xbf16, #tpu.memory_space<vmem>>, %arg20: memref<2x1x128xf32, #tpu.memory_space<vmem>>, %arg21: memref<2x128x32xbf16, #tpu.memory_space<vmem>>, %arg22: memref<2x1x32xf32, #tpu.memory_space<vmem>>, %arg23: memref<16x32xf32, #tpu.memory_space<vmem>>) attributes {dimension_semantics = [], scalar_prefetch = 0 : i64, scratch_operands = 0 : i64, tpu.core_type = #tpu.core_type<tc>} {
    %0 = tpu.iota {dimensions = array<i32: 0>} : vector<16x32xi32>
    %cst = arith.constant 0.000000e+00 : f32
    %1 = vector.broadcast %cst : f32 to vector<16x32xf32>
    %c0 = arith.constant 0 : index
    %2 = memref.load %arg0[%c0] : memref<16xi32, #tpu.memory_space<smem>>
    %3 = arith.index_cast %2 : i32 to index
    %c0_0 = arith.constant 0 : index
    %c0_1 = arith.constant 0 : index
    %4 = vector.load %arg3[%3, %c0_0, %c0_1] : memref<11x1x32xf32, #tpu.memory_space<vmem>>, vector<1x1x32xf32>
    %5 = vector.shape_cast %4 : vector<1x1x32xf32> to vector<1x32xf32>
    %c0_i32 = arith.constant 0 : i32
    %6 = vector.broadcast %c0_i32 : i32 to vector<16x32xi32>
    %7 = arith.cmpi eq, %0, %6 : vector<16x32xi32>
    %8 = vector.shape_cast %5 : vector<1x32xf32> to vector<1x32xf32>
    %9 = vector.broadcast %8 : vector<1x32xf32> to vector<16x32xf32>
    %10 = arith.select %7, %9, %1 : vector<16x32xi1>, vector<16x32xf32>
    %c1 = arith.constant 1 : index
    %11 = memref.load %arg0[%c1] : memref<16xi32, #tpu.memory_space<smem>>
    %12 = arith.index_cast %11 : i32 to index
    %c0_2 = arith.constant 0 : index
    %c0_3 = arith.constant 0 : index
    %13 = vector.load %arg3[%12, %c0_2, %c0_3] : memref<11x1x32xf32, #tpu.memory_space<vmem>>, vector<1x1x32xf32>
    %14 = vector.shape_cast %13 : vector<1x1x32xf32> to vector<1x32xf32>
    %c1_i32 = arith.constant 1 : i32
    %15 = vector.broadcast %c1_i32 : i32 to vector<16x32xi32>
    %16 = arith.cmpi eq, %0, %15 : vector<16x32xi32>
    %17 = vector.shape_cast %14 : vector<1x32xf32> to vector<1x32xf32>
    %18 = vector.broadcast %17 : vector<1x32xf32> to vector<16x32xf32>
    %19 = arith.select %16, %18, %10 : vector<16x32xi1>, vector<16x32xf32>
    %c2 = arith.constant 2 : index
    %20 = memref.load %arg0[%c2] : memref<16xi32, #tpu.memory_space<smem>>
    %21 = arith.index_cast %20 : i32 to index
    %c0_4 = arith.constant 0 : index
    %c0_5 = arith.constant 0 : index
    %22 = vector.load %arg3[%21, %c0_4, %c0_5] : memref<11x1x32xf32, #tpu.memory_space<vmem>>, vector<1x1x32xf32>
    %23 = vector.shape_cast %22 : vector<1x1x32xf32> to vector<1x32xf32>
    %c2_i32 = arith.constant 2 : i32
    %24 = vector.broadcast %c2_i32 : i32 to vector<16x32xi32>
    %25 = arith.cmpi eq, %0, %24 : vector<16x32xi32>
    %26 = vector.shape_cast %23 : vector<1x32xf32> to vector<1x32xf32>
    %27 = vector.broadcast %26 : vector<1x32xf32> to vector<16x32xf32>
    %28 = arith.select %25, %27, %19 : vector<16x32xi1>, vector<16x32xf32>
    %c3 = arith.constant 3 : index
    %29 = memref.load %arg0[%c3] : memref<16xi32, #tpu.memory_space<smem>>
    %30 = arith.index_cast %29 : i32 to index
    %c0_6 = arith.constant 0 : index
    %c0_7 = arith.constant 0 : index
    %31 = vector.load %arg3[%30, %c0_6, %c0_7] : memref<11x1x32xf32, #tpu.memory_space<vmem>>, vector<1x1x32xf32>
    %32 = vector.shape_cast %31 : vector<1x1x32xf32> to vector<1x32xf32>
    %c3_i32 = arith.constant 3 : i32
    %33 = vector.broadcast %c3_i32 : i32 to vector<16x32xi32>
    %34 = arith.cmpi eq, %0, %33 : vector<16x32xi32>
    %35 = vector.shape_cast %32 : vector<1x32xf32> to vector<1x32xf32>
    %36 = vector.broadcast %35 : vector<1x32xf32> to vector<16x32xf32>
    %37 = arith.select %34, %36, %28 : vector<16x32xi1>, vector<16x32xf32>
    %c4 = arith.constant 4 : index
    %38 = memref.load %arg0[%c4] : memref<16xi32, #tpu.memory_space<smem>>
    %39 = arith.index_cast %38 : i32 to index
    %c0_8 = arith.constant 0 : index
    %c0_9 = arith.constant 0 : index
    %40 = vector.load %arg3[%39, %c0_8, %c0_9] : memref<11x1x32xf32, #tpu.memory_space<vmem>>, vector<1x1x32xf32>
    %41 = vector.shape_cast %40 : vector<1x1x32xf32> to vector<1x32xf32>
    %c4_i32 = arith.constant 4 : i32
    %42 = vector.broadcast %c4_i32 : i32 to vector<16x32xi32>
    %43 = arith.cmpi eq, %0, %42 : vector<16x32xi32>
    %44 = vector.shape_cast %41 : vector<1x32xf32> to vector<1x32xf32>
    %45 = vector.broadcast %44 : vector<1x32xf32> to vector<16x32xf32>
    %46 = arith.select %43, %45, %37 : vector<16x32xi1>, vector<16x32xf32>
    %c5 = arith.constant 5 : index
    %47 = memref.load %arg0[%c5] : memref<16xi32, #tpu.memory_space<smem>>
    %48 = arith.index_cast %47 : i32 to index
    %c0_10 = arith.constant 0 : index
    %c0_11 = arith.constant 0 : index
    %49 = vector.load %arg3[%48, %c0_10, %c0_11] : memref<11x1x32xf32, #tpu.memory_space<vmem>>, vector<1x1x32xf32>
    %50 = vector.shape_cast %49 : vector<1x1x32xf32> to vector<1x32xf32>
    %c5_i32 = arith.constant 5 : i32
    %51 = vector.broadcast %c5_i32 : i32 to vector<16x32xi32>
    %52 = arith.cmpi eq, %0, %51 : vector<16x32xi32>
    %53 = vector.shape_cast %50 : vector<1x32xf32> to vector<1x32xf32>
    %54 = vector.broadcast %53 : vector<1x32xf32> to vector<16x32xf32>
    %55 = arith.select %52, %54, %46 : vector<16x32xi1>, vector<16x32xf32>
    %c6 = arith.constant 6 : index
    %56 = memref.load %arg0[%c6] : memref<16xi32, #tpu.memory_space<smem>>
    %57 = arith.index_cast %56 : i32 to index
    %c0_12 = arith.constant 0 : index
    %c0_13 = arith.constant 0 : index
    %58 = vector.load %arg3[%57, %c0_12, %c0_13] : memref<11x1x32xf32, #tpu.memory_space<vmem>>, vector<1x1x32xf32>
    %59 = vector.shape_cast %58 : vector<1x1x32xf32> to vector<1x32xf32>
    %c6_i32 = arith.constant 6 : i32
    %60 = vector.broadcast %c6_i32 : i32 to vector<16x32xi32>
    %61 = arith.cmpi eq, %0, %60 : vector<16x32xi32>
    %62 = vector.shape_cast %59 : vector<1x32xf32> to vector<1x32xf32>
    %63 = vector.broadcast %62 : vector<1x32xf32> to vector<16x32xf32>
    %64 = arith.select %61, %63, %55 : vector<16x32xi1>, vector<16x32xf32>
    %c7 = arith.constant 7 : index
    %65 = memref.load %arg0[%c7] : memref<16xi32, #tpu.memory_space<smem>>
    %66 = arith.index_cast %65 : i32 to index
    %c0_14 = arith.constant 0 : index
    %c0_15 = arith.constant 0 : index
    %67 = vector.load %arg3[%66, %c0_14, %c0_15] : memref<11x1x32xf32, #tpu.memory_space<vmem>>, vector<1x1x32xf32>
    %68 = vector.shape_cast %67 : vector<1x1x32xf32> to vector<1x32xf32>
    %c7_i32 = arith.constant 7 : i32
    %69 = vector.broadcast %c7_i32 : i32 to vector<16x32xi32>
    %70 = arith.cmpi eq, %0, %69 : vector<16x32xi32>
    %71 = vector.shape_cast %68 : vector<1x32xf32> to vector<1x32xf32>
    %72 = vector.broadcast %71 : vector<1x32xf32> to vector<16x32xf32>
    %73 = arith.select %70, %72, %64 : vector<16x32xi1>, vector<16x32xf32>
    %c8 = arith.constant 8 : index
    %74 = memref.load %arg0[%c8] : memref<16xi32, #tpu.memory_space<smem>>
    %75 = arith.index_cast %74 : i32 to index
    %c0_16 = arith.constant 0 : index
    %c0_17 = arith.constant 0 : index
    %76 = vector.load %arg3[%75, %c0_16, %c0_17] : memref<11x1x32xf32, #tpu.memory_space<vmem>>, vector<1x1x32xf32>
    %77 = vector.shape_cast %76 : vector<1x1x32xf32> to vector<1x32xf32>
    %c8_i32 = arith.constant 8 : i32
    %78 = vector.broadcast %c8_i32 : i32 to vector<16x32xi32>
    %79 = arith.cmpi eq, %0, %78 : vector<16x32xi32>
    %80 = vector.shape_cast %77 : vector<1x32xf32> to vector<1x32xf32>
    %81 = vector.broadcast %80 : vector<1x32xf32> to vector<16x32xf32>
    %82 = arith.select %79, %81, %73 : vector<16x32xi1>, vector<16x32xf32>
    %c9 = arith.constant 9 : index
    %83 = memref.load %arg0[%c9] : memref<16xi32, #tpu.memory_space<smem>>
    %84 = arith.index_cast %83 : i32 to index
    %c0_18 = arith.constant 0 : index
    %c0_19 = arith.constant 0 : index
    %85 = vector.load %arg3[%84, %c0_18, %c0_19] : memref<11x1x32xf32, #tpu.memory_space<vmem>>, vector<1x1x32xf32>
    %86 = vector.shape_cast %85 : vector<1x1x32xf32> to vector<1x32xf32>
    %c9_i32 = arith.constant 9 : i32
    %87 = vector.broadcast %c9_i32 : i32 to vector<16x32xi32>
    %88 = arith.cmpi eq, %0, %87 : vector<16x32xi32>
    %89 = vector.shape_cast %86 : vector<1x32xf32> to vector<1x32xf32>
    %90 = vector.broadcast %89 : vector<1x32xf32> to vector<16x32xf32>
    %91 = arith.select %88, %90, %82 : vector<16x32xi1>, vector<16x32xf32>
    %c10 = arith.constant 10 : index
    %92 = memref.load %arg0[%c10] : memref<16xi32, #tpu.memory_space<smem>>
    %93 = arith.index_cast %92 : i32 to index
    %c0_20 = arith.constant 0 : index
    %c0_21 = arith.constant 0 : index
    %94 = vector.load %arg3[%93, %c0_20, %c0_21] : memref<11x1x32xf32, #tpu.memory_space<vmem>>, vector<1x1x32xf32>
    %95 = vector.shape_cast %94 : vector<1x1x32xf32> to vector<1x32xf32>
    %c10_i32 = arith.constant 10 : i32
    %96 = vector.broadcast %c10_i32 : i32 to vector<16x32xi32>
    %97 = arith.cmpi eq, %0, %96 : vector<16x32xi32>
    %98 = vector.shape_cast %95 : vector<1x32xf32> to vector<1x32xf32>
    %99 = vector.broadcast %98 : vector<1x32xf32> to vector<16x32xf32>
    %100 = arith.select %97, %99, %91 : vector<16x32xi1>, vector<16x32xf32>
    %c11 = arith.constant 11 : index
    %101 = memref.load %arg0[%c11] : memref<16xi32, #tpu.memory_space<smem>>
    %102 = arith.index_cast %101 : i32 to index
    %c0_22 = arith.constant 0 : index
    %c0_23 = arith.constant 0 : index
    %103 = vector.load %arg3[%102, %c0_22, %c0_23] : memref<11x1x32xf32, #tpu.memory_space<vmem>>, vector<1x1x32xf32>
    %104 = vector.shape_cast %103 : vector<1x1x32xf32> to vector<1x32xf32>
    %c11_i32 = arith.constant 11 : i32
    %105 = vector.broadcast %c11_i32 : i32 to vector<16x32xi32>
    %106 = arith.cmpi eq, %0, %105 : vector<16x32xi32>
    %107 = vector.shape_cast %104 : vector<1x32xf32> to vector<1x32xf32>
    %108 = vector.broadcast %107 : vector<1x32xf32> to vector<16x32xf32>
    %109 = arith.select %106, %108, %100 : vector<16x32xi1>, vector<16x32xf32>
    %c12 = arith.constant 12 : index
    %110 = memref.load %arg0[%c12] : memref<16xi32, #tpu.memory_space<smem>>
    %111 = arith.index_cast %110 : i32 to index
    %c0_24 = arith.constant 0 : index
    %c0_25 = arith.constant 0 : index
    %112 = vector.load %arg3[%111, %c0_24, %c0_25] : memref<11x1x32xf32, #tpu.memory_space<vmem>>, vector<1x1x32xf32>
    %113 = vector.shape_cast %112 : vector<1x1x32xf32> to vector<1x32xf32>
    %c12_i32 = arith.constant 12 : i32
    %114 = vector.broadcast %c12_i32 : i32 to vector<16x32xi32>
    %115 = arith.cmpi eq, %0, %114 : vector<16x32xi32>
    %116 = vector.shape_cast %113 : vector<1x32xf32> to vector<1x32xf32>
    %117 = vector.broadcast %116 : vector<1x32xf32> to vector<16x32xf32>
    %118 = arith.select %115, %117, %109 : vector<16x32xi1>, vector<16x32xf32>
    %c13 = arith.constant 13 : index
    %119 = memref.load %arg0[%c13] : memref<16xi32, #tpu.memory_space<smem>>
    %120 = arith.index_cast %119 : i32 to index
    %c0_26 = arith.constant 0 : index
    %c0_27 = arith.constant 0 : index
    %121 = vector.load %arg3[%120, %c0_26, %c0_27] : memref<11x1x32xf32, #tpu.memory_space<vmem>>, vector<1x1x32xf32>
    %122 = vector.shape_cast %121 : vector<1x1x32xf32> to vector<1x32xf32>
    %c13_i32 = arith.constant 13 : i32
    %123 = vector.broadcast %c13_i32 : i32 to vector<16x32xi32>
    %124 = arith.cmpi eq, %0, %123 : vector<16x32xi32>
    %125 = vector.shape_cast %122 : vector<1x32xf32> to vector<1x32xf32>
    %126 = vector.broadcast %125 : vector<1x32xf32> to vector<16x32xf32>
    %127 = arith.select %124, %126, %118 : vector<16x32xi1>, vector<16x32xf32>
    %c14 = arith.constant 14 : index
    %128 = memref.load %arg0[%c14] : memref<16xi32, #tpu.memory_space<smem>>
    %129 = arith.index_cast %128 : i32 to index
    %c0_28 = arith.constant 0 : index
    %c0_29 = arith.constant 0 : index
    %130 = vector.load %arg3[%129, %c0_28, %c0_29] : memref<11x1x32xf32, #tpu.memory_space<vmem>>, vector<1x1x32xf32>
    %131 = vector.shape_cast %130 : vector<1x1x32xf32> to vector<1x32xf32>
    %c14_i32 = arith.constant 14 : i32
    %132 = vector.broadcast %c14_i32 : i32 to vector<16x32xi32>
    %133 = arith.cmpi eq, %0, %132 : vector<16x32xi32>
    %134 = vector.shape_cast %131 : vector<1x32xf32> to vector<1x32xf32>
    %135 = vector.broadcast %134 : vector<1x32xf32> to vector<16x32xf32>
    %136 = arith.select %133, %135, %127 : vector<16x32xi1>, vector<16x32xf32>
    %c15 = arith.constant 15 : index
    %137 = memref.load %arg0[%c15] : memref<16xi32, #tpu.memory_space<smem>>
    %138 = arith.index_cast %137 : i32 to index
    %c0_30 = arith.constant 0 : index
    %c0_31 = arith.constant 0 : index
    %139 = vector.load %arg3[%138, %c0_30, %c0_31] : memref<11x1x32xf32, #tpu.memory_space<vmem>>, vector<1x1x32xf32>
    %140 = vector.shape_cast %139 : vector<1x1x32xf32> to vector<1x32xf32>
    %c15_i32 = arith.constant 15 : i32
    %141 = vector.broadcast %c15_i32 : i32 to vector<16x32xi32>
    %142 = arith.cmpi eq, %0, %141 : vector<16x32xi32>
    %143 = vector.shape_cast %140 : vector<1x32xf32> to vector<1x32xf32>
    %144 = vector.broadcast %143 : vector<1x32xf32> to vector<16x32xf32>
    %145 = arith.select %142, %144, %136 : vector<16x32xi1>, vector<16x32xf32>
    %c2_i32_32 = arith.constant 2 : i32
    %146 = tpu.dynamic_rotate %145 by %c2_i32_32 dim 0 : vector<16x32xf32>, i32 -> vector<16x32xf32>
    %c0_33 = arith.constant 0 : index
    %c0_34 = arith.constant 0 : index
    %c0_35 = arith.constant 0 : index
    %147 = vector.load %arg5[%c0_33, %c0_34, %c0_35] : memref<5x16x1xf32, #tpu.memory_space<vmem>>, vector<1x16x1xf32>
    %148 = vector.shape_cast %147 : vector<1x16x1xf32> to vector<16x1xf32>
    %149 = vector.broadcast %148 : vector<16x1xf32> to vector<16x32xf32>
    %150 = arith.mulf %146, %149 : vector<16x32xf32>
    %151 = arith.truncf %150 : vector<16x32xf32> to vector<16x32xbf16>
    %c0_36 = arith.constant 0 : index
    %c0_37 = arith.constant 0 : index
    %c0_38 = arith.constant 0 : index
    %c0_39 = arith.constant 0 : index
    %152 = vector.load %arg4[%c0_36, %c0_37, %c0_38, %c0_39] : memref<3x5x32x32xbf16, #tpu.memory_space<vmem>>, vector<1x1x32x32xbf16>
    %153 = vector.shape_cast %152 : vector<1x1x32x32xbf16> to vector<32x32xbf16>
    %cst_40 = arith.constant dense<0.000000e+00> : vector<16x32xf32>
    %154 = tpu.matmul %151, %153, %cst_40 {dimension_numbers = #tpu.dot_dimension_numbers<[1], [0], [0], [1], [0, 0, 1, 1], [], []>} : vector<16x32xbf16>, vector<32x32xbf16>, vector<16x32xf32> -> vector<16x32xf32>
    %c1_i32_41 = arith.constant 1 : i32
    %155 = tpu.dynamic_rotate %145 by %c1_i32_41 dim 0 : vector<16x32xf32>, i32 -> vector<16x32xf32>
    %c1_42 = arith.constant 1 : index
    %c0_43 = arith.constant 0 : index
    %c0_44 = arith.constant 0 : index
    %156 = vector.load %arg5[%c1_42, %c0_43, %c0_44] : memref<5x16x1xf32, #tpu.memory_space<vmem>>, vector<1x16x1xf32>
    %157 = vector.shape_cast %156 : vector<1x16x1xf32> to vector<16x1xf32>
    %158 = vector.broadcast %157 : vector<16x1xf32> to vector<16x32xf32>
    %159 = arith.mulf %155, %158 : vector<16x32xf32>
    %160 = arith.truncf %159 : vector<16x32xf32> to vector<16x32xbf16>
    %c0_45 = arith.constant 0 : index
    %c1_46 = arith.constant 1 : index
    %c0_47 = arith.constant 0 : index
    %c0_48 = arith.constant 0 : index
    %161 = vector.load %arg4[%c0_45, %c1_46, %c0_47, %c0_48] : memref<3x5x32x32xbf16, #tpu.memory_space<vmem>>, vector<1x1x32x32xbf16>
    %162 = vector.shape_cast %161 : vector<1x1x32x32xbf16> to vector<32x32xbf16>
    %cst_49 = arith.constant dense<0.000000e+00> : vector<16x32xf32>
    %163 = tpu.matmul %160, %162, %cst_49 {dimension_numbers = #tpu.dot_dimension_numbers<[1], [0], [0], [1], [0, 0, 1, 1], [], []>} : vector<16x32xbf16>, vector<32x32xbf16>, vector<16x32xf32> -> vector<16x32xf32>
    %164 = arith.addf %154, %163 : vector<16x32xf32>
    %165 = arith.truncf %145 : vector<16x32xf32> to vector<16x32xbf16>
    %c0_50 = arith.constant 0 : index
    %c2_51 = arith.constant 2 : index
    %c0_52 = arith.constant 0 : index
    %c0_53 = arith.constant 0 : index
    %166 = vector.load %arg4[%c0_50, %c2_51, %c0_52, %c0_53] : memref<3x5x32x32xbf16, #tpu.memory_space<vmem>>, vector<1x1x32x32xbf16>
    %167 = vector.shape_cast %166 : vector<1x1x32x32xbf16> to vector<32x32xbf16>
    %cst_54 = arith.constant dense<0.000000e+00> : vector<16x32xf32>
    %168 = tpu.matmul %165, %167, %cst_54 {dimension_numbers = #tpu.dot_dimension_numbers<[1], [0], [0], [1], [0, 0, 1, 1], [], []>} : vector<16x32xbf16>, vector<32x32xbf16>, vector<16x32xf32> -> vector<16x32xf32>
    %169 = arith.addf %164, %168 : vector<16x32xf32>
    %c15_i32_55 = arith.constant 15 : i32
    %170 = tpu.dynamic_rotate %145 by %c15_i32_55 dim 0 : vector<16x32xf32>, i32 -> vector<16x32xf32>
    %c3_56 = arith.constant 3 : index
    %c0_57 = arith.constant 0 : index
    %c0_58 = arith.constant 0 : index
    %171 = vector.load %arg5[%c3_56, %c0_57, %c0_58] : memref<5x16x1xf32, #tpu.memory_space<vmem>>, vector<1x16x1xf32>
    %172 = vector.shape_cast %171 : vector<1x16x1xf32> to vector<16x1xf32>
    %173 = vector.broadcast %172 : vector<16x1xf32> to vector<16x32xf32>
    %174 = arith.mulf %170, %173 : vector<16x32xf32>
    %175 = arith.truncf %174 : vector<16x32xf32> to vector<16x32xbf16>
    %c0_59 = arith.constant 0 : index
    %c3_60 = arith.constant 3 : index
    %c0_61 = arith.constant 0 : index
    %c0_62 = arith.constant 0 : index
    %176 = vector.load %arg4[%c0_59, %c3_60, %c0_61, %c0_62] : memref<3x5x32x32xbf16, #tpu.memory_space<vmem>>, vector<1x1x32x32xbf16>
    %177 = vector.shape_cast %176 : vector<1x1x32x32xbf16> to vector<32x32xbf16>
    %cst_63 = arith.constant dense<0.000000e+00> : vector<16x32xf32>
    %178 = tpu.matmul %175, %177, %cst_63 {dimension_numbers = #tpu.dot_dimension_numbers<[1], [0], [0], [1], [0, 0, 1, 1], [], []>} : vector<16x32xbf16>, vector<32x32xbf16>, vector<16x32xf32> -> vector<16x32xf32>
    %179 = arith.addf %169, %178 : vector<16x32xf32>
    %c14_i32_64 = arith.constant 14 : i32
    %180 = tpu.dynamic_rotate %145 by %c14_i32_64 dim 0 : vector<16x32xf32>, i32 -> vector<16x32xf32>
    %c4_65 = arith.constant 4 : index
    %c0_66 = arith.constant 0 : index
    %c0_67 = arith.constant 0 : index
    %181 = vector.load %arg5[%c4_65, %c0_66, %c0_67] : memref<5x16x1xf32, #tpu.memory_space<vmem>>, vector<1x16x1xf32>
    %182 = vector.shape_cast %181 : vector<1x16x1xf32> to vector<16x1xf32>
    %183 = vector.broadcast %182 : vector<16x1xf32> to vector<16x32xf32>
    %184 = arith.mulf %180, %183 : vector<16x32xf32>
    %185 = arith.truncf %184 : vector<16x32xf32> to vector<16x32xbf16>
    %c0_68 = arith.constant 0 : index
    %c4_69 = arith.constant 4 : index
    %c0_70 = arith.constant 0 : index
    %c0_71 = arith.constant 0 : index
    %186 = vector.load %arg4[%c0_68, %c4_69, %c0_70, %c0_71] : memref<3x5x32x32xbf16, #tpu.memory_space<vmem>>, vector<1x1x32x32xbf16>
    %187 = vector.shape_cast %186 : vector<1x1x32x32xbf16> to vector<32x32xbf16>
    %cst_72 = arith.constant dense<0.000000e+00> : vector<16x32xf32>
    %188 = tpu.matmul %185, %187, %cst_72 {dimension_numbers = #tpu.dot_dimension_numbers<[1], [0], [0], [1], [0, 0, 1, 1], [], []>} : vector<16x32xbf16>, vector<32x32xbf16>, vector<16x32xf32> -> vector<16x32xf32>
    %189 = arith.addf %179, %188 : vector<16x32xf32>
    %c0_73 = arith.constant 0 : index
    %c0_74 = arith.constant 0 : index
    %c0_75 = arith.constant 0 : index
    %190 = vector.load %arg6[%c0_73, %c0_74, %c0_75] : memref<3x1x32xf32, #tpu.memory_space<vmem>>, vector<1x1x32xf32>
    %191 = vector.shape_cast %190 : vector<1x1x32xf32> to vector<1x32xf32>
    %192 = vector.broadcast %191 : vector<1x32xf32> to vector<16x32xf32>
    %193 = arith.mulf %189, %192 : vector<16x32xf32>
    %c0_76 = arith.constant 0 : index
    %c0_77 = arith.constant 0 : index
    %c0_78 = arith.constant 0 : index
    %194 = vector.load %arg7[%c0_76, %c0_77, %c0_78] : memref<3x1x32xf32, #tpu.memory_space<vmem>>, vector<1x1x32xf32>
    %195 = vector.shape_cast %194 : vector<1x1x32xf32> to vector<1x32xf32>
    %196 = vector.broadcast %195 : vector<1x32xf32> to vector<16x32xf32>
    %197 = arith.addf %193, %196 : vector<16x32xf32>
    %cst_79 = arith.constant 0.000000e+00 : f32
    %198 = vector.broadcast %cst_79 : f32 to vector<16x32xf32>
    %199 = arith.maximumf %197, %198 : vector<16x32xf32>
    %c2_i32_80 = arith.constant 2 : i32
    %200 = tpu.dynamic_rotate %199 by %c2_i32_80 dim 0 : vector<16x32xf32>, i32 -> vector<16x32xf32>
    %c0_81 = arith.constant 0 : index
    %c0_82 = arith.constant 0 : index
    %c0_83 = arith.constant 0 : index
    %201 = vector.load %arg5[%c0_81, %c0_82, %c0_83] : memref<5x16x1xf32, #tpu.memory_space<vmem>>, vector<1x16x1xf32>
    %202 = vector.shape_cast %201 : vector<1x16x1xf32> to vector<16x1xf32>
    %203 = vector.broadcast %202 : vector<16x1xf32> to vector<16x32xf32>
    %204 = arith.mulf %200, %203 : vector<16x32xf32>
    %205 = arith.truncf %204 : vector<16x32xf32> to vector<16x32xbf16>
    %c1_84 = arith.constant 1 : index
    %c0_85 = arith.constant 0 : index
    %c0_86 = arith.constant 0 : index
    %c0_87 = arith.constant 0 : index
    %206 = vector.load %arg4[%c1_84, %c0_85, %c0_86, %c0_87] : memref<3x5x32x32xbf16, #tpu.memory_space<vmem>>, vector<1x1x32x32xbf16>
    %207 = vector.shape_cast %206 : vector<1x1x32x32xbf16> to vector<32x32xbf16>
    %cst_88 = arith.constant dense<0.000000e+00> : vector<16x32xf32>
    %208 = tpu.matmul %205, %207, %cst_88 {dimension_numbers = #tpu.dot_dimension_numbers<[1], [0], [0], [1], [0, 0, 1, 1], [], []>} : vector<16x32xbf16>, vector<32x32xbf16>, vector<16x32xf32> -> vector<16x32xf32>
    %c1_i32_89 = arith.constant 1 : i32
    %209 = tpu.dynamic_rotate %199 by %c1_i32_89 dim 0 : vector<16x32xf32>, i32 -> vector<16x32xf32>
    %c1_90 = arith.constant 1 : index
    %c0_91 = arith.constant 0 : index
    %c0_92 = arith.constant 0 : index
    %210 = vector.load %arg5[%c1_90, %c0_91, %c0_92] : memref<5x16x1xf32, #tpu.memory_space<vmem>>, vector<1x16x1xf32>
    %211 = vector.shape_cast %210 : vector<1x16x1xf32> to vector<16x1xf32>
    %212 = vector.broadcast %211 : vector<16x1xf32> to vector<16x32xf32>
    %213 = arith.mulf %209, %212 : vector<16x32xf32>
    %214 = arith.truncf %213 : vector<16x32xf32> to vector<16x32xbf16>
    %c1_93 = arith.constant 1 : index
    %c1_94 = arith.constant 1 : index
    %c0_95 = arith.constant 0 : index
    %c0_96 = arith.constant 0 : index
    %215 = vector.load %arg4[%c1_93, %c1_94, %c0_95, %c0_96] : memref<3x5x32x32xbf16, #tpu.memory_space<vmem>>, vector<1x1x32x32xbf16>
    %216 = vector.shape_cast %215 : vector<1x1x32x32xbf16> to vector<32x32xbf16>
    %cst_97 = arith.constant dense<0.000000e+00> : vector<16x32xf32>
    %217 = tpu.matmul %214, %216, %cst_97 {dimension_numbers = #tpu.dot_dimension_numbers<[1], [0], [0], [1], [0, 0, 1, 1], [], []>} : vector<16x32xbf16>, vector<32x32xbf16>, vector<16x32xf32> -> vector<16x32xf32>
    %218 = arith.addf %208, %217 : vector<16x32xf32>
    %219 = arith.truncf %199 : vector<16x32xf32> to vector<16x32xbf16>
    %c1_98 = arith.constant 1 : index
    %c2_99 = arith.constant 2 : index
    %c0_100 = arith.constant 0 : index
    %c0_101 = arith.constant 0 : index
    %220 = vector.load %arg4[%c1_98, %c2_99, %c0_100, %c0_101] : memref<3x5x32x32xbf16, #tpu.memory_space<vmem>>, vector<1x1x32x32xbf16>
    %221 = vector.shape_cast %220 : vector<1x1x32x32xbf16> to vector<32x32xbf16>
    %cst_102 = arith.constant dense<0.000000e+00> : vector<16x32xf32>
    %222 = tpu.matmul %219, %221, %cst_102 {dimension_numbers = #tpu.dot_dimension_numbers<[1], [0], [0], [1], [0, 0, 1, 1], [], []>} : vector<16x32xbf16>, vector<32x32xbf16>, vector<16x32xf32> -> vector<16x32xf32>
    %223 = arith.addf %218, %222 : vector<16x32xf32>
    %c15_i32_103 = arith.constant 15 : i32
    %224 = tpu.dynamic_rotate %199 by %c15_i32_103 dim 0 : vector<16x32xf32>, i32 -> vector<16x32xf32>
    %c3_104 = arith.constant 3 : index
    %c0_105 = arith.constant 0 : index
    %c0_106 = arith.constant 0 : index
    %225 = vector.load %arg5[%c3_104, %c0_105, %c0_106] : memref<5x16x1xf32, #tpu.memory_space<vmem>>, vector<1x16x1xf32>
    %226 = vector.shape_cast %225 : vector<1x16x1xf32> to vector<16x1xf32>
    %227 = vector.broadcast %226 : vector<16x1xf32> to vector<16x32xf32>
    %228 = arith.mulf %224, %227 : vector<16x32xf32>
    %229 = arith.truncf %228 : vector<16x32xf32> to vector<16x32xbf16>
    %c1_107 = arith.constant 1 : index
    %c3_108 = arith.constant 3 : index
    %c0_109 = arith.constant 0 : index
    %c0_110 = arith.constant 0 : index
    %230 = vector.load %arg4[%c1_107, %c3_108, %c0_109, %c0_110] : memref<3x5x32x32xbf16, #tpu.memory_space<vmem>>, vector<1x1x32x32xbf16>
    %231 = vector.shape_cast %230 : vector<1x1x32x32xbf16> to vector<32x32xbf16>
    %cst_111 = arith.constant dense<0.000000e+00> : vector<16x32xf32>
    %232 = tpu.matmul %229, %231, %cst_111 {dimension_numbers = #tpu.dot_dimension_numbers<[1], [0], [0], [1], [0, 0, 1, 1], [], []>} : vector<16x32xbf16>, vector<32x32xbf16>, vector<16x32xf32> -> vector<16x32xf32>
    %233 = arith.addf %223, %232 : vector<16x32xf32>
    %c14_i32_112 = arith.constant 14 : i32
    %234 = tpu.dynamic_rotate %199 by %c14_i32_112 dim 0 : vector<16x32xf32>, i32 -> vector<16x32xf32>
    %c4_113 = arith.constant 4 : index
    %c0_114 = arith.constant 0 : index
    %c0_115 = arith.constant 0 : index
    %235 = vector.load %arg5[%c4_113, %c0_114, %c0_115] : memref<5x16x1xf32, #tpu.memory_space<vmem>>, vector<1x16x1xf32>
    %236 = vector.shape_cast %235 : vector<1x16x1xf32> to vector<16x1xf32>
    %237 = vector.broadcast %236 : vector<16x1xf32> to vector<16x32xf32>
    %238 = arith.mulf %234, %237 : vector<16x32xf32>
    %239 = arith.truncf %238 : vector<16x32xf32> to vector<16x32xbf16>
    %c1_116 = arith.constant 1 : index
    %c4_117 = arith.constant 4 : index
    %c0_118 = arith.constant 0 : index
    %c0_119 = arith.constant 0 : index
    %240 = vector.load %arg4[%c1_116, %c4_117, %c0_118, %c0_119] : memref<3x5x32x32xbf16, #tpu.memory_space<vmem>>, vector<1x1x32x32xbf16>
    %241 = vector.shape_cast %240 : vector<1x1x32x32xbf16> to vector<32x32xbf16>
    %cst_120 = arith.constant dense<0.000000e+00> : vector<16x32xf32>
    %242 = tpu.matmul %239, %241, %cst_120 {dimension_numbers = #tpu.dot_dimension_numbers<[1], [0], [0], [1], [0, 0, 1, 1], [], []>} : vector<16x32xbf16>, vector<32x32xbf16>, vector<16x32xf32> -> vector<16x32xf32>
    %243 = arith.addf %233, %242 : vector<16x32xf32>
    %c1_121 = arith.constant 1 : index
    %c0_122 = arith.constant 0 : index
    %c0_123 = arith.constant 0 : index
    %244 = vector.load %arg6[%c1_121, %c0_122, %c0_123] : memref<3x1x32xf32, #tpu.memory_space<vmem>>, vector<1x1x32xf32>
    %245 = vector.shape_cast %244 : vector<1x1x32xf32> to vector<1x32xf32>
    %246 = vector.broadcast %245 : vector<1x32xf32> to vector<16x32xf32>
    %247 = arith.mulf %243, %246 : vector<16x32xf32>
    %c1_124 = arith.constant 1 : index
    %c0_125 = arith.constant 0 : index
    %c0_126 = arith.constant 0 : index
    %248 = vector.load %arg7[%c1_124, %c0_125, %c0_126] : memref<3x1x32xf32, #tpu.memory_space<vmem>>, vector<1x1x32xf32>
    %249 = vector.shape_cast %248 : vector<1x1x32xf32> to vector<1x32xf32>
    %250 = vector.broadcast %249 : vector<1x32xf32> to vector<16x32xf32>
    %251 = arith.addf %247, %250 : vector<16x32xf32>
    %cst_127 = arith.constant 0.000000e+00 : f32
    %252 = vector.broadcast %cst_127 : f32 to vector<16x32xf32>
    %253 = arith.maximumf %251, %252 : vector<16x32xf32>
    %c2_i32_128 = arith.constant 2 : i32
    %254 = tpu.dynamic_rotate %253 by %c2_i32_128 dim 0 : vector<16x32xf32>, i32 -> vector<16x32xf32>
    %c0_129 = arith.constant 0 : index
    %c0_130 = arith.constant 0 : index
    %c0_131 = arith.constant 0 : index
    %255 = vector.load %arg5[%c0_129, %c0_130, %c0_131] : memref<5x16x1xf32, #tpu.memory_space<vmem>>, vector<1x16x1xf32>
    %256 = vector.shape_cast %255 : vector<1x16x1xf32> to vector<16x1xf32>
    %257 = vector.broadcast %256 : vector<16x1xf32> to vector<16x32xf32>
    %258 = arith.mulf %254, %257 : vector<16x32xf32>
    %259 = arith.truncf %258 : vector<16x32xf32> to vector<16x32xbf16>
    %c2_132 = arith.constant 2 : index
    %c0_133 = arith.constant 0 : index
    %c0_134 = arith.constant 0 : index
    %c0_135 = arith.constant 0 : index
    %260 = vector.load %arg4[%c2_132, %c0_133, %c0_134, %c0_135] : memref<3x5x32x32xbf16, #tpu.memory_space<vmem>>, vector<1x1x32x32xbf16>
    %261 = vector.shape_cast %260 : vector<1x1x32x32xbf16> to vector<32x32xbf16>
    %cst_136 = arith.constant dense<0.000000e+00> : vector<16x32xf32>
    %262 = tpu.matmul %259, %261, %cst_136 {dimension_numbers = #tpu.dot_dimension_numbers<[1], [0], [0], [1], [0, 0, 1, 1], [], []>} : vector<16x32xbf16>, vector<32x32xbf16>, vector<16x32xf32> -> vector<16x32xf32>
    %c1_i32_137 = arith.constant 1 : i32
    %263 = tpu.dynamic_rotate %253 by %c1_i32_137 dim 0 : vector<16x32xf32>, i32 -> vector<16x32xf32>
    %c1_138 = arith.constant 1 : index
    %c0_139 = arith.constant 0 : index
    %c0_140 = arith.constant 0 : index
    %264 = vector.load %arg5[%c1_138, %c0_139, %c0_140] : memref<5x16x1xf32, #tpu.memory_space<vmem>>, vector<1x16x1xf32>
    %265 = vector.shape_cast %264 : vector<1x16x1xf32> to vector<16x1xf32>
    %266 = vector.broadcast %265 : vector<16x1xf32> to vector<16x32xf32>
    %267 = arith.mulf %263, %266 : vector<16x32xf32>
    %268 = arith.truncf %267 : vector<16x32xf32> to vector<16x32xbf16>
    %c2_141 = arith.constant 2 : index
    %c1_142 = arith.constant 1 : index
    %c0_143 = arith.constant 0 : index
    %c0_144 = arith.constant 0 : index
    %269 = vector.load %arg4[%c2_141, %c1_142, %c0_143, %c0_144] : memref<3x5x32x32xbf16, #tpu.memory_space<vmem>>, vector<1x1x32x32xbf16>
    %270 = vector.shape_cast %269 : vector<1x1x32x32xbf16> to vector<32x32xbf16>
    %cst_145 = arith.constant dense<0.000000e+00> : vector<16x32xf32>
    %271 = tpu.matmul %268, %270, %cst_145 {dimension_numbers = #tpu.dot_dimension_numbers<[1], [0], [0], [1], [0, 0, 1, 1], [], []>} : vector<16x32xbf16>, vector<32x32xbf16>, vector<16x32xf32> -> vector<16x32xf32>
    %272 = arith.addf %262, %271 : vector<16x32xf32>
    %273 = arith.truncf %253 : vector<16x32xf32> to vector<16x32xbf16>
    %c2_146 = arith.constant 2 : index
    %c2_147 = arith.constant 2 : index
    %c0_148 = arith.constant 0 : index
    %c0_149 = arith.constant 0 : index
    %274 = vector.load %arg4[%c2_146, %c2_147, %c0_148, %c0_149] : memref<3x5x32x32xbf16, #tpu.memory_space<vmem>>, vector<1x1x32x32xbf16>
    %275 = vector.shape_cast %274 : vector<1x1x32x32xbf16> to vector<32x32xbf16>
    %cst_150 = arith.constant dense<0.000000e+00> : vector<16x32xf32>
    %276 = tpu.matmul %273, %275, %cst_150 {dimension_numbers = #tpu.dot_dimension_numbers<[1], [0], [0], [1], [0, 0, 1, 1], [], []>} : vector<16x32xbf16>, vector<32x32xbf16>, vector<16x32xf32> -> vector<16x32xf32>
    %277 = arith.addf %272, %276 : vector<16x32xf32>
    %c15_i32_151 = arith.constant 15 : i32
    %278 = tpu.dynamic_rotate %253 by %c15_i32_151 dim 0 : vector<16x32xf32>, i32 -> vector<16x32xf32>
    %c3_152 = arith.constant 3 : index
    %c0_153 = arith.constant 0 : index
    %c0_154 = arith.constant 0 : index
    %279 = vector.load %arg5[%c3_152, %c0_153, %c0_154] : memref<5x16x1xf32, #tpu.memory_space<vmem>>, vector<1x16x1xf32>
    %280 = vector.shape_cast %279 : vector<1x16x1xf32> to vector<16x1xf32>
    %281 = vector.broadcast %280 : vector<16x1xf32> to vector<16x32xf32>
    %282 = arith.mulf %278, %281 : vector<16x32xf32>
    %283 = arith.truncf %282 : vector<16x32xf32> to vector<16x32xbf16>
    %c2_155 = arith.constant 2 : index
    %c3_156 = arith.constant 3 : index
    %c0_157 = arith.constant 0 : index
    %c0_158 = arith.constant 0 : index
    %284 = vector.load %arg4[%c2_155, %c3_156, %c0_157, %c0_158] : memref<3x5x32x32xbf16, #tpu.memory_space<vmem>>, vector<1x1x32x32xbf16>
    %285 = vector.shape_cast %284 : vector<1x1x32x32xbf16> to vector<32x32xbf16>
    %cst_159 = arith.constant dense<0.000000e+00> : vector<16x32xf32>
    %286 = tpu.matmul %283, %285, %cst_159 {dimension_numbers = #tpu.dot_dimension_numbers<[1], [0], [0], [1], [0, 0, 1, 1], [], []>} : vector<16x32xbf16>, vector<32x32xbf16>, vector<16x32xf32> -> vector<16x32xf32>
    %287 = arith.addf %277, %286 : vector<16x32xf32>
    %c14_i32_160 = arith.constant 14 : i32
    %288 = tpu.dynamic_rotate %253 by %c14_i32_160 dim 0 : vector<16x32xf32>, i32 -> vector<16x32xf32>
    %c4_161 = arith.constant 4 : index
    %c0_162 = arith.constant 0 : index
    %c0_163 = arith.constant 0 : index
    %289 = vector.load %arg5[%c4_161, %c0_162, %c0_163] : memref<5x16x1xf32, #tpu.memory_space<vmem>>, vector<1x16x1xf32>
    %290 = vector.shape_cast %289 : vector<1x16x1xf32> to vector<16x1xf32>
    %291 = vector.broadcast %290 : vector<16x1xf32> to vector<16x32xf32>
    %292 = arith.mulf %288, %291 : vector<16x32xf32>
    %293 = arith.truncf %292 : vector<16x32xf32> to vector<16x32xbf16>
    %c2_164 = arith.constant 2 : index
    %c4_165 = arith.constant 4 : index
    %c0_166 = arith.constant 0 : index
    %c0_167 = arith.constant 0 : index
    %294 = vector.load %arg4[%c2_164, %c4_165, %c0_166, %c0_167] : memref<3x5x32x32xbf16, #tpu.memory_space<vmem>>, vector<1x1x32x32xbf16>
    %295 = vector.shape_cast %294 : vector<1x1x32x32xbf16> to vector<32x32xbf16>
    %cst_168 = arith.constant dense<0.000000e+00> : vector<16x32xf32>
    %296 = tpu.matmul %293, %295, %cst_168 {dimension_numbers = #tpu.dot_dimension_numbers<[1], [0], [0], [1], [0, 0, 1, 1], [], []>} : vector<16x32xbf16>, vector<32x32xbf16>, vector<16x32xf32> -> vector<16x32xf32>
    %297 = arith.addf %287, %296 : vector<16x32xf32>
    %c2_169 = arith.constant 2 : index
    %c0_170 = arith.constant 0 : index
    %c0_171 = arith.constant 0 : index
    %298 = vector.load %arg6[%c2_169, %c0_170, %c0_171] : memref<3x1x32xf32, #tpu.memory_space<vmem>>, vector<1x1x32xf32>
    %299 = vector.shape_cast %298 : vector<1x1x32xf32> to vector<1x32xf32>
    %300 = vector.broadcast %299 : vector<1x32xf32> to vector<16x32xf32>
    %301 = arith.mulf %297, %300 : vector<16x32xf32>
    %c2_172 = arith.constant 2 : index
    %c0_173 = arith.constant 0 : index
    %c0_174 = arith.constant 0 : index
    %302 = vector.load %arg7[%c2_172, %c0_173, %c0_174] : memref<3x1x32xf32, #tpu.memory_space<vmem>>, vector<1x1x32xf32>
    %303 = vector.shape_cast %302 : vector<1x1x32xf32> to vector<1x32xf32>
    %304 = vector.broadcast %303 : vector<1x32xf32> to vector<16x32xf32>
    %305 = arith.addf %301, %304 : vector<16x32xf32>
    %cst_175 = arith.constant 0.000000e+00 : f32
    %306 = vector.broadcast %cst_175 : f32 to vector<16x32xf32>
    %307 = arith.maximumf %305, %306 : vector<16x32xf32>
    %308 = arith.truncf %307 : vector<16x32xf32> to vector<16x32xbf16>
    %c0_176 = arith.constant 0 : index
    %c0_177 = arith.constant 0 : index
    %309 = vector.load %arg8[%c0_176, %c0_177] : memref<32x32xbf16, #tpu.memory_space<vmem>>, vector<32x32xbf16>
    %cst_178 = arith.constant dense<0.000000e+00> : vector<16x32xf32>
    %310 = tpu.matmul %308, %309, %cst_178 {dimension_numbers = #tpu.dot_dimension_numbers<[1], [0], [0], [1], [0, 0, 1, 1], [], []>} : vector<16x32xbf16>, vector<32x32xbf16>, vector<16x32xf32> -> vector<16x32xf32>
    %c0_179 = arith.constant 0 : index
    %c0_180 = arith.constant 0 : index
    %311 = vector.load %arg9[%c0_179, %c0_180] : memref<1x32xf32, #tpu.memory_space<vmem>>, vector<1x32xf32>
    %312 = vector.broadcast %311 : vector<1x32xf32> to vector<16x32xf32>
    %313 = arith.addf %310, %312 : vector<16x32xf32>
    %c0_181 = arith.constant 0 : index
    %c0_182 = arith.constant 0 : index
    %314 = vector.load %arg10[%c0_181, %c0_182] : memref<64x32xf32, #tpu.memory_space<vmem>>, vector<8x32xf32>
    %c0_183 = arith.constant 0 : index
    %c0_184 = arith.constant 0 : index
    %315 = memref.load %arg2[%c0_183, %c0_184] : memref<1x1xf32, #tpu.memory_space<smem>>
    %316 = tpu.concatenate %314, %314 in 0 : vector<8x32xf32>, vector<8x32xf32> -> vector<16x32xf32>
    %317 = vector.broadcast %315 : f32 to vector<16x32xf32>
    %318 = arith.mulf %317, %316 : vector<16x32xf32>
    %319 = arith.addf %313, %318 : vector<16x32xf32>
    %320 = tpu.iota {dimensions = array<i32: 0>} : vector<8x8xi32>
    %321 = tpu.iota {dimensions = array<i32: 1>} : vector<8x8xi32>
    %322 = arith.cmpi eq, %320, %321 : vector<8x8xi32>
    %cst_185 = arith.constant -5.000000e+04 : f32
    %cst_186 = arith.constant 0.000000e+00 : f32
    %323 = vector.broadcast %cst_185 : f32 to vector<8x8xf32>
    %324 = vector.broadcast %cst_186 : f32 to vector<8x8xf32>
    %325 = arith.select %322, %323, %324 : vector<8x8xi1>, vector<8x8xf32>
    %c0_187 = arith.constant 0 : index
    %c0_188 = arith.constant 0 : index
    %326 = vector.load %arg1[%c0_187, %c0_188] : memref<2x8xf32, #tpu.memory_space<vmem>>, vector<2x8xf32>
    %cst_189 = arith.constant 1.000000e+00 : f32
    %327 = vector.broadcast %cst_189 : f32 to vector<2x8xf32>
    %328 = arith.subf %326, %327 : vector<2x8xf32>
    %cst_190 = arith.constant 1.000000e+09 : f32
    %329 = vector.broadcast %cst_190 : f32 to vector<2x8xf32>
    %330 = arith.mulf %328, %329 : vector<2x8xf32>
    %c0_191 = arith.constant 0 : index
    %c0_192 = arith.constant 0 : index
    %331 = vector.load %arg11[%c0_191, %c0_192] : memref<32x32xf32, #tpu.memory_space<vmem>>, vector<32x32xf32>
    %c0_193 = arith.constant 0 : index
    %c0_194 = arith.constant 0 : index
    %c0_195 = arith.constant 0 : index
    %332 = vector.load %arg12[%c0_193, %c0_194, %c0_195] : memref<2x1x32xf32, #tpu.memory_space<vmem>>, vector<1x1x32xf32>
    %333 = vector.shape_cast %332 : vector<1x1x32xf32> to vector<1x32xf32>
    %c0_196 = arith.constant 0 : index
    %c0_197 = arith.constant 0 : index
    %c0_198 = arith.constant 0 : index
    %334 = vector.load %arg13[%c0_196, %c0_197, %c0_198] : memref<2x1x32xf32, #tpu.memory_space<vmem>>, vector<1x1x32xf32>
    %335 = vector.shape_cast %334 : vector<1x1x32xf32> to vector<1x32xf32>
    %cst_199 = arith.constant dense<0.000000e+00> : vector<16xf32>
    %336 = vector.multi_reduction <add>, %319, %cst_199 [1] : vector<16x32xf32> to vector<16xf32>
    %337 = vector.shape_cast %336 : vector<16xf32> to vector<16x1xf32>
    %cst_200 = arith.constant 3.200000e+01 : f32
    %338 = vector.broadcast %cst_200 : f32 to vector<16x1xf32>
    %339 = arith.divf %337, %338 : vector<16x1xf32>
    %340 = vector.broadcast %339 : vector<16x1xf32> to vector<16x32xf32>
    %341 = arith.subf %319, %340 : vector<16x32xf32>
    %342 = arith.mulf %341, %341 : vector<16x32xf32>
    %cst_201 = arith.constant dense<0.000000e+00> : vector<16xf32>
    %343 = vector.multi_reduction <add>, %342, %cst_201 [1] : vector<16x32xf32> to vector<16xf32>
    %344 = vector.shape_cast %343 : vector<16xf32> to vector<16x1xf32>
    %cst_202 = arith.constant 3.200000e+01 : f32
    %345 = vector.broadcast %cst_202 : f32 to vector<16x1xf32>
    %346 = arith.divf %344, %345 : vector<16x1xf32>
    %cst_203 = arith.constant 9.99999974E-6 : f32
    %347 = vector.broadcast %cst_203 : f32 to vector<16x1xf32>
    %348 = arith.addf %346, %347 : vector<16x1xf32>
    %349 = math.rsqrt %348 : vector<16x1xf32>
    %350 = vector.broadcast %349 : vector<16x1xf32> to vector<16x32xf32>
    %351 = arith.mulf %341, %350 : vector<16x32xf32>
    %352 = vector.broadcast %333 : vector<1x32xf32> to vector<16x32xf32>
    %353 = arith.mulf %351, %352 : vector<16x32xf32>
    %354 = vector.broadcast %335 : vector<1x32xf32> to vector<16x32xf32>
    %355 = arith.addf %353, %354 : vector<16x32xf32>
    %356 = arith.truncf %355 : vector<16x32xf32> to vector<16x32xbf16>
    %c0_204 = arith.constant 0 : index
    %c0_205 = arith.constant 0 : index
    %c0_206 = arith.constant 0 : index
    %357 = vector.load %arg14[%c0_204, %c0_205, %c0_206] : memref<2x32x64xbf16, #tpu.memory_space<vmem>>, vector<1x32x64xbf16>
    %358 = vector.shape_cast %357 : vector<1x32x64xbf16> to vector<32x64xbf16>
    %cst_207 = arith.constant dense<0.000000e+00> : vector<16x64xf32>
    %359 = tpu.matmul %356, %358, %cst_207 {dimension_numbers = #tpu.dot_dimension_numbers<[1], [0], [0], [1], [0, 0, 1, 1], [], []>} : vector<16x32xbf16>, vector<32x64xbf16>, vector<16x64xf32> -> vector<16x64xf32>
    %360 = vector.extract_strided_slice %359 {offsets = [0, 0], sizes = [16, 32], strides = [1, 1]} : vector<16x64xf32> to vector<16x32xf32>
    %361 = vector.extract_strided_slice %359 {offsets = [0, 32], sizes = [16, 32], strides = [1, 1]} : vector<16x64xf32> to vector<16x32xf32>
    %362 = arith.mulf %360, %360 : vector<16x32xf32>
    %cst_208 = arith.constant dense<0.000000e+00> : vector<16x32xf32>
    %363 = tpu.matmul %362, %331, %cst_208 {dimension_numbers = #tpu.dot_dimension_numbers<[1], [0], [0], [1], [0, 0, 1, 1], [], []>} : vector<16x32xf32>, vector<32x32xf32>, vector<16x32xf32> -> vector<16x32xf32>
    %cst_209 = arith.constant 9.99999996E-13 : f32
    %364 = vector.broadcast %cst_209 : f32 to vector<16x32xf32>
    %365 = arith.addf %363, %364 : vector<16x32xf32>
    %366 = math.rsqrt %365 : vector<16x32xf32>
    %367 = arith.mulf %360, %366 : vector<16x32xf32>
    %c0_210 = arith.constant 0 : index
    %c0_211 = arith.constant 0 : index
    %c0_212 = arith.constant 0 : index
    %368 = vector.load %arg15[%c0_210, %c0_211, %c0_212] : memref<2x32x32xbf16, #tpu.memory_space<vmem>>, vector<1x32x32xbf16>
    %369 = vector.shape_cast %368 : vector<1x32x32xbf16> to vector<32x32xbf16>
    %370 = vector.extract_strided_slice %330 {offsets = [0, 0], sizes = [1, 8], strides = [1, 1]} : vector<2x8xf32> to vector<1x8xf32>
    %371 = vector.extract_strided_slice %360 {offsets = [0, 0], sizes = [8, 8], strides = [1, 1]} : vector<16x32xf32> to vector<8x8xf32>
    %372 = vector.extract_strided_slice %367 {offsets = [0, 0], sizes = [8, 8], strides = [1, 1]} : vector<16x32xf32> to vector<8x8xf32>
    %373 = vector.extract_strided_slice %361 {offsets = [0, 0], sizes = [8, 8], strides = [1, 1]} : vector<16x32xf32> to vector<8x8xf32>
    "tpu.trace_start"() <{level = 10 : i32, message = "qd,kd->qk"}> : () -> ()
    %cst_213 = arith.constant dense<0.000000e+00> : vector<8x8xf32>
    %374 = tpu.matmul %371, %372, %cst_213 {dimension_numbers = #tpu.dot_dimension_numbers<[1], [1], [0], [0], [0, 0, 1, 0], [], []>} : vector<8x8xf32>, vector<8x8xf32>, vector<8x8xf32> -> vector<8x8xf32>
    "tpu.trace_stop"() : () -> ()
    %cst_214 = arith.constant 0.353553385 : f32
    %375 = vector.broadcast %cst_214 : f32 to vector<8x8xf32>
    %376 = arith.mulf %374, %375 : vector<8x8xf32>
    %377 = arith.addf %376, %325 : vector<8x8xf32>
    %378 = vector.broadcast %370 : vector<1x8xf32> to vector<8x8xf32>
    %379 = arith.addf %377, %378 : vector<8x8xf32>
    %cst_215 = arith.constant dense<0xFF800000> : vector<8xf32>
    %380 = vector.multi_reduction <maximumf>, %379, %cst_215 [1] : vector<8x8xf32> to vector<8xf32>
    %381 = vector.shape_cast %380 : vector<8xf32> to vector<8x1xf32>
    %382 = vector.broadcast %381 : vector<8x1xf32> to vector<8x8xf32>
    %383 = arith.subf %379, %382 : vector<8x8xf32>
    %384 = math.exp %383 : vector<8x8xf32>
    %cst_216 = arith.constant dense<0.000000e+00> : vector<8xf32>
    %385 = vector.multi_reduction <add>, %384, %cst_216 [1] : vector<8x8xf32> to vector<8xf32>
    %386 = vector.shape_cast %385 : vector<8xf32> to vector<8x1xf32>
    %387 = tpu.reciprocal %386 {approx = true} : vector<8x1xf32> -> vector<8x1xf32>
    %388 = vector.broadcast %387 : vector<8x1xf32> to vector<8x8xf32>
    %389 = arith.mulf %384, %388 : vector<8x8xf32>
    %cst_217 = arith.constant dense<0.000000e+00> : vector<8x8xf32>
    %390 = tpu.matmul %389, %373, %cst_217 {dimension_numbers = #tpu.dot_dimension_numbers<[1], [0], [0], [1], [0, 0, 1, 1], [], []>} : vector<8x8xf32>, vector<8x8xf32>, vector<8x8xf32> -> vector<8x8xf32>
    %391 = arith.truncf %390 : vector<8x8xf32> to vector<8x8xbf16>
    %392 = vector.extract_strided_slice %369 {offsets = [0, 0], sizes = [8, 32], strides = [1, 1]} : vector<32x32xbf16> to vector<8x32xbf16>
    %cst_218 = arith.constant dense<0.000000e+00> : vector<8x32xf32>
    %393 = tpu.matmul %391, %392, %cst_218 {dimension_numbers = #tpu.dot_dimension_numbers<[1], [0], [0], [1], [0, 0, 1, 1], [], []>} : vector<8x8xbf16>, vector<8x32xbf16>, vector<8x32xf32> -> vector<8x32xf32>
    %394 = vector.extract_strided_slice %360 {offsets = [0, 8], sizes = [8, 8], strides = [1, 1]} : vector<16x32xf32> to vector<8x8xf32>
    %395 = vector.extract_strided_slice %367 {offsets = [0, 8], sizes = [8, 8], strides = [1, 1]} : vector<16x32xf32> to vector<8x8xf32>
    %396 = vector.extract_strided_slice %361 {offsets = [0, 8], sizes = [8, 8], strides = [1, 1]} : vector<16x32xf32> to vector<8x8xf32>
    "tpu.trace_start"() <{level = 10 : i32, message = "qd,kd->qk"}> : () -> ()
    %cst_219 = arith.constant dense<0.000000e+00> : vector<8x8xf32>
    %397 = tpu.matmul %394, %395, %cst_219 {dimension_numbers = #tpu.dot_dimension_numbers<[1], [1], [0], [0], [0, 0, 1, 0], [], []>} : vector<8x8xf32>, vector<8x8xf32>, vector<8x8xf32> -> vector<8x8xf32>
    "tpu.trace_stop"() : () -> ()
    %cst_220 = arith.constant 0.353553385 : f32
    %398 = vector.broadcast %cst_220 : f32 to vector<8x8xf32>
    %399 = arith.mulf %397, %398 : vector<8x8xf32>
    %400 = arith.addf %399, %325 : vector<8x8xf32>
    %401 = vector.broadcast %370 : vector<1x8xf32> to vector<8x8xf32>
    %402 = arith.addf %400, %401 : vector<8x8xf32>
    %cst_221 = arith.constant dense<0xFF800000> : vector<8xf32>
    %403 = vector.multi_reduction <maximumf>, %402, %cst_221 [1] : vector<8x8xf32> to vector<8xf32>
    %404 = vector.shape_cast %403 : vector<8xf32> to vector<8x1xf32>
    %405 = vector.broadcast %404 : vector<8x1xf32> to vector<8x8xf32>
    %406 = arith.subf %402, %405 : vector<8x8xf32>
    %407 = math.exp %406 : vector<8x8xf32>
    %cst_222 = arith.constant dense<0.000000e+00> : vector<8xf32>
    %408 = vector.multi_reduction <add>, %407, %cst_222 [1] : vector<8x8xf32> to vector<8xf32>
    %409 = vector.shape_cast %408 : vector<8xf32> to vector<8x1xf32>
    %410 = tpu.reciprocal %409 {approx = true} : vector<8x1xf32> -> vector<8x1xf32>
    %411 = vector.broadcast %410 : vector<8x1xf32> to vector<8x8xf32>
    %412 = arith.mulf %407, %411 : vector<8x8xf32>
    %cst_223 = arith.constant dense<0.000000e+00> : vector<8x8xf32>
    %413 = tpu.matmul %412, %396, %cst_223 {dimension_numbers = #tpu.dot_dimension_numbers<[1], [0], [0], [1], [0, 0, 1, 1], [], []>} : vector<8x8xf32>, vector<8x8xf32>, vector<8x8xf32> -> vector<8x8xf32>
    %414 = arith.truncf %413 : vector<8x8xf32> to vector<8x8xbf16>
    %415 = vector.extract_strided_slice %369 {offsets = [8, 0], sizes = [8, 32], strides = [1, 1]} : vector<32x32xbf16> to vector<8x32xbf16>
    %cst_224 = arith.constant dense<0.000000e+00> : vector<8x32xf32>
    %416 = tpu.matmul %414, %415, %cst_224 {dimension_numbers = #tpu.dot_dimension_numbers<[1], [0], [0], [1], [0, 0, 1, 1], [], []>} : vector<8x8xbf16>, vector<8x32xbf16>, vector<8x32xf32> -> vector<8x32xf32>
    %417 = arith.addf %393, %416 : vector<8x32xf32>
    %418 = vector.extract_strided_slice %360 {offsets = [0, 16], sizes = [8, 8], strides = [1, 1]} : vector<16x32xf32> to vector<8x8xf32>
    %419 = vector.extract_strided_slice %367 {offsets = [0, 16], sizes = [8, 8], strides = [1, 1]} : vector<16x32xf32> to vector<8x8xf32>
    %420 = vector.extract_strided_slice %361 {offsets = [0, 16], sizes = [8, 8], strides = [1, 1]} : vector<16x32xf32> to vector<8x8xf32>
    "tpu.trace_start"() <{level = 10 : i32, message = "qd,kd->qk"}> : () -> ()
    %cst_225 = arith.constant dense<0.000000e+00> : vector<8x8xf32>
    %421 = tpu.matmul %418, %419, %cst_225 {dimension_numbers = #tpu.dot_dimension_numbers<[1], [1], [0], [0], [0, 0, 1, 0], [], []>} : vector<8x8xf32>, vector<8x8xf32>, vector<8x8xf32> -> vector<8x8xf32>
    "tpu.trace_stop"() : () -> ()
    %cst_226 = arith.constant 0.353553385 : f32
    %422 = vector.broadcast %cst_226 : f32 to vector<8x8xf32>
    %423 = arith.mulf %421, %422 : vector<8x8xf32>
    %424 = arith.addf %423, %325 : vector<8x8xf32>
    %425 = vector.broadcast %370 : vector<1x8xf32> to vector<8x8xf32>
    %426 = arith.addf %424, %425 : vector<8x8xf32>
    %cst_227 = arith.constant dense<0xFF800000> : vector<8xf32>
    %427 = vector.multi_reduction <maximumf>, %426, %cst_227 [1] : vector<8x8xf32> to vector<8xf32>
    %428 = vector.shape_cast %427 : vector<8xf32> to vector<8x1xf32>
    %429 = vector.broadcast %428 : vector<8x1xf32> to vector<8x8xf32>
    %430 = arith.subf %426, %429 : vector<8x8xf32>
    %431 = math.exp %430 : vector<8x8xf32>
    %cst_228 = arith.constant dense<0.000000e+00> : vector<8xf32>
    %432 = vector.multi_reduction <add>, %431, %cst_228 [1] : vector<8x8xf32> to vector<8xf32>
    %433 = vector.shape_cast %432 : vector<8xf32> to vector<8x1xf32>
    %434 = tpu.reciprocal %433 {approx = true} : vector<8x1xf32> -> vector<8x1xf32>
    %435 = vector.broadcast %434 : vector<8x1xf32> to vector<8x8xf32>
    %436 = arith.mulf %431, %435 : vector<8x8xf32>
    %cst_229 = arith.constant dense<0.000000e+00> : vector<8x8xf32>
    %437 = tpu.matmul %436, %420, %cst_229 {dimension_numbers = #tpu.dot_dimension_numbers<[1], [0], [0], [1], [0, 0, 1, 1], [], []>} : vector<8x8xf32>, vector<8x8xf32>, vector<8x8xf32> -> vector<8x8xf32>
    %438 = arith.truncf %437 : vector<8x8xf32> to vector<8x8xbf16>
    %439 = vector.extract_strided_slice %369 {offsets = [16, 0], sizes = [8, 32], strides = [1, 1]} : vector<32x32xbf16> to vector<8x32xbf16>
    %cst_230 = arith.constant dense<0.000000e+00> : vector<8x32xf32>
    %440 = tpu.matmul %438, %439, %cst_230 {dimension_numbers = #tpu.dot_dimension_numbers<[1], [0], [0], [1], [0, 0, 1, 1], [], []>} : vector<8x8xbf16>, vector<8x32xbf16>, vector<8x32xf32> -> vector<8x32xf32>
    %441 = arith.addf %417, %440 : vector<8x32xf32>
    %442 = vector.extract_strided_slice %360 {offsets = [0, 24], sizes = [8, 8], strides = [1, 1]} : vector<16x32xf32> to vector<8x8xf32>
    %443 = vector.extract_strided_slice %367 {offsets = [0, 24], sizes = [8, 8], strides = [1, 1]} : vector<16x32xf32> to vector<8x8xf32>
    %444 = vector.extract_strided_slice %361 {offsets = [0, 24], sizes = [8, 8], strides = [1, 1]} : vector<16x32xf32> to vector<8x8xf32>
    "tpu.trace_start"() <{level = 10 : i32, message = "qd,kd->qk"}> : () -> ()
    %cst_231 = arith.constant dense<0.000000e+00> : vector<8x8xf32>
    %445 = tpu.matmul %442, %443, %cst_231 {dimension_numbers = #tpu.dot_dimension_numbers<[1], [1], [0], [0], [0, 0, 1, 0], [], []>} : vector<8x8xf32>, vector<8x8xf32>, vector<8x8xf32> -> vector<8x8xf32>
    "tpu.trace_stop"() : () -> ()
    %cst_232 = arith.constant 0.353553385 : f32
    %446 = vector.broadcast %cst_232 : f32 to vector<8x8xf32>
    %447 = arith.mulf %445, %446 : vector<8x8xf32>
    %448 = arith.addf %447, %325 : vector<8x8xf32>
    %449 = vector.broadcast %370 : vector<1x8xf32> to vector<8x8xf32>
    %450 = arith.addf %448, %449 : vector<8x8xf32>
    %cst_233 = arith.constant dense<0xFF800000> : vector<8xf32>
    %451 = vector.multi_reduction <maximumf>, %450, %cst_233 [1] : vector<8x8xf32> to vector<8xf32>
    %452 = vector.shape_cast %451 : vector<8xf32> to vector<8x1xf32>
    %453 = vector.broadcast %452 : vector<8x1xf32> to vector<8x8xf32>
    %454 = arith.subf %450, %453 : vector<8x8xf32>
    %455 = math.exp %454 : vector<8x8xf32>
    %cst_234 = arith.constant dense<0.000000e+00> : vector<8xf32>
    %456 = vector.multi_reduction <add>, %455, %cst_234 [1] : vector<8x8xf32> to vector<8xf32>
    %457 = vector.shape_cast %456 : vector<8xf32> to vector<8x1xf32>
    %458 = tpu.reciprocal %457 {approx = true} : vector<8x1xf32> -> vector<8x1xf32>
    %459 = vector.broadcast %458 : vector<8x1xf32> to vector<8x8xf32>
    %460 = arith.mulf %455, %459 : vector<8x8xf32>
    %cst_235 = arith.constant dense<0.000000e+00> : vector<8x8xf32>
    %461 = tpu.matmul %460, %444, %cst_235 {dimension_numbers = #tpu.dot_dimension_numbers<[1], [0], [0], [1], [0, 0, 1, 1], [], []>} : vector<8x8xf32>, vector<8x8xf32>, vector<8x8xf32> -> vector<8x8xf32>
    %462 = arith.truncf %461 : vector<8x8xf32> to vector<8x8xbf16>
    %463 = vector.extract_strided_slice %369 {offsets = [24, 0], sizes = [8, 32], strides = [1, 1]} : vector<32x32xbf16> to vector<8x32xbf16>
    %cst_236 = arith.constant dense<0.000000e+00> : vector<8x32xf32>
    %464 = tpu.matmul %462, %463, %cst_236 {dimension_numbers = #tpu.dot_dimension_numbers<[1], [0], [0], [1], [0, 0, 1, 1], [], []>} : vector<8x8xbf16>, vector<8x32xbf16>, vector<8x32xf32> -> vector<8x32xf32>
    %465 = arith.addf %441, %464 : vector<8x32xf32>
    %466 = vector.extract_strided_slice %330 {offsets = [1, 0], sizes = [1, 8], strides = [1, 1]} : vector<2x8xf32> to vector<1x8xf32>
    %467 = vector.extract_strided_slice %360 {offsets = [8, 0], sizes = [8, 8], strides = [1, 1]} : vector<16x32xf32> to vector<8x8xf32>
    %468 = vector.extract_strided_slice %367 {offsets = [8, 0], sizes = [8, 8], strides = [1, 1]} : vector<16x32xf32> to vector<8x8xf32>
    %469 = vector.extract_strided_slice %361 {offsets = [8, 0], sizes = [8, 8], strides = [1, 1]} : vector<16x32xf32> to vector<8x8xf32>
    "tpu.trace_start"() <{level = 10 : i32, message = "qd,kd->qk"}> : () -> ()
    %cst_237 = arith.constant dense<0.000000e+00> : vector<8x8xf32>
    %470 = tpu.matmul %467, %468, %cst_237 {dimension_numbers = #tpu.dot_dimension_numbers<[1], [1], [0], [0], [0, 0, 1, 0], [], []>} : vector<8x8xf32>, vector<8x8xf32>, vector<8x8xf32> -> vector<8x8xf32>
    "tpu.trace_stop"() : () -> ()
    %cst_238 = arith.constant 0.353553385 : f32
    %471 = vector.broadcast %cst_238 : f32 to vector<8x8xf32>
    %472 = arith.mulf %470, %471 : vector<8x8xf32>
    %473 = arith.addf %472, %325 : vector<8x8xf32>
    %474 = vector.broadcast %466 : vector<1x8xf32> to vector<8x8xf32>
    %475 = arith.addf %473, %474 : vector<8x8xf32>
    %cst_239 = arith.constant dense<0xFF800000> : vector<8xf32>
    %476 = vector.multi_reduction <maximumf>, %475, %cst_239 [1] : vector<8x8xf32> to vector<8xf32>
    %477 = vector.shape_cast %476 : vector<8xf32> to vector<8x1xf32>
    %478 = vector.broadcast %477 : vector<8x1xf32> to vector<8x8xf32>
    %479 = arith.subf %475, %478 : vector<8x8xf32>
    %480 = math.exp %479 : vector<8x8xf32>
    %cst_240 = arith.constant dense<0.000000e+00> : vector<8xf32>
    %481 = vector.multi_reduction <add>, %480, %cst_240 [1] : vector<8x8xf32> to vector<8xf32>
    %482 = vector.shape_cast %481 : vector<8xf32> to vector<8x1xf32>
    %483 = tpu.reciprocal %482 {approx = true} : vector<8x1xf32> -> vector<8x1xf32>
    %484 = vector.broadcast %483 : vector<8x1xf32> to vector<8x8xf32>
    %485 = arith.mulf %480, %484 : vector<8x8xf32>
    %cst_241 = arith.constant dense<0.000000e+00> : vector<8x8xf32>
    %486 = tpu.matmul %485, %469, %cst_241 {dimension_numbers = #tpu.dot_dimension_numbers<[1], [0], [0], [1], [0, 0, 1, 1], [], []>} : vector<8x8xf32>, vector<8x8xf32>, vector<8x8xf32> -> vector<8x8xf32>
    %487 = arith.truncf %486 : vector<8x8xf32> to vector<8x8xbf16>
    %488 = vector.extract_strided_slice %369 {offsets = [0, 0], sizes = [8, 32], strides = [1, 1]} : vector<32x32xbf16> to vector<8x32xbf16>
    %cst_242 = arith.constant dense<0.000000e+00> : vector<8x32xf32>
    %489 = tpu.matmul %487, %488, %cst_242 {dimension_numbers = #tpu.dot_dimension_numbers<[1], [0], [0], [1], [0, 0, 1, 1], [], []>} : vector<8x8xbf16>, vector<8x32xbf16>, vector<8x32xf32> -> vector<8x32xf32>
    %490 = vector.extract_strided_slice %360 {offsets = [8, 8], sizes = [8, 8], strides = [1, 1]} : vector<16x32xf32> to vector<8x8xf32>
    %491 = vector.extract_strided_slice %367 {offsets = [8, 8], sizes = [8, 8], strides = [1, 1]} : vector<16x32xf32> to vector<8x8xf32>
    %492 = vector.extract_strided_slice %361 {offsets = [8, 8], sizes = [8, 8], strides = [1, 1]} : vector<16x32xf32> to vector<8x8xf32>
    "tpu.trace_start"() <{level = 10 : i32, message = "qd,kd->qk"}> : () -> ()
    %cst_243 = arith.constant dense<0.000000e+00> : vector<8x8xf32>
    %493 = tpu.matmul %490, %491, %cst_243 {dimension_numbers = #tpu.dot_dimension_numbers<[1], [1], [0], [0], [0, 0, 1, 0], [], []>} : vector<8x8xf32>, vector<8x8xf32>, vector<8x8xf32> -> vector<8x8xf32>
    "tpu.trace_stop"() : () -> ()
    %cst_244 = arith.constant 0.353553385 : f32
    %494 = vector.broadcast %cst_244 : f32 to vector<8x8xf32>
    %495 = arith.mulf %493, %494 : vector<8x8xf32>
    %496 = arith.addf %495, %325 : vector<8x8xf32>
    %497 = vector.broadcast %466 : vector<1x8xf32> to vector<8x8xf32>
    %498 = arith.addf %496, %497 : vector<8x8xf32>
    %cst_245 = arith.constant dense<0xFF800000> : vector<8xf32>
    %499 = vector.multi_reduction <maximumf>, %498, %cst_245 [1] : vector<8x8xf32> to vector<8xf32>
    %500 = vector.shape_cast %499 : vector<8xf32> to vector<8x1xf32>
    %501 = vector.broadcast %500 : vector<8x1xf32> to vector<8x8xf32>
    %502 = arith.subf %498, %501 : vector<8x8xf32>
    %503 = math.exp %502 : vector<8x8xf32>
    %cst_246 = arith.constant dense<0.000000e+00> : vector<8xf32>
    %504 = vector.multi_reduction <add>, %503, %cst_246 [1] : vector<8x8xf32> to vector<8xf32>
    %505 = vector.shape_cast %504 : vector<8xf32> to vector<8x1xf32>
    %506 = tpu.reciprocal %505 {approx = true} : vector<8x1xf32> -> vector<8x1xf32>
    %507 = vector.broadcast %506 : vector<8x1xf32> to vector<8x8xf32>
    %508 = arith.mulf %503, %507 : vector<8x8xf32>
    %cst_247 = arith.constant dense<0.000000e+00> : vector<8x8xf32>
    %509 = tpu.matmul %508, %492, %cst_247 {dimension_numbers = #tpu.dot_dimension_numbers<[1], [0], [0], [1], [0, 0, 1, 1], [], []>} : vector<8x8xf32>, vector<8x8xf32>, vector<8x8xf32> -> vector<8x8xf32>
    %510 = arith.truncf %509 : vector<8x8xf32> to vector<8x8xbf16>
    %511 = vector.extract_strided_slice %369 {offsets = [8, 0], sizes = [8, 32], strides = [1, 1]} : vector<32x32xbf16> to vector<8x32xbf16>
    %cst_248 = arith.constant dense<0.000000e+00> : vector<8x32xf32>
    %512 = tpu.matmul %510, %511, %cst_248 {dimension_numbers = #tpu.dot_dimension_numbers<[1], [0], [0], [1], [0, 0, 1, 1], [], []>} : vector<8x8xbf16>, vector<8x32xbf16>, vector<8x32xf32> -> vector<8x32xf32>
    %513 = arith.addf %489, %512 : vector<8x32xf32>
    %514 = vector.extract_strided_slice %360 {offsets = [8, 16], sizes = [8, 8], strides = [1, 1]} : vector<16x32xf32> to vector<8x8xf32>
    %515 = vector.extract_strided_slice %367 {offsets = [8, 16], sizes = [8, 8], strides = [1, 1]} : vector<16x32xf32> to vector<8x8xf32>
    %516 = vector.extract_strided_slice %361 {offsets = [8, 16], sizes = [8, 8], strides = [1, 1]} : vector<16x32xf32> to vector<8x8xf32>
    "tpu.trace_start"() <{level = 10 : i32, message = "qd,kd->qk"}> : () -> ()
    %cst_249 = arith.constant dense<0.000000e+00> : vector<8x8xf32>
    %517 = tpu.matmul %514, %515, %cst_249 {dimension_numbers = #tpu.dot_dimension_numbers<[1], [1], [0], [0], [0, 0, 1, 0], [], []>} : vector<8x8xf32>, vector<8x8xf32>, vector<8x8xf32> -> vector<8x8xf32>
    "tpu.trace_stop"() : () -> ()
    %cst_250 = arith.constant 0.353553385 : f32
    %518 = vector.broadcast %cst_250 : f32 to vector<8x8xf32>
    %519 = arith.mulf %517, %518 : vector<8x8xf32>
    %520 = arith.addf %519, %325 : vector<8x8xf32>
    %521 = vector.broadcast %466 : vector<1x8xf32> to vector<8x8xf32>
    %522 = arith.addf %520, %521 : vector<8x8xf32>
    %cst_251 = arith.constant dense<0xFF800000> : vector<8xf32>
    %523 = vector.multi_reduction <maximumf>, %522, %cst_251 [1] : vector<8x8xf32> to vector<8xf32>
    %524 = vector.shape_cast %523 : vector<8xf32> to vector<8x1xf32>
    %525 = vector.broadcast %524 : vector<8x1xf32> to vector<8x8xf32>
    %526 = arith.subf %522, %525 : vector<8x8xf32>
    %527 = math.exp %526 : vector<8x8xf32>
    %cst_252 = arith.constant dense<0.000000e+00> : vector<8xf32>
    %528 = vector.multi_reduction <add>, %527, %cst_252 [1] : vector<8x8xf32> to vector<8xf32>
    %529 = vector.shape_cast %528 : vector<8xf32> to vector<8x1xf32>
    %530 = tpu.reciprocal %529 {approx = true} : vector<8x1xf32> -> vector<8x1xf32>
    %531 = vector.broadcast %530 : vector<8x1xf32> to vector<8x8xf32>
    %532 = arith.mulf %527, %531 : vector<8x8xf32>
    %cst_253 = arith.constant dense<0.000000e+00> : vector<8x8xf32>
    %533 = tpu.matmul %532, %516, %cst_253 {dimension_numbers = #tpu.dot_dimension_numbers<[1], [0], [0], [1], [0, 0, 1, 1], [], []>} : vector<8x8xf32>, vector<8x8xf32>, vector<8x8xf32> -> vector<8x8xf32>
    %534 = arith.truncf %533 : vector<8x8xf32> to vector<8x8xbf16>
    %535 = vector.extract_strided_slice %369 {offsets = [16, 0], sizes = [8, 32], strides = [1, 1]} : vector<32x32xbf16> to vector<8x32xbf16>
    %cst_254 = arith.constant dense<0.000000e+00> : vector<8x32xf32>
    %536 = tpu.matmul %534, %535, %cst_254 {dimension_numbers = #tpu.dot_dimension_numbers<[1], [0], [0], [1], [0, 0, 1, 1], [], []>} : vector<8x8xbf16>, vector<8x32xbf16>, vector<8x32xf32> -> vector<8x32xf32>
    %537 = arith.addf %513, %536 : vector<8x32xf32>
    %538 = vector.extract_strided_slice %360 {offsets = [8, 24], sizes = [8, 8], strides = [1, 1]} : vector<16x32xf32> to vector<8x8xf32>
    %539 = vector.extract_strided_slice %367 {offsets = [8, 24], sizes = [8, 8], strides = [1, 1]} : vector<16x32xf32> to vector<8x8xf32>
    %540 = vector.extract_strided_slice %361 {offsets = [8, 24], sizes = [8, 8], strides = [1, 1]} : vector<16x32xf32> to vector<8x8xf32>
    "tpu.trace_start"() <{level = 10 : i32, message = "qd,kd->qk"}> : () -> ()
    %cst_255 = arith.constant dense<0.000000e+00> : vector<8x8xf32>
    %541 = tpu.matmul %538, %539, %cst_255 {dimension_numbers = #tpu.dot_dimension_numbers<[1], [1], [0], [0], [0, 0, 1, 0], [], []>} : vector<8x8xf32>, vector<8x8xf32>, vector<8x8xf32> -> vector<8x8xf32>
    "tpu.trace_stop"() : () -> ()
    %cst_256 = arith.constant 0.353553385 : f32
    %542 = vector.broadcast %cst_256 : f32 to vector<8x8xf32>
    %543 = arith.mulf %541, %542 : vector<8x8xf32>
    %544 = arith.addf %543, %325 : vector<8x8xf32>
    %545 = vector.broadcast %466 : vector<1x8xf32> to vector<8x8xf32>
    %546 = arith.addf %544, %545 : vector<8x8xf32>
    %cst_257 = arith.constant dense<0xFF800000> : vector<8xf32>
    %547 = vector.multi_reduction <maximumf>, %546, %cst_257 [1] : vector<8x8xf32> to vector<8xf32>
    %548 = vector.shape_cast %547 : vector<8xf32> to vector<8x1xf32>
    %549 = vector.broadcast %548 : vector<8x1xf32> to vector<8x8xf32>
    %550 = arith.subf %546, %549 : vector<8x8xf32>
    %551 = math.exp %550 : vector<8x8xf32>
    %cst_258 = arith.constant dense<0.000000e+00> : vector<8xf32>
    %552 = vector.multi_reduction <add>, %551, %cst_258 [1] : vector<8x8xf32> to vector<8xf32>
    %553 = vector.shape_cast %552 : vector<8xf32> to vector<8x1xf32>
    %554 = tpu.reciprocal %553 {approx = true} : vector<8x1xf32> -> vector<8x1xf32>
    %555 = vector.broadcast %554 : vector<8x1xf32> to vector<8x8xf32>
    %556 = arith.mulf %551, %555 : vector<8x8xf32>
    %cst_259 = arith.constant dense<0.000000e+00> : vector<8x8xf32>
    %557 = tpu.matmul %556, %540, %cst_259 {dimension_numbers = #tpu.dot_dimension_numbers<[1], [0], [0], [1], [0, 0, 1, 1], [], []>} : vector<8x8xf32>, vector<8x8xf32>, vector<8x8xf32> -> vector<8x8xf32>
    %558 = arith.truncf %557 : vector<8x8xf32> to vector<8x8xbf16>
    %559 = vector.extract_strided_slice %369 {offsets = [24, 0], sizes = [8, 32], strides = [1, 1]} : vector<32x32xbf16> to vector<8x32xbf16>
    %cst_260 = arith.constant dense<0.000000e+00> : vector<8x32xf32>
    %560 = tpu.matmul %558, %559, %cst_260 {dimension_numbers = #tpu.dot_dimension_numbers<[1], [0], [0], [1], [0, 0, 1, 1], [], []>} : vector<8x8xbf16>, vector<8x32xbf16>, vector<8x32xf32> -> vector<8x32xf32>
    %561 = arith.addf %537, %560 : vector<8x32xf32>
    %562 = tpu.concatenate %465, %561 in 0 : vector<8x32xf32>, vector<8x32xf32> -> vector<16x32xf32>
    %c0_261 = arith.constant 0 : index
    %c0_262 = arith.constant 0 : index
    %c0_263 = arith.constant 0 : index
    %563 = vector.load %arg16[%c0_261, %c0_262, %c0_263] : memref<2x1x32xf32, #tpu.memory_space<vmem>>, vector<1x1x32xf32>
    %564 = vector.shape_cast %563 : vector<1x1x32xf32> to vector<1x32xf32>
    %565 = vector.broadcast %564 : vector<1x32xf32> to vector<16x32xf32>
    %566 = arith.addf %562, %565 : vector<16x32xf32>
    %567 = arith.addf %319, %566 : vector<16x32xf32>
    %c0_264 = arith.constant 0 : index
    %c0_265 = arith.constant 0 : index
    %c0_266 = arith.constant 0 : index
    %568 = vector.load %arg17[%c0_264, %c0_265, %c0_266] : memref<2x1x32xf32, #tpu.memory_space<vmem>>, vector<1x1x32xf32>
    %569 = vector.shape_cast %568 : vector<1x1x32xf32> to vector<1x32xf32>
    %c0_267 = arith.constant 0 : index
    %c0_268 = arith.constant 0 : index
    %c0_269 = arith.constant 0 : index
    %570 = vector.load %arg18[%c0_267, %c0_268, %c0_269] : memref<2x1x32xf32, #tpu.memory_space<vmem>>, vector<1x1x32xf32>
    %571 = vector.shape_cast %570 : vector<1x1x32xf32> to vector<1x32xf32>
    %cst_270 = arith.constant dense<0.000000e+00> : vector<16xf32>
    %572 = vector.multi_reduction <add>, %567, %cst_270 [1] : vector<16x32xf32> to vector<16xf32>
    %573 = vector.shape_cast %572 : vector<16xf32> to vector<16x1xf32>
    %cst_271 = arith.constant 3.200000e+01 : f32
    %574 = vector.broadcast %cst_271 : f32 to vector<16x1xf32>
    %575 = arith.divf %573, %574 : vector<16x1xf32>
    %576 = vector.broadcast %575 : vector<16x1xf32> to vector<16x32xf32>
    %577 = arith.subf %567, %576 : vector<16x32xf32>
    %578 = arith.mulf %577, %577 : vector<16x32xf32>
    %cst_272 = arith.constant dense<0.000000e+00> : vector<16xf32>
    %579 = vector.multi_reduction <add>, %578, %cst_272 [1] : vector<16x32xf32> to vector<16xf32>
    %580 = vector.shape_cast %579 : vector<16xf32> to vector<16x1xf32>
    %cst_273 = arith.constant 3.200000e+01 : f32
    %581 = vector.broadcast %cst_273 : f32 to vector<16x1xf32>
    %582 = arith.divf %580, %581 : vector<16x1xf32>
    %cst_274 = arith.constant 9.99999974E-6 : f32
    %583 = vector.broadcast %cst_274 : f32 to vector<16x1xf32>
    %584 = arith.addf %582, %583 : vector<16x1xf32>
    %585 = math.rsqrt %584 : vector<16x1xf32>
    %586 = vector.broadcast %585 : vector<16x1xf32> to vector<16x32xf32>
    %587 = arith.mulf %577, %586 : vector<16x32xf32>
    %588 = vector.broadcast %569 : vector<1x32xf32> to vector<16x32xf32>
    %589 = arith.mulf %587, %588 : vector<16x32xf32>
    %590 = vector.broadcast %571 : vector<1x32xf32> to vector<16x32xf32>
    %591 = arith.addf %589, %590 : vector<16x32xf32>
    %592 = arith.truncf %591 : vector<16x32xf32> to vector<16x32xbf16>
    %c0_275 = arith.constant 0 : index
    %c0_276 = arith.constant 0 : index
    %c0_277 = arith.constant 0 : index
    %593 = vector.load %arg19[%c0_275, %c0_276, %c0_277] : memref<2x32x128xbf16, #tpu.memory_space<vmem>>, vector<1x32x128xbf16>
    %594 = vector.shape_cast %593 : vector<1x32x128xbf16> to vector<32x128xbf16>
    %cst_278 = arith.constant dense<0.000000e+00> : vector<16x128xf32>
    %595 = tpu.matmul %592, %594, %cst_278 {dimension_numbers = #tpu.dot_dimension_numbers<[1], [0], [0], [1], [0, 0, 1, 1], [], []>} : vector<16x32xbf16>, vector<32x128xbf16>, vector<16x128xf32> -> vector<16x128xf32>
    %c0_279 = arith.constant 0 : index
    %c0_280 = arith.constant 0 : index
    %c0_281 = arith.constant 0 : index
    %596 = vector.load %arg20[%c0_279, %c0_280, %c0_281] : memref<2x1x128xf32, #tpu.memory_space<vmem>>, vector<1x1x128xf32>
    %597 = vector.shape_cast %596 : vector<1x1x128xf32> to vector<1x128xf32>
    %598 = vector.broadcast %597 : vector<1x128xf32> to vector<16x128xf32>
    %599 = arith.addf %595, %598 : vector<16x128xf32>
    %600 = arith.mulf %599, %599 : vector<16x128xf32>
    %601 = arith.mulf %599, %600 : vector<16x128xf32>
    %cst_282 = arith.constant 4.471500e-02 : f32
    %602 = vector.broadcast %cst_282 : f32 to vector<16x128xf32>
    %603 = arith.mulf %602, %601 : vector<16x128xf32>
    %604 = arith.addf %599, %603 : vector<16x128xf32>
    %cst_283 = arith.constant 0.797884583 : f32
    %605 = vector.broadcast %cst_283 : f32 to vector<16x128xf32>
    %606 = arith.mulf %605, %604 : vector<16x128xf32>
    %607 = math.tanh %606 : vector<16x128xf32>
    %cst_284 = arith.constant 1.000000e+00 : f32
    %608 = vector.broadcast %cst_284 : f32 to vector<16x128xf32>
    %609 = arith.addf %608, %607 : vector<16x128xf32>
    %cst_285 = arith.constant 5.000000e-01 : f32
    %610 = vector.broadcast %cst_285 : f32 to vector<16x128xf32>
    %611 = arith.mulf %610, %609 : vector<16x128xf32>
    %612 = arith.mulf %599, %611 : vector<16x128xf32>
    %613 = arith.truncf %612 : vector<16x128xf32> to vector<16x128xbf16>
    %c0_286 = arith.constant 0 : index
    %c0_287 = arith.constant 0 : index
    %c0_288 = arith.constant 0 : index
    %614 = vector.load %arg21[%c0_286, %c0_287, %c0_288] : memref<2x128x32xbf16, #tpu.memory_space<vmem>>, vector<1x128x32xbf16>
    %615 = vector.shape_cast %614 : vector<1x128x32xbf16> to vector<128x32xbf16>
    %cst_289 = arith.constant dense<0.000000e+00> : vector<16x32xf32>
    %616 = tpu.matmul %613, %615, %cst_289 {dimension_numbers = #tpu.dot_dimension_numbers<[1], [0], [0], [1], [0, 0, 1, 1], [], []>} : vector<16x128xbf16>, vector<128x32xbf16>, vector<16x32xf32> -> vector<16x32xf32>
    %c0_290 = arith.constant 0 : index
    %c0_291 = arith.constant 0 : index
    %c0_292 = arith.constant 0 : index
    %617 = vector.load %arg22[%c0_290, %c0_291, %c0_292] : memref<2x1x32xf32, #tpu.memory_space<vmem>>, vector<1x1x32xf32>
    %618 = vector.shape_cast %617 : vector<1x1x32xf32> to vector<1x32xf32>
    %619 = vector.broadcast %618 : vector<1x32xf32> to vector<16x32xf32>
    %620 = arith.addf %616, %619 : vector<16x32xf32>
    %621 = arith.addf %319, %620 : vector<16x32xf32>
    %c1_293 = arith.constant 1 : index
    %c0_294 = arith.constant 0 : index
    %c0_295 = arith.constant 0 : index
    %622 = vector.load %arg12[%c1_293, %c0_294, %c0_295] : memref<2x1x32xf32, #tpu.memory_space<vmem>>, vector<1x1x32xf32>
    %623 = vector.shape_cast %622 : vector<1x1x32xf32> to vector<1x32xf32>
    %c1_296 = arith.constant 1 : index
    %c0_297 = arith.constant 0 : index
    %c0_298 = arith.constant 0 : index
    %624 = vector.load %arg13[%c1_296, %c0_297, %c0_298] : memref<2x1x32xf32, #tpu.memory_space<vmem>>, vector<1x1x32xf32>
    %625 = vector.shape_cast %624 : vector<1x1x32xf32> to vector<1x32xf32>
    %cst_299 = arith.constant dense<0.000000e+00> : vector<16xf32>
    %626 = vector.multi_reduction <add>, %621, %cst_299 [1] : vector<16x32xf32> to vector<16xf32>
    %627 = vector.shape_cast %626 : vector<16xf32> to vector<16x1xf32>
    %cst_300 = arith.constant 3.200000e+01 : f32
    %628 = vector.broadcast %cst_300 : f32 to vector<16x1xf32>
    %629 = arith.divf %627, %628 : vector<16x1xf32>
    %630 = vector.broadcast %629 : vector<16x1xf32> to vector<16x32xf32>
    %631 = arith.subf %621, %630 : vector<16x32xf32>
    %632 = arith.mulf %631, %631 : vector<16x32xf32>
    %cst_301 = arith.constant dense<0.000000e+00> : vector<16xf32>
    %633 = vector.multi_reduction <add>, %632, %cst_301 [1] : vector<16x32xf32> to vector<16xf32>
    %634 = vector.shape_cast %633 : vector<16xf32> to vector<16x1xf32>
    %cst_302 = arith.constant 3.200000e+01 : f32
    %635 = vector.broadcast %cst_302 : f32 to vector<16x1xf32>
    %636 = arith.divf %634, %635 : vector<16x1xf32>
    %cst_303 = arith.constant 9.99999974E-6 : f32
    %637 = vector.broadcast %cst_303 : f32 to vector<16x1xf32>
    %638 = arith.addf %636, %637 : vector<16x1xf32>
    %639 = math.rsqrt %638 : vector<16x1xf32>
    %640 = vector.broadcast %639 : vector<16x1xf32> to vector<16x32xf32>
    %641 = arith.mulf %631, %640 : vector<16x32xf32>
    %642 = vector.broadcast %623 : vector<1x32xf32> to vector<16x32xf32>
    %643 = arith.mulf %641, %642 : vector<16x32xf32>
    %644 = vector.broadcast %625 : vector<1x32xf32> to vector<16x32xf32>
    %645 = arith.addf %643, %644 : vector<16x32xf32>
    %646 = arith.truncf %645 : vector<16x32xf32> to vector<16x32xbf16>
    %c1_304 = arith.constant 1 : index
    %c0_305 = arith.constant 0 : index
    %c0_306 = arith.constant 0 : index
    %647 = vector.load %arg14[%c1_304, %c0_305, %c0_306] : memref<2x32x64xbf16, #tpu.memory_space<vmem>>, vector<1x32x64xbf16>
    %648 = vector.shape_cast %647 : vector<1x32x64xbf16> to vector<32x64xbf16>
    %cst_307 = arith.constant dense<0.000000e+00> : vector<16x64xf32>
    %649 = tpu.matmul %646, %648, %cst_307 {dimension_numbers = #tpu.dot_dimension_numbers<[1], [0], [0], [1], [0, 0, 1, 1], [], []>} : vector<16x32xbf16>, vector<32x64xbf16>, vector<16x64xf32> -> vector<16x64xf32>
    %650 = vector.extract_strided_slice %649 {offsets = [0, 0], sizes = [16, 32], strides = [1, 1]} : vector<16x64xf32> to vector<16x32xf32>
    %651 = vector.extract_strided_slice %649 {offsets = [0, 32], sizes = [16, 32], strides = [1, 1]} : vector<16x64xf32> to vector<16x32xf32>
    %652 = arith.mulf %650, %650 : vector<16x32xf32>
    %cst_308 = arith.constant dense<0.000000e+00> : vector<16x32xf32>
    %653 = tpu.matmul %652, %331, %cst_308 {dimension_numbers = #tpu.dot_dimension_numbers<[1], [0], [0], [1], [0, 0, 1, 1], [], []>} : vector<16x32xf32>, vector<32x32xf32>, vector<16x32xf32> -> vector<16x32xf32>
    %cst_309 = arith.constant 9.99999996E-13 : f32
    %654 = vector.broadcast %cst_309 : f32 to vector<16x32xf32>
    %655 = arith.addf %653, %654 : vector<16x32xf32>
    %656 = math.rsqrt %655 : vector<16x32xf32>
    %657 = arith.mulf %650, %656 : vector<16x32xf32>
    %c1_310 = arith.constant 1 : index
    %c0_311 = arith.constant 0 : index
    %c0_312 = arith.constant 0 : index
    %658 = vector.load %arg15[%c1_310, %c0_311, %c0_312] : memref<2x32x32xbf16, #tpu.memory_space<vmem>>, vector<1x32x32xbf16>
    %659 = vector.shape_cast %658 : vector<1x32x32xbf16> to vector<32x32xbf16>
    %660 = vector.extract_strided_slice %330 {offsets = [0, 0], sizes = [1, 8], strides = [1, 1]} : vector<2x8xf32> to vector<1x8xf32>
    %661 = vector.extract_strided_slice %650 {offsets = [0, 0], sizes = [8, 8], strides = [1, 1]} : vector<16x32xf32> to vector<8x8xf32>
    %662 = vector.extract_strided_slice %657 {offsets = [0, 0], sizes = [8, 8], strides = [1, 1]} : vector<16x32xf32> to vector<8x8xf32>
    %663 = vector.extract_strided_slice %651 {offsets = [0, 0], sizes = [8, 8], strides = [1, 1]} : vector<16x32xf32> to vector<8x8xf32>
    "tpu.trace_start"() <{level = 10 : i32, message = "qd,kd->qk"}> : () -> ()
    %cst_313 = arith.constant dense<0.000000e+00> : vector<8x8xf32>
    %664 = tpu.matmul %661, %662, %cst_313 {dimension_numbers = #tpu.dot_dimension_numbers<[1], [1], [0], [0], [0, 0, 1, 0], [], []>} : vector<8x8xf32>, vector<8x8xf32>, vector<8x8xf32> -> vector<8x8xf32>
    "tpu.trace_stop"() : () -> ()
    %cst_314 = arith.constant 0.353553385 : f32
    %665 = vector.broadcast %cst_314 : f32 to vector<8x8xf32>
    %666 = arith.mulf %664, %665 : vector<8x8xf32>
    %667 = arith.addf %666, %325 : vector<8x8xf32>
    %668 = vector.broadcast %660 : vector<1x8xf32> to vector<8x8xf32>
    %669 = arith.addf %667, %668 : vector<8x8xf32>
    %cst_315 = arith.constant dense<0xFF800000> : vector<8xf32>
    %670 = vector.multi_reduction <maximumf>, %669, %cst_315 [1] : vector<8x8xf32> to vector<8xf32>
    %671 = vector.shape_cast %670 : vector<8xf32> to vector<8x1xf32>
    %672 = vector.broadcast %671 : vector<8x1xf32> to vector<8x8xf32>
    %673 = arith.subf %669, %672 : vector<8x8xf32>
    %674 = math.exp %673 : vector<8x8xf32>
    %cst_316 = arith.constant dense<0.000000e+00> : vector<8xf32>
    %675 = vector.multi_reduction <add>, %674, %cst_316 [1] : vector<8x8xf32> to vector<8xf32>
    %676 = vector.shape_cast %675 : vector<8xf32> to vector<8x1xf32>
    %677 = tpu.reciprocal %676 {approx = true} : vector<8x1xf32> -> vector<8x1xf32>
    %678 = vector.broadcast %677 : vector<8x1xf32> to vector<8x8xf32>
    %679 = arith.mulf %674, %678 : vector<8x8xf32>
    %cst_317 = arith.constant dense<0.000000e+00> : vector<8x8xf32>
    %680 = tpu.matmul %679, %663, %cst_317 {dimension_numbers = #tpu.dot_dimension_numbers<[1], [0], [0], [1], [0, 0, 1, 1], [], []>} : vector<8x8xf32>, vector<8x8xf32>, vector<8x8xf32> -> vector<8x8xf32>
    %681 = arith.truncf %680 : vector<8x8xf32> to vector<8x8xbf16>
    %682 = vector.extract_strided_slice %659 {offsets = [0, 0], sizes = [8, 32], strides = [1, 1]} : vector<32x32xbf16> to vector<8x32xbf16>
    %cst_318 = arith.constant dense<0.000000e+00> : vector<8x32xf32>
    %683 = tpu.matmul %681, %682, %cst_318 {dimension_numbers = #tpu.dot_dimension_numbers<[1], [0], [0], [1], [0, 0, 1, 1], [], []>} : vector<8x8xbf16>, vector<8x32xbf16>, vector<8x32xf32> -> vector<8x32xf32>
    %684 = vector.extract_strided_slice %650 {offsets = [0, 8], sizes = [8, 8], strides = [1, 1]} : vector<16x32xf32> to vector<8x8xf32>
    %685 = vector.extract_strided_slice %657 {offsets = [0, 8], sizes = [8, 8], strides = [1, 1]} : vector<16x32xf32> to vector<8x8xf32>
    %686 = vector.extract_strided_slice %651 {offsets = [0, 8], sizes = [8, 8], strides = [1, 1]} : vector<16x32xf32> to vector<8x8xf32>
    "tpu.trace_start"() <{level = 10 : i32, message = "qd,kd->qk"}> : () -> ()
    %cst_319 = arith.constant dense<0.000000e+00> : vector<8x8xf32>
    %687 = tpu.matmul %684, %685, %cst_319 {dimension_numbers = #tpu.dot_dimension_numbers<[1], [1], [0], [0], [0, 0, 1, 0], [], []>} : vector<8x8xf32>, vector<8x8xf32>, vector<8x8xf32> -> vector<8x8xf32>
    "tpu.trace_stop"() : () -> ()
    %cst_320 = arith.constant 0.353553385 : f32
    %688 = vector.broadcast %cst_320 : f32 to vector<8x8xf32>
    %689 = arith.mulf %687, %688 : vector<8x8xf32>
    %690 = arith.addf %689, %325 : vector<8x8xf32>
    %691 = vector.broadcast %660 : vector<1x8xf32> to vector<8x8xf32>
    %692 = arith.addf %690, %691 : vector<8x8xf32>
    %cst_321 = arith.constant dense<0xFF800000> : vector<8xf32>
    %693 = vector.multi_reduction <maximumf>, %692, %cst_321 [1] : vector<8x8xf32> to vector<8xf32>
    %694 = vector.shape_cast %693 : vector<8xf32> to vector<8x1xf32>
    %695 = vector.broadcast %694 : vector<8x1xf32> to vector<8x8xf32>
    %696 = arith.subf %692, %695 : vector<8x8xf32>
    %697 = math.exp %696 : vector<8x8xf32>
    %cst_322 = arith.constant dense<0.000000e+00> : vector<8xf32>
    %698 = vector.multi_reduction <add>, %697, %cst_322 [1] : vector<8x8xf32> to vector<8xf32>
    %699 = vector.shape_cast %698 : vector<8xf32> to vector<8x1xf32>
    %700 = tpu.reciprocal %699 {approx = true} : vector<8x1xf32> -> vector<8x1xf32>
    %701 = vector.broadcast %700 : vector<8x1xf32> to vector<8x8xf32>
    %702 = arith.mulf %697, %701 : vector<8x8xf32>
    %cst_323 = arith.constant dense<0.000000e+00> : vector<8x8xf32>
    %703 = tpu.matmul %702, %686, %cst_323 {dimension_numbers = #tpu.dot_dimension_numbers<[1], [0], [0], [1], [0, 0, 1, 1], [], []>} : vector<8x8xf32>, vector<8x8xf32>, vector<8x8xf32> -> vector<8x8xf32>
    %704 = arith.truncf %703 : vector<8x8xf32> to vector<8x8xbf16>
    %705 = vector.extract_strided_slice %659 {offsets = [8, 0], sizes = [8, 32], strides = [1, 1]} : vector<32x32xbf16> to vector<8x32xbf16>
    %cst_324 = arith.constant dense<0.000000e+00> : vector<8x32xf32>
    %706 = tpu.matmul %704, %705, %cst_324 {dimension_numbers = #tpu.dot_dimension_numbers<[1], [0], [0], [1], [0, 0, 1, 1], [], []>} : vector<8x8xbf16>, vector<8x32xbf16>, vector<8x32xf32> -> vector<8x32xf32>
    %707 = arith.addf %683, %706 : vector<8x32xf32>
    %708 = vector.extract_strided_slice %650 {offsets = [0, 16], sizes = [8, 8], strides = [1, 1]} : vector<16x32xf32> to vector<8x8xf32>
    %709 = vector.extract_strided_slice %657 {offsets = [0, 16], sizes = [8, 8], strides = [1, 1]} : vector<16x32xf32> to vector<8x8xf32>
    %710 = vector.extract_strided_slice %651 {offsets = [0, 16], sizes = [8, 8], strides = [1, 1]} : vector<16x32xf32> to vector<8x8xf32>
    "tpu.trace_start"() <{level = 10 : i32, message = "qd,kd->qk"}> : () -> ()
    %cst_325 = arith.constant dense<0.000000e+00> : vector<8x8xf32>
    %711 = tpu.matmul %708, %709, %cst_325 {dimension_numbers = #tpu.dot_dimension_numbers<[1], [1], [0], [0], [0, 0, 1, 0], [], []>} : vector<8x8xf32>, vector<8x8xf32>, vector<8x8xf32> -> vector<8x8xf32>
    "tpu.trace_stop"() : () -> ()
    %cst_326 = arith.constant 0.353553385 : f32
    %712 = vector.broadcast %cst_326 : f32 to vector<8x8xf32>
    %713 = arith.mulf %711, %712 : vector<8x8xf32>
    %714 = arith.addf %713, %325 : vector<8x8xf32>
    %715 = vector.broadcast %660 : vector<1x8xf32> to vector<8x8xf32>
    %716 = arith.addf %714, %715 : vector<8x8xf32>
    %cst_327 = arith.constant dense<0xFF800000> : vector<8xf32>
    %717 = vector.multi_reduction <maximumf>, %716, %cst_327 [1] : vector<8x8xf32> to vector<8xf32>
    %718 = vector.shape_cast %717 : vector<8xf32> to vector<8x1xf32>
    %719 = vector.broadcast %718 : vector<8x1xf32> to vector<8x8xf32>
    %720 = arith.subf %716, %719 : vector<8x8xf32>
    %721 = math.exp %720 : vector<8x8xf32>
    %cst_328 = arith.constant dense<0.000000e+00> : vector<8xf32>
    %722 = vector.multi_reduction <add>, %721, %cst_328 [1] : vector<8x8xf32> to vector<8xf32>
    %723 = vector.shape_cast %722 : vector<8xf32> to vector<8x1xf32>
    %724 = tpu.reciprocal %723 {approx = true} : vector<8x1xf32> -> vector<8x1xf32>
    %725 = vector.broadcast %724 : vector<8x1xf32> to vector<8x8xf32>
    %726 = arith.mulf %721, %725 : vector<8x8xf32>
    %cst_329 = arith.constant dense<0.000000e+00> : vector<8x8xf32>
    %727 = tpu.matmul %726, %710, %cst_329 {dimension_numbers = #tpu.dot_dimension_numbers<[1], [0], [0], [1], [0, 0, 1, 1], [], []>} : vector<8x8xf32>, vector<8x8xf32>, vector<8x8xf32> -> vector<8x8xf32>
    %728 = arith.truncf %727 : vector<8x8xf32> to vector<8x8xbf16>
    %729 = vector.extract_strided_slice %659 {offsets = [16, 0], sizes = [8, 32], strides = [1, 1]} : vector<32x32xbf16> to vector<8x32xbf16>
    %cst_330 = arith.constant dense<0.000000e+00> : vector<8x32xf32>
    %730 = tpu.matmul %728, %729, %cst_330 {dimension_numbers = #tpu.dot_dimension_numbers<[1], [0], [0], [1], [0, 0, 1, 1], [], []>} : vector<8x8xbf16>, vector<8x32xbf16>, vector<8x32xf32> -> vector<8x32xf32>
    %731 = arith.addf %707, %730 : vector<8x32xf32>
    %732 = vector.extract_strided_slice %650 {offsets = [0, 24], sizes = [8, 8], strides = [1, 1]} : vector<16x32xf32> to vector<8x8xf32>
    %733 = vector.extract_strided_slice %657 {offsets = [0, 24], sizes = [8, 8], strides = [1, 1]} : vector<16x32xf32> to vector<8x8xf32>
    %734 = vector.extract_strided_slice %651 {offsets = [0, 24], sizes = [8, 8], strides = [1, 1]} : vector<16x32xf32> to vector<8x8xf32>
    "tpu.trace_start"() <{level = 10 : i32, message = "qd,kd->qk"}> : () -> ()
    %cst_331 = arith.constant dense<0.000000e+00> : vector<8x8xf32>
    %735 = tpu.matmul %732, %733, %cst_331 {dimension_numbers = #tpu.dot_dimension_numbers<[1], [1], [0], [0], [0, 0, 1, 0], [], []>} : vector<8x8xf32>, vector<8x8xf32>, vector<8x8xf32> -> vector<8x8xf32>
    "tpu.trace_stop"() : () -> ()
    %cst_332 = arith.constant 0.353553385 : f32
    %736 = vector.broadcast %cst_332 : f32 to vector<8x8xf32>
    %737 = arith.mulf %735, %736 : vector<8x8xf32>
    %738 = arith.addf %737, %325 : vector<8x8xf32>
    %739 = vector.broadcast %660 : vector<1x8xf32> to vector<8x8xf32>
    %740 = arith.addf %738, %739 : vector<8x8xf32>
    %cst_333 = arith.constant dense<0xFF800000> : vector<8xf32>
    %741 = vector.multi_reduction <maximumf>, %740, %cst_333 [1] : vector<8x8xf32> to vector<8xf32>
    %742 = vector.shape_cast %741 : vector<8xf32> to vector<8x1xf32>
    %743 = vector.broadcast %742 : vector<8x1xf32> to vector<8x8xf32>
    %744 = arith.subf %740, %743 : vector<8x8xf32>
    %745 = math.exp %744 : vector<8x8xf32>
    %cst_334 = arith.constant dense<0.000000e+00> : vector<8xf32>
    %746 = vector.multi_reduction <add>, %745, %cst_334 [1] : vector<8x8xf32> to vector<8xf32>
    %747 = vector.shape_cast %746 : vector<8xf32> to vector<8x1xf32>
    %748 = tpu.reciprocal %747 {approx = true} : vector<8x1xf32> -> vector<8x1xf32>
    %749 = vector.broadcast %748 : vector<8x1xf32> to vector<8x8xf32>
    %750 = arith.mulf %745, %749 : vector<8x8xf32>
    %cst_335 = arith.constant dense<0.000000e+00> : vector<8x8xf32>
    %751 = tpu.matmul %750, %734, %cst_335 {dimension_numbers = #tpu.dot_dimension_numbers<[1], [0], [0], [1], [0, 0, 1, 1], [], []>} : vector<8x8xf32>, vector<8x8xf32>, vector<8x8xf32> -> vector<8x8xf32>
    %752 = arith.truncf %751 : vector<8x8xf32> to vector<8x8xbf16>
    %753 = vector.extract_strided_slice %659 {offsets = [24, 0], sizes = [8, 32], strides = [1, 1]} : vector<32x32xbf16> to vector<8x32xbf16>
    %cst_336 = arith.constant dense<0.000000e+00> : vector<8x32xf32>
    %754 = tpu.matmul %752, %753, %cst_336 {dimension_numbers = #tpu.dot_dimension_numbers<[1], [0], [0], [1], [0, 0, 1, 1], [], []>} : vector<8x8xbf16>, vector<8x32xbf16>, vector<8x32xf32> -> vector<8x32xf32>
    %755 = arith.addf %731, %754 : vector<8x32xf32>
    %756 = vector.extract_strided_slice %330 {offsets = [1, 0], sizes = [1, 8], strides = [1, 1]} : vector<2x8xf32> to vector<1x8xf32>
    %757 = vector.extract_strided_slice %650 {offsets = [8, 0], sizes = [8, 8], strides = [1, 1]} : vector<16x32xf32> to vector<8x8xf32>
    %758 = vector.extract_strided_slice %657 {offsets = [8, 0], sizes = [8, 8], strides = [1, 1]} : vector<16x32xf32> to vector<8x8xf32>
    %759 = vector.extract_strided_slice %651 {offsets = [8, 0], sizes = [8, 8], strides = [1, 1]} : vector<16x32xf32> to vector<8x8xf32>
    "tpu.trace_start"() <{level = 10 : i32, message = "qd,kd->qk"}> : () -> ()
    %cst_337 = arith.constant dense<0.000000e+00> : vector<8x8xf32>
    %760 = tpu.matmul %757, %758, %cst_337 {dimension_numbers = #tpu.dot_dimension_numbers<[1], [1], [0], [0], [0, 0, 1, 0], [], []>} : vector<8x8xf32>, vector<8x8xf32>, vector<8x8xf32> -> vector<8x8xf32>
    "tpu.trace_stop"() : () -> ()
    %cst_338 = arith.constant 0.353553385 : f32
    %761 = vector.broadcast %cst_338 : f32 to vector<8x8xf32>
    %762 = arith.mulf %760, %761 : vector<8x8xf32>
    %763 = arith.addf %762, %325 : vector<8x8xf32>
    %764 = vector.broadcast %756 : vector<1x8xf32> to vector<8x8xf32>
    %765 = arith.addf %763, %764 : vector<8x8xf32>
    %cst_339 = arith.constant dense<0xFF800000> : vector<8xf32>
    %766 = vector.multi_reduction <maximumf>, %765, %cst_339 [1] : vector<8x8xf32> to vector<8xf32>
    %767 = vector.shape_cast %766 : vector<8xf32> to vector<8x1xf32>
    %768 = vector.broadcast %767 : vector<8x1xf32> to vector<8x8xf32>
    %769 = arith.subf %765, %768 : vector<8x8xf32>
    %770 = math.exp %769 : vector<8x8xf32>
    %cst_340 = arith.constant dense<0.000000e+00> : vector<8xf32>
    %771 = vector.multi_reduction <add>, %770, %cst_340 [1] : vector<8x8xf32> to vector<8xf32>
    %772 = vector.shape_cast %771 : vector<8xf32> to vector<8x1xf32>
    %773 = tpu.reciprocal %772 {approx = true} : vector<8x1xf32> -> vector<8x1xf32>
    %774 = vector.broadcast %773 : vector<8x1xf32> to vector<8x8xf32>
    %775 = arith.mulf %770, %774 : vector<8x8xf32>
    %cst_341 = arith.constant dense<0.000000e+00> : vector<8x8xf32>
    %776 = tpu.matmul %775, %759, %cst_341 {dimension_numbers = #tpu.dot_dimension_numbers<[1], [0], [0], [1], [0, 0, 1, 1], [], []>} : vector<8x8xf32>, vector<8x8xf32>, vector<8x8xf32> -> vector<8x8xf32>
    %777 = arith.truncf %776 : vector<8x8xf32> to vector<8x8xbf16>
    %778 = vector.extract_strided_slice %659 {offsets = [0, 0], sizes = [8, 32], strides = [1, 1]} : vector<32x32xbf16> to vector<8x32xbf16>
    %cst_342 = arith.constant dense<0.000000e+00> : vector<8x32xf32>
    %779 = tpu.matmul %777, %778, %cst_342 {dimension_numbers = #tpu.dot_dimension_numbers<[1], [0], [0], [1], [0, 0, 1, 1], [], []>} : vector<8x8xbf16>, vector<8x32xbf16>, vector<8x32xf32> -> vector<8x32xf32>
    %780 = vector.extract_strided_slice %650 {offsets = [8, 8], sizes = [8, 8], strides = [1, 1]} : vector<16x32xf32> to vector<8x8xf32>
    %781 = vector.extract_strided_slice %657 {offsets = [8, 8], sizes = [8, 8], strides = [1, 1]} : vector<16x32xf32> to vector<8x8xf32>
    %782 = vector.extract_strided_slice %651 {offsets = [8, 8], sizes = [8, 8], strides = [1, 1]} : vector<16x32xf32> to vector<8x8xf32>
    "tpu.trace_start"() <{level = 10 : i32, message = "qd,kd->qk"}> : () -> ()
    %cst_343 = arith.constant dense<0.000000e+00> : vector<8x8xf32>
    %783 = tpu.matmul %780, %781, %cst_343 {dimension_numbers = #tpu.dot_dimension_numbers<[1], [1], [0], [0], [0, 0, 1, 0], [], []>} : vector<8x8xf32>, vector<8x8xf32>, vector<8x8xf32> -> vector<8x8xf32>
    "tpu.trace_stop"() : () -> ()
    %cst_344 = arith.constant 0.353553385 : f32
    %784 = vector.broadcast %cst_344 : f32 to vector<8x8xf32>
    %785 = arith.mulf %783, %784 : vector<8x8xf32>
    %786 = arith.addf %785, %325 : vector<8x8xf32>
    %787 = vector.broadcast %756 : vector<1x8xf32> to vector<8x8xf32>
    %788 = arith.addf %786, %787 : vector<8x8xf32>
    %cst_345 = arith.constant dense<0xFF800000> : vector<8xf32>
    %789 = vector.multi_reduction <maximumf>, %788, %cst_345 [1] : vector<8x8xf32> to vector<8xf32>
    %790 = vector.shape_cast %789 : vector<8xf32> to vector<8x1xf32>
    %791 = vector.broadcast %790 : vector<8x1xf32> to vector<8x8xf32>
    %792 = arith.subf %788, %791 : vector<8x8xf32>
    %793 = math.exp %792 : vector<8x8xf32>
    %cst_346 = arith.constant dense<0.000000e+00> : vector<8xf32>
    %794 = vector.multi_reduction <add>, %793, %cst_346 [1] : vector<8x8xf32> to vector<8xf32>
    %795 = vector.shape_cast %794 : vector<8xf32> to vector<8x1xf32>
    %796 = tpu.reciprocal %795 {approx = true} : vector<8x1xf32> -> vector<8x1xf32>
    %797 = vector.broadcast %796 : vector<8x1xf32> to vector<8x8xf32>
    %798 = arith.mulf %793, %797 : vector<8x8xf32>
    %cst_347 = arith.constant dense<0.000000e+00> : vector<8x8xf32>
    %799 = tpu.matmul %798, %782, %cst_347 {dimension_numbers = #tpu.dot_dimension_numbers<[1], [0], [0], [1], [0, 0, 1, 1], [], []>} : vector<8x8xf32>, vector<8x8xf32>, vector<8x8xf32> -> vector<8x8xf32>
    %800 = arith.truncf %799 : vector<8x8xf32> to vector<8x8xbf16>
    %801 = vector.extract_strided_slice %659 {offsets = [8, 0], sizes = [8, 32], strides = [1, 1]} : vector<32x32xbf16> to vector<8x32xbf16>
    %cst_348 = arith.constant dense<0.000000e+00> : vector<8x32xf32>
    %802 = tpu.matmul %800, %801, %cst_348 {dimension_numbers = #tpu.dot_dimension_numbers<[1], [0], [0], [1], [0, 0, 1, 1], [], []>} : vector<8x8xbf16>, vector<8x32xbf16>, vector<8x32xf32> -> vector<8x32xf32>
    %803 = arith.addf %779, %802 : vector<8x32xf32>
    %804 = vector.extract_strided_slice %650 {offsets = [8, 16], sizes = [8, 8], strides = [1, 1]} : vector<16x32xf32> to vector<8x8xf32>
    %805 = vector.extract_strided_slice %657 {offsets = [8, 16], sizes = [8, 8], strides = [1, 1]} : vector<16x32xf32> to vector<8x8xf32>
    %806 = vector.extract_strided_slice %651 {offsets = [8, 16], sizes = [8, 8], strides = [1, 1]} : vector<16x32xf32> to vector<8x8xf32>
    "tpu.trace_start"() <{level = 10 : i32, message = "qd,kd->qk"}> : () -> ()
    %cst_349 = arith.constant dense<0.000000e+00> : vector<8x8xf32>
    %807 = tpu.matmul %804, %805, %cst_349 {dimension_numbers = #tpu.dot_dimension_numbers<[1], [1], [0], [0], [0, 0, 1, 0], [], []>} : vector<8x8xf32>, vector<8x8xf32>, vector<8x8xf32> -> vector<8x8xf32>
    "tpu.trace_stop"() : () -> ()
    %cst_350 = arith.constant 0.353553385 : f32
    %808 = vector.broadcast %cst_350 : f32 to vector<8x8xf32>
    %809 = arith.mulf %807, %808 : vector<8x8xf32>
    %810 = arith.addf %809, %325 : vector<8x8xf32>
    %811 = vector.broadcast %756 : vector<1x8xf32> to vector<8x8xf32>
    %812 = arith.addf %810, %811 : vector<8x8xf32>
    %cst_351 = arith.constant dense<0xFF800000> : vector<8xf32>
    %813 = vector.multi_reduction <maximumf>, %812, %cst_351 [1] : vector<8x8xf32> to vector<8xf32>
    %814 = vector.shape_cast %813 : vector<8xf32> to vector<8x1xf32>
    %815 = vector.broadcast %814 : vector<8x1xf32> to vector<8x8xf32>
    %816 = arith.subf %812, %815 : vector<8x8xf32>
    %817 = math.exp %816 : vector<8x8xf32>
    %cst_352 = arith.constant dense<0.000000e+00> : vector<8xf32>
    %818 = vector.multi_reduction <add>, %817, %cst_352 [1] : vector<8x8xf32> to vector<8xf32>
    %819 = vector.shape_cast %818 : vector<8xf32> to vector<8x1xf32>
    %820 = tpu.reciprocal %819 {approx = true} : vector<8x1xf32> -> vector<8x1xf32>
    %821 = vector.broadcast %820 : vector<8x1xf32> to vector<8x8xf32>
    %822 = arith.mulf %817, %821 : vector<8x8xf32>
    %cst_353 = arith.constant dense<0.000000e+00> : vector<8x8xf32>
    %823 = tpu.matmul %822, %806, %cst_353 {dimension_numbers = #tpu.dot_dimension_numbers<[1], [0], [0], [1], [0, 0, 1, 1], [], []>} : vector<8x8xf32>, vector<8x8xf32>, vector<8x8xf32> -> vector<8x8xf32>
    %824 = arith.truncf %823 : vector<8x8xf32> to vector<8x8xbf16>
    %825 = vector.extract_strided_slice %659 {offsets = [16, 0], sizes = [8, 32], strides = [1, 1]} : vector<32x32xbf16> to vector<8x32xbf16>
    %cst_354 = arith.constant dense<0.000000e+00> : vector<8x32xf32>
    %826 = tpu.matmul %824, %825, %cst_354 {dimension_numbers = #tpu.dot_dimension_numbers<[1], [0], [0], [1], [0, 0, 1, 1], [], []>} : vector<8x8xbf16>, vector<8x32xbf16>, vector<8x32xf32> -> vector<8x32xf32>
    %827 = arith.addf %803, %826 : vector<8x32xf32>
    %828 = vector.extract_strided_slice %650 {offsets = [8, 24], sizes = [8, 8], strides = [1, 1]} : vector<16x32xf32> to vector<8x8xf32>
    %829 = vector.extract_strided_slice %657 {offsets = [8, 24], sizes = [8, 8], strides = [1, 1]} : vector<16x32xf32> to vector<8x8xf32>
    %830 = vector.extract_strided_slice %651 {offsets = [8, 24], sizes = [8, 8], strides = [1, 1]} : vector<16x32xf32> to vector<8x8xf32>
    "tpu.trace_start"() <{level = 10 : i32, message = "qd,kd->qk"}> : () -> ()
    %cst_355 = arith.constant dense<0.000000e+00> : vector<8x8xf32>
    %831 = tpu.matmul %828, %829, %cst_355 {dimension_numbers = #tpu.dot_dimension_numbers<[1], [1], [0], [0], [0, 0, 1, 0], [], []>} : vector<8x8xf32>, vector<8x8xf32>, vector<8x8xf32> -> vector<8x8xf32>
    "tpu.trace_stop"() : () -> ()
    %cst_356 = arith.constant 0.353553385 : f32
    %832 = vector.broadcast %cst_356 : f32 to vector<8x8xf32>
    %833 = arith.mulf %831, %832 : vector<8x8xf32>
    %834 = arith.addf %833, %325 : vector<8x8xf32>
    %835 = vector.broadcast %756 : vector<1x8xf32> to vector<8x8xf32>
    %836 = arith.addf %834, %835 : vector<8x8xf32>
    %cst_357 = arith.constant dense<0xFF800000> : vector<8xf32>
    %837 = vector.multi_reduction <maximumf>, %836, %cst_357 [1] : vector<8x8xf32> to vector<8xf32>
    %838 = vector.shape_cast %837 : vector<8xf32> to vector<8x1xf32>
    %839 = vector.broadcast %838 : vector<8x1xf32> to vector<8x8xf32>
    %840 = arith.subf %836, %839 : vector<8x8xf32>
    %841 = math.exp %840 : vector<8x8xf32>
    %cst_358 = arith.constant dense<0.000000e+00> : vector<8xf32>
    %842 = vector.multi_reduction <add>, %841, %cst_358 [1] : vector<8x8xf32> to vector<8xf32>
    %843 = vector.shape_cast %842 : vector<8xf32> to vector<8x1xf32>
    %844 = tpu.reciprocal %843 {approx = true} : vector<8x1xf32> -> vector<8x1xf32>
    %845 = vector.broadcast %844 : vector<8x1xf32> to vector<8x8xf32>
    %846 = arith.mulf %841, %845 : vector<8x8xf32>
    %cst_359 = arith.constant dense<0.000000e+00> : vector<8x8xf32>
    %847 = tpu.matmul %846, %830, %cst_359 {dimension_numbers = #tpu.dot_dimension_numbers<[1], [0], [0], [1], [0, 0, 1, 1], [], []>} : vector<8x8xf32>, vector<8x8xf32>, vector<8x8xf32> -> vector<8x8xf32>
    %848 = arith.truncf %847 : vector<8x8xf32> to vector<8x8xbf16>
    %849 = vector.extract_strided_slice %659 {offsets = [24, 0], sizes = [8, 32], strides = [1, 1]} : vector<32x32xbf16> to vector<8x32xbf16>
    %cst_360 = arith.constant dense<0.000000e+00> : vector<8x32xf32>
    %850 = tpu.matmul %848, %849, %cst_360 {dimension_numbers = #tpu.dot_dimension_numbers<[1], [0], [0], [1], [0, 0, 1, 1], [], []>} : vector<8x8xbf16>, vector<8x32xbf16>, vector<8x32xf32> -> vector<8x32xf32>
    %851 = arith.addf %827, %850 : vector<8x32xf32>
    %852 = tpu.concatenate %755, %851 in 0 : vector<8x32xf32>, vector<8x32xf32> -> vector<16x32xf32>
    %c1_361 = arith.constant 1 : index
    %c0_362 = arith.constant 0 : index
    %c0_363 = arith.constant 0 : index
    %853 = vector.load %arg16[%c1_361, %c0_362, %c0_363] : memref<2x1x32xf32, #tpu.memory_space<vmem>>, vector<1x1x32xf32>
    %854 = vector.shape_cast %853 : vector<1x1x32xf32> to vector<1x32xf32>
    %855 = vector.broadcast %854 : vector<1x32xf32> to vector<16x32xf32>
    %856 = arith.addf %852, %855 : vector<16x32xf32>
    %857 = arith.addf %567, %856 : vector<16x32xf32>
    %c1_364 = arith.constant 1 : index
    %c0_365 = arith.constant 0 : index
    %c0_366 = arith.constant 0 : index
    %858 = vector.load %arg17[%c1_364, %c0_365, %c0_366] : memref<2x1x32xf32, #tpu.memory_space<vmem>>, vector<1x1x32xf32>
    %859 = vector.shape_cast %858 : vector<1x1x32xf32> to vector<1x32xf32>
    %c1_367 = arith.constant 1 : index
    %c0_368 = arith.constant 0 : index
    %c0_369 = arith.constant 0 : index
    %860 = vector.load %arg18[%c1_367, %c0_368, %c0_369] : memref<2x1x32xf32, #tpu.memory_space<vmem>>, vector<1x1x32xf32>
    %861 = vector.shape_cast %860 : vector<1x1x32xf32> to vector<1x32xf32>
    %cst_370 = arith.constant dense<0.000000e+00> : vector<16xf32>
    %862 = vector.multi_reduction <add>, %857, %cst_370 [1] : vector<16x32xf32> to vector<16xf32>
    %863 = vector.shape_cast %862 : vector<16xf32> to vector<16x1xf32>
    %cst_371 = arith.constant 3.200000e+01 : f32
    %864 = vector.broadcast %cst_371 : f32 to vector<16x1xf32>
    %865 = arith.divf %863, %864 : vector<16x1xf32>
    %866 = vector.broadcast %865 : vector<16x1xf32> to vector<16x32xf32>
    %867 = arith.subf %857, %866 : vector<16x32xf32>
    %868 = arith.mulf %867, %867 : vector<16x32xf32>
    %cst_372 = arith.constant dense<0.000000e+00> : vector<16xf32>
    %869 = vector.multi_reduction <add>, %868, %cst_372 [1] : vector<16x32xf32> to vector<16xf32>
    %870 = vector.shape_cast %869 : vector<16xf32> to vector<16x1xf32>
    %cst_373 = arith.constant 3.200000e+01 : f32
    %871 = vector.broadcast %cst_373 : f32 to vector<16x1xf32>
    %872 = arith.divf %870, %871 : vector<16x1xf32>
    %cst_374 = arith.constant 9.99999974E-6 : f32
    %873 = vector.broadcast %cst_374 : f32 to vector<16x1xf32>
    %874 = arith.addf %872, %873 : vector<16x1xf32>
    %875 = math.rsqrt %874 : vector<16x1xf32>
    %876 = vector.broadcast %875 : vector<16x1xf32> to vector<16x32xf32>
    %877 = arith.mulf %867, %876 : vector<16x32xf32>
    %878 = vector.broadcast %859 : vector<1x32xf32> to vector<16x32xf32>
    %879 = arith.mulf %877, %878 : vector<16x32xf32>
    %880 = vector.broadcast %861 : vector<1x32xf32> to vector<16x32xf32>
    %881 = arith.addf %879, %880 : vector<16x32xf32>
    %882 = arith.truncf %881 : vector<16x32xf32> to vector<16x32xbf16>
    %c1_375 = arith.constant 1 : index
    %c0_376 = arith.constant 0 : index
    %c0_377 = arith.constant 0 : index
    %883 = vector.load %arg19[%c1_375, %c0_376, %c0_377] : memref<2x32x128xbf16, #tpu.memory_space<vmem>>, vector<1x32x128xbf16>
    %884 = vector.shape_cast %883 : vector<1x32x128xbf16> to vector<32x128xbf16>
    %cst_378 = arith.constant dense<0.000000e+00> : vector<16x128xf32>
    %885 = tpu.matmul %882, %884, %cst_378 {dimension_numbers = #tpu.dot_dimension_numbers<[1], [0], [0], [1], [0, 0, 1, 1], [], []>} : vector<16x32xbf16>, vector<32x128xbf16>, vector<16x128xf32> -> vector<16x128xf32>
    %c1_379 = arith.constant 1 : index
    %c0_380 = arith.constant 0 : index
    %c0_381 = arith.constant 0 : index
    %886 = vector.load %arg20[%c1_379, %c0_380, %c0_381] : memref<2x1x128xf32, #tpu.memory_space<vmem>>, vector<1x1x128xf32>
    %887 = vector.shape_cast %886 : vector<1x1x128xf32> to vector<1x128xf32>
    %888 = vector.broadcast %887 : vector<1x128xf32> to vector<16x128xf32>
    %889 = arith.addf %885, %888 : vector<16x128xf32>
    %890 = arith.mulf %889, %889 : vector<16x128xf32>
    %891 = arith.mulf %889, %890 : vector<16x128xf32>
    %cst_382 = arith.constant 4.471500e-02 : f32
    %892 = vector.broadcast %cst_382 : f32 to vector<16x128xf32>
    %893 = arith.mulf %892, %891 : vector<16x128xf32>
    %894 = arith.addf %889, %893 : vector<16x128xf32>
    %cst_383 = arith.constant 0.797884583 : f32
    %895 = vector.broadcast %cst_383 : f32 to vector<16x128xf32>
    %896 = arith.mulf %895, %894 : vector<16x128xf32>
    %897 = math.tanh %896 : vector<16x128xf32>
    %cst_384 = arith.constant 1.000000e+00 : f32
    %898 = vector.broadcast %cst_384 : f32 to vector<16x128xf32>
    %899 = arith.addf %898, %897 : vector<16x128xf32>
    %cst_385 = arith.constant 5.000000e-01 : f32
    %900 = vector.broadcast %cst_385 : f32 to vector<16x128xf32>
    %901 = arith.mulf %900, %899 : vector<16x128xf32>
    %902 = arith.mulf %889, %901 : vector<16x128xf32>
    %903 = arith.truncf %902 : vector<16x128xf32> to vector<16x128xbf16>
    %c1_386 = arith.constant 1 : index
    %c0_387 = arith.constant 0 : index
    %c0_388 = arith.constant 0 : index
    %904 = vector.load %arg21[%c1_386, %c0_387, %c0_388] : memref<2x128x32xbf16, #tpu.memory_space<vmem>>, vector<1x128x32xbf16>
    %905 = vector.shape_cast %904 : vector<1x128x32xbf16> to vector<128x32xbf16>
    %cst_389 = arith.constant dense<0.000000e+00> : vector<16x32xf32>
    %906 = tpu.matmul %903, %905, %cst_389 {dimension_numbers = #tpu.dot_dimension_numbers<[1], [0], [0], [1], [0, 0, 1, 1], [], []>} : vector<16x128xbf16>, vector<128x32xbf16>, vector<16x32xf32> -> vector<16x32xf32>
    %c1_390 = arith.constant 1 : index
    %c0_391 = arith.constant 0 : index
    %c0_392 = arith.constant 0 : index
    %907 = vector.load %arg22[%c1_390, %c0_391, %c0_392] : memref<2x1x32xf32, #tpu.memory_space<vmem>>, vector<1x1x32xf32>
    %908 = vector.shape_cast %907 : vector<1x1x32xf32> to vector<1x32xf32>
    %909 = vector.broadcast %908 : vector<1x32xf32> to vector<16x32xf32>
    %910 = arith.addf %906, %909 : vector<16x32xf32>
    %911 = arith.addf %621, %910 : vector<16x32xf32>
    %912 = arith.addf %857, %911 : vector<16x32xf32>
    %cst_393 = arith.constant 5.000000e-01 : f32
    %913 = vector.broadcast %cst_393 : f32 to vector<16x32xf32>
    %914 = arith.mulf %913, %912 : vector<16x32xf32>
    %c0_394 = arith.constant 0 : index
    %c0_395 = arith.constant 0 : index
    %915 = vector.load %arg23[%c0_394, %c0_395] : memref<16x32xf32, #tpu.memory_space<vmem>>, vector<16x32xf32>
    tpu.vector_store %arg23[%c0_394, %c0_395], %914 {strides = array<i32>} : memref<16x32xf32, #tpu.memory_space<vmem>>, vector<16x32xf32>,
    return
  }
}

</mosaic_0001>

<llo_original>
// kernel: encoder_forward.1
$region0: #{encoder_forward.1}
  #allocation0 [shape = 'u32[]', space=smem, size = 0x4, offset = 0x4, fixed_abs, tag = 'smem constant byte address 0x4 - core index']
  #allocation1 [shape = 'u32[144,128]{1,0:T(1,128)}', space=vmem, size = 0x12000, scoped, tag = 'internal scratch']
  #allocation2 [shape = 'f32[1,1]{1,0:T(1,128)S(6)}', space=smem, size = 0x200, scoped, tag = 'scoped memory for encoder_forward.1']
  %s0 = inlined_call_operand.vmem [shape: s32[16], index: 0, kind: input, shape index: {}]
  %s1 = inlined_call_operand.vmem [shape: f32[2,8], index: 1, kind: input, shape index: {}]
  %s2 = inlined_call_operand.<no memory space> [shape: f32[1,1], index: 2, kind: input, shape index: {}]
  %s3 = inlined_call_operand.hbm [shape: f32[11,1,32], index: 3, kind: input, shape index: {}]
  %s4 = inlined_call_operand.vmem [shape: bf16[3,5,32,32], index: 4, kind: input, shape index: {}]
  %s5 = inlined_call_operand.hbm [shape: f32[5,16,1], index: 5, kind: input, shape index: {}]
  %s6 = inlined_call_operand.hbm [shape: f32[3,1,32], index: 6, kind: input, shape index: {}]
  %s7 = inlined_call_operand.hbm [shape: f32[3,1,32], index: 7, kind: input, shape index: {}]
  %s8 = inlined_call_operand.hbm [shape: bf16[32,32], index: 8, kind: input, shape index: {}]
  %s9 = inlined_call_operand.vmem [shape: f32[1,32], index: 9, kind: input, shape index: {}]
  %s10 = inlined_call_operand.vmem [shape: f32[64,32], index: 10, kind: input, shape index: {}]
  %s11 = inlined_call_operand.hbm [shape: f32[32,32], index: 11, kind: input, shape index: {}]
  %s12 = inlined_call_operand.hbm [shape: f32[2,1,32], index: 12, kind: input, shape index: {}]
  %s13 = inlined_call_operand.hbm [shape: f32[2,1,32], index: 13, kind: input, shape index: {}]
  %s14 = inlined_call_operand.vmem [shape: bf16[2,32,64], index: 14, kind: input, shape index: {}]
  %s15 = inlined_call_operand.hbm [shape: bf16[2,32,32], index: 15, kind: input, shape index: {}]
  %s16 = inlined_call_operand.hbm [shape: f32[2,1,32], index: 16, kind: input, shape index: {}]
  %s17 = inlined_call_operand.vmem [shape: f32[2,1,32], index: 17, kind: input, shape index: {}]
  %s18 = inlined_call_operand.hbm [shape: f32[2,1,32], index: 18, kind: input, shape index: {}]
  %s19 = inlined_call_operand.hbm [shape: bf16[2,32,128], index: 19, kind: input, shape index: {}]
  %s20 = inlined_call_operand.hbm [shape: f32[2,1,128], index: 20, kind: input, shape index: {}]
  %s21 = inlined_call_operand.vmem [shape: bf16[2,128,32], index: 21, kind: input, shape index: {}]
  %s22 = inlined_call_operand.hbm [shape: f32[2,1,32], index: 22, kind: input, shape index: {}]
  %s23 = inlined_call_operand.hbm [shape: f32[16,32], index: 23, kind: output, shape index: {}]
  %s24 = sld [smem:[#allocation0]]
  $region162: #{encoder_forward.1} parent=0
    _
  %s26 = ssub.s32 1, %s24
  %s27 = scalar_select 0, %s26, %s24
  %28 = sst [smem:[#allocation2]] %s2
  $region1: #{encoder_forward.1} parent=0
    #allocation3 [shape = 'u8[512]{0}', space=smem, size = 0x200, scoped, tag = 'input window, operand 0, single buffered']
    #allocation4 [shape = 's32[1]{0}', space=sflag, size = 0x4, scoped, tag = 'scoped memory for encoder_forward.1']
    #allocation5 [shape = 's32[1]{0}', space=sflag, size = 0x4, scoped, tag = 'scoped memory for encoder_forward.1']
    #allocation6 [shape = 's32[1]{0}', space=sflag, size = 0x4, scoped, tag = 'scoped memory for encoder_forward.1']
    #allocation7 [shape = 'u8[5632]{0}', space=vmem, size = 0x1800, scoped, tag = 'input window, operand 3, single buffered']
    #allocation8 [shape = 'u8[40960]{0}', space=vmem, size = 0xa000, scoped, tag = 'input window, operand 5, single buffered']
    #allocation9 [shape = 's32[1]{0}', space=sflag, size = 0x4, scoped, tag = 'scoped memory for encoder_forward.1']
    #allocation10 [shape = 'u8[1536]{0}', space=vmem, size = 0x800, scoped, tag = 'input window, operand 6, single buffered']
    #allocation11 [shape = 'u8[1536]{0}', space=vmem, size = 0x800, scoped, tag = 'input window, operand 7, single buffered']
    #allocation12 [shape = 's32[1]{0}', space=sflag, size = 0x4, scoped, tag = 'scoped memory for encoder_forward.1']
    #allocation13 [shape = 'u8[8192]{0}', space=vmem, size = 0x2000, scoped, tag = 'input window, operand 8, single buffered']
    #allocation14 [shape = 'u8[16384]{0}', space=vmem, size = 0x4000, scoped, tag = 'input window, operand 11, single buffered']
    #allocation15 [shape = 's32[1]{0}', space=sflag, size = 0x4, scoped, tag = 'scoped memory for encoder_forward.1']
    #allocation16 [shape = 'u8[1024]{0}', space=vmem, size = 0x400, scoped, tag = 'input window, operand 12, single buffered']
    #allocation17 [shape = 'u8[1024]{0}', space=vmem, size = 0x400, scoped, tag = 'input window, operand 13, single buffered']
    #allocation18 [shape = 's32[1]{0}', space=sflag, size = 0x4, scoped, tag = 'scoped memory for encoder_forward.1']
    #allocation19 [shape = 'u8[16384]{0}', space=vmem, size = 0x4000, scoped, tag = 'input window, operand 15, single buffered']
    #allocation20 [shape = 'u8[1024]{0}', space=vmem, size = 0x400, scoped, tag = 'input window, operand 16, single buffered']
    #allocation21 [shape = 's32[1]{0}', space=sflag, size = 0x4, scoped, tag = 'scoped memory for encoder_forward.1']
    #allocation22 [shape = 'u8[1024]{0}', space=vmem, size = 0x400, scoped, tag = 'input window, operand 18, single buffered']
    #allocation23 [shape = 'u8[16384]{0}', space=vmem, size = 0x4000, scoped, tag = 'input window, operand 19, single buffered']
    #allocation24 [shape = 's32[1]{0}', space=sflag, size = 0x4, scoped, tag = 'scoped memory for encoder_forward.1']
    #allocation25 [shape = 'u8[1024]{0}', space=vmem, size = 0x400, scoped, tag = 'input window, operand 20, single buffered']
    #allocation26 [shape = 'u8[1024]{0}', space=vmem, size = 0x400, scoped, tag = 'input window, operand 22, single buffered']
    #allocation27 [shape = 's32[1]{0}', space=sflag, size = 0x4, scoped, tag = 'scoped memory for encoder_forward.1']
    #allocation28 [shape = 'u8[8192]{0}', space=vmem, size = 0x2000, scoped, tag = 'output window, operand 0, single buffered']
    %29 = vsyncpa [#allocation6], 0
    %30 = vsyncpa [#allocation4], 0
    %31 = vsyncpa [#allocation9], 0
    %32 = vsyncpa [#allocation12], 0
    %33 = vsyncpa [#allocation15], 0
    %34 = vsyncpa [#allocation18], 0
    %35 = vsyncpa [#allocation21], 0
    %36 = vsyncpa [#allocation24], 0
    %37 = vsyncpa [#allocation27], 0
    %38 = vsyncpa [#allocation5], 0
    // Predicated region
    $region2: #{encoder_forward.1} parent=1 // pred_check
      _
    $region3: #{encoder_forward.1} parent=1 // pred_check_branch
      %40 = sbr.rel (0) target = $region5
    $region4: #{encoder_forward.1} parent=1 // pred_region
      %s42 = ssub.s32 16, 16
      %43 = vsyncadd [#allocation6], %s42
      %s45 = sshll.u32 %s0, 4
      %s46 = int_to_ptr.vmem [resolvable:$true] %s45
      %48 = dma.vmem_to_smem %s46, 16, [#allocation3], [#allocation6]
    $region5: #{encoder_forward.1} parent=1 // pred_fallthru
      _
    // Predicated region
    $region6: #{encoder_forward.1} parent=1 // pred_check
      _
    $region7: #{encoder_forward.1} parent=1 // pred_check_branch
      %50 = sbr.rel (0) target = $region9
    $region8: #{encoder_forward.1} parent=1 // pred_region
      _
    $region9: #{encoder_forward.1} parent=1 // pred_fallthru
      _
    // Predicated region
    $region10: #{encoder_forward.1} parent=1 // pred_check
      _
    $region11: #{encoder_forward.1} parent=1 // pred_check_branch
      %52 = sbr.rel (0) target = $region13
    $region12: #{encoder_forward.1} parent=1 // pred_region
      _
    $region13: #{encoder_forward.1} parent=1 // pred_fallthru
      _
    // Predicated region
    $region14: #{encoder_forward.1} parent=1 // pred_check
      _
    $region15: #{encoder_forward.1} parent=1 // pred_check_branch
      %54 = sbr.rel (0) target = $region17
    $region16: #{encoder_forward.1} parent=1 // pred_region
      %s56 = ssub.s32 176, 176
      %57 = vsyncadd [#allocation4], %s56
      %s58 = sshll.u32 [#allocation7], 4
      %s59 = int_to_ptr.vmem [resolvable:$true] %s58
      %64 = dma.hbm_to_vmem [thread:$0]  %s3, 176, %s59, [#allocation4], 16, 16, 1
    $region17: #{encoder_forward.1} parent=1 // pred_fallthru
      _
    // Predicated region
    $region18: #{encoder_forward.1} parent=1 // pred_check
      _
    $region19: #{encoder_forward.1} parent=1 // pred_check_branch
      %66 = sbr.rel (0) target = $region21
    $region20: #{encoder_forward.1} parent=1 // pred_region
      _
    $region21: #{encoder_forward.1} parent=1 // pred_fallthru
      _
    // Predicated region
    $region22: #{encoder_forward.1} parent=1 // pred_check
      _
    $region23: #{encoder_forward.1} parent=1 // pred_check_branch
      %68 = sbr.rel (0) target = $region25
    $region24: #{encoder_forward.1} parent=1 // pred_region
      %s70 = ssub.s32 1280, 1280
      %71 = vsyncadd [#allocation9], %s70
      %s72 = sshll.u32 [#allocation8], 4
      %s73 = int_to_ptr.vmem [resolvable:$true] %s72
      %78 = dma.hbm_to_vmem [thread:$0]  %s5, 1280, %s73, [#allocation9], 128, 128, 8
    $region25: #{encoder_forward.1} parent=1 // pred_fallthru
      _
    // Predicated region
    $region26: #{encoder_forward.1} parent=1 // pred_check
      _
    $region27: #{encoder_forward.1} parent=1 // pred_check_branch
      %80 = sbr.rel (0) target = $region29
    $region28: #{encoder_forward.1} parent=1 // pred_region
      %s82 = ssub.s32 48, 48
      %83 = vsyncadd [#allocation9], %s82
      %s84 = sshll.u32 [#allocation10], 4
      %s85 = int_to_ptr.vmem [resolvable:$true] %s84
      %90 = dma.hbm_to_vmem [thread:$0]  %s6, 48, %s85, [#allocation9], 16, 16, 1
    $region29: #{encoder_forward.1} parent=1 // pred_fallthru
      _
    // Predicated region
    $region30: #{encoder_forward.1} parent=1 // pred_check
      _
    $region31: #{encoder_forward.1} parent=1 // pred_check_branch
      %92 = sbr.rel (0) target = $region33
    $region32: #{encoder_forward.1} parent=1 // pred_region
      %s94 = ssub.s32 48, 48
      %95 = vsyncadd [#allocation12], %s94
      %s96 = sshll.u32 [#allocation11], 4
      %s97 = int_to_ptr.vmem [resolvable:$true] %s96
      %102 = dma.hbm_to_vmem [thread:$0]  %s7, 48, %s97, [#allocation12], 16, 16, 1
    $region33: #{encoder_forward.1} parent=1 // pred_fallthru
      _
    // Predicated region
    $region34: #{encoder_forward.1} parent=1 // pred_check
      _
    $region35: #{encoder_forward.1} parent=1 // pred_check_branch
      %104 = sbr.rel (0) target = $region37
    $region36: #{encoder_forward.1} parent=1 // pred_region
      %s106 = ssub.s32 256, 256
      %107 = vsyncadd [#allocation12], %s106
      %s108 = sshll.u32 [#allocation13], 4
      %s109 = int_to_ptr.vmem [resolvable:$true] %s108
      %114 = dma.hbm_to_vmem [thread:$0]  %s8, 256, %s109, [#allocation12], 64, 64, 4
    $region37: #{encoder_forward.1} parent=1 // pred_fallthru
      _
    // Predicated region
    $region38: #{encoder_forward.1} parent=1 // pred_check
      _
    $region39: #{encoder_forward.1} parent=1 // pred_check_branch
      %116 = sbr.rel (0) target = $region41
    $region40: #{encoder_forward.1} parent=1 // pred_region
      _
    $region41: #{encoder_forward.1} parent=1 // pred_fallthru
      _
    // Predicated region
    $region42: #{encoder_forward.1} parent=1 // pred_check
      _
    $region43: #{encoder_forward.1} parent=1 // pred_check_branch
      %118 = sbr.rel (0) target = $region45
    $region44: #{encoder_forward.1} parent=1 // pred_region
      _
    $region45: #{encoder_forward.1} parent=1 // pred_fallthru
      _
    // Predicated region
    $region46: #{encoder_forward.1} parent=1 // pred_check
      _
    $region47: #{encoder_forward.1} parent=1 // pred_check_branch
      %120 = sbr.rel (0) target = $region49
    $region48: #{encoder_forward.1} parent=1 // pred_region
      %s122 = ssub.s32 512, 512
      %123 = vsyncadd [#allocation15], %s122
      %s124 = sshll.u32 [#allocation14], 4
      %s125 = int_to_ptr.vmem [resolvable:$true] %s124
      %130 = dma.hbm_to_vmem [thread:$0]  %s11, 512, %s125, [#allocation15], 128, 128, 8
    $region49: #{encoder_forward.1} parent=1 // pred_fallthru
      _
    // Predicated region
    $region50: #{encoder_forward.1} parent=1 // pred_check
      _
    $region51: #{encoder_forward.1} parent=1 // pred_check_branch
      %132 = sbr.rel (0) target = $region53
    $region52: #{encoder_forward.1} parent=1 // pred_region
      %s134 = ssub.s32 32, 32
      %135 = vsyncadd [#allocation15], %s134
      %s136 = sshll.u32 [#allocation16], 4
      %s137 = int_to_ptr.vmem [resolvable:$true] %s136
      %142 = dma.hbm_to_vmem [thread:$0]  %s12, 32, %s137, [#allocation15], 16, 16, 1
    $region53: #{encoder_forward.1} parent=1 // pred_fallthru
      _
    // Predicated region
    $region54: #{encoder_forward.1} parent=1 // pred_check
      _
    $region55: #{encoder_forward.1} parent=1 // pred_check_branch
      %144 = sbr.rel (0) target = $region57
    $region56: #{encoder_forward.1} parent=1 // pred_region
      %s146 = ssub.s32 32, 32
      %147 = vsyncadd [#allocation18], %s146
      %s148 = sshll.u32 [#allocation17], 4
      %s149 = int_to_ptr.vmem [resolvable:$true] %s148
      %154 = dma.hbm_to_vmem [thread:$0]  %s13, 32, %s149, [#allocation18], 16, 16, 1
    $region57: #{encoder_forward.1} parent=1 // pred_fallthru
      _
    // Predicated region
    $region58: #{encoder_forward.1} parent=1 // pred_check
      _
    $region59: #{encoder_forward.1} parent=1 // pred_check_branch
      %156 = sbr.rel (0) target = $region61
    $region60: #{encoder_forward.1} parent=1 // pred_region
      _
    $region61: #{encoder_forward.1} parent=1 // pred_fallthru
      _
    // Predicated region
    $region62: #{encoder_forward.1} parent=1 // pred_check
      _
    $region63: #{encoder_forward.1} parent=1 // pred_check_branch
      %158 = sbr.rel (0) target = $region65
    $region64: #{encoder_forward.1} parent=1 // pred_region
      %s160 = ssub.s32 512, 512
      %161 = vsyncadd [#allocation18], %s160
      %s162 = sshll.u32 [#allocation19], 4
      %s163 = int_to_ptr.vmem [resolvable:$true] %s162
      %168 = dma.hbm_to_vmem [thread:$0]  %s15, 512, %s163, [#allocation18], 64, 64, 4
    $region65: #{encoder_forward.1} parent=1 // pred_fallthru
      _
    // Predicated region
    $region66: #{encoder_forward.1} parent=1 // pred_check
      _
    $region67: #{encoder_forward.1} parent=1 // pred_check_branch
      %170 = sbr.rel (0) target = $region69
    $region68: #{encoder_forward.1} parent=1 // pred_region
      %s172 = ssub.s32 32, 32
      %173 = vsyncadd [#allocation21], %s172
      %s174 = sshll.u32 [#allocation20], 4
      %s175 = int_to_ptr.vmem [resolvable:$true] %s174
      %180 = dma.hbm_to_vmem [thread:$0]  %s16, 32, %s175, [#allocation21], 16, 16, 1
    $region69: #{encoder_forward.1} parent=1 // pred_fallthru
      _
    // Predicated region
    $region70: #{encoder_forward.1} parent=1 // pred_check
      _
    $region71: #{encoder_forward.1} parent=1 // pred_check_branch
      %182 = sbr.rel (0) target = $region73
    $region72: #{encoder_forward.1} parent=1 // pred_region
      _
    $region73: #{encoder_forward.1} parent=1 // pred_fallthru
      _
    // Predicated region
    $region74: #{encoder_forward.1} parent=1 // pred_check
      _
    $region75: #{encoder_forward.1} parent=1 // pred_check_branch
      %184 = sbr.rel (0) target = $region77
    $region76: #{encoder_forward.1} parent=1 // pred_region
      %s186 = ssub.s32 32, 32
      %187 = vsyncadd [#allocation21], %s186
      %s188 = sshll.u32 [#allocation22], 4
      %s189 = int_to_ptr.vmem [resolvable:$true] %s188
      %194 = dma.hbm_to_vmem [thread:$0]  %s18, 32, %s189, [#allocation21], 16, 16, 1
    $region77: #{encoder_forward.1} parent=1 // pred_fallthru
      _
    // Predicated region
    $region78: #{encoder_forward.1} parent=1 // pred_check
      _
    $region79: #{encoder_forward.1} parent=1 // pred_check_branch
      %196 = sbr.rel (0) target = $region81
    $region80: #{encoder_forward.1} parent=1 // pred_region
      %s198 = ssub.s32 512, 512
      %199 = vsyncadd [#allocation24], %s198
      %s200 = sshll.u32 [#allocation23], 4
      %s201 = int_to_ptr.vmem [resolvable:$true] %s200
      %206 = dma.hbm_to_vmem [thread:$0]  %s19, 512, %s201, [#allocation24], 64, 64, 4
    $region81: #{encoder_forward.1} parent=1 // pred_fallthru
      _
    // Predicated region
    $region82: #{encoder_forward.1} parent=1 // pred_check
      _
    $region83: #{encoder_forward.1} parent=1 // pred_check_branch
      %208 = sbr.rel (0) target = $region85
    $region84: #{encoder_forward.1} parent=1 // pred_region
      %s210 = ssub.s32 32, 32
      %211 = vsyncadd [#allocation24], %s210
      %s212 = sshll.u32 [#allocation25], 4
      %s213 = int_to_ptr.vmem [resolvable:$true] %s212
      %218 = dma.hbm_to_vmem [thread:$0]  %s20, 32, %s213, [#allocation24], 16, 16, 1
    $region85: #{encoder_forward.1} parent=1 // pred_fallthru
      _
    // Predicated region
    $region86: #{encoder_forward.1} parent=1 // pred_check
      _
    $region87: #{encoder_forward.1} parent=1 // pred_check_branch
      %220 = sbr.rel (0) target = $region89
    $region88: #{encoder_forward.1} parent=1 // pred_region
      _
    $region89: #{encoder_forward.1} parent=1 // pred_fallthru
      _
    // Predicated region
    $region90: #{encoder_forward.1} parent=1 // pred_check
      _
    $region91: #{encoder_forward.1} parent=1 // pred_check_branch
      %222 = sbr.rel (0) target = $region93
    $region92: #{encoder_forward.1} parent=1 // pred_region
      %s224 = ssub.s32 32, 32
      %225 = vsyncadd [#allocation27], %s224
      %s226 = sshll.u32 [#allocation26], 4
      %s227 = int_to_ptr.vmem [resolvable:$true] %s226
      %232 = dma.hbm_to_vmem [thread:$0]  %s22, 32, %s227, [#allocation27], 16, 16, 1
    $region93: #{encoder_forward.1} parent=1 // pred_fallthru
      _
    // Predicated region
    $region94: #{encoder_forward.1} parent=1 // pred_check
      _
    $region95: #{encoder_forward.1} parent=1 // pred_check_branch
      %234 = sbr.rel (0) target = $region97
    $region96: #{encoder_forward.1} parent=1 // pred_region
      %235 = dma.done [#allocation6], 16
    $region97: #{encoder_forward.1} parent=1 // pred_fallthru
      _
    // Predicated region
    $region98: #{encoder_forward.1} parent=1 // pred_check
      _
    $region99: #{encoder_forward.1} parent=1 // pred_check_branch
      %237 = sbr.rel (0) target = $region101
    $region100: #{encoder_forward.1} parent=1 // pred_region
      %238 = dma.done [#allocation4], 176
    $region101: #{encoder_forward.1} parent=1 // pred_fallthru
      _
    // Predicated region
    $region102: #{encoder_forward.1} parent=1 // pred_check
      _
    $region103: #{encoder_forward.1} parent=1 // pred_check_branch
      %240 = sbr.rel (0) target = $region105
    $region104: #{encoder_forward.1} parent=1 // pred_region
      %241 = dma.done [#allocation9], 1280
    $region105: #{encoder_forward.1} parent=1 // pred_fallthru
      _
    // Predicated region
    $region106: #{encoder_forward.1} parent=1 // pred_check
      _
    $region107: #{encoder_forward.1} parent=1 // pred_check_branch
      %243 = sbr.rel (0) target = $region109
    $region108: #{encoder_forward.1} parent=1 // pred_region
      %244 = dma.done [#allocation9], 48
    $region109: #{encoder_forward.1} parent=1 // pred_fallthru
      _
    // Predicated region
    $region110: #{encoder_forward.1} parent=1 // pred_check
      _
    $region111: #{encoder_forward.1} parent=1 // pred_check_branch
      %246 = sbr.rel (0) target = $region113
    $region112: #{encoder_forward.1} parent=1 // pred_region
      %247 = dma.done [#allocation12], 48
    $region113: #{encoder_forward.1} parent=1 // pred_fallthru
      _
    // Predicated region
    $region114: #{encoder_forward.1} parent=1 // pred_check
      _
    $region115: #{encoder_forward.1} parent=1 // pred_check_branch
      %249 = sbr.rel (0) target = $region117
    $region116: #{encoder_forward.1} parent=1 // pred_region
      %250 = dma.done [#allocation12], 256
    $region117: #{encoder_forward.1} parent=1 // pred_fallthru
      _
    // Predicated region
    $region118: #{encoder_forward.1} parent=1 // pred_check
      _
    $region119: #{encoder_forward.1} parent=1 // pred_check_branch
      %252 = sbr.rel (0) target = $region121
    $region120: #{encoder_forward.1} parent=1 // pred_region
      %253 = dma.done [#allocation15], 512
    $region121: #{encoder_forward.1} parent=1 // pred_fallthru
      _
    // Predicated region
    $region122: #{encoder_forward.1} parent=1 // pred_check
      _
    $region123: #{encoder_forward.1} parent=1 // pred_check_branch
      %255 = sbr.rel (0) target = $region125
    $region124: #{encoder_forward.1} parent=1 // pred_region
      %256 = dma.done [#allocation15], 32
    $region125: #{encoder_forward.1} parent=1 // pred_fallthru
      _
    // Predicated region
    $region126: #{encoder_forward.1} parent=1 // pred_check
      _
    $region127: #{encoder_forward.1} parent=1 // pred_check_branch
      %258 = sbr.rel (0) target = $region129
    $region128: #{encoder_forward.1} parent=1 // pred_region
      %259 = dma.done [#allocation18], 32
    $region129: #{encoder_forward.1} parent=1 // pred_fallthru
      _
    // Predicated region
    $region130: #{encoder_forward.1} parent=1 // pred_check
      _
    $region131: #{encoder_forward.1} parent=1 // pred_check_branch
      %261 = sbr.rel (0) target = $region133
    $region132: #{encoder_forward.1} parent=1 // pred_region
      %262 = dma.done [#allocation18], 512
    $region133: #{encoder_forward.1} parent=1 // pred_fallthru
      _
    // Predicated region
    $region134: #{encoder_forward.1} parent=1 // pred_check
      _
    $region135: #{encoder_forward.1} parent=1 // pred_check_branch
      %264 = sbr.rel (0) target = $region137
    $region136: #{encoder_forward.1} parent=1 // pred_region
      %265 = dma.done [#allocation21], 32
    $region137: #{encoder_forward.1} parent=1 // pred_fallthru
      _
    // Predicated region
    $region138: #{encoder_forward.1} parent=1 // pred_check
      _
    $region139: #{encoder_forward.1} parent=1 // pred_check_branch
      %267 = sbr.rel (0) target = $region141
    $region140: #{encoder_forward.1} parent=1 // pred_region
      %268 = dma.done [#allocation21], 32
    $region141: #{encoder_forward.1} parent=1 // pred_fallthru
      _
    // Predicated region
    $region142: #{encoder_forward.1} parent=1 // pred_check
      _
    $region143: #{encoder_forward.1} parent=1 // pred_check_branch
      %270 = sbr.rel (0) target = $region145
    $region144: #{encoder_forward.1} parent=1 // pred_region
      %271 = dma.done [#allocation24], 512
    $region145: #{encoder_forward.1} parent=1 // pred_fallthru
      _
    // Predicated region
    $region146: #{encoder_forward.1} parent=1 // pred_check
      _
    $region147: #{encoder_forward.1} parent=1 // pred_check_branch
      %273 = sbr.rel (0) target = $region149
    $region148: #{encoder_forward.1} parent=1 // pred_region
      %274 = dma.done [#allocation24], 32
    $region149: #{encoder_forward.1} parent=1 // pred_fallthru
      _
    // Predicated region
    $region150: #{encoder_forward.1} parent=1 // pred_check
      _
    $region151: #{encoder_forward.1} parent=1 // pred_check_branch
      %276 = sbr.rel (0) target = $region153
    $region152: #{encoder_forward.1} parent=1 // pred_region
      %277 = dma.done [#allocation27], 32
    $region153: #{encoder_forward.1} parent=1 // pred_fallthru
      _
    %278 = sfence
    %v280 = vlaneseq
    %v281 = vshrl.u32 %v280, 7
    %v282 = vadd.s32 %v281, 8
    %s283 = sld [smem:[#allocation3]]
    %s284 = scalar_lea.vmem [#allocation7], %s283
    %v285 = vld [vmem:[%s284] sm:$0x1]
    %vm286 = vcmp.eq.s32.totalorder %v281, 0
    %vm287 = vcmp.eq.s32.totalorder %v282, 0
    %v289 = vlaneseq
    %v290 = vshrl.u32 %v289, 7
    %v291 = vsub.s32 0, %v290
    %v292 = vrot.slane %v285, %v291
    %v294 = vsel %vm286, %v292, 0.0
    %v295 = vsel %vm287, %v292, 0.0
    %s296 = sld [smem:[#allocation3 + $0x1]]
    %s297 = scalar_lea.vmem [#allocation7], %s296
    %v298 = vld [vmem:[%s297] sm:$0x1]
    %vm299 = vcmp.eq.s32.totalorder %v281, 1
    %vm300 = vcmp.eq.s32.totalorder %v282, 1
    %v302 = vlaneseq
    %v303 = vshrl.u32 %v302, 7
    %v304 = vsub.s32 0, %v303
    %v305 = vrot.slane %v298, %v304
    %v307 = vsel %vm299, %v305, %v294
    %v308 = vsel %vm300, %v305, %v295
    %s309 = sld [smem:[#allocation3 + $0x2]]
    %s310 = scalar_lea.vmem [#allocation7], %s309
    %v311 = vld [vmem:[%s310] sm:$0x1]
    %vm312 = vcmp.eq.s32.totalorder %v281, 2
    %vm313 = vcmp.eq.s32.totalorder %v282, 2
    %v315 = vlaneseq
    %v316 = vshrl.u32 %v315, 7
    %v317 = vsub.s32 0, %v316
    %v318 = vrot.slane %v311, %v317
    %v320 = vsel %vm312, %v318, %v307
    %v321 = vsel %vm313, %v318, %v308
    %s322 = sld [smem:[#allocation3 + $0x3]]
    %s323 = scalar_lea.vmem [#allocation7], %s322
    %v324 = vld [vmem:[%s323] sm:$0x1]
    %vm325 = vcmp.eq.s32.totalorder %v281, 3
    %vm326 = vcmp.eq.s32.totalorder %v282, 3
    %v328 = vlaneseq
    %v329 = vshrl.u32 %v328, 7
    %v330 = vsub.s32 0, %v329
    %v331 = vrot.slane %v324, %v330
    %v333 = vsel %vm325, %v331, %v320
    %v334 = vsel %vm326, %v331, %v321
    %s335 = sld [smem:[#allocation3 + $0x4]]
    %s336 = scalar_lea.vmem [#allocation7], %s335
    %v337 = vld [vmem:[%s336] sm:$0x1]
    %vm338 = vcmp.eq.s32.totalorder %v281, 4
    %vm339 = vcmp.eq.s32.totalorder %v282, 4
    %v341 = vlaneseq
    %v342 = vshrl.u32 %v341, 7
    %v343 = vsub.s32 0, %v342
    %v344 = vrot.slane %v337, %v343
    %v346 = vsel %vm338, %v344, %v333
    %v347 = vsel %vm339, %v344, %v334
    %s348 = sld [smem:[#allocation3 + $0x5]]
    %s349 = scalar_lea.vmem [#allocation7], %s348
    %v350 = vld [vmem:[%s349] sm:$0x1]
    %vm351 = vcmp.eq.s32.totalorder %v281, 5
    %vm352 = vcmp.eq.s32.totalorder %v282, 5
    %v354 = vlaneseq
    %v355 = vshrl.u32 %v354, 7
    %v356 = vsub.s32 0, %v355
    %v357 = vrot.slane %v350, %v356
    %v359 = vsel %vm351, %v357, %v346
    %v360 = vsel %vm352, %v357, %v347
    %s361 = sld [smem:[#allocation3 + $0x6]]
    %s362 = scalar_lea.vmem [#allocation7], %s361
    %v363 = vld [vmem:[%s362] sm:$0x1]
    %vm364 = vcmp.eq.s32.totalorder %v281, 6
    %vm365 = vcmp.eq.s32.totalorder %v282, 6
    %v367 = vlaneseq
    %v368 = vshrl.u32 %v367, 7
    %v369 = vsub.s32 0, %v368
    %v370 = vrot.slane %v363, %v369
    %v372 = vsel %vm364, %v370, %v359
    %v373 = vsel %vm365, %v370, %v360
    %s374 = sld [smem:[#allocation3 + $0x7]]
    %s375 = scalar_lea.vmem [#allocation7], %s374
    %v376 = vld [vmem:[%s375] sm:$0x1]
    %vm377 = vcmp.eq.s32.totalorder %v281, 7
    %vm378 = vcmp.eq.s32.totalorder %v282, 7
    %v380 = vlaneseq
    %v381 = vshrl.u32 %v380, 7
    %v382 = vsub.s32 0, %v381
    %v383 = vrot.slane %v376, %v382
    %v385 = vsel %vm377, %v383, %v372
    %v386 = vsel %vm378, %v383, %v373
    %s387 = sld [smem:[#allocation3 + $0x8]]
    %s388 = scalar_lea.vmem [#allocation7], %s387
    %v389 = vld [vmem:[%s388] sm:$0x1]
    %vm390 = vcmp.eq.s32.totalorder %v281, 8
    %vm391 = vcmp.eq.s32.totalorder %v282, 8
    %v393 = vlaneseq
    %v394 = vshrl.u32 %v393, 7
    %v395 = vsub.s32 0, %v394
    %v396 = vrot.slane %v389, %v395
    %v398 = vsel %vm390, %v396, %v385
    %v399 = vsel %vm391, %v396, %v386
    %s400 = sld [smem:[#allocation3 + $0x9]]
    %s401 = scalar_lea.vmem [#allocation7], %s400
    %v402 = vld [vmem:[%s401] sm:$0x1]
    %vm403 = vcmp.eq.s32.totalorder %v281, 9
    %vm404 = vcmp.eq.s32.totalorder %v282, 9
    %v406 = vlaneseq
    %v407 = vshrl.u32 %v406, 7
    %v408 = vsub.s32 0, %v407
    %v409 = vrot.slane %v402, %v408
    %v411 = vsel %vm403, %v409, %v398
    %v412 = vsel %vm404, %v409, %v399
    %s413 = sld [smem:[#allocation3 + $0xa]]
    %s414 = scalar_lea.vmem [#allocation7], %s413
    %v415 = vld [vmem:[%s414] sm:$0x1]
    %vm416 = vcmp.eq.s32.totalorder %v281, 10
    %vm417 = vcmp.eq.s32.totalorder %v282, 10
    %v419 = vlaneseq
    %v420 = vshrl.u32 %v419, 7
    %v421 = vsub.s32 0, %v420
    %v422 = vrot.slane %v415, %v421
    %v424 = vsel %vm416, %v422, %v411
    %v425 = vsel %vm417, %v422, %v412
    %s426 = sld [smem:[#allocation3 + $0xb]]
    %s427 = scalar_lea.vmem [#allocation7], %s426
    %v428 = vld [vmem:[%s427] sm:$0x1]
    %vm429 = vcmp.eq.s32.totalorder %v281, 11
    %vm430 = vcmp.eq.s32.totalorder %v282, 11
    %v432 = vlaneseq
    %v433 = vshrl.u32 %v432, 7
    %v434 = vsub.s32 0, %v433
    %v435 = vrot.slane %v428, %v434
    %v437 = vsel %vm429, %v435, %v424
    %v438 = vsel %vm430, %v435, %v425
    %s439 = sld [smem:[#allocation3 + $0xc]]
    %s440 = scalar_lea.vmem [#allocation7], %s439
    %v441 = vld [vmem:[%s440] sm:$0x1]
    %vm442 = vcmp.eq.s32.totalorder %v281, 12
    %vm443 = vcmp.eq.s32.totalorder %v282, 12
    %v445 = vlaneseq
    %v446 = vshrl.u32 %v445, 7
    %v447 = vsub.s32 0, %v446
    %v448 = vrot.slane %v441, %v447
    %v450 = vsel %vm442, %v448, %v437
    %v451 = vsel %vm443, %v448, %v438
    %s452 = sld [smem:[#allocation3 + $0xd]]
    %s453 = scalar_lea.vmem [#allocation7], %s452
    %v454 = vld [vmem:[%s453] sm:$0x1]
    %vm455 = vcmp.eq.s32.totalorder %v281, 13
    %vm456 = vcmp.eq.s32.totalorder %v282, 13
    %v458 = vlaneseq
    %v459 = vshrl.u32 %v458, 7
    %v460 = vsub.s32 0, %v459
    %v461 = vrot.slane %v454, %v460
    %v463 = vsel %vm455, %v461, %v450
    %v464 = vsel %vm456, %v461, %v451
    %s465 = sld [smem:[#allocation3 + $0xe]]
    %s466 = scalar_lea.vmem [#allocation7], %s465
    %v467 = vld [vmem:[%s466] sm:$0x1]
    %vm468 = vcmp.eq.s32.totalorder %v281, 14
    %vm469 = vcmp.eq.s32.totalorder %v282, 14
    %v471 = vlaneseq
    %v472 = vshrl.u32 %v471, 7
    %v473 = vsub.s32 0, %v472
    %v474 = vrot.slane %v467, %v473
    %v476 = vsel %vm468, %v474, %v463
    %v477 = vsel %vm469, %v474, %v464
    %s478 = sld [smem:[#allocation3 + $0xf]]
    %s479 = scalar_lea.vmem [#allocation7], %s478
    %v480 = vld [vmem:[%s479] sm:$0x1]
    %vm481 = vcmp.eq.s32.totalorder %v281, 15
    %vm482 = vcmp.eq.s32.totalorder %v282, 15
    %v484 = vlaneseq
    %v485 = vshrl.u32 %v484, 7
    %v486 = vsub.s32 0, %v485
    %v487 = vrot.slane %v480, %v486
    %v489 = vsel %vm481, %v487, %v476
    %v490 = vsel %vm482, %v487, %v477
    %v491 = vrot.slane %v489, 6
    %v492 = vrot.slane %v490, 6
    %vm493 = vcmp.lt.s32.totalorder %v281, 2
    %v494 = vsel %vm493, %v491, %v492
    %v495 = vsel %vm493, %v492, %v491
    %v496 = vld [vmem:[#allocation8] sm:$0xff]
    %v497 = vld [vmem:[#allocation8 + $0x8] sm:$0xff]
    %499 = vset.pattern.permute.xlu0 0
    %500 = vperm.xlu0 %499, %v496
    %v501 = vpop.permute.xlu0 %500
    %504 = vset.pattern.permute.xlu0 0
    %505 = vperm.xlu0 %504, %v497
    %v506 = vpop.permute.xlu0 %505
    %v508 = vmul.f32 %v495, %v501
    %v509 = vmul.f32 %v494, %v506
    %v510 = vpack.c.bf16 %v509, %v508
    %v511 = vld [vmem:[%s4] sm:$0xf]
    %v512 = vld [vmem:[%s4 + $0x4] sm:$0xf]
    %v513 = vld [vmem:[%s4 + $0x8] sm:$0xf]
    %v514 = vld [vmem:[%s4 + $0xc] sm:$0xf]
    %v515 = vrot.slane %v489, 7
    %v516 = vrot.slane %v490, 7
    %vm517 = vcmp.lt.s32.totalorder %v281, 1
    %v518 = vsel %vm517, %v515, %v516
    %v519 = vsel %vm517, %v516, %v515
    %s520 = scalar_lea.vmem [#allocation8], 16
    %v521 = vld [vmem:[%s520] sm:$0xff]
    %v522 = vld [vmem:[%s520 + $0x8] sm:$0xff]
    %524 = vset.pattern.permute.xlu0 0
    %525 = vperm.xlu0 %524, %v521
    %v526 = vpop.permute.xlu0 %525
    %529 = vset.pattern.permute.xlu0 0
    %530 = vperm.xlu0 %529, %v522
    %v531 = vpop.permute.xlu0 %530
    %v533 = vmul.f32 %v519, %v526
    %v534 = vmul.f32 %v518, %v531
    %v535 = vpack.c.bf16 %v534, %v533
    %s536 = scalar_lea.vmem %s4, 16
    %v537 = vld [vmem:[%s536] sm:$0xf]
    %v538 = vld [vmem:[%s536 + $0x4] sm:$0xf]
    %v539 = vld [vmem:[%s536 + $0x8] sm:$0xf]
    %v540 = vld [vmem:[%s536 + $0xc] sm:$0xf]
    %v545 = vunpack.c.l.b16 %v537
    %v546 = vunpack.c.l.b16 %v538
    %v547 = vunpack.c.l.b16 %v539
    %v548 = vunpack.c.l.b16 %v540
    %v549 = vpack.c.b16 %v546, %v545
    %v550 = vpack.c.b16 %v548, %v547
    %vm553 = vcmask 261120
    %v555 = vsel %vm553, %v535, 0
    %557 = vmatprep.subr.bf16.mxu0 0
    %558 = vmatpush1.bf16.msra.mxu0 0
    %559 = vmatprep.subr.bf16.mxu0 0
    %560 = vmatpush1.bf16.msra.mxu0 0
    %561 = vmatprep.subr.bf16.mxu0 0
    %562 = vmatpush1.bf16.msra.mxu0 0
    %563 = vmatprep.subr.bf16.mxu0 0
    %564 = vmatpush1.bf16.msra.mxu0 0
    %565 = vmatprep.subr.bf16.mxu0 0
    %566 = vmatpush1.bf16.msra.mxu0 0
    %567 = vmatprep.subr.bf16.mxu0 0
    %568 = vmatpush1.bf16.msra.mxu0 0
    %569 = vmatprep.subr.bf16.mxu0 0
    %570 = vmatpush1.bf16.msra.mxu0 %v550
    %571 = vmatprep.subr.bf16.mxu0 0
    %572 = vmatpush1.bf16.msra.mxu0 %v549
    %573 = vmatprep.subr.bf16.mxu0 0
    %574 = vmatpush2.bf16.msra.mxu0 0
    %575 = vmatprep.subr.bf16.mxu0 0
    %576 = vmatpush2.bf16.msra.mxu0 0
    %577 = vmatprep.subr.bf16.mxu0 0
    %578 = vmatpush2.bf16.msra.mxu0 0
    %579 = vmatprep.subr.bf16.mxu0 0
    %580 = vmatpush2.bf16.msra.mxu0 0
    %581 = vmatprep.subr.bf16.mxu0 0
    %582 = vmatpush2.bf16.msra.mxu0 0
    %583 = vmatprep.subr.bf16.mxu0 0
    %584 = vmatpush2.bf16.msra.mxu0 0
    %585 = vmatprep.subr.bf16.mxu0 0
    %586 = vmatpush2.bf16.msra.mxu0 0
    %587 = vmatprep.subr.bf16.mxu0 0
    %588 = vmatpush2.bf16.msra.mxu0 0
    %589 = vmatprep.mubr.bf16.mxu0 0
    %590 = vmatmul.mubr.bf16.gmra.mxu0 %v555
    %v591 = vpop.f32.mrf.mxu0
    %v592 = vadd.f32 0.0, %v591
    %v593 = vpop.f32.mrf.mxu0
    %v594 = vpop.f32.mrf.mxu0
    %v595 = vadd.f32 0.0, %v594
    %v596 = vpop.f32.mrf.mxu0
    %597 = vdwg.mxu0
    %v602 = vunpack.c.l.b16 %v511
    %v603 = vunpack.c.l.b16 %v512
    %v604 = vunpack.c.l.b16 %v513
    %v605 = vunpack.c.l.b16 %v514
    %v606 = vpack.c.b16 %v603, %v602
    %v607 = vpack.c.b16 %v605, %v604
    %v611 = vsel %vm553, %v510, 0
    %613 = vmatprep.subr.bf16.mxu0 0
    %614 = vmatpush1.bf16.msra.mxu0 0
    %615 = vmatprep.subr.bf16.mxu0 0
    %616 = vmatpush1.bf16.msra.mxu0 0
    %617 = vmatprep.subr.bf16.mxu0 0
    %618 = vmatpush1.bf16.msra.mxu0 0
    %619 = vmatprep.subr.bf16.mxu0 0
    %620 = vmatpush1.bf16.msra.mxu0 0
    %621 = vmatprep.subr.bf16.mxu0 0
    %622 = vmatpush1.bf16.msra.mxu0 0
    %623 = vmatprep.subr.bf16.mxu0 0
    %624 = vmatpush1.bf16.msra.mxu0 0
    %625 = vmatprep.subr.bf16.mxu0 0
    %626 = vmatpush1.bf16.msra.mxu0 %v607
    %627 = vmatprep.subr.bf16.mxu0 0
    %628 = vmatpush1.bf16.msra.mxu0 %v606
    %629 = vmatprep.subr.bf16.mxu0 0
    %630 = vmatpush2.bf16.msra.mxu0 0
    %631 = vmatprep.subr.bf16.mxu0 0
    %632 = vmatpush2.bf16.msra.mxu0 0
    %633 = vmatprep.subr.bf16.mxu0 0
    %634 = vmatpush2.bf16.msra.mxu0 0
    %635 = vmatprep.subr.bf16.mxu0 0
    %636 = vmatpush2.bf16.msra.mxu0 0
    %637 = vmatprep.subr.bf16.mxu0 0
    %638 = vmatpush2.bf16.msra.mxu0 0
    %639 = vmatprep.subr.bf16.mxu0 0
    %640 = vmatpush2.bf16.msra.mxu0 0
    %641 = vmatprep.subr.bf16.mxu0 0
    %642 = vmatpush2.bf16.msra.mxu0 0
    %643 = vmatprep.subr.bf16.mxu0 0
    %644 = vmatpush2.bf16.msra.mxu0 0
    %645 = vmatprep.mubr.bf16.mxu0 0
    %646 = vmatmul.mubr.bf16.gmra.mxu0 %v611
    %v647 = vpop.f32.mrf.mxu0
    %v648 = vadd.f32 %v592, %v647
    %v649 = vpop.f32.mrf.mxu0
    %v650 = vpop.f32.mrf.mxu0
    %v651 = vadd.f32 %v595, %v650
    %v652 = vpop.f32.mrf.mxu0
    %653 = vdwg.mxu0
    %v654 = vpack.c.bf16 %v490, %v489
    %s655 = scalar_lea.vmem %s4, 32
    %v656 = vld [vmem:[%s655] sm:$0xf]
    %v657 = vld [vmem:[%s655 + $0x4] sm:$0xf]
    %v658 = vld [vmem:[%s655 + $0x8] sm:$0xf]
    %v659 = vld [vmem:[%s655 + $0xc] sm:$0xf]
    %v664 = vunpack.c.l.b16 %v656
    %v665 = vunpack.c.l.b16 %v657
    %v666 = vunpack.c.l.b16 %v658
    %v667 = vunpack.c.l.b16 %v659
    %v668 = vpack.c.b16 %v665, %v664
    %v669 = vpack.c.b16 %v667, %v666
    %v673 = vsel %vm553, %v654, 0
    %675 = vmatprep.subr.bf16.mxu0 0
    %676 = vmatpush1.bf16.msra.mxu0 0
    %677 = vmatprep.subr.bf16.mxu0 0
    %678 = vmatpush1.bf16.msra.mxu0 0
    %679 = vmatprep.subr.bf16.mxu0 0
    %680 = vmatpush1.bf16.msra.mxu0 0
    %681 = vmatprep.subr.bf16.mxu0 0
    %682 = vmatpush1.bf16.msra.mxu0 0
    %683 = vmatprep.subr.bf16.mxu0 0
    %684 = vmatpush1.bf16.msra.mxu0 0
    %685 = vmatprep.subr.bf16.mxu0 0
    %686 = vmatpush1.bf16.msra.mxu0 0
    %687 = vmatprep.subr.bf16.mxu0 0
    %688 = vmatpush1.bf16.msra.mxu0 %v669
    %689 = vmatprep.subr.bf16.mxu0 0
    %690 = vmatpush1.bf16.msra.mxu0 %v668
    %691 = vmatprep.subr.bf16.mxu0 0
    %692 = vmatpush2.bf16.msra.mxu0 0
    %693 = vmatprep.subr.bf16.mxu0 0
    %694 = vmatpush2.bf16.msra.mxu0 0
    %695 = vmatprep.subr.bf16.mxu0 0
    %696 = vmatpush2.bf16.msra.mxu0 0
    %697 = vmatprep.subr.bf16.mxu0 0
    %698 = vmatpush2.bf16.msra.mxu0 0
    %699 = vmatprep.subr.bf16.mxu0 0
    %700 = vmatpush2.bf16.msra.mxu0 0
    %701 = vmatprep.subr.bf16.mxu0 0
    %702 = vmatpush2.bf16.msra.mxu0 0
    %703 = vmatprep.subr.bf16.mxu0 0
    %704 = vmatpush2.bf16.msra.mxu0 0
    %705 = vmatprep.subr.bf16.mxu0 0
    %706 = vmatpush2.bf16.msra.mxu0 0
    %707 = vmatprep.mubr.bf16.mxu0 0
    %708 = vmatmul.mubr.bf16.gmra.mxu0 %v673
    %v709 = vpop.f32.mrf.mxu0
    %v710 = vadd.f32 0.0, %v709
    %v711 = vpop.f32.mrf.mxu0
    %v712 = vpop.f32.mrf.mxu0
    %v713 = vadd.f32 0.0, %v712
    %v714 = vpop.f32.mrf.mxu0
    %715 = vdwg.mxu0
    %v716 = vadd.f32 %v648, %v710
    %v717 = vadd.f32 %v651, %v713
    %v718 = vrot.slane %v489, 1
    %v719 = vrot.slane %v490, 1
    %vm720 = vcmp.lt.s32.totalorder %v281, 7
    %v721 = vsel %vm720, %v718, %v719
    %v722 = vsel %vm720, %v719, %v718
    %s723 = scalar_lea.vmem [#allocation8], 48
    %v724 = vld [vmem:[%s723] sm:$0xff]
    %v725 = vld [vmem:[%s723 + $0x8] sm:$0xff]
    %727 = vset.pattern.permute.xlu0 0
    %728 = vperm.xlu0 %727, %v724
    %v729 = vpop.permute.xlu0 %728
    %732 = vset.pattern.permute.xlu0 0
    %733 = vperm.xlu0 %732, %v725
    %v734 = vpop.permute.xlu0 %733
    %v736 = vmul.f32 %v721, %v729
    %v737 = vmul.f32 %v722, %v734
    %v738 = vpack.c.bf16 %v737, %v736
    %s739 = scalar_lea.vmem %s4, 48
    %v740 = vld [vmem:[%s739] sm:$0xf]
    %v741 = vld [vmem:[%s739 + $0x4] sm:$0xf]
    %v742 = vld [vmem:[%s739 + $0x8] sm:$0xf]
    %v743 = vld [vmem:[%s739 + $0xc] sm:$0xf]
    %v748 = vunpack.c.l.b16 %v740
    %v749 = vunpack.c.l.b16 %v741
    %v750 = vunpack.c.l.b16 %v742
    %v751 = vunpack.c.l.b16 %v743
    %v752 = vpack.c.b16 %v749, %v748
    %v753 = vpack.c.b16 %v751, %v750
    %v757 = vsel %vm553, %v738, 0
    %759 = vmatprep.subr.bf16.mxu0 0
    %760 = vmatpush1.bf16.msra.mxu0 0
    %761 = vmatprep.subr.bf16.mxu0 0
    %762 = vmatpush1.bf16.msra.mxu0 0
    %763 = vmatprep.subr.bf16.mxu0 0
    %764 = vmatpush1.bf16.msra.mxu0 0
    %765 = vmatprep.subr.bf16.mxu0 0
    %766 = vmatpush1.bf16.msra.mxu0 0
    %767 = vmatprep.subr.bf16.mxu0 0
    %768 = vmatpush1.bf16.msra.mxu0 0
    %769 = vmatprep.subr.bf16.mxu0 0
    %770 = vmatpush1.bf16.msra.mxu0 0
    %771 = vmatprep.subr.bf16.mxu0 0
    %772 = vmatpush1.bf16.msra.mxu0 %v753
    %773 = vmatprep.subr.bf16.mxu0 0
    %774 = vmatpush1.bf16.msra.mxu0 %v752
    %775 = vmatprep.subr.bf16.mxu0 0
    %776 = vmatpush2.bf16.msra.mxu0 0
    %777 = vmatprep.subr.bf16.mxu0 0
    %778 = vmatpush2.bf16.msra.mxu0 0
    %779 = vmatprep.subr.bf16.mxu0 0
    %780 = vmatpush2.bf16.msra.mxu0 0
    %781 = vmatprep.subr.bf16.mxu0 0
    %782 = vmatpush2.bf16.msra.mxu0 0
    %783 = vmatprep.subr.bf16.mxu0 0
    %784 = vmatpush2.bf16.msra.mxu0 0
    %785 = vmatprep.subr.bf16.mxu0 0
    %786 = vmatpush2.bf16.msra.mxu0 0
    %787 = vmatprep.subr.bf16.mxu0 0
    %788 = vmatpush2.bf16.msra.mxu0 0
    %789 = vmatprep.subr.bf16.mxu0 0
    %790 = vmatpush2.bf16.msra.mxu0 0
    %791 = vmatprep.mubr.bf16.mxu0 0
    %792 = vmatmul.mubr.bf16.gmra.mxu0 %v757
    %v793 = vpop.f32.mrf.mxu0
    %v794 = vadd.f32 0.0, %v793
    %v795 = vpop.f32.mrf.mxu0
    %v796 = vpop.f32.mrf.mxu0
    %v797 = vadd.f32 0.0, %v796
    %v798 = vpop.f32.mrf.mxu0
    %799 = vdwg.mxu0
    %v800 = vadd.f32 %v716, %v794
    %v801 = vadd.f32 %v717, %v797
    %v802 = vrot.slane %v489, 2
    %v803 = vrot.slane %v490, 2
    %vm804 = vcmp.lt.s32.totalorder %v281, 6
    %v805 = vsel %vm804, %v802, %v803
    %v806 = vsel %vm804, %v803, %v802
    %s807 = scalar_lea.vmem [#allocation8], 64
    %v808 = vld [vmem:[%s807] sm:$0xff]
    %v809 = vld [vmem:[%s807 + $0x8] sm:$0xff]
    %811 = vset.pattern.permute.xlu0 0
    %812 = vperm.xlu0 %811, %v808
    %v813 = vpop.permute.xlu0 %812
    %816 = vset.pattern.permute.xlu0 0
    %817 = vperm.xlu0 %816, %v809
    %v818 = vpop.permute.xlu0 %817
    %v820 = vmul.f32 %v805, %v813
    %v821 = vmul.f32 %v806, %v818
    %v822 = vpack.c.bf16 %v821, %v820
    %s823 = scalar_lea.vmem %s4, 64
    %v824 = vld [vmem:[%s823] sm:$0xf]
    %v825 = vld [vmem:[%s823 + $0x4] sm:$0xf]
    %v826 = vld [vmem:[%s823 + $0x8] sm:$0xf]
    %v827 = vld [vmem:[%s823 + $0xc] sm:$0xf]
    %v832 = vunpack.c.l.b16 %v824
    %v833 = vunpack.c.l.b16 %v825
    %v834 = vunpack.c.l.b16 %v826
    %v835 = vunpack.c.l.b16 %v827
    %v836 = vpack.c.b16 %v833, %v832
    %v837 = vpack.c.b16 %v835, %v834
    %v841 = vsel %vm553, %v822, 0
    %843 = vmatprep.subr.bf16.mxu0 0
    %844 = vmatpush1.bf16.msra.mxu0 0
    %845 = vmatprep.subr.bf16.mxu0 0
    %846 = vmatpush1.bf16.msra.mxu0 0
    %847 = vmatprep.subr.bf16.mxu0 0
    %848 = vmatpush1.bf16.msra.mxu0 0
    %849 = vmatprep.subr.bf16.mxu0 0
    %850 = vmatpush1.bf16.msra.mxu0 0
    %851 = vmatprep.subr.bf16.mxu0 0
    %852 = vmatpush1.bf16.msra.mxu0 0
    %853 = vmatprep.subr.bf16.mxu0 0
    %854 = vmatpush1.bf16.msra.mxu0 0
    %855 = vmatprep.subr.bf16.mxu0 0
    %856 = vmatpush1.bf16.msra.mxu0 %v837
    %857 = vmatprep.subr.bf16.mxu0 0
    %858 = vmatpush1.bf16.msra.mxu0 %v836
    %859 = vmatprep.subr.bf16.mxu0 0
    %860 = vmatpush2.bf16.msra.mxu0 0
    %861 = vmatprep.subr.bf16.mxu0 0
    %862 = vmatpush2.bf16.msra.mxu0 0
    %863 = vmatprep.subr.bf16.mxu0 0
    %864 = vmatpush2.bf16.msra.mxu0 0
    %865 = vmatprep.subr.bf16.mxu0 0
    %866 = vmatpush2.bf16.msra.mxu0 0
    %867 = vmatprep.subr.bf16.mxu0 0
    %868 = vmatpush2.bf16.msra.mxu0 0
    %869 = vmatprep.subr.bf16.mxu0 0
    %870 = vmatpush2.bf16.msra.mxu0 0
    %871 = vmatprep.subr.bf16.mxu0 0
    %872 = vmatpush2.bf16.msra.mxu0 0
    %873 = vmatprep.subr.bf16.mxu0 0
    %874 = vmatpush2.bf16.msra.mxu0 0
    %875 = vmatprep.mubr.bf16.mxu0 0
    %876 = vmatmul.mubr.bf16.gmra.mxu0 %v841
    %v877 = vpop.f32.mrf.mxu0
    %v878 = vadd.f32 0.0, %v877
    %v879 = vpop.f32.mrf.mxu0
    %v880 = vpop.f32.mrf.mxu0
    %v881 = vadd.f32 0.0, %v880
    %v882 = vpop.f32.mrf.mxu0
    %883 = vdwg.mxu0
    %v884 = vadd.f32 %v800, %v878
    %v885 = vadd.f32 %v801, %v881
    %v886 = vld [vmem:[#allocation10] sm:$0x1]
    %v888 = vlaneseq
    %v889 = vshrl.u32 %v888, 7
    %v890 = vsub.s32 0, %v889
    %v891 = vrot.slane %v886, %v890
    %v893 = vmul.f32 %v884, %v891
    %v894 = vmul.f32 %v885, %v891
    %v895 = vld [vmem:[#allocation11] sm:$0x1]
    %v897 = vlaneseq
    %v898 = vshrl.u32 %v897, 7
    %v899 = vsub.s32 0, %v898
    %v900 = vrot.slane %v895, %v899
    %v902 = vadd.f32 %v893, %v900
    %v903 = vadd.f32 %v894, %v900
    %v904 = vmax.f32 %v902, 0.0
    %v905 = vmax.f32 %v903, 0.0
    %v906 = vrot.slane %v904, 6
    %v907 = vrot.slane %v905, 6
    %v908 = vsel %vm493, %v906, %v907
    %v909 = vsel %vm493, %v907, %v906
    %v910 = vmul.f32 %v909, %v501
    %v911 = vmul.f32 %v908, %v506
    %v912 = vpack.c.bf16 %v911, %v910
    %s913 = scalar_lea.vmem %s4, 80
    %v914 = vld [vmem:[%s913] sm:$0xf]
    %v915 = vld [vmem:[%s913 + $0x4] sm:$0xf]
    %v916 = vld [vmem:[%s913 + $0x8] sm:$0xf]
    %v917 = vld [vmem:[%s913 + $0xc] sm:$0xf]
    %v918 = vrot.slane %v904, 7
    %v919 = vrot.slane %v905, 7
    %v920 = vsel %vm517, %v918, %v919
    %v921 = vsel %vm517, %v919, %v918
    %v922 = vmul.f32 %v921, %v526
    %v923 = vmul.f32 %v920, %v531
    %v924 = vpack.c.bf16 %v923, %v922
    %s925 = scalar_lea.vmem %s4, 96
    %v926 = vld [vmem:[%s925] sm:$0xf]
    %v927 = vld [vmem:[%s925 + $0x4] sm:$0xf]
    %v928 = vld [vmem:[%s925 + $0x8] sm:$0xf]
    %v929 = vld [vmem:[%s925 + $0xc] sm:$0xf]
    %v934 = vunpack.c.l.b16 %v926
    %v935 = vunpack.c.l.b16 %v927
    %v936 = vunpack.c.l.b16 %v928
    %v937 = vunpack.c.l.b16 %v929
    %v938 = vpack.c.b16 %v935, %v934
    %v939 = vpack.c.b16 %v937, %v936
    %v943 = vsel %vm553, %v924, 0
    %945 = vmatprep.subr.bf16.mxu0 0
    %946 = vmatpush1.bf16.msra.mxu0 0
    %947 = vmatprep.subr.bf16.mxu0 0
    %948 = vmatpush1.bf16.msra.mxu0 0
    %949 = vmatprep.subr.bf16.mxu0 0
    %950 = vmatpush1.bf16.msra.mxu0 0
    %951 = vmatprep.subr.bf16.mxu0 0
    %952 = vmatpush1.bf16.msra.mxu0 0
    %953 = vmatprep.subr.bf16.mxu0 0
    %954 = vmatpush1.bf16.msra.mxu0 0
    %955 = vmatprep.subr.bf16.mxu0 0
    %956 = vmatpush1.bf16.msra.mxu0 0
    %957 = vmatprep.subr.bf16.mxu0 0
    %958 = vmatpush1.bf16.msra.mxu0 %v939
    %959 = vmatprep.subr.bf16.mxu0 0
    %960 = vmatpush1.bf16.msra.mxu0 %v938
    %961 = vmatprep.subr.bf16.mxu0 0
    %962 = vmatpush2.bf16.msra.mxu0 0
    %963 = vmatprep.subr.bf16.mxu0 0
    %964 = vmatpush2.bf16.msra.mxu0 0
    %965 = vmatprep.subr.bf16.mxu0 0
    %966 = vmatpush2.bf16.msra.mxu0 0
    %967 = vmatprep.subr.bf16.mxu0 0
    %968 = vmatpush2.bf16.msra.mxu0 0
    %969 = vmatprep.subr.bf16.mxu0 0
    %970 = vmatpush2.bf16.msra.mxu0 0
    %971 = vmatprep.subr.bf16.mxu0 0
    %972 = vmatpush2.bf16.msra.mxu0 0
    %973 = vmatprep.subr.bf16.mxu0 0
    %974 = vmatpush2.bf16.msra.mxu0 0
    %975 = vmatprep.subr.bf16.mxu0 0
    %976 = vmatpush2.bf16.msra.mxu0 0
    %977 = vmatprep.mubr.bf16.mxu0 0
    %978 = vmatmul.mubr.bf16.gmra.mxu0 %v943
    %v979 = vpop.f32.mrf.mxu0
    %v980 = vadd.f32 0.0, %v979
    %v981 = vpop.f32.mrf.mxu0
    %v982 = vpop.f32.mrf.mxu0
    %v983 = vadd.f32 0.0, %v982
    %v984 = vpop.f32.mrf.mxu0
    %985 = vdwg.mxu0
    %v990 = vunpack.c.l.b16 %v914
    %v991 = vunpack.c.l.b16 %v915
    %v992 = vunpack.c.l.b16 %v916
    %v993 = vunpack.c.l.b16 %v917
    %v994 = vpack.c.b16 %v991, %v990
    %v995 = vpack.c.b16 %v993, %v992
    %v999 = vsel %vm553, %v912, 0
    %1001 = vmatprep.subr.bf16.mxu0 0
    %1002 = vmatpush1.bf16.msra.mxu0 0
    %1003 = vmatprep.subr.bf16.mxu0 0
    %1004 = vmatpush1.bf16.msra.mxu0 0
    %1005 = vmatprep.subr.bf16.mxu0 0
    %1006 = vmatpush1.bf16.msra.mxu0 0
    %1007 = vmatprep.subr.bf16.mxu0 0
    %1008 = vmatpush1.bf16.msra.mxu0 0
    %1009 = vmatprep.subr.bf16.mxu0 0
    %1010 = vmatpush1.bf16.msra.mxu0 0
    %1011 = vmatprep.subr.bf16.mxu0 0
    %1012 = vmatpush1.bf16.msra.mxu0 0
    %1013 = vmatprep.subr.bf16.mxu0 0
    %1014 = vmatpush1.bf16.msra.mxu0 %v995
    %1015 = vmatprep.subr.bf16.mxu0 0
    %1016 = vmatpush1.bf16.msra.mxu0 %v994
    %1017 = vmatprep.subr.bf16.mxu0 0
    %1018 = vmatpush2.bf16.msra.mxu0 0
    %1019 = vmatprep.subr.bf16.mxu0 0
    %1020 = vmatpush2.bf16.msra.mxu0 0
    %1021 = vmatprep.subr.bf16.mxu0 0
    %1022 = vmatpush2.bf16.msra.mxu0 0
    %1023 = vmatprep.subr.bf16.mxu0 0
    %1024 = vmatpush2.bf16.msra.mxu0 0
    %1025 = vmatprep.subr.bf16.mxu0 0
    %1026 = vmatpush2.bf16.msra.mxu0 0
    %1027 = vmatprep.subr.bf16.mxu0 0
    %1028 = vmatpush2.bf16.msra.mxu0 0
    %1029 = vmatprep.subr.bf16.mxu0 0
    %1030 = vmatpush2.bf16.msra.mxu0 0
    %1031 = vmatprep.subr.bf16.mxu0 0
    %1032 = vmatpush2.bf16.msra.mxu0 0
    %1033 = vmatprep.mubr.bf16.mxu0 0
    %1034 = vmatmul.mubr.bf16.gmra.mxu0 %v999
    %v1035 = vpop.f32.mrf.mxu0
    %v1036 = vadd.f32 %v980, %v1035
    %v1037 = vpop.f32.mrf.mxu0
    %v1038 = vpop.f32.mrf.mxu0
    %v1039 = vadd.f32 %v983, %v1038
    %v1040 = vpop.f32.mrf.mxu0
    %1041 = vdwg.mxu0
    %v1042 = vpack.c.bf16 %v905, %v904
    %s1043 = scalar_lea.vmem %s4, 112
    %v1044 = vld [vmem:[%s1043] sm:$0xf]
    %v1045 = vld [vmem:[%s1043 + $0x4] sm:$0xf]
    %v1046 = vld [vmem:[%s1043 + $0x8] sm:$0xf]
    %v1047 = vld [vmem:[%s1043 + $0xc] sm:$0xf]
    %v1052 = vunpack.c.l.b16 %v1044
    %v1053 = vunpack.c.l.b16 %v1045
    %v1054 = vunpack.c.l.b16 %v1046
    %v1055 = vunpack.c.l.b16 %v1047
    %v1056 = vpack.c.b16 %v1053, %v1052
    %v1057 = vpack.c.b16 %v1055, %v1054
    %v1061 = vsel %vm553, %v1042, 0
    %1063 = vmatprep.subr.bf16.mxu0 0
    %1064 = vmatpush1.bf16.msra.mxu0 0
    %1065 = vmatprep.subr.bf16.mxu0 0
    %1066 = vmatpush1.bf16.msra.mxu0 0
    %1067 = vmatprep.subr.bf16.mxu0 0
    %1068 = vmatpush1.bf16.msra.mxu0 0
    %1069 = vmatprep.subr.bf16.mxu0 0
    %1070 = vmatpush1.bf16.msra.mxu0 0
    %1071 = vmatprep.subr.bf16.mxu0 0
    %1072 = vmatpush1.bf16.msra.mxu0 0
    %1073 = vmatprep.subr.bf16.mxu0 0
    %1074 = vmatpush1.bf16.msra.mxu0 0
    %1075 = vmatprep.subr.bf16.mxu0 0
    %1076 = vmatpush1.bf16.msra.mxu0 %v1057
    %1077 = vmatprep.subr.bf16.mxu0 0
    %1078 = vmatpush1.bf16.msra.mxu0 %v1056
    %1079 = vmatprep.subr.bf16.mxu0 0
    %1080 = vmatpush2.bf16.msra.mxu0 0
    %1081 = vmatprep.subr.bf16.mxu0 0
    %1082 = vmatpush2.bf16.msra.mxu0 0
    %1083 = vmatprep.subr.bf16.mxu0 0
    %1084 = vmatpush2.bf16.msra.mxu0 0
    %1085 = vmatprep.subr.bf16.mxu0 0
    %1086 = vmatpush2.bf16.msra.mxu0 0
    %1087 = vmatprep.subr.bf16.mxu0 0
    %1088 = vmatpush2.bf16.msra.mxu0 0
    %1089 = vmatprep.subr.bf16.mxu0 0
    %1090 = vmatpush2.bf16.msra.mxu0 0
    %1091 = vmatprep.subr.bf16.mxu0 0
    %1092 = vmatpush2.bf16.msra.mxu0 0
    %1093 = vmatprep.subr.bf16.mxu0 0
    %1094 = vmatpush2.bf16.msra.mxu0 0
    %1095 = vmatprep.mubr.bf16.mxu0 0
    %1096 = vmatmul.mubr.bf16.gmra.mxu0 %v1061
    %v1097 = vpop.f32.mrf.mxu0
    %v1098 = vadd.f32 0.0, %v1097
    %v1099 = vpop.f32.mrf.mxu0
    %v1100 = vpop.f32.mrf.mxu0
    %v1101 = vadd.f32 0.0, %v1100
    %v1102 = vpop.f32.mrf.mxu0
    %1103 = vdwg.mxu0
    %v1104 = vadd.f32 %v1036, %v1098
    %v1105 = vadd.f32 %v1039, %v1101
    %v1106 = vrot.slane %v904, 1
    %v1107 = vrot.slane %v905, 1
    %v1108 = vsel %vm720, %v1106, %v1107
    %v1109 = vsel %vm720, %v1107, %v1106
    %v1110 = vmul.f32 %v1108, %v729
    %v1111 = vmul.f32 %v1109, %v734
    %v1112 = vpack.c.bf16 %v1111, %v1110
    %s1113 = scalar_lea.vmem %s4, 128
    %v1114 = vld [vmem:[%s1113] sm:$0xf]
    %v1115 = vld [vmem:[%s1113 + $0x4] sm:$0xf]
    %v1116 = vld [vmem:[%s1113 + $0x8] sm:$0xf]
    %v1117 = vld [vmem:[%s1113 + $0xc] sm:$0xf]
    %v1122 = vunpack.c.l.b16 %v1114
    %v1123 = vunpack.c.l.b16 %v1115
    %v1124 = vunpack.c.l.b16 %v1116
    %v1125 = vunpack.c.l.b16 %v1117
    %v1126 = vpack.c.b16 %v1123, %v1122
    %v1127 = vpack.c.b16 %v1125, %v1124
    %v1131 = vsel %vm553, %v1112, 0
    %1133 = vmatprep.subr.bf16.mxu0 0
    %1134 = vmatpush1.bf16.msra.mxu0 0
    %1135 = vmatprep.subr.bf16.mxu0 0
    %1136 = vmatpush1.bf16.msra.mxu0 0
    %1137 = vmatprep.subr.bf16.mxu0 0
    %1138 = vmatpush1.bf16.msra.mxu0 0
    %1139 = vmatprep.subr.bf16.mxu0 0
    %1140 = vmatpush1.bf16.msra.mxu0 0
    %1141 = vmatprep.subr.bf16.mxu0 0
    %1142 = vmatpush1.bf16.msra.mxu0 0
    %1143 = vmatprep.subr.bf16.mxu0 0
    %1144 = vmatpush1.bf16.msra.mxu0 0
    %1145 = vmatprep.subr.bf16.mxu0 0
    %1146 = vmatpush1.bf16.msra.mxu0 %v1127
    %1147 = vmatprep.subr.bf16.mxu0 0
    %1148 = vmatpush1.bf16.msra.mxu0 %v1126
    %1149 = vmatprep.subr.bf16.mxu0 0
    %1150 = vmatpush2.bf16.msra.mxu0 0
    %1151 = vmatprep.subr.bf16.mxu0 0
    %1152 = vmatpush2.bf16.msra.mxu0 0
    %1153 = vmatprep.subr.bf16.mxu0 0
    %1154 = vmatpush2.bf16.msra.mxu0 0
    %1155 = vmatprep.subr.bf16.mxu0 0
    %1156 = vmatpush2.bf16.msra.mxu0 0
    %1157 = vmatprep.subr.bf16.mxu0 0
    %1158 = vmatpush2.bf16.msra.mxu0 0
    %1159 = vmatprep.subr.bf16.mxu0 0
    %1160 = vmatpush2.bf16.msra.mxu0 0
    %1161 = vmatprep.subr.bf16.mxu0 0
    %1162 = vmatpush2.bf16.msra.mxu0 0
    %1163 = vmatprep.subr.bf16.mxu0 0
    %1164 = vmatpush2.bf16.msra.mxu0 0
    %1165 = vmatprep.mubr.bf16.mxu0 0
    %1166 = vmatmul.mubr.bf16.gmra.mxu0 %v1131
    %v1167 = vpop.f32.mrf.mxu0
    %v1168 = vadd.f32 0.0, %v1167
    %v1169 = vpop.f32.mrf.mxu0
    %v1170 = vpop.f32.mrf.mxu0
    %v1171 = vadd.f32 0.0, %v1170
    %v1172 = vpop.f32.mrf.mxu0
    %1173 = vdwg.mxu0
    %v1174 = vadd.f32 %v1104, %v1168
    %v1175 = vadd.f32 %v1105, %v1171
    %v1176 = vrot.slane %v904, 2
    %v1177 = vrot.slane %v905, 2
    %v1178 = vsel %vm804, %v1176, %v1177
    %v1179 = vsel %vm804, %v1177, %v1176
    %v1180 = vmul.f32 %v1178, %v813
    %v1181 = vmul.f32 %v1179, %v818
    %v1182 = vpack.c.bf16 %v1181, %v1180
    %s1183 = scalar_lea.vmem %s4, 144
    %v1184 = vld [vmem:[%s1183] sm:$0xf]
    %v1185 = vld [vmem:[%s1183 + $0x4] sm:$0xf]
    %v1186 = vld [vmem:[%s1183 + $0x8] sm:$0xf]
    %v1187 = vld [vmem:[%s1183 + $0xc] sm:$0xf]
    %v1192 = vunpack.c.l.b16 %v1184
    %v1193 = vunpack.c.l.b16 %v1185
    %v1194 = vunpack.c.l.b16 %v1186
    %v1195 = vunpack.c.l.b16 %v1187
    %v1196 = vpack.c.b16 %v1193, %v1192
    %v1197 = vpack.c.b16 %v1195, %v1194
    %v1201 = vsel %vm553, %v1182, 0
    %1203 = vmatprep.subr.bf16.mxu0 0
    %1204 = vmatpush1.bf16.msra.mxu0 0
    %1205 = vmatprep.subr.bf16.mxu0 0
    %1206 = vmatpush1.bf16.msra.mxu0 0
    %1207 = vmatprep.subr.bf16.mxu0 0
    %1208 = vmatpush1.bf16.msra.mxu0 0
    %1209 = vmatprep.subr.bf16.mxu0 0
    %1210 = vmatpush1.bf16.msra.mxu0 0
    %1211 = vmatprep.subr.bf16.mxu0 0
    %1212 = vmatpush1.bf16.msra.mxu0 0
    %1213 = vmatprep.subr.bf16.mxu0 0
    %1214 = vmatpush1.bf16.msra.mxu0 0
    %1215 = vmatprep.subr.bf16.mxu0 0
    %1216 = vmatpush1.bf16.msra.mxu0 %v1197
    %1217 = vmatprep.subr.bf16.mxu0 0
    %1218 = vmatpush1.bf16.msra.mxu0 %v1196
    %1219 = vmatprep.subr.bf16.mxu0 0
    %1220 = vmatpush2.bf16.msra.mxu0 0
    %1221 = vmatprep.subr.bf16.mxu0 0
    %1222 = vmatpush2.bf16.msra.mxu0 0
    %1223 = vmatprep.subr.bf16.mxu0 0
    %1224 = vmatpush2.bf16.msra.mxu0 0
    %1225 = vmatprep.subr.bf16.mxu0 0
    %1226 = vmatpush2.bf16.msra.mxu0 0
    %1227 = vmatprep.subr.bf16.mxu0 0
    %1228 = vmatpush2.bf16.msra.mxu0 0
    %1229 = vmatprep.subr.bf16.mxu0 0
    %1230 = vmatpush2.bf16.msra.mxu0 0
    %1231 = vmatprep.subr.bf16.mxu0 0
    %1232 = vmatpush2.bf16.msra.mxu0 0
    %1233 = vmatprep.subr.bf16.mxu0 0
    %1234 = vmatpush2.bf16.msra.mxu0 0
    %1235 = vmatprep.mubr.bf16.mxu0 0
    %1236 = vmatmul.mubr.bf16.gmra.mxu0 %v1201
    %v1237 = vpop.f32.mrf.mxu0
    %v1238 = vadd.f32 0.0, %v1237
    %v1239 = vpop.f32.mrf.mxu0
    %v1240 = vpop.f32.mrf.mxu0
    %v1241 = vadd.f32 0.0, %v1240
    %v1242 = vpop.f32.mrf.mxu0
    %1243 = vdwg.mxu0
    %v1244 = vadd.f32 %v1174, %v1238
    %v1245 = vadd.f32 %v1175, %v1241
    %s1246 = scalar_lea.vmem [#allocation10], 1
    %v1247 = vld [vmem:[%s1246] sm:$0x1]
    %v1249 = vlaneseq
    %v1250 = vshrl.u32 %v1249, 7
    %v1251 = vsub.s32 0, %v1250
    %v1252 = vrot.slane %v1247, %v1251
    %v1254 = vmul.f32 %v1244, %v1252
    %v1255 = vmul.f32 %v1245, %v1252
    %s1256 = scalar_lea.vmem [#allocation11], 1
    %v1257 = vld [vmem:[%s1256] sm:$0x1]
    %v1259 = vlaneseq
    %v1260 = vshrl.u32 %v1259, 7
    %v1261 = vsub.s32 0, %v1260
    %v1262 = vrot.slane %v1257, %v1261
    %v1264 = vadd.f32 %v1254, %v1262
    %v1265 = vadd.f32 %v1255, %v1262
    %v1266 = vmax.f32 %v1264, 0.0
    %v1267 = vmax.f32 %v1265, 0.0
    %v1268 = vrot.slane %v1266, 6
    %v1269 = vrot.slane %v1267, 6
    %v1270 = vsel %vm493, %v1268, %v1269
    %v1271 = vsel %vm493, %v1269, %v1268
    %v1272 = vmul.f32 %v1271, %v501
    %v1273 = vmul.f32 %v1270, %v506
    %v1274 = vpack.c.bf16 %v1273, %v1272
    %s1275 = scalar_lea.vmem %s4, 160
    %v1276 = vld [vmem:[%s1275] sm:$0xf]
    %v1277 = vld [vmem:[%s1275 + $0x4] sm:$0xf]
    %v1278 = vld [vmem:[%s1275 + $0x8] sm:$0xf]
    %v1279 = vld [vmem:[%s1275 + $0xc] sm:$0xf]
    %v1280 = vrot.slane %v1266, 7
    %v1281 = vrot.slane %v1267, 7
    %v1282 = vsel %vm517, %v1280, %v1281
    %v1283 = vsel %vm517, %v1281, %v1280
    %v1284 = vmul.f32 %v1283, %v526
    %v1285 = vmul.f32 %v1282, %v531
    %v1286 = vpack.c.bf16 %v1285, %v1284
    %s1287 = scalar_lea.vmem %s4, 176
    %v1288 = vld [vmem:[%s1287] sm:$0xf]
    %v1289 = vld [vmem:[%s1287 + $0x4] sm:$0xf]
    %v1290 = vld [vmem:[%s1287 + $0x8] sm:$0xf]
    %v1291 = vld [vmem:[%s1287 + $0xc] sm:$0xf]
    %v1296 = vunpack.c.l.b16 %v1288
    %v1297 = vunpack.c.l.b16 %v1289
    %v1298 = vunpack.c.l.b16 %v1290
    %v1299 = vunpack.c.l.b16 %v1291
    %v1300 = vpack.c.b16 %v1297, %v1296
    %v1301 = vpack.c.b16 %v1299, %v1298
    %v1305 = vsel %vm553, %v1286, 0
    %1307 = vmatprep.subr.bf16.mxu0 0
    %1308 = vmatpush1.bf16.msra.mxu0 0
    %1309 = vmatprep.subr.bf16.mxu0 0
    %1310 = vmatpush1.bf16.msra.mxu0 0
    %1311 = vmatprep.subr.bf16.mxu0 0
    %1312 = vmatpush1.bf16.msra.mxu0 0
    %1313 = vmatprep.subr.bf16.mxu0 0
    %1314 = vmatpush1.bf16.msra.mxu0 0
    %1315 = vmatprep.subr.bf16.mxu0 0
    %1316 = vmatpush1.bf16.msra.mxu0 0
    %1317 = vmatprep.subr.bf16.mxu0 0
    %1318 = vmatpush1.bf16.msra.mxu0 0
    %1319 = vmatprep.subr.bf16.mxu0 0
    %1320 = vmatpush1.bf16.msra.mxu0 %v1301
    %1321 = vmatprep.subr.bf16.mxu0 0
    %1322 = vmatpush1.bf16.msra.mxu0 %v1300
    %1323 = vmatprep.subr.bf16.mxu0 0
    %1324 = vmatpush2.bf16.msra.mxu0 0
    %1325 = vmatprep.subr.bf16.mxu0 0
    %1326 = vmatpush2.bf16.msra.mxu0 0
    %1327 = vmatprep.subr.bf16.mxu0 0
    %1328 = vmatpush2.bf16.msra.mxu0 0
    %1329 = vmatprep.subr.bf16.mxu0 0
    %1330 = vmatpush2.bf16.msra.mxu0 0
    %1331 = vmatprep.subr.bf16.mxu0 0
    %1332 = vmatpush2.bf16.msra.mxu0 0
    %1333 = vmatprep.subr.bf16.mxu0 0
    %1334 = vmatpush2.bf16.msra.mxu0 0
    %1335 = vmatprep.subr.bf16.mxu0 0
    %1336 = vmatpush2.bf16.msra.mxu0 0
    %1337 = vmatprep.subr.bf16.mxu0 0
    %1338 = vmatpush2.bf16.msra.mxu0 0
    %1339 = vmatprep.mubr.bf16.mxu0 0
    %1340 = vmatmul.mubr.bf16.gmra.mxu0 %v1305
    %v1341 = vpop.f32.mrf.mxu0
    %v1342 = vadd.f32 0.0, %v1341
    %v1343 = vpop.f32.mrf.mxu0
    %v1344 = vpop.f32.mrf.mxu0
    %v1345 = vadd.f32 0.0, %v1344
    %v1346 = vpop.f32.mrf.mxu0
    %1347 = vdwg.mxu0
    %v1352 = vunpack.c.l.b16 %v1276
    %v1353 = vunpack.c.l.b16 %v1277
    %v1354 = vunpack.c.l.b16 %v1278
    %v1355 = vunpack.c.l.b16 %v1279
    %v1356 = vpack.c.b16 %v1353, %v1352
    %v1357 = vpack.c.b16 %v1355, %v1354
    %v1361 = vsel %vm553, %v1274, 0
    %1363 = vmatprep.subr.bf16.mxu0 0
    %1364 = vmatpush1.bf16.msra.mxu0 0
    %1365 = vmatprep.subr.bf16.mxu0 0
    %1366 = vmatpush1.bf16.msra.mxu0 0
    %1367 = vmatprep.subr.bf16.mxu0 0
    %1368 = vmatpush1.bf16.msra.mxu0 0
    %1369 = vmatprep.subr.bf16.mxu0 0
    %1370 = vmatpush1.bf16.msra.mxu0 0
    %1371 = vmatprep.subr.bf16.mxu0 0
    %1372 = vmatpush1.bf16.msra.mxu0 0
    %1373 = vmatprep.subr.bf16.mxu0 0
    %1374 = vmatpush1.bf16.msra.mxu0 0
    %1375 = vmatprep.subr.bf16.mxu0 0
    %1376 = vmatpush1.bf16.msra.mxu0 %v1357
    %1377 = vmatprep.subr.bf16.mxu0 0
    %1378 = vmatpush1.bf16.msra.mxu0 %v1356
    %1379 = vmatprep.subr.bf16.mxu0 0
    %1380 = vmatpush2.bf16.msra.mxu0 0
    %1381 = vmatprep.subr.bf16.mxu0 0
    %1382 = vmatpush2.bf16.msra.mxu0 0
    %1383 = vmatprep.subr.bf16.mxu0 0
    %1384 = vmatpush2.bf16.msra.mxu0 0
    %1385 = vmatprep.subr.bf16.mxu0 0
    %1386 = vmatpush2.bf16.msra.mxu0 0
    %1387 = vmatprep.subr.bf16.mxu0 0
    %1388 = vmatpush2.bf16.msra.mxu0 0
    %1389 = vmatprep.subr.bf16.mxu0 0
    %1390 = vmatpush2.bf16.msra.mxu0 0
    %1391 = vmatprep.subr.bf16.mxu0 0
    %1392 = vmatpush2.bf16.msra.mxu0 0
    %1393 = vmatprep.subr.bf16.mxu0 0
    %1394 = vmatpush2.bf16.msra.mxu0 0
    %1395 = vmatprep.mubr.bf16.mxu0 0
    %1396 = vmatmul.mubr.bf16.gmra.mxu0 %v1361
    %v1397 = vpop.f32.mrf.mxu0
    %v1398 = vadd.f32 %v1342, %v1397
    %v1399 = vpop.f32.mrf.mxu0
    %v1400 = vpop.f32.mrf.mxu0
    %v1401 = vadd.f32 %v1345, %v1400
    %v1402 = vpop.f32.mrf.mxu0
    %1403 = vdwg.mxu0
    %v1404 = vpack.c.bf16 %v1267, %v1266
    %s1405 = scalar_lea.vmem %s4, 192
    %v1406 = vld [vmem:[%s1405] sm:$0xf]
    %v1407 = vld [vmem:[%s1405 + $0x4] sm:$0xf]
    %v1408 = vld [vmem:[%s1405 + $0x8] sm:$0xf]
    %v1409 = vld [vmem:[%s1405 + $0xc] sm:$0xf]
    %v1414 = vunpack.c.l.b16 %v1406
    %v1415 = vunpack.c.l.b16 %v1407
    %v1416 = vunpack.c.l.b16 %v1408
    %v1417 = vunpack.c.l.b16 %v1409
    %v1418 = vpack.c.b16 %v1415, %v1414
    %v1419 = vpack.c.b16 %v1417, %v1416
    %v1423 = vsel %vm553, %v1404, 0
    %1425 = vmatprep.subr.bf16.mxu0 0
    %1426 = vmatpush1.bf16.msra.mxu0 0
    %1427 = vmatprep.subr.bf16.mxu0 0
    %1428 = vmatpush1.bf16.msra.mxu0 0
    %1429 = vmatprep.subr.bf16.mxu0 0
    %1430 = vmatpush1.bf16.msra.mxu0 0
    %1431 = vmatprep.subr.bf16.mxu0 0
    %1432 = vmatpush1.bf16.msra.mxu0 0
    %1433 = vmatprep.subr.bf16.mxu0 0
    %1434 = vmatpush1.bf16.msra.mxu0 0
    %1435 = vmatprep.subr.bf16.mxu0 0
    %1436 = vmatpush1.bf16.msra.mxu0 0
    %1437 = vmatprep.subr.bf16.mxu0 0
    %1438 = vmatpush1.bf16.msra.mxu0 %v1419
    %1439 = vmatprep.subr.bf16.mxu0 0
    %1440 = vmatpush1.bf16.msra.mxu0 %v1418
    %1441 = vmatprep.subr.bf16.mxu0 0
    %1442 = vmatpush2.bf16.msra.mxu0 0
    %1443 = vmatprep.subr.bf16.mxu0 0
    %1444 = vmatpush2.bf16.msra.mxu0 0
    %1445 = vmatprep.subr.bf16.mxu0 0
    %1446 = vmatpush2.bf16.msra.mxu0 0
    %1447 = vmatprep.subr.bf16.mxu0 0
    %1448 = vmatpush2.bf16.msra.mxu0 0
    %1449 = vmatprep.subr.bf16.mxu0 0
    %1450 = vmatpush2.bf16.msra.mxu0 0
    %1451 = vmatprep.subr.bf16.mxu0 0
    %1452 = vmatpush2.bf16.msra.mxu0 0
    %1453 = vmatprep.subr.bf16.mxu0 0
    %1454 = vmatpush2.bf16.msra.mxu0 0
    %1455 = vmatprep.subr.bf16.mxu0 0
    %1456 = vmatpush2.bf16.msra.mxu0 0
    %1457 = vmatprep.mubr.bf16.mxu0 0
    %1458 = vmatmul.mubr.bf16.gmra.mxu0 %v1423
    %v1459 = vpop.f32.mrf.mxu0
    %v1460 = vadd.f32 0.0, %v1459
    %v1461 = vpop.f32.mrf.mxu0
    %v1462 = vpop.f32.mrf.mxu0
    %v1463 = vadd.f32 0.0, %v1462
    %v1464 = vpop.f32.mrf.mxu0
    %1465 = vdwg.mxu0
    %v1466 = vadd.f32 %v1398, %v1460
    %v1467 = vadd.f32 %v1401, %v1463
    %v1468 = vrot.slane %v1266, 1
    %v1469 = vrot.slane %v1267, 1
    %v1470 = vsel %vm720, %v1468, %v1469
    %v1471 = vsel %vm720, %v1469, %v1468
    %v1472 = vmul.f32 %v1470, %v729
    %v1473 = vmul.f32 %v1471, %v734
    %v1474 = vpack.c.bf16 %v1473, %v1472
    %s1475 = scalar_lea.vmem %s4, 208
    %v1476 = vld [vmem:[%s1475] sm:$0xf]
    %v1477 = vld [vmem:[%s1475 + $0x4] sm:$0xf]
    %v1478 = vld [vmem:[%s1475 + $0x8] sm:$0xf]
    %v1479 = vld [vmem:[%s1475 + $0xc] sm:$0xf]
    %v1484 = vunpack.c.l.b16 %v1476
    %v1485 = vunpack.c.l.b16 %v1477
    %v1486 = vunpack.c.l.b16 %v1478
    %v1487 = vunpack.c.l.b16 %v1479
    %v1488 = vpack.c.b16 %v1485, %v1484
    %v1489 = vpack.c.b16 %v1487, %v1486
    %v1493 = vsel %vm553, %v1474, 0
    %1495 = vmatprep.subr.bf16.mxu0 0
    %1496 = vmatpush1.bf16.msra.mxu0 0
    %1497 = vmatprep.subr.bf16.mxu0 0
    %1498 = vmatpush1.bf16.msra.mxu0 0
    %1499 = vmatprep.subr.bf16.mxu0 0
    %1500 = vmatpush1.bf16.msra.mxu0 0
    %1501 = vmatprep.subr.bf16.mxu0 0
    %1502 = vmatpush1.bf16.msra.mxu0 0
    %1503 = vmatprep.subr.bf16.mxu0 0
    %1504 = vmatpush1.bf16.msra.mxu0 0
    %1505 = vmatprep.subr.bf16.mxu0 0
    %1506 = vmatpush1.bf16.msra.mxu0 0
    %1507 = vmatprep.subr.bf16.mxu0 0
    %1508 = vmatpush1.bf16.msra.mxu0 %v1489
    %1509 = vmatprep.subr.bf16.mxu0 0
    %1510 = vmatpush1.bf16.msra.mxu0 %v1488
    %1511 = vmatprep.subr.bf16.mxu0 0
    %1512 = vmatpush2.bf16.msra.mxu0 0
    %1513 = vmatprep.subr.bf16.mxu0 0
    %1514 = vmatpush2.bf16.msra.mxu0 0
    %1515 = vmatprep.subr.bf16.mxu0 0
    %1516 = vmatpush2.bf16.msra.mxu0 0
    %1517 = vmatprep.subr.bf16.mxu0 0
    %1518 = vmatpush2.bf16.msra.mxu0 0
    %1519 = vmatprep.subr.bf16.mxu0 0
    %1520 = vmatpush2.bf16.msra.mxu0 0
    %1521 = vmatprep.subr.bf16.mxu0 0
    %1522 = vmatpush2.bf16.msra.mxu0 0
    %1523 = vmatprep.subr.bf16.mxu0 0
    %1524 = vmatpush2.bf16.msra.mxu0 0
    %1525 = vmatprep.subr.bf16.mxu0 0
    %1526 = vmatpush2.bf16.msra.mxu0 0
    %1527 = vmatprep.mubr.bf16.mxu0 0
    %1528 = vmatmul.mubr.bf16.gmra.mxu0 %v1493
    %v1529 = vpop.f32.mrf.mxu0
    %v1530 = vadd.f32 0.0, %v1529
    %v1531 = vpop.f32.mrf.mxu0
    %v1532 = vpop.f32.mrf.mxu0
    %v1533 = vadd.f32 0.0, %v1532
    %v1534 = vpop.f32.mrf.mxu0
    %1535 = vdwg.mxu0
    %v1536 = vadd.f32 %v1466, %v1530
    %v1537 = vadd.f32 %v1467, %v1533
    %v1538 = vrot.slane %v1266, 2
    %v1539 = vrot.slane %v1267, 2
    %v1540 = vsel %vm804, %v1538, %v1539
    %v1541 = vsel %vm804, %v1539, %v1538
    %v1542 = vmul.f32 %v1540, %v813
    %v1543 = vmul.f32 %v1541, %v818
    %v1544 = vpack.c.bf16 %v1543, %v1542
    %s1545 = scalar_lea.vmem %s4, 224
    %v1546 = vld [vmem:[%s1545] sm:$0xf]
    %v1547 = vld [vmem:[%s1545 + $0x4] sm:$0xf]
    %v1548 = vld [vmem:[%s1545 + $0x8] sm:$0xf]
    %v1549 = vld [vmem:[%s1545 + $0xc] sm:$0xf]
    %v1554 = vunpack.c.l.b16 %v1546
    %v1555 = vunpack.c.l.b16 %v1547
    %v1556 = vunpack.c.l.b16 %v1548
    %v1557 = vunpack.c.l.b16 %v1549
    %v1558 = vpack.c.b16 %v1555, %v1554
    %v1559 = vpack.c.b16 %v1557, %v1556
    %v1563 = vsel %vm553, %v1544, 0
    %1565 = vmatprep.subr.bf16.mxu0 0
    %1566 = vmatpush1.bf16.msra.mxu0 0
    %1567 = vmatprep.subr.bf16.mxu0 0
    %1568 = vmatpush1.bf16.msra.mxu0 0
    %1569 = vmatprep.subr.bf16.mxu0 0
    %1570 = vmatpush1.bf16.msra.mxu0 0
    %1571 = vmatprep.subr.bf16.mxu0 0
    %1572 = vmatpush1.bf16.msra.mxu0 0
    %1573 = vmatprep.subr.bf16.mxu0 0
    %1574 = vmatpush1.bf16.msra.mxu0 0
    %1575 = vmatprep.subr.bf16.mxu0 0
    %1576 = vmatpush1.bf16.msra.mxu0 0
    %1577 = vmatprep.subr.bf16.mxu0 0
    %1578 = vmatpush1.bf16.msra.mxu0 %v1559
    %1579 = vmatprep.subr.bf16.mxu0 0
    %1580 = vmatpush1.bf16.msra.mxu0 %v1558
    %1581 = vmatprep.subr.bf16.mxu0 0
    %1582 = vmatpush2.bf16.msra.mxu0 0
    %1583 = vmatprep.subr.bf16.mxu0 0
    %1584 = vmatpush2.bf16.msra.mxu0 0
    %1585 = vmatprep.subr.bf16.mxu0 0
    %1586 = vmatpush2.bf16.msra.mxu0 0
    %1587 = vmatprep.subr.bf16.mxu0 0
    %1588 = vmatpush2.bf16.msra.mxu0 0
    %1589 = vmatprep.subr.bf16.mxu0 0
    %1590 = vmatpush2.bf16.msra.mxu0 0
    %1591 = vmatprep.subr.bf16.mxu0 0
    %1592 = vmatpush2.bf16.msra.mxu0 0
    %1593 = vmatprep.subr.bf16.mxu0 0
    %1594 = vmatpush2.bf16.msra.mxu0 0
    %1595 = vmatprep.subr.bf16.mxu0 0
    %1596 = vmatpush2.bf16.msra.mxu0 0
    %1597 = vmatprep.mubr.bf16.mxu0 0
    %1598 = vmatmul.mubr.bf16.gmra.mxu0 %v1563
    %v1599 = vpop.f32.mrf.mxu0
    %v1600 = vadd.f32 0.0, %v1599
    %v1601 = vpop.f32.mrf.mxu0
    %v1602 = vpop.f32.mrf.mxu0
    %v1603 = vadd.f32 0.0, %v1602
    %v1604 = vpop.f32.mrf.mxu0
    %1605 = vdwg.mxu0
    %v1606 = vadd.f32 %v1536, %v1600
    %v1607 = vadd.f32 %v1537, %v1603
    %s1608 = scalar_lea.vmem [#allocation10], 2
    %v1609 = vld [vmem:[%s1608] sm:$0x1]
    %v1611 = vlaneseq
    %v1612 = vshrl.u32 %v1611, 7
    %v1613 = vsub.s32 0, %v1612
    %v1614 = vrot.slane %v1609, %v1613
    %v1616 = vmul.f32 %v1606, %v1614
    %v1617 = vmul.f32 %v1607, %v1614
    %s1618 = scalar_lea.vmem [#allocation11], 2
    %v1619 = vld [vmem:[%s1618] sm:$0x1]
    %v1621 = vlaneseq
    %v1622 = vshrl.u32 %v1621, 7
    %v1623 = vsub.s32 0, %v1622
    %v1624 = vrot.slane %v1619, %v1623
    %v1626 = vadd.f32 %v1616, %v1624
    %v1627 = vadd.f32 %v1617, %v1624
    %v1628 = vmax.f32 %v1626, 0.0
    %v1629 = vmax.f32 %v1627, 0.0
    %v1630 = vpack.c.bf16 %v1629, %v1628
    %v1631 = vld [vmem:[#allocation13] sm:$0xf]
    %v1632 = vld [vmem:[#allocation13 + $0x4] sm:$0xf]
    %v1633 = vld [vmem:[#allocation13 + $0x8] sm:$0xf]
    %v1634 = vld [vmem:[#allocation13 + $0xc] sm:$0xf]
    %v1635 = vld [vmem:[%s9] sm:$0x1]
    %v1637 = vlaneseq
    %v1638 = vshrl.u32 %v1637, 7
    %v1639 = vsub.s32 0, %v1638
    %v1640 = vrot.slane %v1635, %v1639
    %v1646 = vunpack.c.l.b16 %v1631
    %v1647 = vunpack.c.l.b16 %v1632
    %v1648 = vunpack.c.l.b16 %v1633
    %v1649 = vunpack.c.l.b16 %v1634
    %v1650 = vpack.c.b16 %v1647, %v1646
    %v1651 = vpack.c.b16 %v1649, %v1648
    %v1655 = vsel %vm553, %v1630, 0
    %1657 = vmatprep.subr.bf16.mxu0 0
    %1658 = vmatpush1.bf16.msra.mxu0 0
    %1659 = vmatprep.subr.bf16.mxu0 0
    %1660 = vmatpush1.bf16.msra.mxu0 0
    %1661 = vmatprep.subr.bf16.mxu0 0
    %1662 = vmatpush1.bf16.msra.mxu0 0
    %1663 = vmatprep.subr.bf16.mxu0 0
    %1664 = vmatpush1.bf16.msra.mxu0 0
    %1665 = vmatprep.subr.bf16.mxu0 0
    %1666 = vmatpush1.bf16.msra.mxu0 0
    %1667 = vmatprep.subr.bf16.mxu0 0
    %1668 = vmatpush1.bf16.msra.mxu0 0
    %1669 = vmatprep.subr.bf16.mxu0 0
    %1670 = vmatpush1.bf16.msra.mxu0 %v1651
    %1671 = vmatprep.subr.bf16.mxu0 0
    %1672 = vmatpush1.bf16.msra.mxu0 %v1650
    %1673 = vmatprep.subr.bf16.mxu0 0
    %1674 = vmatpush2.bf16.msra.mxu0 0
    %1675 = vmatprep.subr.bf16.mxu0 0
    %1676 = vmatpush2.bf16.msra.mxu0 0
    %1677 = vmatprep.subr.bf16.mxu0 0
    %1678 = vmatpush2.bf16.msra.mxu0 0
    %1679 = vmatprep.subr.bf16.mxu0 0
    %1680 = vmatpush2.bf16.msra.mxu0 0
    %1681 = vmatprep.subr.bf16.mxu0 0
    %1682 = vmatpush2.bf16.msra.mxu0 0
    %1683 = vmatprep.subr.bf16.mxu0 0
    %1684 = vmatpush2.bf16.msra.mxu0 0
    %1685 = vmatprep.subr.bf16.mxu0 0
    %1686 = vmatpush2.bf16.msra.mxu0 0
    %1687 = vmatprep.subr.bf16.mxu0 0
    %1688 = vmatpush2.bf16.msra.mxu0 0
    %1689 = vmatprep.mubr.bf16.mxu0 0
    %1690 = vmatmul.mubr.bf16.gmra.mxu0 %v1655
    %v1691 = vpop.f32.mrf.mxu0
    %v1692 = vadd.f32 %v1640, %v1691
    %v1693 = vpop.f32.mrf.mxu0
    %v1694 = vpop.f32.mrf.mxu0
    %v1695 = vadd.f32 %v1640, %v1694
    %v1696 = vpop.f32.mrf.mxu0
    %1697 = vdwg.mxu0
    %v1698 = vld [vmem:[%s10] sm:$0xff]
    %s1699 = sld [smem:[#allocation2]]
    %v1700 = vstv %s1699
    %v1701 = vmul.f32 %v1700, %v1698
    %v1702 = vadd.f32 %v1692, %v1701
    %v1703 = vadd.f32 %v1695, %v1701
    %v1704 = vlaneseq
    %v1705 = vand.u32 %v1704, 127
    %vm1706 = vcmp.eq.s32.totalorder %v281, %v1705
    %v1707 = vsel %vm1706, -50000.0, 0.0
    %v1708 = vld [vmem:[%s1] sm:$0x3]
    %v1709 = vsub.f32 %v1708, 1.0
    %v1710 = vmul.f32 %v1709, 1e+09
    %v1711 = vld [vmem:[#allocation14] sm:$0xff]
    %v1712 = vld [vmem:[#allocation14 + $0x8] sm:$0xff]
    %v1713 = vld [vmem:[#allocation14 + $0x10] sm:$0xff]
    %v1714 = vld [vmem:[#allocation14 + $0x18] sm:$0xff]
    %v1715 = vld [vmem:[#allocation16] sm:$0x1]
    %v1716 = vld [vmem:[#allocation17] sm:$0x1]
    %v1717 = vsel %vm553, %v1702, 0.0
    %1718 = vadd.xlane.f32.xlu0 %v1717
    %v1719 = vpop.xlane.xlu0 %1718
    %v1720 = vsel %vm553, %v1703, 0.0
    %1721 = vadd.xlane.f32.xlu0 %v1720
    %v1722 = vpop.xlane.xlu0 %1721
    %v1723 = vrcp.pop 32.0
    %v1724 = vmul.f32 %v1719, %v1723
    %v1725 = vmul.f32 %v1722, %v1723
    %v1726 = vsub.f32 %v1702, %v1724
    %v1727 = vsub.f32 %v1703, %v1725
    %v1728 = vmul.f32 %v1726, %v1726
    %v1729 = vmul.f32 %v1727, %v1727
    %v1730 = vsel %vm553, %v1728, 0.0
    %1731 = vadd.xlane.f32.xlu0 %v1730
    %v1732 = vpop.xlane.xlu0 %1731
    %v1733 = vsel %vm553, %v1729, 0.0
    %1734 = vadd.xlane.f32.xlu0 %v1733
    %v1735 = vpop.xlane.xlu0 %1734
    %v1736 = vmul.f32 %v1732, %v1723
    %v1737 = vmul.f32 %v1735, %v1723
    %v1738 = vadd.f32 %v1736, 1e-05
    %v1739 = vadd.f32 %v1737, 1e-05
    %v1740 = vrsqrt.pop %v1738
    %v1741 = vrsqrt.pop %v1739
    %v1742 = vmul.f32 %v1726, %v1740
    %v1743 = vmul.f32 %v1727, %v1741
    %v1745 = vlaneseq
    %v1746 = vshrl.u32 %v1745, 7
    %v1747 = vsub.s32 0, %v1746
    %v1748 = vrot.slane %v1715, %v1747
    %v1750 = vmul.f32 %v1742, %v1748
    %v1751 = vmul.f32 %v1743, %v1748
    %v1753 = vlaneseq
    %v1754 = vshrl.u32 %v1753, 7
    %v1755 = vsub.s32 0, %v1754
    %v1756 = vrot.slane %v1716, %v1755
    %v1758 = vadd.f32 %v1750, %v1756
    %v1759 = vadd.f32 %v1751, %v1756
    %v1760 = vpack.c.bf16 %v1759, %v1758
    %v1761 = vld [vmem:[%s14] sm:$0xf]
    %v1762 = vld [vmem:[%s14 + $0x4] sm:$0xf]
    %v1763 = vld [vmem:[%s14 + $0x8] sm:$0xf]
    %v1764 = vld [vmem:[%s14 + $0xc] sm:$0xf]
    %v1769 = vunpack.c.l.b16 %v1761
    %v1770 = vunpack.c.l.b16 %v1762
    %v1771 = vunpack.c.l.b16 %v1763
    %v1772 = vunpack.c.l.b16 %v1764
    %v1773 = vpack.c.b16 %v1770, %v1769
    %v1774 = vpack.c.b16 %v1772, %v1771
    %v1778 = vsel %vm553, %v1760, 0
    %1780 = vmatprep.subr.bf16.mxu0 0
    %1781 = vmatpush1.bf16.msra.mxu0 0
    %1782 = vmatprep.subr.bf16.mxu0 0
    %1783 = vmatpush1.bf16.msra.mxu0 0
    %1784 = vmatprep.subr.bf16.mxu0 0
    %1785 = vmatpush1.bf16.msra.mxu0 0
    %1786 = vmatprep.subr.bf16.mxu0 0
    %1787 = vmatpush1.bf16.msra.mxu0 0
    %1788 = vmatprep.subr.bf16.mxu0 0
    %1789 = vmatpush1.bf16.msra.mxu0 0
    %1790 = vmatprep.subr.bf16.mxu0 0
    %1791 = vmatpush1.bf16.msra.mxu0 0
    %1792 = vmatprep.subr.bf16.mxu0 0
    %1793 = vmatpush1.bf16.msra.mxu0 %v1774
    %1794 = vmatprep.subr.bf16.mxu0 0
    %1795 = vmatpush1.bf16.msra.mxu0 %v1773
    %1796 = vmatprep.subr.bf16.mxu0 0
    %1797 = vmatpush2.bf16.msra.mxu0 0
    %1798 = vmatprep.subr.bf16.mxu0 0
    %1799 = vmatpush2.bf16.msra.mxu0 0
    %1800 = vmatprep.subr.bf16.mxu0 0
    %1801 = vmatpush2.bf16.msra.mxu0 0
    %1802 = vmatprep.subr.bf16.mxu0 0
    %1803 = vmatpush2.bf16.msra.mxu0 0
    %1804 = vmatprep.subr.bf16.mxu0 0
    %1805 = vmatpush2.bf16.msra.mxu0 0
    %1806 = vmatprep.subr.bf16.mxu0 0
    %1807 = vmatpush2.bf16.msra.mxu0 0
    %1808 = vmatprep.subr.bf16.mxu0 0
    %1809 = vmatpush2.bf16.msra.mxu0 0
    %1810 = vmatprep.subr.bf16.mxu0 0
    %1811 = vmatpush2.bf16.msra.mxu0 0
    %1812 = vmatprep.mubr.bf16.mxu0 0
    %1813 = vmatmul.mubr.bf16.gmra.mxu0 %v1778
    %v1814 = vpop.f32.mrf.mxu0
    %v1815 = vadd.f32 0.0, %v1814
    %v1816 = vpop.f32.mrf.mxu0
    %v1817 = vpop.f32.mrf.mxu0
    %v1818 = vadd.f32 0.0, %v1817
    %v1819 = vpop.f32.mrf.mxu0
    %1820 = vdwg.mxu0
    %v1821 = vmul.f32 %v1815, %v1815
    %v1822 = vmul.f32 %v1818, %v1818
    %v1824 = vsel %vm553, %v1821, 0
    %v1827 = vsel %vm553, %v1822, 0
    %1829 = vmatprep.subr.mxu0 0.0
    %1830 = vmatpush1.msra.mxu0 0.0
    %1831 = vmatprep.subr.mxu0 0.0
    %1832 = vmatpush1.msra.mxu0 0.0
    %1833 = vmatprep.subr.mxu0 0.0
    %1834 = vmatpush1.msra.mxu0 0.0
    %1835 = vmatprep.subr.mxu0 0.0
    %1836 = vmatpush1.msra.mxu0 0.0
    %1837 = vmatprep.subr.mxu0 0.0
    %1838 = vmatpush1.msra.mxu0 0.0
    %1839 = vmatprep.subr.mxu0 0.0
    %1840 = vmatpush1.msra.mxu0 0.0
    %1841 = vmatprep.subr.mxu0 0.0
    %1842 = vmatpush1.msra.mxu0 0.0
    %1843 = vmatprep.subr.mxu0 0.0
    %1844 = vmatpush1.msra.mxu0 0.0
    %1845 = vmatprep.subr.mxu0 0.0
    %1846 = vmatpush1.msra.mxu0 0.0
    %1847 = vmatprep.subr.mxu0 0.0
    %1848 = vmatpush1.msra.mxu0 0.0
    %1849 = vmatprep.subr.mxu0 0.0
    %1850 = vmatpush1.msra.mxu0 0.0
    %1851 = vmatprep.subr.mxu0 0.0
    %1852 = vmatpush1.msra.mxu0 0.0
    %1853 = vmatprep.subr.mxu0 0.0
    %1854 = vmatpush1.msra.mxu0 %v1714
    %1855 = vmatprep.subr.mxu0 0.0
    %1856 = vmatpush1.msra.mxu0 %v1713
    %1857 = vmatprep.subr.mxu0 0.0
    %1858 = vmatpush1.msra.mxu0 %v1712
    %1859 = vmatprep.subr.mxu0 0.0
    %1860 = vmatpush1.msra.mxu0 %v1711
    %1861 = vmatprep.subr.mxu0 0.0
    %1862 = vmatpush2.msra.mxu0 0.0
    %1863 = vmatprep.subr.mxu0 0.0
    %1864 = vmatpush2.msra.mxu0 0.0
    %1865 = vmatprep.subr.mxu0 0.0
    %1866 = vmatpush2.msra.mxu0 0.0
    %1867 = vmatprep.subr.mxu0 0.0
    %1868 = vmatpush2.msra.mxu0 0.0
    %1869 = vmatprep.subr.mxu0 0.0
    %1870 = vmatpush2.msra.mxu0 0.0
    %1871 = vmatprep.subr.mxu0 0.0
    %1872 = vmatpush2.msra.mxu0 0.0
    %1873 = vmatprep.subr.mxu0 0.0
    %1874 = vmatpush2.msra.mxu0 0.0
    %1875 = vmatprep.subr.mxu0 0.0
    %1876 = vmatpush2.msra.mxu0 0.0
    %1877 = vmatprep.subr.mxu0 0.0
    %1878 = vmatpush2.msra.mxu0 0.0
    %1879 = vmatprep.subr.mxu0 0.0
    %1880 = vmatpush2.msra.mxu0 0.0
    %1881 = vmatprep.subr.mxu0 0.0
    %1882 = vmatpush2.msra.mxu0 0.0
    %1883 = vmatprep.subr.mxu0 0.0
    %1884 = vmatpush2.msra.mxu0 0.0
    %1885 = vmatprep.subr.mxu0 0.0
    %1886 = vmatpush2.msra.mxu0 0.0
    %1887 = vmatprep.subr.mxu0 0.0
    %1888 = vmatpush2.msra.mxu0 0.0
    %1889 = vmatprep.subr.mxu0 0.0
    %1890 = vmatpush2.msra.mxu0 0.0
    %1891 = vmatprep.subr.mxu0 0.0
    %1892 = vmatpush2.msra.mxu0 0.0
    %1893 = vmatprep.mubr.f32.mxu0 0.0
    %1894 = vmatmul.mubr.f32.gmra.mxu0 %v1824
    %v1895 = vpop.f32.mrf.mxu0
    %v1896 = vadd.f32 1e-12, %v1895
    %v1897 = vpop.f32.mrf.mxu0
    %1898 = vmatprep.mubr.f32.mxu0 0.0
    %1899 = vmatmul.mubr.f32.gmra.mxu0 %v1827
    %v1900 = vpop.f32.mrf.mxu0
    %v1901 = vadd.f32 1e-12, %v1900
    %v1902 = vpop.f32.mrf.mxu0
    %1903 = vdwg.mxu0
    %v1904 = vrsqrt.pop %v1896
    %v1905 = vrsqrt.pop %v1901
    %v1906 = vmul.f32 %v1815, %v1904
    %v1907 = vmul.f32 %v1818, %v1905
    %v1908 = vld [vmem:[#allocation19] sm:$0xf]
    %v1909 = vld [vmem:[#allocation19 + $0x4] sm:$0xf]
    %v1910 = vld [vmem:[#allocation19 + $0x8] sm:$0xf]
    %v1911 = vld [vmem:[#allocation19 + $0xc] sm:$0xf]
    %vm1912 = vcmask 64512
    %v1914 = vsel %vm1912, %v1815, 0
    %v1917 = vsel %vm1912, %v1906, 0
    %1919 = vmatprep.subr.mxu0 0.0
    %1920 = vmatpush1.xpose.msra.mxu0 0.0
    %1921 = vmatprep.subr.mxu0 0.0
    %1922 = vmatpush1.xpose.msra.mxu0 0.0
    %1923 = vmatprep.subr.mxu0 0.0
    %1924 = vmatpush1.xpose.msra.mxu0 0.0
    %1925 = vmatprep.subr.mxu0 0.0
    %1926 = vmatpush1.xpose.msra.mxu0 0.0
    %1927 = vmatprep.subr.mxu0 0.0
    %1928 = vmatpush1.xpose.msra.mxu0 0.0
    %1929 = vmatprep.subr.mxu0 0.0
    %1930 = vmatpush1.xpose.msra.mxu0 0.0
    %1931 = vmatprep.subr.mxu0 0.0
    %1932 = vmatpush1.xpose.msra.mxu0 0.0
    %1933 = vmatprep.subr.mxu0 0.0
    %1934 = vmatpush1.xpose.msra.mxu0 0.0
    %1935 = vmatprep.subr.mxu0 0.0
    %1936 = vmatpush1.xpose.msra.mxu0 0.0
    %1937 = vmatprep.subr.mxu0 0.0
    %1938 = vmatpush1.xpose.msra.mxu0 0.0
    %1939 = vmatprep.subr.mxu0 0.0
    %1940 = vmatpush1.xpose.msra.mxu0 0.0
    %1941 = vmatprep.subr.mxu0 0.0
    %1942 = vmatpush1.xpose.msra.mxu0 0.0
    %1943 = vmatprep.subr.mxu0 0.0
    %1944 = vmatpush1.xpose.msra.mxu0 0.0
    %1945 = vmatprep.subr.mxu0 0.0
    %1946 = vmatpush1.xpose.msra.mxu0 0.0
    %1947 = vmatprep.subr.mxu0 0.0
    %1948 = vmatpush1.xpose.msra.mxu0 0.0
    %1949 = vmatprep.subr.mxu0 0.0
    %1950 = vmatpush1.xpose.msra.mxu0 %v1917
    %1951 = vmatprep.subr.mxu0 0.0
    %1952 = vmatpush2.xpose.msra.mxu0 0.0
    %1953 = vmatprep.subr.mxu0 0.0
    %1954 = vmatpush2.xpose.msra.mxu0 0.0
    %1955 = vmatprep.subr.mxu0 0.0
    %1956 = vmatpush2.xpose.msra.mxu0 0.0
    %1957 = vmatprep.subr.mxu0 0.0
    %1958 = vmatpush2.xpose.msra.mxu0 0.0
    %1959 = vmatprep.subr.mxu0 0.0
    %1960 = vmatpush2.xpose.msra.mxu0 0.0
    %1961 = vmatprep.subr.mxu0 0.0
    %1962 = vmatpush2.xpose.msra.mxu0 0.0
    %1963 = vmatprep.subr.mxu0 0.0
    %1964 = vmatpush2.xpose.msra.mxu0 0.0
    %1965 = vmatprep.subr.mxu0 0.0
    %1966 = vmatpush2.xpose.msra.mxu0 0.0
    %1967 = vmatprep.subr.mxu0 0.0
    %1968 = vmatpush2.xpose.msra.mxu0 0.0
    %1969 = vmatprep.subr.mxu0 0.0
    %1970 = vmatpush2.xpose.msra.mxu0 0.0
    %1971 = vmatprep.subr.mxu0 0.0
    %1972 = vmatpush2.xpose.msra.mxu0 0.0
    %1973 = vmatprep.subr.mxu0 0.0
    %1974 = vmatpush2.xpose.msra.mxu0 0.0
    %1975 = vmatprep.subr.mxu0 0.0
    %1976 = vmatpush2.xpose.msra.mxu0 0.0
    %1977 = vmatprep.subr.mxu0 0.0
    %1978 = vmatpush2.xpose.msra.mxu0 0.0
    %1979 = vmatprep.subr.mxu0 0.0
    %1980 = vmatpush2.xpose.msra.mxu0 0.0
    %1981 = vmatprep.subr.mxu0 0.0
    %1982 = vmatpush2.xpose.msra.mxu0 0.0
    %1983 = vmatprep.mubr.f32.mxu0 0.0
    %1984 = vmatmul.mubr.f32.gmra.mxu0 %v1914
    %v1985 = vpop.f32.mrf.mxu0
    %v1986 = vadd.f32 0.0, %v1985
    %v1987 = vpop.f32.mrf.mxu0
    %1988 = vdwg.mxu0
    %v1989 = vmul.f32 %v1986, 0.35355338
    %v1990 = vadd.f32 %v1989, %v1707
    %v1991 = vlaneseq
    %v1992 = vshrl.u32 %v1991, 7
    %v1993 = vsub.s32 0, %v1992
    %v1994 = vrot.slane %v1710, %v1993
    %v1995 = vadd.f32 %v1990, %v1994
    %v1996 = vsel %vm1912, %v1995, -inf
    %1997 = vmax.xlane.f32.xlu0 %v1996
    %v1998 = vpop.xlane.xlu0 %1997
    %v1999 = vsub.f32 %v1995, %v1998
    %v2000 = vmul.f32 %v1999, 1.442695
    %v2001 = vpow.pop %v2000
    %v2002 = vsel %vm1912, %v2001, 0.0
    %2003 = vadd.xlane.f32.xlu0 %v2002
    %v2004 = vpop.xlane.xlu0 %2003
    %v2005 = vrcp.pop %v2004
    %v2006 = vmul.f32 %v2001, %v2005
    %2007 = vrot.lane.b32.xlu0 %v1815, 96
    %v2008 = vpop.permute.xlu0 %2007
    %v2011 = vsel %vm1912, %v2006, 0
    %2013 = vmatprep.subr.mxu0 0.0
    %2014 = vmatpush1.msra.mxu0 0.0
    %2015 = vmatprep.subr.mxu0 0.0
    %2016 = vmatpush1.msra.mxu0 0.0
    %2017 = vmatprep.subr.mxu0 0.0
    %2018 = vmatpush1.msra.mxu0 0.0
    %2019 = vmatprep.subr.mxu0 0.0
    %2020 = vmatpush1.msra.mxu0 0.0
    %2021 = vmatprep.subr.mxu0 0.0
    %2022 = vmatpush1.msra.mxu0 0.0
    %2023 = vmatprep.subr.mxu0 0.0
    %2024 = vmatpush1.msra.mxu0 0.0
    %2025 = vmatprep.subr.mxu0 0.0
    %2026 = vmatpush1.msra.mxu0 0.0
    %2027 = vmatprep.subr.mxu0 0.0
    %2028 = vmatpush1.msra.mxu0 0.0
    %2029 = vmatprep.subr.mxu0 0.0
    %2030 = vmatpush1.msra.mxu0 0.0
    %2031 = vmatprep.subr.mxu0 0.0
    %2032 = vmatpush1.msra.mxu0 0.0
    %2033 = vmatprep.subr.mxu0 0.0
    %2034 = vmatpush1.msra.mxu0 0.0
    %2035 = vmatprep.subr.mxu0 0.0
    %2036 = vmatpush1.msra.mxu0 0.0
    %2037 = vmatprep.subr.mxu0 0.0
    %2038 = vmatpush1.msra.mxu0 0.0
    %2039 = vmatprep.subr.mxu0 0.0
    %2040 = vmatpush1.msra.mxu0 0.0
    %2041 = vmatprep.subr.mxu0 0.0
    %2042 = vmatpush1.msra.mxu0 0.0
    %2043 = vmatprep.subr.mxu0 0.0
    %2044 = vmatpush1.msra.mxu0 %v2008
    %2045 = vmatprep.subr.mxu0 0.0
    %2046 = vmatpush2.msra.mxu0 0.0
    %2047 = vmatprep.subr.mxu0 0.0
    %2048 = vmatpush2.msra.mxu0 0.0
    %2049 = vmatprep.subr.mxu0 0.0
    %2050 = vmatpush2.msra.mxu0 0.0
    %2051 = vmatprep.subr.mxu0 0.0
    %2052 = vmatpush2.msra.mxu0 0.0
    %2053 = vmatprep.subr.mxu0 0.0
    %2054 = vmatpush2.msra.mxu0 0.0
    %2055 = vmatprep.subr.mxu0 0.0
    %2056 = vmatpush2.msra.mxu0 0.0
    %2057 = vmatprep.subr.mxu0 0.0
    %2058 = vmatpush2.msra.mxu0 0.0
    %2059 = vmatprep.subr.mxu0 0.0
    %2060 = vmatpush2.msra.mxu0 0.0
    %2061 = vmatprep.subr.mxu0 0.0
    %2062 = vmatpush2.msra.mxu0 0.0
    %2063 = vmatprep.subr.mxu0 0.0
    %2064 = vmatpush2.msra.mxu0 0.0
    %2065 = vmatprep.subr.mxu0 0.0
    %2066 = vmatpush2.msra.mxu0 0.0
    %2067 = vmatprep.subr.mxu0 0.0
    %2068 = vmatpush2.msra.mxu0 0.0
    %2069 = vmatprep.subr.mxu0 0.0
    %2070 = vmatpush2.msra.mxu0 0.0
    %2071 = vmatprep.subr.mxu0 0.0
    %2072 = vmatpush2.msra.mxu0 0.0
    %2073 = vmatprep.subr.mxu0 0.0
    %2074 = vmatpush2.msra.mxu0 0.0
    %2075 = vmatprep.subr.mxu0 0.0
    %2076 = vmatpush2.msra.mxu0 0.0
    %2077 = vmatprep.mubr.f32.mxu0 0.0
    %2078 = vmatmul.mubr.f32.gmra.mxu0 %v2011
    %v2079 = vpop.f32.mrf.mxu0
    %v2080 = vadd.f32 0.0, %v2079
    %v2081 = vpop.f32.mrf.mxu0
    %2082 = vdwg.mxu0
    %v2083 = vpack.c.bf16 %v2080, %v2080
    %2084 = vrot.lane.b32.xlu0 %v1815, 120
    %v2085 = vpop.permute.xlu0 %2084
    %2086 = vrot.lane.b32.xlu0 %v1906, 120
    %v2087 = vpop.permute.xlu0 %2086
    %v2088 = vsel %vm1912, %v2085, 0
    %v2090 = vsel %vm1912, %v2087, 0
    %2092 = vmatprep.subr.mxu0 0.0
    %2093 = vmatpush1.xpose.msra.mxu0 0.0
    %2094 = vmatprep.subr.mxu0 0.0
    %2095 = vmatpush1.xpose.msra.mxu0 0.0
    %2096 = vmatprep.subr.mxu0 0.0
    %2097 = vmatpush1.xpose.msra.mxu0 0.0
    %2098 = vmatprep.subr.mxu0 0.0
    %2099 = vmatpush1.xpose.msra.mxu0 0.0
    %2100 = vmatprep.subr.mxu0 0.0
    %2101 = vmatpush1.xpose.msra.mxu0 0.0
    %2102 = vmatprep.subr.mxu0 0.0
    %2103 = vmatpush1.xpose.msra.mxu0 0.0
    %2104 = vmatprep.subr.mxu0 0.0
    %2105 = vmatpush1.xpose.msra.mxu0 0.0
    %2106 = vmatprep.subr.mxu0 0.0
    %2107 = vmatpush1.xpose.msra.mxu0 0.0
    %2108 = vmatprep.subr.mxu0 0.0
    %2109 = vmatpush1.xpose.msra.mxu0 0.0
    %2110 = vmatprep.subr.mxu0 0.0
    %2111 = vmatpush1.xpose.msra.mxu0 0.0
    %2112 = vmatprep.subr.mxu0 0.0
    %2113 = vmatpush1.xpose.msra.mxu0 0.0
    %2114 = vmatprep.subr.mxu0 0.0
    %2115 = vmatpush1.xpose.msra.mxu0 0.0
    %2116 = vmatprep.subr.mxu0 0.0
    %2117 = vmatpush1.xpose.msra.mxu0 0.0
    %2118 = vmatprep.subr.mxu0 0.0
    %2119 = vmatpush1.xpose.msra.mxu0 0.0
    %2120 = vmatprep.subr.mxu0 0.0
    %2121 = vmatpush1.xpose.msra.mxu0 0.0
    %2122 = vmatprep.subr.mxu0 0.0
    %2123 = vmatpush1.xpose.msra.mxu0 %v2090
    %2124 = vmatprep.subr.mxu0 0.0
    %2125 = vmatpush2.xpose.msra.mxu0 0.0
    %2126 = vmatprep.subr.mxu0 0.0
    %2127 = vmatpush2.xpose.msra.mxu0 0.0
    %2128 = vmatprep.subr.mxu0 0.0
    %2129 = vmatpush2.xpose.msra.mxu0 0.0
    %2130 = vmatprep.subr.mxu0 0.0
    %2131 = vmatpush2.xpose.msra.mxu0 0.0
    %2132 = vmatprep.subr.mxu0 0.0
    %2133 = vmatpush2.xpose.msra.mxu0 0.0
    %2134 = vmatprep.subr.mxu0 0.0
    %2135 = vmatpush2.xpose.msra.mxu0 0.0
    %2136 = vmatprep.subr.mxu0 0.0
    %2137 = vmatpush2.xpose.msra.mxu0 0.0
    %2138 = vmatprep.subr.mxu0 0.0
    %2139 = vmatpush2.xpose.msra.mxu0 0.0
    %2140 = vmatprep.subr.mxu0 0.0
    %2141 = vmatpush2.xpose.msra.mxu0 0.0
    %2142 = vmatprep.subr.mxu0 0.0
    %2143 = vmatpush2.xpose.msra.mxu0 0.0
    %2144 = vmatprep.subr.mxu0 0.0
    %2145 = vmatpush2.xpose.msra.mxu0 0.0
    %2146 = vmatprep.subr.mxu0 0.0
    %2147 = vmatpush2.xpose.msra.mxu0 0.0
    %2148 = vmatprep.subr.mxu0 0.0
    %2149 = vmatpush2.xpose.msra.mxu0 0.0
    %2150 = vmatprep.subr.mxu0 0.0
    %2151 = vmatpush2.xpose.msra.mxu0 0.0
    %2152 = vmatprep.subr.mxu0 0.0
    %2153 = vmatpush2.xpose.msra.mxu0 0.0
    %2154 = vmatprep.subr.mxu0 0.0
    %2155 = vmatpush2.xpose.msra.mxu0 0.0
    %2156 = vmatprep.mubr.f32.mxu0 0.0
    %2157 = vmatmul.mubr.f32.gmra.mxu0 %v2088
    %v2158 = vpop.f32.mrf.mxu0
    %v2159 = vadd.f32 0.0, %v2158
    %v2160 = vpop.f32.mrf.mxu0
    %2161 = vdwg.mxu0
    %v2162 = vmul.f32 %v2159, 0.35355338
    %v2163 = vadd.f32 %v2162, %v1707
    %v2164 = vadd.f32 %v2163, %v1994
    %v2165 = vsel %vm1912, %v2164, -inf
    %2166 = vmax.xlane.f32.xlu0 %v2165
    %v2167 = vpop.xlane.xlu0 %2166
    %v2168 = vsub.f32 %v2164, %v2167
    %v2169 = vmul.f32 %v2168, 1.442695
    %v2170 = vpow.pop %v2169
    %v2171 = vsel %vm1912, %v2170, 0.0
    %2172 = vadd.xlane.f32.xlu0 %v2171
    %v2173 = vpop.xlane.xlu0 %2172
    %v2174 = vrcp.pop %v2173
    %v2175 = vmul.f32 %v2170, %v2174
    %2176 = vrot.lane.b32.xlu0 %v1815, 88
    %v2177 = vpop.permute.xlu0 %2176
    %v2180 = vsel %vm1912, %v2175, 0
    %2182 = vmatprep.subr.mxu0 0.0
    %2183 = vmatpush1.msra.mxu0 0.0
    %2184 = vmatprep.subr.mxu0 0.0
    %2185 = vmatpush1.msra.mxu0 0.0
    %2186 = vmatprep.subr.mxu0 0.0
    %2187 = vmatpush1.msra.mxu0 0.0
    %2188 = vmatprep.subr.mxu0 0.0
    %2189 = vmatpush1.msra.mxu0 0.0
    %2190 = vmatprep.subr.mxu0 0.0
    %2191 = vmatpush1.msra.mxu0 0.0
    %2192 = vmatprep.subr.mxu0 0.0
    %2193 = vmatpush1.msra.mxu0 0.0
    %2194 = vmatprep.subr.mxu0 0.0
    %2195 = vmatpush1.msra.mxu0 0.0
    %2196 = vmatprep.subr.mxu0 0.0
    %2197 = vmatpush1.msra.mxu0 0.0
    %2198 = vmatprep.subr.mxu0 0.0
    %2199 = vmatpush1.msra.mxu0 0.0
    %2200 = vmatprep.subr.mxu0 0.0
    %2201 = vmatpush1.msra.mxu0 0.0
    %2202 = vmatprep.subr.mxu0 0.0
    %2203 = vmatpush1.msra.mxu0 0.0
    %2204 = vmatprep.subr.mxu0 0.0
    %2205 = vmatpush1.msra.mxu0 0.0
    %2206 = vmatprep.subr.mxu0 0.0
    %2207 = vmatpush1.msra.mxu0 0.0
    %2208 = vmatprep.subr.mxu0 0.0
    %2209 = vmatpush1.msra.mxu0 0.0
    %2210 = vmatprep.subr.mxu0 0.0
    %2211 = vmatpush1.msra.mxu0 0.0
    %2212 = vmatprep.subr.mxu0 0.0
    %2213 = vmatpush1.msra.mxu0 %v2177
    %2214 = vmatprep.subr.mxu0 0.0
    %2215 = vmatpush2.msra.mxu0 0.0
    %2216 = vmatprep.subr.mxu0 0.0
    %2217 = vmatpush2.msra.mxu0 0.0
    %2218 = vmatprep.subr.mxu0 0.0
    %2219 = vmatpush2.msra.mxu0 0.0
    %2220 = vmatprep.subr.mxu0 0.0
    %2221 = vmatpush2.msra.mxu0 0.0
    %2222 = vmatprep.subr.mxu0 0.0
    %2223 = vmatpush2.msra.mxu0 0.0
    %2224 = vmatprep.subr.mxu0 0.0
    %2225 = vmatpush2.msra.mxu0 0.0
    %2226 = vmatprep.subr.mxu0 0.0
    %2227 = vmatpush2.msra.mxu0 0.0
    %2228 = vmatprep.subr.mxu0 0.0
    %2229 = vmatpush2.msra.mxu0 0.0
    %2230 = vmatprep.subr.mxu0 0.0
    %2231 = vmatpush2.msra.mxu0 0.0
    %2232 = vmatprep.subr.mxu0 0.0
    %2233 = vmatpush2.msra.mxu0 0.0
    %2234 = vmatprep.subr.mxu0 0.0
    %2235 = vmatpush2.msra.mxu0 0.0
    %2236 = vmatprep.subr.mxu0 0.0
    %2237 = vmatpush2.msra.mxu0 0.0
    %2238 = vmatprep.subr.mxu0 0.0
    %2239 = vmatpush2.msra.mxu0 0.0
    %2240 = vmatprep.subr.mxu0 0.0
    %2241 = vmatpush2.msra.mxu0 0.0
    %2242 = vmatprep.subr.mxu0 0.0
    %2243 = vmatpush2.msra.mxu0 0.0
    %2244 = vmatprep.subr.mxu0 0.0
    %2245 = vmatpush2.msra.mxu0 0.0
    %2246 = vmatprep.mubr.f32.mxu0 0.0
    %2247 = vmatmul.mubr.f32.gmra.mxu0 %v2180
    %v2248 = vpop.f32.mrf.mxu0
    %v2249 = vadd.f32 0.0, %v2248
    %v2250 = vpop.f32.mrf.mxu0
    %2251 = vdwg.mxu0
    %v2252 = vpack.c.bf16 %v2249, %v2249
    %v2254 = vsel %vm1912, %v2252, 0
    %vm2256 = vcmask 1043456
    %v2258 = vsel %vm2256, %v1909, 0
    %2260 = vmatprep.subr.bf16.mxu0 0
    %2261 = vmatpush1.bf16.msra.mxu0 0
    %2262 = vmatprep.subr.bf16.mxu0 0
    %2263 = vmatpush1.bf16.msra.mxu0 0
    %2264 = vmatprep.subr.bf16.mxu0 0
    %2265 = vmatpush1.bf16.msra.mxu0 0
    %2266 = vmatprep.subr.bf16.mxu0 0
    %2267 = vmatpush1.bf16.msra.mxu0 0
    %2268 = vmatprep.subr.bf16.mxu0 0
    %2269 = vmatpush1.bf16.msra.mxu0 0
    %2270 = vmatprep.subr.bf16.mxu0 0
    %2271 = vmatpush1.bf16.msra.mxu0 0
    %2272 = vmatprep.subr.bf16.mxu0 0
    %2273 = vmatpush1.bf16.msra.mxu0 0
    %2274 = vmatprep.subr.bf16.mxu0 0
    %2275 = vmatpush1.bf16.msra.mxu0 %v2258
    %2276 = vmatprep.subr.bf16.mxu0 0
    %2277 = vmatpush2.bf16.msra.mxu0 0
    %2278 = vmatprep.subr.bf16.mxu0 0
    %2279 = vmatpush2.bf16.msra.mxu0 0
    %2280 = vmatprep.subr.bf16.mxu0 0
    %2281 = vmatpush2.bf16.msra.mxu0 0
    %2282 = vmatprep.subr.bf16.mxu0 0
    %2283 = vmatpush2.bf16.msra.mxu0 0
    %2284 = vmatprep.subr.bf16.mxu0 0
    %2285 = vmatpush2.bf16.msra.mxu0 0
    %2286 = vmatprep.subr.bf16.mxu0 0
    %2287 = vmatpush2.bf16.msra.mxu0 0
    %2288 = vmatprep.subr.bf16.mxu0 0
    %2289 = vmatpush2.bf16.msra.mxu0 0
    %2290 = vmatprep.subr.bf16.mxu0 0
    %2291 = vmatpush2.bf16.msra.mxu0 0
    %2292 = vmatprep.mubr.bf16.mxu0 0
    %2293 = vmatmul.mubr.bf16.gmra.mxu0 %v2254
    %v2294 = vpop.f32.mrf.mxu0
    %v2295 = vadd.f32 0.0, %v2294
    %v2296 = vpop.f32.mrf.mxu0
    %v2297 = vpop.f32.mrf.mxu0
    %v2298 = vpop.f32.mrf.mxu0
    %2299 = vdwg.mxu0
    %v2301 = vsel %vm1912, %v2083, 0
    %v2304 = vsel %vm2256, %v1908, 0
    %2306 = vmatprep.subr.bf16.mxu0 0
    %2307 = vmatpush1.bf16.msra.mxu0 0
    %2308 = vmatprep.subr.bf16.mxu0 0
    %2309 = vmatpush1.bf16.msra.mxu0 0
    %2310 = vmatprep.subr.bf16.mxu0 0
    %2311 = vmatpush1.bf16.msra.mxu0 0
    %2312 = vmatprep.subr.bf16.mxu0 0
    %2313 = vmatpush1.bf16.msra.mxu0 0
    %2314 = vmatprep.subr.bf16.mxu0 0
    %2315 = vmatpush1.bf16.msra.mxu0 0
    %2316 = vmatprep.subr.bf16.mxu0 0
    %2317 = vmatpush1.bf16.msra.mxu0 0
    %2318 = vmatprep.subr.bf16.mxu0 0
    %2319 = vmatpush1.bf16.msra.mxu0 0
    %2320 = vmatprep.subr.bf16.mxu0 0
    %2321 = vmatpush1.bf16.msra.mxu0 %v2304
    %2322 = vmatprep.subr.bf16.mxu0 0
    %2323 = vmatpush2.bf16.msra.mxu0 0
    %2324 = vmatprep.subr.bf16.mxu0 0
    %2325 = vmatpush2.bf16.msra.mxu0 0
    %2326 = vmatprep.subr.bf16.mxu0 0
    %2327 = vmatpush2.bf16.msra.mxu0 0
    %2328 = vmatprep.subr.bf16.mxu0 0
    %2329 = vmatpush2.bf16.msra.mxu0 0
    %2330 = vmatprep.subr.bf16.mxu0 0
    %2331 = vmatpush2.bf16.msra.mxu0 0
    %2332 = vmatprep.subr.bf16.mxu0 0
    %2333 = vmatpush2.bf16.msra.mxu0 0
    %2334 = vmatprep.subr.bf16.mxu0 0
    %2335 = vmatpush2.bf16.msra.mxu0 0
    %2336 = vmatprep.subr.bf16.mxu0 0
    %2337 = vmatpush2.bf16.msra.mxu0 0
    %2338 = vmatprep.mubr.bf16.mxu0 0
    %2339 = vmatmul.mubr.bf16.gmra.mxu0 %v2301
    %v2340 = vpop.f32.mrf.mxu0
    %v2341 = vadd.f32 %v2295, %v2340
    %v2342 = vpop.f32.mrf.mxu0
    %v2343 = vpop.f32.mrf.mxu0
    %v2344 = vpop.f32.mrf.mxu0
    %2345 = vdwg.mxu0
    %2346 = vrot.lane.b32.xlu0 %v1815, 112
    %v2347 = vpop.permute.xlu0 %2346
    %2348 = vrot.lane.b32.xlu0 %v1906, 112
    %v2349 = vpop.permute.xlu0 %2348
    %v2350 = vsel %vm1912, %v2347, 0
    %v2352 = vsel %vm1912, %v2349, 0
    %2354 = vmatprep.subr.mxu0 0.0
    %2355 = vmatpush1.xpose.msra.mxu0 0.0
    %2356 = vmatprep.subr.mxu0 0.0
    %2357 = vmatpush1.xpose.msra.mxu0 0.0
    %2358 = vmatprep.subr.mxu0 0.0
    %2359 = vmatpush1.xpose.msra.mxu0 0.0
    %2360 = vmatprep.subr.mxu0 0.0
    %2361 = vmatpush1.xpose.msra.mxu0 0.0
    %2362 = vmatprep.subr.mxu0 0.0
    %2363 = vmatpush1.xpose.msra.mxu0 0.0
    %2364 = vmatprep.subr.mxu0 0.0
    %2365 = vmatpush1.xpose.msra.mxu0 0.0
    %2366 = vmatprep.subr.mxu0 0.0
    %2367 = vmatpush1.xpose.msra.mxu0 0.0
    %2368 = vmatprep.subr.mxu0 0.0
    %2369 = vmatpush1.xpose.msra.mxu0 0.0
    %2370 = vmatprep.subr.mxu0 0.0
    %2371 = vmatpush1.xpose.msra.mxu0 0.0
    %2372 = vmatprep.subr.mxu0 0.0
    %2373 = vmatpush1.xpose.msra.mxu0 0.0
    %2374 = vmatprep.subr.mxu0 0.0
    %2375 = vmatpush1.xpose.msra.mxu0 0.0
    %2376 = vmatprep.subr.mxu0 0.0
    %2377 = vmatpush1.xpose.msra.mxu0 0.0
    %2378 = vmatprep.subr.mxu0 0.0
    %2379 = vmatpush1.xpose.msra.mxu0 0.0
    %2380 = vmatprep.subr.mxu0 0.0
    %2381 = vmatpush1.xpose.msra.mxu0 0.0
    %2382 = vmatprep.subr.mxu0 0.0
    %2383 = vmatpush1.xpose.msra.mxu0 0.0
    %2384 = vmatprep.subr.mxu0 0.0
    %2385 = vmatpush1.xpose.msra.mxu0 %v2352
    %2386 = vmatprep.subr.mxu0 0.0
    %2387 = vmatpush2.xpose.msra.mxu0 0.0
    %2388 = vmatprep.subr.mxu0 0.0
    %2389 = vmatpush2.xpose.msra.mxu0 0.0
    %2390 = vmatprep.subr.mxu0 0.0
    %2391 = vmatpush2.xpose.msra.mxu0 0.0
    %2392 = vmatprep.subr.mxu0 0.0
    %2393 = vmatpush2.xpose.msra.mxu0 0.0
    %2394 = vmatprep.subr.mxu0 0.0
    %2395 = vmatpush2.xpose.msra.mxu0 0.0
    %2396 = vmatprep.subr.mxu0 0.0
    %2397 = vmatpush2.xpose.msra.mxu0 0.0
    %2398 = vmatprep.subr.mxu0 0.0
    %2399 = vmatpush2.xpose.msra.mxu0 0.0
    %2400 = vmatprep.subr.mxu0 0.0
    %2401 = vmatpush2.xpose.msra.mxu0 0.0
    %2402 = vmatprep.subr.mxu0 0.0
    %2403 = vmatpush2.xpose.msra.mxu0 0.0
    %2404 = vmatprep.subr.mxu0 0.0
    %2405 = vmatpush2.xpose.msra.mxu0 0.0
    %2406 = vmatprep.subr.mxu0 0.0
    %2407 = vmatpush2.xpose.msra.mxu0 0.0
    %2408 = vmatprep.subr.mxu0 0.0
    %2409 = vmatpush2.xpose.msra.mxu0 0.0
    %2410 = vmatprep.subr.mxu0 0.0
    %2411 = vmatpush2.xpose.msra.mxu0 0.0
    %2412 = vmatprep.subr.mxu0 0.0
    %2413 = vmatpush2.xpose.msra.mxu0 0.0
    %2414 = vmatprep.subr.mxu0 0.0
    %2415 = vmatpush2.xpose.msra.mxu0 0.0
    %2416 = vmatprep.subr.mxu0 0.0
    %2417 = vmatpush2.xpose.msra.mxu0 0.0
    %2418 = vmatprep.mubr.f32.mxu0 0.0
    %2419 = vmatmul.mubr.f32.gmra.mxu0 %v2350
    %v2420 = vpop.f32.mrf.mxu0
    %v2421 = vadd.f32 0.0, %v2420
    %v2422 = vpop.f32.mrf.mxu0
    %2423 = vdwg.mxu0
    %v2424 = vmul.f32 %v2421, 0.35355338
    %v2425 = vadd.f32 %v2424, %v1707
    %v2426 = vadd.f32 %v2425, %v1994
    %v2427 = vsel %vm1912, %v2426, -inf
    %2428 = vmax.xlane.f32.xlu0 %v2427
    %v2429 = vpop.xlane.xlu0 %2428
    %v2430 = vsub.f32 %v2426, %v2429
    %v2431 = vmul.f32 %v2430, 1.442695
    %v2432 = vpow.pop %v2431
    %v2433 = vsel %vm1912, %v2432, 0.0
    %2434 = vadd.xlane.f32.xlu0 %v2433
    %v2435 = vpop.xlane.xlu0 %2434
    %v2436 = vrcp.pop %v2435
    %v2437 = vmul.f32 %v2432, %v2436
    %2438 = vrot.lane.b32.xlu0 %v1815, 80
    %v2439 = vpop.permute.xlu0 %2438
    %v2442 = vsel %vm1912, %v2437, 0
    %2444 = vmatprep.subr.mxu0 0.0
    %2445 = vmatpush1.msra.mxu0 0.0
    %2446 = vmatprep.subr.mxu0 0.0
    %2447 = vmatpush1.msra.mxu0 0.0
    %2448 = vmatprep.subr.mxu0 0.0
    %2449 = vmatpush1.msra.mxu0 0.0
    %2450 = vmatprep.subr.mxu0 0.0
    %2451 = vmatpush1.msra.mxu0 0.0
    %2452 = vmatprep.subr.mxu0 0.0
    %2453 = vmatpush1.msra.mxu0 0.0
    %2454 = vmatprep.subr.mxu0 0.0
    %2455 = vmatpush1.msra.mxu0 0.0
    %2456 = vmatprep.subr.mxu0 0.0
    %2457 = vmatpush1.msra.mxu0 0.0
    %2458 = vmatprep.subr.mxu0 0.0
    %2459 = vmatpush1.msra.mxu0 0.0
    %2460 = vmatprep.subr.mxu0 0.0
    %2461 = vmatpush1.msra.mxu0 0.0
    %2462 = vmatprep.subr.mxu0 0.0
    %2463 = vmatpush1.msra.mxu0 0.0
    %2464 = vmatprep.subr.mxu0 0.0
    %2465 = vmatpush1.msra.mxu0 0.0
    %2466 = vmatprep.subr.mxu0 0.0
    %2467 = vmatpush1.msra.mxu0 0.0
    %2468 = vmatprep.subr.mxu0 0.0
    %2469 = vmatpush1.msra.mxu0 0.0
    %2470 = vmatprep.subr.mxu0 0.0
    %2471 = vmatpush1.msra.mxu0 0.0
    %2472 = vmatprep.subr.mxu0 0.0
    %2473 = vmatpush1.msra.mxu0 0.0
    %2474 = vmatprep.subr.mxu0 0.0
    %2475 = vmatpush1.msra.mxu0 %v2439
    %2476 = vmatprep.subr.mxu0 0.0
    %2477 = vmatpush2.msra.mxu0 0.0
    %2478 = vmatprep.subr.mxu0 0.0
    %2479 = vmatpush2.msra.mxu0 0.0
    %2480 = vmatprep.subr.mxu0 0.0
    %2481 = vmatpush2.msra.mxu0 0.0
    %2482 = vmatprep.subr.mxu0 0.0
    %2483 = vmatpush2.msra.mxu0 0.0
    %2484 = vmatprep.subr.mxu0 0.0
    %2485 = vmatpush2.msra.mxu0 0.0
    %2486 = vmatprep.subr.mxu0 0.0
    %2487 = vmatpush2.msra.mxu0 0.0
    %2488 = vmatprep.subr.mxu0 0.0
    %2489 = vmatpush2.msra.mxu0 0.0
    %2490 = vmatprep.subr.mxu0 0.0
    %2491 = vmatpush2.msra.mxu0 0.0
    %2492 = vmatprep.subr.mxu0 0.0
    %2493 = vmatpush2.msra.mxu0 0.0
    %2494 = vmatprep.subr.mxu0 0.0
    %2495 = vmatpush2.msra.mxu0 0.0
    %2496 = vmatprep.subr.mxu0 0.0
    %2497 = vmatpush2.msra.mxu0 0.0
    %2498 = vmatprep.subr.mxu0 0.0
    %2499 = vmatpush2.msra.mxu0 0.0
    %2500 = vmatprep.subr.mxu0 0.0
    %2501 = vmatpush2.msra.mxu0 0.0
    %2502 = vmatprep.subr.mxu0 0.0
    %2503 = vmatpush2.msra.mxu0 0.0
    %2504 = vmatprep.subr.mxu0 0.0
    %2505 = vmatpush2.msra.mxu0 0.0
    %2506 = vmatprep.subr.mxu0 0.0
    %2507 = vmatpush2.msra.mxu0 0.0
    %2508 = vmatprep.mubr.f32.mxu0 0.0
    %2509 = vmatmul.mubr.f32.gmra.mxu0 %v2442
    %v2510 = vpop.f32.mrf.mxu0
    %v2511 = vadd.f32 0.0, %v2510
    %v2512 = vpop.f32.mrf.mxu0
    %2513 = vdwg.mxu0
    %v2514 = vpack.c.bf16 %v2511, %v2511
    %v2516 = vsel %vm1912, %v2514, 0
    %v2519 = vsel %vm2256, %v1910, 0
    %2521 = vmatprep.subr.bf16.mxu0 0
    %2522 = vmatpush1.bf16.msra.mxu0 0
    %2523 = vmatprep.subr.bf16.mxu0 0
    %2524 = vmatpush1.bf16.msra.mxu0 0
    %2525 = vmatprep.subr.bf16.mxu0 0
    %2526 = vmatpush1.bf16.msra.mxu0 0
    %2527 = vmatprep.subr.bf16.mxu0 0
    %2528 = vmatpush1.bf16.msra.mxu0 0
    %2529 = vmatprep.subr.bf16.mxu0 0
    %2530 = vmatpush1.bf16.msra.mxu0 0
    %2531 = vmatprep.subr.bf16.mxu0 0
    %2532 = vmatpush1.bf16.msra.mxu0 0
    %2533 = vmatprep.subr.bf16.mxu0 0
    %2534 = vmatpush1.bf16.msra.mxu0 0
    %2535 = vmatprep.subr.bf16.mxu0 0
    %2536 = vmatpush1.bf16.msra.mxu0 %v2519
    %2537 = vmatprep.subr.bf16.mxu0 0
    %2538 = vmatpush2.bf16.msra.mxu0 0
    %2539 = vmatprep.subr.bf16.mxu0 0
    %2540 = vmatpush2.bf16.msra.mxu0 0
    %2541 = vmatprep.subr.bf16.mxu0 0
    %2542 = vmatpush2.bf16.msra.mxu0 0
    %2543 = vmatprep.subr.bf16.mxu0 0
    %2544 = vmatpush2.bf16.msra.mxu0 0
    %2545 = vmatprep.subr.bf16.mxu0 0
    %2546 = vmatpush2.bf16.msra.mxu0 0
    %2547 = vmatprep.subr.bf16.mxu0 0
    %2548 = vmatpush2.bf16.msra.mxu0 0
    %2549 = vmatprep.subr.bf16.mxu0 0
    %2550 = vmatpush2.bf16.msra.mxu0 0
    %2551 = vmatprep.subr.bf16.mxu0 0
    %2552 = vmatpush2.bf16.msra.mxu0 0
    %2553 = vmatprep.mubr.bf16.mxu0 0
    %2554 = vmatmul.mubr.bf16.gmra.mxu0 %v2516
    %v2555 = vpop.f32.mrf.mxu0
    %v2556 = vadd.f32 0.0, %v2555
    %v2557 = vpop.f32.mrf.mxu0
    %v2558 = vpop.f32.mrf.mxu0
    %v2559 = vpop.f32.mrf.mxu0
    %2560 = vdwg.mxu0
    %v2561 = vadd.f32 %v2341, %v2556
    %2562 = vrot.lane.b32.xlu0 %v1815, 104
    %v2563 = vpop.permute.xlu0 %2562
    %2564 = vrot.lane.b32.xlu0 %v1906, 104
    %v2565 = vpop.permute.xlu0 %2564
    %v2566 = vsel %vm1912, %v2563, 0
    %v2568 = vsel %vm1912, %v2565, 0
    %2570 = vmatprep.subr.mxu0 0.0
    %2571 = vmatpush1.xpose.msra.mxu0 0.0
    %2572 = vmatprep.subr.mxu0 0.0
    %2573 = vmatpush1.xpose.msra.mxu0 0.0
    %2574 = vmatprep.subr.mxu0 0.0
    %2575 = vmatpush1.xpose.msra.mxu0 0.0
    %2576 = vmatprep.subr.mxu0 0.0
    %2577 = vmatpush1.xpose.msra.mxu0 0.0
    %2578 = vmatprep.subr.mxu0 0.0
    %2579 = vmatpush1.xpose.msra.mxu0 0.0
    %2580 = vmatprep.subr.mxu0 0.0
    %2581 = vmatpush1.xpose.msra.mxu0 0.0
    %2582 = vmatprep.subr.mxu0 0.0
    %2583 = vmatpush1.xpose.msra.mxu0 0.0
    %2584 = vmatprep.subr.mxu0 0.0
    %2585 = vmatpush1.xpose.msra.mxu0 0.0
    %2586 = vmatprep.subr.mxu0 0.0
    %2587 = vmatpush1.xpose.msra.mxu0 0.0
    %2588 = vmatprep.subr.mxu0 0.0
    %2589 = vmatpush1.xpose.msra.mxu0 0.0
    %2590 = vmatprep.subr.mxu0 0.0
    %2591 = vmatpush1.xpose.msra.mxu0 0.0
    %2592 = vmatprep.subr.mxu0 0.0
    %2593 = vmatpush1.xpose.msra.mxu0 0.0
    %2594 = vmatprep.subr.mxu0 0.0
    %2595 = vmatpush1.xpose.msra.mxu0 0.0
    %2596 = vmatprep.subr.mxu0 0.0
    %2597 = vmatpush1.xpose.msra.mxu0 0.0
    %2598 = vmatprep.subr.mxu0 0.0
    %2599 = vmatpush1.xpose.msra.mxu0 0.0
    %2600 = vmatprep.subr.mxu0 0.0
    %2601 = vmatpush1.xpose.msra.mxu0 %v2568
    %2602 = vmatprep.subr.mxu0 0.0
    %2603 = vmatpush2.xpose.msra.mxu0 0.0
    %2604 = vmatprep.subr.mxu0 0.0
    %2605 = vmatpush2.xpose.msra.mxu0 0.0
    %2606 = vmatprep.subr.mxu0 0.0
    %2607 = vmatpush2.xpose.msra.mxu0 0.0
    %2608 = vmatprep.subr.mxu0 0.0
    %2609 = vmatpush2.xpose.msra.mxu0 0.0
    %2610 = vmatprep.subr.mxu0 0.0
    %2611 = vmatpush2.xpose.msra.mxu0 0.0
    %2612 = vmatprep.subr.mxu0 0.0
    %2613 = vmatpush2.xpose.msra.mxu0 0.0
    %2614 = vmatprep.subr.mxu0 0.0
    %2615 = vmatpush2.xpose.msra.mxu0 0.0
    %2616 = vmatprep.subr.mxu0 0.0
    %2617 = vmatpush2.xpose.msra.mxu0 0.0
    %2618 = vmatprep.subr.mxu0 0.0
    %2619 = vmatpush2.xpose.msra.mxu0 0.0
    %2620 = vmatprep.subr.mxu0 0.0
    %2621 = vmatpush2.xpose.msra.mxu0 0.0
    %2622 = vmatprep.subr.mxu0 0.0
    %2623 = vmatpush2.xpose.msra.mxu0 0.0
    %2624 = vmatprep.subr.mxu0 0.0
    %2625 = vmatpush2.xpose.msra.mxu0 0.0
    %2626 = vmatprep.subr.mxu0 0.0
    %2627 = vmatpush2.xpose.msra.mxu0 0.0
    %2628 = vmatprep.subr.mxu0 0.0
    %2629 = vmatpush2.xpose.msra.mxu0 0.0
    %2630 = vmatprep.subr.mxu0 0.0
    %2631 = vmatpush2.xpose.msra.mxu0 0.0
    %2632 = vmatprep.subr.mxu0 0.0
    %2633 = vmatpush2.xpose.msra.mxu0 0.0
    %2634 = vmatprep.mubr.f32.mxu0 0.0
    %2635 = vmatmul.mubr.f32.gmra.mxu0 %v2566
    %v2636 = vpop.f32.mrf.mxu0
    %v2637 = vadd.f32 0.0, %v2636
    %v2638 = vpop.f32.mrf.mxu0
    %2639 = vdwg.mxu0
    %v2640 = vmul.f32 %v2637, 0.35355338
    %v2641 = vadd.f32 %v2640, %v1707
    %v2642 = vadd.f32 %v2641, %v1994
    %v2643 = vsel %vm1912, %v2642, -inf
    %2644 = vmax.xlane.f32.xlu0 %v2643
    %v2645 = vpop.xlane.xlu0 %2644
    %v2646 = vsub.f32 %v2642, %v2645
    %v2647 = vmul.f32 %v2646, 1.442695
    %v2648 = vpow.pop %v2647
    %v2649 = vsel %vm1912, %v2648, 0.0
    %2650 = vadd.xlane.f32.xlu0 %v2649
    %v2651 = vpop.xlane.xlu0 %2650
    %v2652 = vrcp.pop %v2651
    %v2653 = vmul.f32 %v2648, %v2652
    %2654 = vrot.lane.b32.xlu0 %v1815, 72
    %v2655 = vpop.permute.xlu0 %2654
    %v2658 = vsel %vm1912, %v2653, 0
    %2660 = vmatprep.subr.mxu0 0.0
    %2661 = vmatpush1.msra.mxu0 0.0
    %2662 = vmatprep.subr.mxu0 0.0
    %2663 = vmatpush1.msra.mxu0 0.0
    %2664 = vmatprep.subr.mxu0 0.0
    %2665 = vmatpush1.msra.mxu0 0.0
    %2666 = vmatprep.subr.mxu0 0.0
    %2667 = vmatpush1.msra.mxu0 0.0
    %2668 = vmatprep.subr.mxu0 0.0
    %2669 = vmatpush1.msra.mxu0 0.0
    %2670 = vmatprep.subr.mxu0 0.0
    %2671 = vmatpush1.msra.mxu0 0.0
    %2672 = vmatprep.subr.mxu0 0.0
    %2673 = vmatpush1.msra.mxu0 0.0
    %2674 = vmatprep.subr.mxu0 0.0
    %2675 = vmatpush1.msra.mxu0 0.0
    %2676 = vmatprep.subr.mxu0 0.0
    %2677 = vmatpush1.msra.mxu0 0.0
    %2678 = vmatprep.subr.mxu0 0.0
    %2679 = vmatpush1.msra.mxu0 0.0
    %2680 = vmatprep.subr.mxu0 0.0
    %2681 = vmatpush1.msra.mxu0 0.0
    %2682 = vmatprep.subr.mxu0 0.0
    %2683 = vmatpush1.msra.mxu0 0.0
    %2684 = vmatprep.subr.mxu0 0.0
    %2685 = vmatpush1.msra.mxu0 0.0
    %2686 = vmatprep.subr.mxu0 0.0
    %2687 = vmatpush1.msra.mxu0 0.0
    %2688 = vmatprep.subr.mxu0 0.0
    %2689 = vmatpush1.msra.mxu0 0.0
    %2690 = vmatprep.subr.mxu0 0.0
    %2691 = vmatpush1.msra.mxu0 %v2655
    %2692 = vmatprep.subr.mxu0 0.0
    %2693 = vmatpush2.msra.mxu0 0.0
    %2694 = vmatprep.subr.mxu0 0.0
    %2695 = vmatpush2.msra.mxu0 0.0
    %2696 = vmatprep.subr.mxu0 0.0
    %2697 = vmatpush2.msra.mxu0 0.0
    %2698 = vmatprep.subr.mxu0 0.0
    %2699 = vmatpush2.msra.mxu0 0.0
    %2700 = vmatprep.subr.mxu0 0.0
    %2701 = vmatpush2.msra.mxu0 0.0
    %2702 = vmatprep.subr.mxu0 0.0
    %2703 = vmatpush2.msra.mxu0 0.0
    %2704 = vmatprep.subr.mxu0 0.0
    %2705 = vmatpush2.msra.mxu0 0.0
    %2706 = vmatprep.subr.mxu0 0.0
    %2707 = vmatpush2.msra.mxu0 0.0
    %2708 = vmatprep.subr.mxu0 0.0
    %2709 = vmatpush2.msra.mxu0 0.0
    %2710 = vmatprep.subr.mxu0 0.0
    %2711 = vmatpush2.msra.mxu0 0.0
    %2712 = vmatprep.subr.mxu0 0.0
    %2713 = vmatpush2.msra.mxu0 0.0
    %2714 = vmatprep.subr.mxu0 0.0
    %2715 = vmatpush2.msra.mxu0 0.0
    %2716 = vmatprep.subr.mxu0 0.0
    %2717 = vmatpush2.msra.mxu0 0.0
    %2718 = vmatprep.subr.mxu0 0.0
    %2719 = vmatpush2.msra.mxu0 0.0
    %2720 = vmatprep.subr.mxu0 0.0
    %2721 = vmatpush2.msra.mxu0 0.0
    %2722 = vmatprep.subr.mxu0 0.0
    %2723 = vmatpush2.msra.mxu0 0.0
    %2724 = vmatprep.mubr.f32.mxu0 0.0
    %2725 = vmatmul.mubr.f32.gmra.mxu0 %v2658
    %v2726 = vpop.f32.mrf.mxu0
    %v2727 = vadd.f32 0.0, %v2726
    %v2728 = vpop.f32.mrf.mxu0
    %2729 = vdwg.mxu0
    %v2730 = vpack.c.bf16 %v2727, %v2727
    %v2732 = vsel %vm1912, %v2730, 0
    %v2735 = vsel %vm2256, %v1911, 0
    %2737 = vmatprep.subr.bf16.mxu0 0
    %2738 = vmatpush1.bf16.msra.mxu0 0
    %2739 = vmatprep.subr.bf16.mxu0 0
    %2740 = vmatpush1.bf16.msra.mxu0 0
    %2741 = vmatprep.subr.bf16.mxu0 0
    %2742 = vmatpush1.bf16.msra.mxu0 0
    %2743 = vmatprep.subr.bf16.mxu0 0
    %2744 = vmatpush1.bf16.msra.mxu0 0
    %2745 = vmatprep.subr.bf16.mxu0 0
    %2746 = vmatpush1.bf16.msra.mxu0 0
    %2747 = vmatprep.subr.bf16.mxu0 0
    %2748 = vmatpush1.bf16.msra.mxu0 0
    %2749 = vmatprep.subr.bf16.mxu0 0
    %2750 = vmatpush1.bf16.msra.mxu0 0
    %2751 = vmatprep.subr.bf16.mxu0 0
    %2752 = vmatpush1.bf16.msra.mxu0 %v2735
    %2753 = vmatprep.subr.bf16.mxu0 0
    %2754 = vmatpush2.bf16.msra.mxu0 0
    %2755 = vmatprep.subr.bf16.mxu0 0
    %2756 = vmatpush2.bf16.msra.mxu0 0
    %2757 = vmatprep.subr.bf16.mxu0 0
    %2758 = vmatpush2.bf16.msra.mxu0 0
    %2759 = vmatprep.subr.bf16.mxu0 0
    %2760 = vmatpush2.bf16.msra.mxu0 0
    %2761 = vmatprep.subr.bf16.mxu0 0
    %2762 = vmatpush2.bf16.msra.mxu0 0
    %2763 = vmatprep.subr.bf16.mxu0 0
    %2764 = vmatpush2.bf16.msra.mxu0 0
    %2765 = vmatprep.subr.bf16.mxu0 0
    %2766 = vmatpush2.bf16.msra.mxu0 0
    %2767 = vmatprep.subr.bf16.mxu0 0
    %2768 = vmatpush2.bf16.msra.mxu0 0
    %2769 = vmatprep.mubr.bf16.mxu0 0
    %2770 = vmatmul.mubr.bf16.gmra.mxu0 %v2732
    %v2771 = vpop.f32.mrf.mxu0
    %v2772 = vadd.f32 0.0, %v2771
    %v2773 = vpop.f32.mrf.mxu0
    %v2774 = vpop.f32.mrf.mxu0
    %v2775 = vpop.f32.mrf.mxu0
    %2776 = vdwg.mxu0
    %v2777 = vadd.f32 %v2561, %v2772
    %v2779 = vsel %vm1912, %v1818, 0
    %v2782 = vsel %vm1912, %v1907, 0
    %2784 = vmatprep.subr.mxu0 0.0
    %2785 = vmatpush1.xpose.msra.mxu0 0.0
    %2786 = vmatprep.subr.mxu0 0.0
    %2787 = vmatpush1.xpose.msra.mxu0 0.0
    %2788 = vmatprep.subr.mxu0 0.0
    %2789 = vmatpush1.xpose.msra.mxu0 0.0
    %2790 = vmatprep.subr.mxu0 0.0
    %2791 = vmatpush1.xpose.msra.mxu0 0.0
    %2792 = vmatprep.subr.mxu0 0.0
    %2793 = vmatpush1.xpose.msra.mxu0 0.0
    %2794 = vmatprep.subr.mxu0 0.0
    %2795 = vmatpush1.xpose.msra.mxu0 0.0
    %2796 = vmatprep.subr.mxu0 0.0
    %2797 = vmatpush1.xpose.msra.mxu0 0.0
    %2798 = vmatprep.subr.mxu0 0.0
    %2799 = vmatpush1.xpose.msra.mxu0 0.0
    %2800 = vmatprep.subr.mxu0 0.0
    %2801 = vmatpush1.xpose.msra.mxu0 0.0
    %2802 = vmatprep.subr.mxu0 0.0
    %2803 = vmatpush1.xpose.msra.mxu0 0.0
    %2804 = vmatprep.subr.mxu0 0.0
    %2805 = vmatpush1.xpose.msra.mxu0 0.0
    %2806 = vmatprep.subr.mxu0 0.0
    %2807 = vmatpush1.xpose.msra.mxu0 0.0
    %2808 = vmatprep.subr.mxu0 0.0
    %2809 = vmatpush1.xpose.msra.mxu0 0.0
    %2810 = vmatprep.subr.mxu0 0.0
    %2811 = vmatpush1.xpose.msra.mxu0 0.0
    %2812 = vmatprep.subr.mxu0 0.0
    %2813 = vmatpush1.xpose.msra.mxu0 0.0
    %2814 = vmatprep.subr.mxu0 0.0
    %2815 = vmatpush1.xpose.msra.mxu0 %v2782
    %2816 = vmatprep.subr.mxu0 0.0
    %2817 = vmatpush2.xpose.msra.mxu0 0.0
    %2818 = vmatprep.subr.mxu0 0.0
    %2819 = vmatpush2.xpose.msra.mxu0 0.0
    %2820 = vmatprep.subr.mxu0 0.0
    %2821 = vmatpush2.xpose.msra.mxu0 0.0
    %2822 = vmatprep.subr.mxu0 0.0
    %2823 = vmatpush2.xpose.msra.mxu0 0.0
    %2824 = vmatprep.subr.mxu0 0.0
    %2825 = vmatpush2.xpose.msra.mxu0 0.0
    %2826 = vmatprep.subr.mxu0 0.0
    %2827 = vmatpush2.xpose.msra.mxu0 0.0
    %2828 = vmatprep.subr.mxu0 0.0
    %2829 = vmatpush2.xpose.msra.mxu0 0.0
    %2830 = vmatprep.subr.mxu0 0.0
    %2831 = vmatpush2.xpose.msra.mxu0 0.0
    %2832 = vmatprep.subr.mxu0 0.0
    %2833 = vmatpush2.xpose.msra.mxu0 0.0
    %2834 = vmatprep.subr.mxu0 0.0
    %2835 = vmatpush2.xpose.msra.mxu0 0.0
    %2836 = vmatprep.subr.mxu0 0.0
    %2837 = vmatpush2.xpose.msra.mxu0 0.0
    %2838 = vmatprep.subr.mxu0 0.0
    %2839 = vmatpush2.xpose.msra.mxu0 0.0
    %2840 = vmatprep.subr.mxu0 0.0
    %2841 = vmatpush2.xpose.msra.mxu0 0.0
    %2842 = vmatprep.subr.mxu0 0.0
    %2843 = vmatpush2.xpose.msra.mxu0 0.0
    %2844 = vmatprep.subr.mxu0 0.0
    %2845 = vmatpush2.xpose.msra.mxu0 0.0
    %2846 = vmatprep.subr.mxu0 0.0
    %2847 = vmatpush2.xpose.msra.mxu0 0.0
    %2848 = vmatprep.mubr.f32.mxu0 0.0
    %2849 = vmatmul.mubr.f32.gmra.mxu0 %v2779
    %v2850 = vpop.f32.mrf.mxu0
    %v2851 = vadd.f32 0.0, %v2850
    %v2852 = vpop.f32.mrf.mxu0
    %2853 = vdwg.mxu0
    %v2854 = vmul.f32 %v2851, 0.35355338
    %v2855 = vadd.f32 %v2854, %v1707
    %v2856 = vlaneseq
    %v2857 = vshrl.u32 %v2856, 7
    %v2858 = vsub.s32 1, %v2857
    %v2859 = vrot.slane %v1710, %v2858
    %v2860 = vadd.f32 %v2855, %v2859
    %v2861 = vsel %vm1912, %v2860, -inf
    %2862 = vmax.xlane.f32.xlu0 %v2861
    %v2863 = vpop.xlane.xlu0 %2862
    %v2864 = vsub.f32 %v2860, %v2863
    %v2865 = vmul.f32 %v2864, 1.442695
    %v2866 = vpow.pop %v2865
    %v2867 = vsel %vm1912, %v2866, 0.0
    %2868 = vadd.xlane.f32.xlu0 %v2867
    %v2869 = vpop.xlane.xlu0 %2868
    %v2870 = vrcp.pop %v2869
    %v2871 = vmul.f32 %v2866, %v2870
    %2872 = vrot.lane.b32.xlu0 %v1818, 96
    %v2873 = vpop.permute.xlu0 %2872
    %v2876 = vsel %vm1912, %v2871, 0
    %2878 = vmatprep.subr.mxu0 0.0
    %2879 = vmatpush1.msra.mxu0 0.0
    %2880 = vmatprep.subr.mxu0 0.0
    %2881 = vmatpush1.msra.mxu0 0.0
    %2882 = vmatprep.subr.mxu0 0.0
    %2883 = vmatpush1.msra.mxu0 0.0
    %2884 = vmatprep.subr.mxu0 0.0
    %2885 = vmatpush1.msra.mxu0 0.0
    %2886 = vmatprep.subr.mxu0 0.0
    %2887 = vmatpush1.msra.mxu0 0.0
    %2888 = vmatprep.subr.mxu0 0.0
    %2889 = vmatpush1.msra.mxu0 0.0
    %2890 = vmatprep.subr.mxu0 0.0
    %2891 = vmatpush1.msra.mxu0 0.0
    %2892 = vmatprep.subr.mxu0 0.0
    %2893 = vmatpush1.msra.mxu0 0.0
    %2894 = vmatprep.subr.mxu0 0.0
    %2895 = vmatpush1.msra.mxu0 0.0
    %2896 = vmatprep.subr.mxu0 0.0
    %2897 = vmatpush1.msra.mxu0 0.0
    %2898 = vmatprep.subr.mxu0 0.0
    %2899 = vmatpush1.msra.mxu0 0.0
    %2900 = vmatprep.subr.mxu0 0.0
    %2901 = vmatpush1.msra.mxu0 0.0
    %2902 = vmatprep.subr.mxu0 0.0
    %2903 = vmatpush1.msra.mxu0 0.0
    %2904 = vmatprep.subr.mxu0 0.0
    %2905 = vmatpush1.msra.mxu0 0.0
    %2906 = vmatprep.subr.mxu0 0.0
    %2907 = vmatpush1.msra.mxu0 0.0
    %2908 = vmatprep.subr.mxu0 0.0
    %2909 = vmatpush1.msra.mxu0 %v2873
    %2910 = vmatprep.subr.mxu0 0.0
    %2911 = vmatpush2.msra.mxu0 0.0
    %2912 = vmatprep.subr.mxu0 0.0
    %2913 = vmatpush2.msra.mxu0 0.0
    %2914 = vmatprep.subr.mxu0 0.0
    %2915 = vmatpush2.msra.mxu0 0.0
    %2916 = vmatprep.subr.mxu0 0.0
    %2917 = vmatpush2.msra.mxu0 0.0
    %2918 = vmatprep.subr.mxu0 0.0
    %2919 = vmatpush2.msra.mxu0 0.0
    %2920 = vmatprep.subr.mxu0 0.0
    %2921 = vmatpush2.msra.mxu0 0.0
    %2922 = vmatprep.subr.mxu0 0.0
    %2923 = vmatpush2.msra.mxu0 0.0
    %2924 = vmatprep.subr.mxu0 0.0
    %2925 = vmatpush2.msra.mxu0 0.0
    %2926 = vmatprep.subr.mxu0 0.0
    %2927 = vmatpush2.msra.mxu0 0.0
    %2928 = vmatprep.subr.mxu0 0.0
    %2929 = vmatpush2.msra.mxu0 0.0
    %2930 = vmatprep.subr.mxu0 0.0
    %2931 = vmatpush2.msra.mxu0 0.0
    %2932 = vmatprep.subr.mxu0 0.0
    %2933 = vmatpush2.msra.mxu0 0.0
    %2934 = vmatprep.subr.mxu0 0.0
    %2935 = vmatpush2.msra.mxu0 0.0
    %2936 = vmatprep.subr.mxu0 0.0
    %2937 = vmatpush2.msra.mxu0 0.0
    %2938 = vmatprep.subr.mxu0 0.0
    %2939 = vmatpush2.msra.mxu0 0.0
    %2940 = vmatprep.subr.mxu0 0.0
    %2941 = vmatpush2.msra.mxu0 0.0
    %2942 = vmatprep.mubr.f32.mxu0 0.0
    %2943 = vmatmul.mubr.f32.gmra.mxu0 %v2876
    %v2944 = vpop.f32.mrf.mxu0
    %v2945 = vadd.f32 0.0, %v2944
    %v2946 = vpop.f32.mrf.mxu0
    %2947 = vdwg.mxu0
    %v2948 = vpack.c.bf16 %v2945, %v2945
    %2949 = vrot.lane.b32.xlu0 %v1818, 120
    %v2950 = vpop.permute.xlu0 %2949
    %2951 = vrot.lane.b32.xlu0 %v1907, 120
    %v2952 = vpop.permute.xlu0 %2951
    %v2953 = vsel %vm1912, %v2950, 0
    %v2955 = vsel %vm1912, %v2952, 0
    %2957 = vmatprep.subr.mxu0 0.0
    %2958 = vmatpush1.xpose.msra.mxu0 0.0
    %2959 = vmatprep.subr.mxu0 0.0
    %2960 = vmatpush1.xpose.msra.mxu0 0.0
    %2961 = vmatprep.subr.mxu0 0.0
    %2962 = vmatpush1.xpose.msra.mxu0 0.0
    %2963 = vmatprep.subr.mxu0 0.0
    %2964 = vmatpush1.xpose.msra.mxu0 0.0
    %2965 = vmatprep.subr.mxu0 0.0
    %2966 = vmatpush1.xpose.msra.mxu0 0.0
    %2967 = vmatprep.subr.mxu0 0.0
    %2968 = vmatpush1.xpose.msra.mxu0 0.0
    %2969 = vmatprep.subr.mxu0 0.0
    %2970 = vmatpush1.xpose.msra.mxu0 0.0
    %2971 = vmatprep.subr.mxu0 0.0
    %2972 = vmatpush1.xpose.msra.mxu0 0.0
    %2973 = vmatprep.subr.mxu0 0.0
    %2974 = vmatpush1.xpose.msra.mxu0 0.0
    %2975 = vmatprep.subr.mxu0 0.0
    %2976 = vmatpush1.xpose.msra.mxu0 0.0
    %2977 = vmatprep.subr.mxu0 0.0
    %2978 = vmatpush1.xpose.msra.mxu0 0.0
    %2979 = vmatprep.subr.mxu0 0.0
    %2980 = vmatpush1.xpose.msra.mxu0 0.0
    %2981 = vmatprep.subr.mxu0 0.0
    %2982 = vmatpush1.xpose.msra.mxu0 0.0
    %2983 = vmatprep.subr.mxu0 0.0
    %2984 = vmatpush1.xpose.msra.mxu0 0.0
    %2985 = vmatprep.subr.mxu0 0.0
    %2986 = vmatpush1.xpose.msra.mxu0 0.0
    %2987 = vmatprep.subr.mxu0 0.0
    %2988 = vmatpush1.xpose.msra.mxu0 %v2955
    %2989 = vmatprep.subr.mxu0 0.0
    %2990 = vmatpush2.xpose.msra.mxu0 0.0
    %2991 = vmatprep.subr.mxu0 0.0
    %2992 = vmatpush2.xpose.msra.mxu0 0.0
    %2993 = vmatprep.subr.mxu0 0.0
    %2994 = vmatpush2.xpose.msra.mxu0 0.0
    %2995 = vmatprep.subr.mxu0 0.0
    %2996 = vmatpush2.xpose.msra.mxu0 0.0
    %2997 = vmatprep.subr.mxu0 0.0
    %2998 = vmatpush2.xpose.msra.mxu0 0.0
    %2999 = vmatprep.subr.mxu0 0.0
    %3000 = vmatpush2.xpose.msra.mxu0 0.0
    %3001 = vmatprep.subr.mxu0 0.0
    %3002 = vmatpush2.xpose.msra.mxu0 0.0
    %3003 = vmatprep.subr.mxu0 0.0
    %3004 = vmatpush2.xpose.msra.mxu0 0.0
    %3005 = vmatprep.subr.mxu0 0.0
    %3006 = vmatpush2.xpose.msra.mxu0 0.0
    %3007 = vmatprep.subr.mxu0 0.0
    %3008 = vmatpush2.xpose.msra.mxu0 0.0
    %3009 = vmatprep.subr.mxu0 0.0
    %3010 = vmatpush2.xpose.msra.mxu0 0.0
    %3011 = vmatprep.subr.mxu0 0.0
    %3012 = vmatpush2.xpose.msra.mxu0 0.0
    %3013 = vmatprep.subr.mxu0 0.0
    %3014 = vmatpush2.xpose.msra.mxu0 0.0
    %3015 = vmatprep.subr.mxu0 0.0
    %3016 = vmatpush2.xpose.msra.mxu0 0.0
    %3017 = vmatprep.subr.mxu0 0.0
    %3018 = vmatpush2.xpose.msra.mxu0 0.0
    %3019 = vmatprep.subr.mxu0 0.0
    %3020 = vmatpush2.xpose.msra.mxu0 0.0
    %3021 = vmatprep.mubr.f32.mxu0 0.0
    %3022 = vmatmul.mubr.f32.gmra.mxu0 %v2953
    %v3023 = vpop.f32.mrf.mxu0
    %v3024 = vadd.f32 0.0, %v3023
    %v3025 = vpop.f32.mrf.mxu0
    %3026 = vdwg.mxu0
    %v3027 = vmul.f32 %v3024, 0.35355338
    %v3028 = vadd.f32 %v3027, %v1707
    %v3029 = vadd.f32 %v3028, %v2859
    %v3030 = vsel %vm1912, %v3029, -inf
    %3031 = vmax.xlane.f32.xlu0 %v3030
    %v3032 = vpop.xlane.xlu0 %3031
    %v3033 = vsub.f32 %v3029, %v3032
    %v3034 = vmul.f32 %v3033, 1.442695
    %v3035 = vpow.pop %v3034
    %v3036 = vsel %vm1912, %v3035, 0.0
    %3037 = vadd.xlane.f32.xlu0 %v3036
    %v3038 = vpop.xlane.xlu0 %3037
    %v3039 = vrcp.pop %v3038
    %v3040 = vmul.f32 %v3035, %v3039
    %3041 = vrot.lane.b32.xlu0 %v1818, 88
    %v3042 = vpop.permute.xlu0 %3041
    %v3045 = vsel %vm1912, %v3040, 0
    %3047 = vmatprep.subr.mxu0 0.0
    %3048 = vmatpush1.msra.mxu0 0.0
    %3049 = vmatprep.subr.mxu0 0.0
    %3050 = vmatpush1.msra.mxu0 0.0
    %3051 = vmatprep.subr.mxu0 0.0
    %3052 = vmatpush1.msra.mxu0 0.0
    %3053 = vmatprep.subr.mxu0 0.0
    %3054 = vmatpush1.msra.mxu0 0.0
    %3055 = vmatprep.subr.mxu0 0.0
    %3056 = vmatpush1.msra.mxu0 0.0
    %3057 = vmatprep.subr.mxu0 0.0
    %3058 = vmatpush1.msra.mxu0 0.0
    %3059 = vmatprep.subr.mxu0 0.0
    %3060 = vmatpush1.msra.mxu0 0.0
    %3061 = vmatprep.subr.mxu0 0.0
    %3062 = vmatpush1.msra.mxu0 0.0
    %3063 = vmatprep.subr.mxu0 0.0
    %3064 = vmatpush1.msra.mxu0 0.0
    %3065 = vmatprep.subr.mxu0 0.0
    %3066 = vmatpush1.msra.mxu0 0.0
    %3067 = vmatprep.subr.mxu0 0.0
    %3068 = vmatpush1.msra.mxu0 0.0
    %3069 = vmatprep.subr.mxu0 0.0
    %3070 = vmatpush1.msra.mxu0 0.0
    %3071 = vmatprep.subr.mxu0 0.0
    %3072 = vmatpush1.msra.mxu0 0.0
    %3073 = vmatprep.subr.mxu0 0.0
    %3074 = vmatpush1.msra.mxu0 0.0
    %3075 = vmatprep.subr.mxu0 0.0
    %3076 = vmatpush1.msra.mxu0 0.0
    %3077 = vmatprep.subr.mxu0 0.0
    %3078 = vmatpush1.msra.mxu0 %v3042
    %3079 = vmatprep.subr.mxu0 0.0
    %3080 = vmatpush2.msra.mxu0 0.0
    %3081 = vmatprep.subr.mxu0 0.0
    %3082 = vmatpush2.msra.mxu0 0.0
    %3083 = vmatprep.subr.mxu0 0.0
    %3084 = vmatpush2.msra.mxu0 0.0
    %3085 = vmatprep.subr.mxu0 0.0
    %3086 = vmatpush2.msra.mxu0 0.0
    %3087 = vmatprep.subr.mxu0 0.0
    %3088 = vmatpush2.msra.mxu0 0.0
    %3089 = vmatprep.subr.mxu0 0.0
    %3090 = vmatpush2.msra.mxu0 0.0
    %3091 = vmatprep.subr.mxu0 0.0
    %3092 = vmatpush2.msra.mxu0 0.0
    %3093 = vmatprep.subr.mxu0 0.0
    %3094 = vmatpush2.msra.mxu0 0.0
    %3095 = vmatprep.subr.mxu0 0.0
    %3096 = vmatpush2.msra.mxu0 0.0
    %3097 = vmatprep.subr.mxu0 0.0
    %3098 = vmatpush2.msra.mxu0 0.0
    %3099 = vmatprep.subr.mxu0 0.0
    %3100 = vmatpush2.msra.mxu0 0.0
    %3101 = vmatprep.subr.mxu0 0.0
    %3102 = vmatpush2.msra.mxu0 0.0
    %3103 = vmatprep.subr.mxu0 0.0
    %3104 = vmatpush2.msra.mxu0 0.0
    %3105 = vmatprep.subr.mxu0 0.0
    %3106 = vmatpush2.msra.mxu0 0.0
    %3107 = vmatprep.subr.mxu0 0.0
    %3108 = vmatpush2.msra.mxu0 0.0
    %3109 = vmatprep.subr.mxu0 0.0
    %3110 = vmatpush2.msra.mxu0 0.0
    %3111 = vmatprep.mubr.f32.mxu0 0.0
    %3112 = vmatmul.mubr.f32.gmra.mxu0 %v3045
    %v3113 = vpop.f32.mrf.mxu0
    %v3114 = vadd.f32 0.0, %v3113
    %v3115 = vpop.f32.mrf.mxu0
    %3116 = vdwg.mxu0
    %v3117 = vpack.c.bf16 %v3114, %v3114
    %v3119 = vsel %vm1912, %v3117, 0
    %3121 = vmatprep.subr.bf16.mxu0 0
    %3122 = vmatpush1.bf16.msra.mxu0 0
    %3123 = vmatprep.subr.bf16.mxu0 0
    %3124 = vmatpush1.bf16.msra.mxu0 0
    %3125 = vmatprep.subr.bf16.mxu0 0
    %3126 = vmatpush1.bf16.msra.mxu0 0
    %3127 = vmatprep.subr.bf16.mxu0 0
    %3128 = vmatpush1.bf16.msra.mxu0 0
    %3129 = vmatprep.subr.bf16.mxu0 0
    %3130 = vmatpush1.bf16.msra.mxu0 0
    %3131 = vmatprep.subr.bf16.mxu0 0
    %3132 = vmatpush1.bf16.msra.mxu0 0
    %3133 = vmatprep.subr.bf16.mxu0 0
    %3134 = vmatpush1.bf16.msra.mxu0 0
    %3135 = vmatprep.subr.bf16.mxu0 0
    %3136 = vmatpush1.bf16.msra.mxu0 %v2258
    %3137 = vmatprep.subr.bf16.mxu0 0
    %3138 = vmatpush2.bf16.msra.mxu0 0
    %3139 = vmatprep.subr.bf16.mxu0 0
    %3140 = vmatpush2.bf16.msra.mxu0 0
    %3141 = vmatprep.subr.bf16.mxu0 0
    %3142 = vmatpush2.bf16.msra.mxu0 0
    %3143 = vmatprep.subr.bf16.mxu0 0
    %3144 = vmatpush2.bf16.msra.mxu0 0
    %3145 = vmatprep.subr.bf16.mxu0 0
    %3146 = vmatpush2.bf16.msra.mxu0 0
    %3147 = vmatprep.subr.bf16.mxu0 0
    %3148 = vmatpush2.bf16.msra.mxu0 0
    %3149 = vmatprep.subr.bf16.mxu0 0
    %3150 = vmatpush2.bf16.msra.mxu0 0
    %3151 = vmatprep.subr.bf16.mxu0 0
    %3152 = vmatpush2.bf16.msra.mxu0 0
    %3153 = vmatprep.mubr.bf16.mxu0 0
    %3154 = vmatmul.mubr.bf16.gmra.mxu0 %v3119
    %v3155 = vpop.f32.mrf.mxu0
    %v3156 = vadd.f32 0.0, %v3155
    %v3157 = vpop.f32.mrf.mxu0
    %v3158 = vpop.f32.mrf.mxu0
    %v3159 = vpop.f32.mrf.mxu0
    %3160 = vdwg.mxu0
    %v3162 = vsel %vm1912, %v2948, 0
    %3164 = vmatprep.subr.bf16.mxu0 0
    %3165 = vmatpush1.bf16.msra.mxu0 0
    %3166 = vmatprep.subr.bf16.mxu0 0
    %3167 = vmatpush1.bf16.msra.mxu0 0
    %3168 = vmatprep.subr.bf16.mxu0 0
    %3169 = vmatpush1.bf16.msra.mxu0 0
    %3170 = vmatprep.subr.bf16.mxu0 0
    %3171 = vmatpush1.bf16.msra.mxu0 0
    %3172 = vmatprep.subr.bf16.mxu0 0
    %3173 = vmatpush1.bf16.msra.mxu0 0
    %3174 = vmatprep.subr.bf16.mxu0 0
    %3175 = vmatpush1.bf16.msra.mxu0 0
    %3176 = vmatprep.subr.bf16.mxu0 0
    %3177 = vmatpush1.bf16.msra.mxu0 0
    %3178 = vmatprep.subr.bf16.mxu0 0
    %3179 = vmatpush1.bf16.msra.mxu0 %v2304
    %3180 = vmatprep.subr.bf16.mxu0 0
    %3181 = vmatpush2.bf16.msra.mxu0 0
    %3182 = vmatprep.subr.bf16.mxu0 0
    %3183 = vmatpush2.bf16.msra.mxu0 0
    %3184 = vmatprep.subr.bf16.mxu0 0
    %3185 = vmatpush2.bf16.msra.mxu0 0
    %3186 = vmatprep.subr.bf16.mxu0 0
    %3187 = vmatpush2.bf16.msra.mxu0 0
    %3188 = vmatprep.subr.bf16.mxu0 0
    %3189 = vmatpush2.bf16.msra.mxu0 0
    %3190 = vmatprep.subr.bf16.mxu0 0
    %3191 = vmatpush2.bf16.msra.mxu0 0
    %3192 = vmatprep.subr.bf16.mxu0 0
    %3193 = vmatpush2.bf16.msra.mxu0 0
    %3194 = vmatprep.subr.bf16.mxu0 0
    %3195 = vmatpush2.bf16.msra.mxu0 0
    %3196 = vmatprep.mubr.bf16.mxu0 0
    %3197 = vmatmul.mubr.bf16.gmra.mxu0 %v3162
    %v3198 = vpop.f32.mrf.mxu0
    %v3199 = vadd.f32 %v3156, %v3198
    %v3200 = vpop.f32.mrf.mxu0
    %v3201 = vpop.f32.mrf.mxu0
    %v3202 = vpop.f32.mrf.mxu0
    %3203 = vdwg.mxu0
    %3204 = vrot.lane.b32.xlu0 %v1818, 112
    %v3205 = vpop.permute.xlu0 %3204
    %3206 = vrot.lane.b32.xlu0 %v1907, 112
    %v3207 = vpop.permute.xlu0 %3206
    %v3208 = vsel %vm1912, %v3205, 0
    %v3210 = vsel %vm1912, %v3207, 0
    %3212 = vmatprep.subr.mxu0 0.0
    %3213 = vmatpush1.xpose.msra.mxu0 0.0
    %3214 = vmatprep.subr.mxu0 0.0
    %3215 = vmatpush1.xpose.msra.mxu0 0.0
    %3216 = vmatprep.subr.mxu0 0.0
    %3217 = vmatpush1.xpose.msra.mxu0 0.0
    %3218 = vmatprep.subr.mxu0 0.0
    %3219 = vmatpush1.xpose.msra.mxu0 0.0
    %3220 = vmatprep.subr.mxu0 0.0
    %3221 = vmatpush1.xpose.msra.mxu0 0.0
    %3222 = vmatprep.subr.mxu0 0.0
    %3223 = vmatpush1.xpose.msra.mxu0 0.0
    %3224 = vmatprep.subr.mxu0 0.0
    %3225 = vmatpush1.xpose.msra.mxu0 0.0
    %3226 = vmatprep.subr.mxu0 0.0
    %3227 = vmatpush1.xpose.msra.mxu0 0.0
    %3228 = vmatprep.subr.mxu0 0.0
    %3229 = vmatpush1.xpose.msra.mxu0 0.0
    %3230 = vmatprep.subr.mxu0 0.0
    %3231 = vmatpush1.xpose.msra.mxu0 0.0
    %3232 = vmatprep.subr.mxu0 0.0
    %3233 = vmatpush1.xpose.msra.mxu0 0.0
    %3234 = vmatprep.subr.mxu0 0.0
    %3235 = vmatpush1.xpose.msra.mxu0 0.0
    %3236 = vmatprep.subr.mxu0 0.0
    %3237 = vmatpush1.xpose.msra.mxu0 0.0
    %3238 = vmatprep.subr.mxu0 0.0
    %3239 = vmatpush1.xpose.msra.mxu0 0.0
    %3240 = vmatprep.subr.mxu0 0.0
    %3241 = vmatpush1.xpose.msra.mxu0 0.0
    %3242 = vmatprep.subr.mxu0 0.0
    %3243 = vmatpush1.xpose.msra.mxu0 %v3210
    %3244 = vmatprep.subr.mxu0 0.0
    %3245 = vmatpush2.xpose.msra.mxu0 0.0
    %3246 = vmatprep.subr.mxu0 0.0
    %3247 = vmatpush2.xpose.msra.mxu0 0.0
    %3248 = vmatprep.subr.mxu0 0.0
    %3249 = vmatpush2.xpose.msra.mxu0 0.0
    %3250 = vmatprep.subr.mxu0 0.0
    %3251 = vmatpush2.xpose.msra.mxu0 0.0
    %3252 = vmatprep.subr.mxu0 0.0
    %3253 = vmatpush2.xpose.msra.mxu0 0.0
    %3254 = vmatprep.subr.mxu0 0.0
    %3255 = vmatpush2.xpose.msra.mxu0 0.0
    %3256 = vmatprep.subr.mxu0 0.0
    %3257 = vmatpush2.xpose.msra.mxu0 0.0
    %3258 = vmatprep.subr.mxu0 0.0
    %3259 = vmatpush2.xpose.msra.mxu0 0.0
    %3260 = vmatprep.subr.mxu0 0.0
    %3261 = vmatpush2.xpose.msra.mxu0 0.0
    %3262 = vmatprep.subr.mxu0 0.0
    %3263 = vmatpush2.xpose.msra.mxu0 0.0
    %3264 = vmatprep.subr.mxu0 0.0
    %3265 = vmatpush2.xpose.msra.mxu0 0.0
    %3266 = vmatprep.subr.mxu0 0.0
    %3267 = vmatpush2.xpose.msra.mxu0 0.0
    %3268 = vmatprep.subr.mxu0 0.0
    %3269 = vmatpush2.xpose.msra.mxu0 0.0
    %3270 = vmatprep.subr.mxu0 0.0
    %3271 = vmatpush2.xpose.msra.mxu0 0.0
    %3272 = vmatprep.subr.mxu0 0.0
    %3273 = vmatpush2.xpose.msra.mxu0 0.0
    %3274 = vmatprep.subr.mxu0 0.0
    %3275 = vmatpush2.xpose.msra.mxu0 0.0
    %3276 = vmatprep.mubr.f32.mxu0 0.0
    %3277 = vmatmul.mubr.f32.gmra.mxu0 %v3208
    %v3278 = vpop.f32.mrf.mxu0
    %v3279 = vadd.f32 0.0, %v3278
    %v3280 = vpop.f32.mrf.mxu0
    %3281 = vdwg.mxu0
    %v3282 = vmul.f32 %v3279, 0.35355338
    %v3283 = vadd.f32 %v3282, %v1707
    %v3284 = vadd.f32 %v3283, %v2859
    %v3285 = vsel %vm1912, %v3284, -inf
    %3286 = vmax.xlane.f32.xlu0 %v3285
    %v3287 = vpop.xlane.xlu0 %3286
    %v3288 = vsub.f32 %v3284, %v3287
    %v3289 = vmul.f32 %v3288, 1.442695
    %v3290 = vpow.pop %v3289
    %v3291 = vsel %vm1912, %v3290, 0.0
    %3292 = vadd.xlane.f32.xlu0 %v3291
    %v3293 = vpop.xlane.xlu0 %3292
    %v3294 = vrcp.pop %v3293
    %v3295 = vmul.f32 %v3290, %v3294
    %3296 = vrot.lane.b32.xlu0 %v1818, 80
    %v3297 = vpop.permute.xlu0 %3296
    %v3300 = vsel %vm1912, %v3295, 0
    %3302 = vmatprep.subr.mxu0 0.0
    %3303 = vmatpush1.msra.mxu0 0.0
    %3304 = vmatprep.subr.mxu0 0.0
    %3305 = vmatpush1.msra.mxu0 0.0
    %3306 = vmatprep.subr.mxu0 0.0
    %3307 = vmatpush1.msra.mxu0 0.0
    %3308 = vmatprep.subr.mxu0 0.0
    %3309 = vmatpush1.msra.mxu0 0.0
    %3310 = vmatprep.subr.mxu0 0.0
    %3311 = vmatpush1.msra.mxu0 0.0
    %3312 = vmatprep.subr.mxu0 0.0
    %3313 = vmatpush1.msra.mxu0 0.0
    %3314 = vmatprep.subr.mxu0 0.0
    %3315 = vmatpush1.msra.mxu0 0.0
    %3316 = vmatprep.subr.mxu0 0.0
    %3317 = vmatpush1.msra.mxu0 0.0
    %3318 = vmatprep.subr.mxu0 0.0
    %3319 = vmatpush1.msra.mxu0 0.0
    %3320 = vmatprep.subr.mxu0 0.0
    %3321 = vmatpush1.msra.mxu0 0.0
    %3322 = vmatprep.subr.mxu0 0.0
    %3323 = vmatpush1.msra.mxu0 0.0
    %3324 = vmatprep.subr.mxu0 0.0
    %3325 = vmatpush1.msra.mxu0 0.0
    %3326 = vmatprep.subr.mxu0 0.0
    %3327 = vmatpush1.msra.mxu0 0.0
    %3328 = vmatprep.subr.mxu0 0.0
    %3329 = vmatpush1.msra.mxu0 0.0
    %3330 = vmatprep.subr.mxu0 0.0
    %3331 = vmatpush1.msra.mxu0 0.0
    %3332 = vmatprep.subr.mxu0 0.0
    %3333 = vmatpush1.msra.mxu0 %v3297
    %3334 = vmatprep.subr.mxu0 0.0
    %3335 = vmatpush2.msra.mxu0 0.0
    %3336 = vmatprep.subr.mxu0 0.0
    %3337 = vmatpush2.msra.mxu0 0.0
    %3338 = vmatprep.subr.mxu0 0.0
    %3339 = vmatpush2.msra.mxu0 0.0
    %3340 = vmatprep.subr.mxu0 0.0
    %3341 = vmatpush2.msra.mxu0 0.0
    %3342 = vmatprep.subr.mxu0 0.0
    %3343 = vmatpush2.msra.mxu0 0.0
    %3344 = vmatprep.subr.mxu0 0.0
    %3345 = vmatpush2.msra.mxu0 0.0
    %3346 = vmatprep.subr.mxu0 0.0
    %3347 = vmatpush2.msra.mxu0 0.0
    %3348 = vmatprep.subr.mxu0 0.0
    %3349 = vmatpush2.msra.mxu0 0.0
    %3350 = vmatprep.subr.mxu0 0.0
    %3351 = vmatpush2.msra.mxu0 0.0
    %3352 = vmatprep.subr.mxu0 0.0
    %3353 = vmatpush2.msra.mxu0 0.0
    %3354 = vmatprep.subr.mxu0 0.0
    %3355 = vmatpush2.msra.mxu0 0.0
    %3356 = vmatprep.subr.mxu0 0.0
    %3357 = vmatpush2.msra.mxu0 0.0
    %3358 = vmatprep.subr.mxu0 0.0
    %3359 = vmatpush2.msra.mxu0 0.0
    %3360 = vmatprep.subr.mxu0 0.0
    %3361 = vmatpush2.msra.mxu0 0.0
    %3362 = vmatprep.subr.mxu0 0.0
    %3363 = vmatpush2.msra.mxu0 0.0
    %3364 = vmatprep.subr.mxu0 0.0
    %3365 = vmatpush2.msra.mxu0 0.0
    %3366 = vmatprep.mubr.f32.mxu0 0.0
    %3367 = vmatmul.mubr.f32.gmra.mxu0 %v3300
    %v3368 = vpop.f32.mrf.mxu0
    %v3369 = vadd.f32 0.0, %v3368
    %v3370 = vpop.f32.mrf.mxu0
    %3371 = vdwg.mxu0
    %v3372 = vpack.c.bf16 %v3369, %v3369
    %v3374 = vsel %vm1912, %v3372, 0
    %3376 = vmatprep.subr.bf16.mxu0 0
    %3377 = vmatpush1.bf16.msra.mxu0 0
    %3378 = vmatprep.subr.bf16.mxu0 0
    %3379 = vmatpush1.bf16.msra.mxu0 0
    %3380 = vmatprep.subr.bf16.mxu0 0
    %3381 = vmatpush1.bf16.msra.mxu0 0
    %3382 = vmatprep.subr.bf16.mxu0 0
    %3383 = vmatpush1.bf16.msra.mxu0 0
    %3384 = vmatprep.subr.bf16.mxu0 0
    %3385 = vmatpush1.bf16.msra.mxu0 0
    %3386 = vmatprep.subr.bf16.mxu0 0
    %3387 = vmatpush1.bf16.msra.mxu0 0
    %3388 = vmatprep.subr.bf16.mxu0 0
    %3389 = vmatpush1.bf16.msra.mxu0 0
    %3390 = vmatprep.subr.bf16.mxu0 0
    %3391 = vmatpush1.bf16.msra.mxu0 %v2519
    %3392 = vmatprep.subr.bf16.mxu0 0
    %3393 = vmatpush2.bf16.msra.mxu0 0
    %3394 = vmatprep.subr.bf16.mxu0 0
    %3395 = vmatpush2.bf16.msra.mxu0 0
    %3396 = vmatprep.subr.bf16.mxu0 0
    %3397 = vmatpush2.bf16.msra.mxu0 0
    %3398 = vmatprep.subr.bf16.mxu0 0
    %3399 = vmatpush2.bf16.msra.mxu0 0
    %3400 = vmatprep.subr.bf16.mxu0 0
    %3401 = vmatpush2.bf16.msra.mxu0 0
    %3402 = vmatprep.subr.bf16.mxu0 0
    %3403 = vmatpush2.bf16.msra.mxu0 0
    %3404 = vmatprep.subr.bf16.mxu0 0
    %3405 = vmatpush2.bf16.msra.mxu0 0
    %3406 = vmatprep.subr.bf16.mxu0 0
    %3407 = vmatpush2.bf16.msra.mxu0 0
    %3408 = vmatprep.mubr.bf16.mxu0 0
    %3409 = vmatmul.mubr.bf16.gmra.mxu0 %v3374
    %v3410 = vpop.f32.mrf.mxu0
    %v3411 = vadd.f32 0.0, %v3410
    %v3412 = vpop.f32.mrf.mxu0
    %v3413 = vpop.f32.mrf.mxu0
    %v3414 = vpop.f32.mrf.mxu0
    %3415 = vdwg.mxu0
    %v3416 = vadd.f32 %v3199, %v3411
    %3417 = vrot.lane.b32.xlu0 %v1818, 104
    %v3418 = vpop.permute.xlu0 %3417
    %3419 = vrot.lane.b32.xlu0 %v1907, 104
    %v3420 = vpop.permute.xlu0 %3419
    %v3421 = vsel %vm1912, %v3418, 0
    %v3423 = vsel %vm1912, %v3420, 0
    %3425 = vmatprep.subr.mxu0 0.0
    %3426 = vmatpush1.xpose.msra.mxu0 0.0
    %3427 = vmatprep.subr.mxu0 0.0
    %3428 = vmatpush1.xpose.msra.mxu0 0.0
    %3429 = vmatprep.subr.mxu0 0.0
    %3430 = vmatpush1.xpose.msra.mxu0 0.0
    %3431 = vmatprep.subr.mxu0 0.0
    %3432 = vmatpush1.xpose.msra.mxu0 0.0
    %3433 = vmatprep.subr.mxu0 0.0
    %3434 = vmatpush1.xpose.msra.mxu0 0.0
    %3435 = vmatprep.subr.mxu0 0.0
    %3436 = vmatpush1.xpose.msra.mxu0 0.0
    %3437 = vmatprep.subr.mxu0 0.0
    %3438 = vmatpush1.xpose.msra.mxu0 0.0
    %3439 = vmatprep.subr.mxu0 0.0
    %3440 = vmatpush1.xpose.msra.mxu0 0.0
    %3441 = vmatprep.subr.mxu0 0.0
    %3442 = vmatpush1.xpose.msra.mxu0 0.0
    %3443 = vmatprep.subr.mxu0 0.0
    %3444 = vmatpush1.xpose.msra.mxu0 0.0
    %3445 = vmatprep.subr.mxu0 0.0
    %3446 = vmatpush1.xpose.msra.mxu0 0.0
    %3447 = vmatprep.subr.mxu0 0.0
    %3448 = vmatpush1.xpose.msra.mxu0 0.0
    %3449 = vmatprep.subr.mxu0 0.0
    %3450 = vmatpush1.xpose.msra.mxu0 0.0
    %3451 = vmatprep.subr.mxu0 0.0
    %3452 = vmatpush1.xpose.msra.mxu0 0.0
    %3453 = vmatprep.subr.mxu0 0.0
    %3454 = vmatpush1.xpose.msra.mxu0 0.0
    %3455 = vmatprep.subr.mxu0 0.0
    %3456 = vmatpush1.xpose.msra.mxu0 %v3423
    %3457 = vmatprep.subr.mxu0 0.0
    %3458 = vmatpush2.xpose.msra.mxu0 0.0
    %3459 = vmatprep.subr.mxu0 0.0
    %3460 = vmatpush2.xpose.msra.mxu0 0.0
    %3461 = vmatprep.subr.mxu0 0.0
    %3462 = vmatpush2.xpose.msra.mxu0 0.0
    %3463 = vmatprep.subr.mxu0 0.0
    %3464 = vmatpush2.xpose.msra.mxu0 0.0
    %3465 = vmatprep.subr.mxu0 0.0
    %3466 = vmatpush2.xpose.msra.mxu0 0.0
    %3467 = vmatprep.subr.mxu0 0.0
    %3468 = vmatpush2.xpose.msra.mxu0 0.0
    %3469 = vmatprep.subr.mxu0 0.0
    %3470 = vmatpush2.xpose.msra.mxu0 0.0
    %3471 = vmatprep.subr.mxu0 0.0
    %3472 = vmatpush2.xpose.msra.mxu0 0.0
    %3473 = vmatprep.subr.mxu0 0.0
    %3474 = vmatpush2.xpose.msra.mxu0 0.0
    %3475 = vmatprep.subr.mxu0 0.0
    %3476 = vmatpush2.xpose.msra.mxu0 0.0
    %3477 = vmatprep.subr.mxu0 0.0
    %3478 = vmatpush2.xpose.msra.mxu0 0.0
    %3479 = vmatprep.subr.mxu0 0.0
    %3480 = vmatpush2.xpose.msra.mxu0 0.0
    %3481 = vmatprep.subr.mxu0 0.0
    %3482 = vmatpush2.xpose.msra.mxu0 0.0
    %3483 = vmatprep.subr.mxu0 0.0
    %3484 = vmatpush2.xpose.msra.mxu0 0.0
    %3485 = vmatprep.subr.mxu0 0.0
    %3486 = vmatpush2.xpose.msra.mxu0 0.0
    %3487 = vmatprep.subr.mxu0 0.0
    %3488 = vmatpush2.xpose.msra.mxu0 0.0
    %3489 = vmatprep.mubr.f32.mxu0 0.0
    %3490 = vmatmul.mubr.f32.gmra.mxu0 %v3421
    %v3491 = vpop.f32.mrf.mxu0
    %v3492 = vadd.f32 0.0, %v3491
    %v3493 = vpop.f32.mrf.mxu0
    %3494 = vdwg.mxu0
    %v3495 = vmul.f32 %v3492, 0.35355338
    %v3496 = vadd.f32 %v3495, %v1707
    %v3497 = vadd.f32 %v3496, %v2859
    %v3498 = vsel %vm1912, %v3497, -inf
    %3499 = vmax.xlane.f32.xlu0 %v3498
    %v3500 = vpop.xlane.xlu0 %3499
    %v3501 = vsub.f32 %v3497, %v3500
    %v3502 = vmul.f32 %v3501, 1.442695
    %v3503 = vpow.pop %v3502
    %v3504 = vsel %vm1912, %v3503, 0.0
    %3505 = vadd.xlane.f32.xlu0 %v3504
    %v3506 = vpop.xlane.xlu0 %3505
    %v3507 = vrcp.pop %v3506
    %v3508 = vmul.f32 %v3503, %v3507
    %3509 = vrot.lane.b32.xlu0 %v1818, 72
    %v3510 = vpop.permute.xlu0 %3509
    %v3513 = vsel %vm1912, %v3508, 0
    %3515 = vmatprep.subr.mxu0 0.0
    %3516 = vmatpush1.msra.mxu0 0.0
    %3517 = vmatprep.subr.mxu0 0.0
    %3518 = vmatpush1.msra.mxu0 0.0
    %3519 = vmatprep.subr.mxu0 0.0
    %3520 = vmatpush1.msra.mxu0 0.0
    %3521 = vmatprep.subr.mxu0 0.0
    %3522 = vmatpush1.msra.mxu0 0.0
    %3523 = vmatprep.subr.mxu0 0.0
    %3524 = vmatpush1.msra.mxu0 0.0
    %3525 = vmatprep.subr.mxu0 0.0
    %3526 = vmatpush1.msra.mxu0 0.0
    %3527 = vmatprep.subr.mxu0 0.0
    %3528 = vmatpush1.msra.mxu0 0.0
    %3529 = vmatprep.subr.mxu0 0.0
    %3530 = vmatpush1.msra.mxu0 0.0
    %3531 = vmatprep.subr.mxu0 0.0
    %3532 = vmatpush1.msra.mxu0 0.0
    %3533 = vmatprep.subr.mxu0 0.0
    %3534 = vmatpush1.msra.mxu0 0.0
    %3535 = vmatprep.subr.mxu0 0.0
    %3536 = vmatpush1.msra.mxu0 0.0
    %3537 = vmatprep.subr.mxu0 0.0
    %3538 = vmatpush1.msra.mxu0 0.0
    %3539 = vmatprep.subr.mxu0 0.0
    %3540 = vmatpush1.msra.mxu0 0.0
    %3541 = vmatprep.subr.mxu0 0.0
    %3542 = vmatpush1.msra.mxu0 0.0
    %3543 = vmatprep.subr.mxu0 0.0
    %3544 = vmatpush1.msra.mxu0 0.0
    %3545 = vmatprep.subr.mxu0 0.0
    %3546 = vmatpush1.msra.mxu0 %v3510
    %3547 = vmatprep.subr.mxu0 0.0
    %3548 = vmatpush2.msra.mxu0 0.0
    %3549 = vmatprep.subr.mxu0 0.0
    %3550 = vmatpush2.msra.mxu0 0.0
    %3551 = vmatprep.subr.mxu0 0.0
    %3552 = vmatpush2.msra.mxu0 0.0
    %3553 = vmatprep.subr.mxu0 0.0
    %3554 = vmatpush2.msra.mxu0 0.0
    %3555 = vmatprep.subr.mxu0 0.0
    %3556 = vmatpush2.msra.mxu0 0.0
    %3557 = vmatprep.subr.mxu0 0.0
    %3558 = vmatpush2.msra.mxu0 0.0
    %3559 = vmatprep.subr.mxu0 0.0
    %3560 = vmatpush2.msra.mxu0 0.0
    %3561 = vmatprep.subr.mxu0 0.0
    %3562 = vmatpush2.msra.mxu0 0.0
    %3563 = vmatprep.subr.mxu0 0.0
    %3564 = vmatpush2.msra.mxu0 0.0
    %3565 = vmatprep.subr.mxu0 0.0
    %3566 = vmatpush2.msra.mxu0 0.0
    %3567 = vmatprep.subr.mxu0 0.0
    %3568 = vmatpush2.msra.mxu0 0.0
    %3569 = vmatprep.subr.mxu0 0.0
    %3570 = vmatpush2.msra.mxu0 0.0
    %3571 = vmatprep.subr.mxu0 0.0
    %3572 = vmatpush2.msra.mxu0 0.0
    %3573 = vmatprep.subr.mxu0 0.0
    %3574 = vmatpush2.msra.mxu0 0.0
    %3575 = vmatprep.subr.mxu0 0.0
    %3576 = vmatpush2.msra.mxu0 0.0
    %3577 = vmatprep.subr.mxu0 0.0
    %3578 = vmatpush2.msra.mxu0 0.0
    %3579 = vmatprep.mubr.f32.mxu0 0.0
    %3580 = vmatmul.mubr.f32.gmra.mxu0 %v3513
    %v3581 = vpop.f32.mrf.mxu0
    %v3582 = vadd.f32 0.0, %v3581
    %v3583 = vpop.f32.mrf.mxu0
    %3584 = vdwg.mxu0
    %v3585 = vpack.c.bf16 %v3582, %v3582
    %v3587 = vsel %vm1912, %v3585, 0
    %3589 = vmatprep.subr.bf16.mxu0 0
    %3590 = vmatpush1.bf16.msra.mxu0 0
    %3591 = vmatprep.subr.bf16.mxu0 0
    %3592 = vmatpush1.bf16.msra.mxu0 0
    %3593 = vmatprep.subr.bf16.mxu0 0
    %3594 = vmatpush1.bf16.msra.mxu0 0
    %3595 = vmatprep.subr.bf16.mxu0 0
    %3596 = vmatpush1.bf16.msra.mxu0 0
    %3597 = vmatprep.subr.bf16.mxu0 0
    %3598 = vmatpush1.bf16.msra.mxu0 0
    %3599 = vmatprep.subr.bf16.mxu0 0
    %3600 = vmatpush1.bf16.msra.mxu0 0
    %3601 = vmatprep.subr.bf16.mxu0 0
    %3602 = vmatpush1.bf16.msra.mxu0 0
    %3603 = vmatprep.subr.bf16.mxu0 0
    %3604 = vmatpush1.bf16.msra.mxu0 %v2735
    %3605 = vmatprep.subr.bf16.mxu0 0
    %3606 = vmatpush2.bf16.msra.mxu0 0
    %3607 = vmatprep.subr.bf16.mxu0 0
    %3608 = vmatpush2.bf16.msra.mxu0 0
    %3609 = vmatprep.subr.bf16.mxu0 0
    %3610 = vmatpush2.bf16.msra.mxu0 0
    %3611 = vmatprep.subr.bf16.mxu0 0
    %3612 = vmatpush2.bf16.msra.mxu0 0
    %3613 = vmatprep.subr.bf16.mxu0 0
    %3614 = vmatpush2.bf16.msra.mxu0 0
    %3615 = vmatprep.subr.bf16.mxu0 0
    %3616 = vmatpush2.bf16.msra.mxu0 0
    %3617 = vmatprep.subr.bf16.mxu0 0
    %3618 = vmatpush2.bf16.msra.mxu0 0
    %3619 = vmatprep.subr.bf16.mxu0 0
    %3620 = vmatpush2.bf16.msra.mxu0 0
    %3621 = vmatprep.mubr.bf16.mxu0 0
    %3622 = vmatmul.mubr.bf16.gmra.mxu0 %v3587
    %v3623 = vpop.f32.mrf.mxu0
    %v3624 = vadd.f32 0.0, %v3623
    %v3625 = vpop.f32.mrf.mxu0
    %v3626 = vpop.f32.mrf.mxu0
    %v3627 = vpop.f32.mrf.mxu0
    %3628 = vdwg.mxu0
    %v3629 = vadd.f32 %v3416, %v3624
    %v3630 = vld [vmem:[#allocation20] sm:$0x1]
    %v3632 = vlaneseq
    %v3633 = vshrl.u32 %v3632, 7
    %v3634 = vsub.s32 0, %v3633
    %v3635 = vrot.slane %v3630, %v3634
    %v3637 = vadd.f32 %v2777, %v3635
    %v3638 = vadd.f32 %v3629, %v3635
    %v3639 = vadd.f32 %v1702, %v3637
    %v3640 = vadd.f32 %v1703, %v3638
    %v3641 = vld [vmem:[%s17] sm:$0x1]
    %v3642 = vld [vmem:[#allocation22] sm:$0x1]
    %v3643 = vsel %vm553, %v3639, 0.0
    %3644 = vadd.xlane.f32.xlu0 %v3643
    %v3645 = vpop.xlane.xlu0 %3644
    %v3646 = vsel %vm553, %v3640, 0.0
    %3647 = vadd.xlane.f32.xlu0 %v3646
    %v3648 = vpop.xlane.xlu0 %3647
    %v3649 = vmul.f32 %v3645, %v1723
    %v3650 = vmul.f32 %v3648, %v1723
    %v3651 = vsub.f32 %v3639, %v3649
    %v3652 = vsub.f32 %v3640, %v3650
    %v3653 = vmul.f32 %v3651, %v3651
    %v3654 = vmul.f32 %v3652, %v3652
    %v3655 = vsel %vm553, %v3653, 0.0
    %3656 = vadd.xlane.f32.xlu0 %v3655
    %v3657 = vpop.xlane.xlu0 %3656
    %v3658 = vsel %vm553, %v3654, 0.0
    %3659 = vadd.xlane.f32.xlu0 %v3658
    %v3660 = vpop.xlane.xlu0 %3659
    %v3661 = vmul.f32 %v3657, %v1723
    %v3662 = vmul.f32 %v3660, %v1723
    %v3663 = vadd.f32 %v3661, 1e-05
    %v3664 = vadd.f32 %v3662, 1e-05
    %v3665 = vrsqrt.pop %v3663
    %v3666 = vrsqrt.pop %v3664
    %v3667 = vmul.f32 %v3651, %v3665
    %v3668 = vmul.f32 %v3652, %v3666
    %v3670 = vlaneseq
    %v3671 = vshrl.u32 %v3670, 7
    %v3672 = vsub.s32 0, %v3671
    %v3673 = vrot.slane %v3641, %v3672
    %v3675 = vmul.f32 %v3667, %v3673
    %v3676 = vmul.f32 %v3668, %v3673
    %v3678 = vlaneseq
    %v3679 = vshrl.u32 %v3678, 7
    %v3680 = vsub.s32 0, %v3679
    %v3681 = vrot.slane %v3642, %v3680
    %v3683 = vadd.f32 %v3675, %v3681
    %v3684 = vadd.f32 %v3676, %v3681
    %v3685 = vpack.c.bf16 %v3684, %v3683
    %v3686 = vld [vmem:[#allocation23] sm:$0xf]
    %v3687 = vld [vmem:[#allocation23 + $0x4] sm:$0xf]
    %v3688 = vld [vmem:[#allocation23 + $0x8] sm:$0xf]
    %v3689 = vld [vmem:[#allocation23 + $0xc] sm:$0xf]
    %v3690 = vld [vmem:[#allocation25] sm:$0x1]
    %v3692 = vlaneseq
    %v3693 = vshrl.u32 %v3692, 7
    %v3694 = vsub.s32 0, %v3693
    %v3695 = vrot.slane %v3690, %v3694
    %v3701 = vunpack.c.l.b16 %v3686
    %v3702 = vunpack.c.l.b16 %v3687
    %v3703 = vunpack.c.l.b16 %v3688
    %v3704 = vunpack.c.l.b16 %v3689
    %v3705 = vpack.c.b16 %v3702, %v3701
    %v3706 = vpack.c.b16 %v3704, %v3703
    %v3710 = vsel %vm553, %v3685, 0
    %3712 = vmatprep.subr.bf16.mxu0 0
    %3713 = vmatpush1.bf16.msra.mxu0 0
    %3714 = vmatprep.subr.bf16.mxu0 0
    %3715 = vmatpush1.bf16.msra.mxu0 0
    %3716 = vmatprep.subr.bf16.mxu0 0
    %3717 = vmatpush1.bf16.msra.mxu0 0
    %3718 = vmatprep.subr.bf16.mxu0 0
    %3719 = vmatpush1.bf16.msra.mxu0 0
    %3720 = vmatprep.subr.bf16.mxu0 0
    %3721 = vmatpush1.bf16.msra.mxu0 0
    %3722 = vmatprep.subr.bf16.mxu0 0
    %3723 = vmatpush1.bf16.msra.mxu0 0
    %3724 = vmatprep.subr.bf16.mxu0 0
    %3725 = vmatpush1.bf16.msra.mxu0 %v3706
    %3726 = vmatprep.subr.bf16.mxu0 0
    %3727 = vmatpush1.bf16.msra.mxu0 %v3705
    %3728 = vmatprep.subr.bf16.mxu0 0
    %3729 = vmatpush2.bf16.msra.mxu0 0
    %3730 = vmatprep.subr.bf16.mxu0 0
    %3731 = vmatpush2.bf16.msra.mxu0 0
    %3732 = vmatprep.subr.bf16.mxu0 0
    %3733 = vmatpush2.bf16.msra.mxu0 0
    %3734 = vmatprep.subr.bf16.mxu0 0
    %3735 = vmatpush2.bf16.msra.mxu0 0
    %3736 = vmatprep.subr.bf16.mxu0 0
    %3737 = vmatpush2.bf16.msra.mxu0 0
    %3738 = vmatprep.subr.bf16.mxu0 0
    %3739 = vmatpush2.bf16.msra.mxu0 0
    %3740 = vmatprep.subr.bf16.mxu0 0
    %3741 = vmatpush2.bf16.msra.mxu0 0
    %3742 = vmatprep.subr.bf16.mxu0 0
    %3743 = vmatpush2.bf16.msra.mxu0 0
    %3744 = vmatprep.mubr.bf16.mxu0 0
    %3745 = vmatmul.mubr.bf16.gmra.mxu0 %v3710
    %v3746 = vpop.f32.mrf.mxu0
    %v3747 = vadd.f32 %v3695, %v3746
    %v3748 = vpop.f32.mrf.mxu0
    %v3749 = vpop.f32.mrf.mxu0
    %v3750 = vadd.f32 %v3695, %v3749
    %v3751 = vpop.f32.mrf.mxu0
    %3752 = vdwg.mxu0
    %v3753 = vmul.f32 %v3747, %v3747
    %v3754 = vmul.f32 %v3750, %v3750
    %v3755 = vmul.f32 %v3747, %v3753
    %v3756 = vmul.f32 %v3750, %v3754
    %v3757 = vmul.f32 %v3755, 0.044715
    %v3758 = vmul.f32 %v3756, 0.044715
    %v3759 = vadd.f32 %v3747, %v3757
    %v3760 = vadd.f32 %v3750, %v3758
    %v3761 = vmul.f32 %v3759, 0.7978846
    %v3762 = vmul.f32 %v3760, 0.7978846
    %v3763 = vtanh.pop %v3761
    %v3764 = vtanh.pop %v3762
    %v3765 = vadd.f32 %v3763, 1.0
    %v3766 = vadd.f32 %v3764, 1.0
    %v3767 = vmul.f32 %v3765, 0.5
    %v3768 = vmul.f32 %v3766, 0.5
    %v3769 = vmul.f32 %v3747, %v3767
    %v3770 = vmul.f32 %v3750, %v3768
    %v3771 = vpack.c.bf16 %v3770, %v3769
    %v3772 = vld [vmem:[%s21] sm:$0xf]
    %v3773 = vld [vmem:[%s21 + $0x4] sm:$0xf]
    %v3774 = vld [vmem:[%s21 + $0x8] sm:$0xf]
    %v3775 = vld [vmem:[%s21 + $0xc] sm:$0xf]
    %v3776 = vld [vmem:[%s21 + $0x10] sm:$0xf]
    %v3777 = vld [vmem:[%s21 + $0x14] sm:$0xf]
    %v3778 = vld [vmem:[%s21 + $0x18] sm:$0xf]
    %v3779 = vld [vmem:[%s21 + $0x1c] sm:$0xf]
    %v3780 = vld [vmem:[%s21 + $0x20] sm:$0xf]
    %v3781 = vld [vmem:[%s21 + $0x24] sm:$0xf]
    %v3782 = vld [vmem:[%s21 + $0x28] sm:$0xf]
    %v3783 = vld [vmem:[%s21 + $0x2c] sm:$0xf]
    %v3784 = vld [vmem:[%s21 + $0x30] sm:$0xf]
    %v3785 = vld [vmem:[%s21 + $0x34] sm:$0xf]
    %v3786 = vld [vmem:[%s21 + $0x38] sm:$0xf]
    %v3787 = vld [vmem:[%s21 + $0x3c] sm:$0xf]
    %v3788 = vld [vmem:[#allocation26] sm:$0x1]
    %v3790 = vlaneseq
    %v3791 = vshrl.u32 %v3790, 7
    %v3792 = vsub.s32 0, %v3791
    %v3793 = vrot.slane %v3788, %v3792
    %v3811 = vunpack.c.l.b16 %v3772
    %v3812 = vunpack.c.l.b16 %v3773
    %v3813 = vunpack.c.l.b16 %v3774
    %v3814 = vunpack.c.l.b16 %v3775
    %v3815 = vunpack.c.l.b16 %v3776
    %v3816 = vunpack.c.l.b16 %v3777
    %v3817 = vunpack.c.l.b16 %v3778
    %v3818 = vunpack.c.l.b16 %v3779
    %v3819 = vunpack.c.l.b16 %v3780
    %v3820 = vunpack.c.l.b16 %v3781
    %v3821 = vunpack.c.l.b16 %v3782
    %v3822 = vunpack.c.l.b16 %v3783
    %v3823 = vunpack.c.l.b16 %v3784
    %v3824 = vunpack.c.l.b16 %v3785
    %v3825 = vunpack.c.l.b16 %v3786
    %v3826 = vunpack.c.l.b16 %v3787
    %v3827 = vpack.c.b16 %v3812, %v3811
    %v3828 = vpack.c.b16 %v3814, %v3813
    %v3829 = vpack.c.b16 %v3816, %v3815
    %v3830 = vpack.c.b16 %v3818, %v3817
    %v3831 = vpack.c.b16 %v3820, %v3819
    %v3832 = vpack.c.b16 %v3822, %v3821
    %v3833 = vpack.c.b16 %v3824, %v3823
    %v3834 = vpack.c.b16 %v3826, %v3825
    %3843 = vmatprep.subr.bf16.mxu0 0
    %3844 = vmatpush1.bf16.msra.mxu0 %v3834
    %3845 = vmatprep.subr.bf16.mxu0 0
    %3846 = vmatpush1.bf16.msra.mxu0 %v3833
    %3847 = vmatprep.subr.bf16.mxu0 0
    %3848 = vmatpush1.bf16.msra.mxu0 %v3832
    %3849 = vmatprep.subr.bf16.mxu0 0
    %3850 = vmatpush1.bf16.msra.mxu0 %v3831
    %3851 = vmatprep.subr.bf16.mxu0 0
    %3852 = vmatpush1.bf16.msra.mxu0 %v3830
    %3853 = vmatprep.subr.bf16.mxu0 0
    %3854 = vmatpush1.bf16.msra.mxu0 %v3829
    %3855 = vmatprep.subr.bf16.mxu0 0
    %3856 = vmatpush1.bf16.msra.mxu0 %v3828
    %3857 = vmatprep.subr.bf16.mxu0 0
    %3858 = vmatpush1.bf16.msra.mxu0 %v3827
    %3859 = vmatprep.subr.bf16.mxu0 0
    %3860 = vmatpush2.bf16.msra.mxu0 0
    %3861 = vmatprep.subr.bf16.mxu0 0
    %3862 = vmatpush2.bf16.msra.mxu0 0
    %3863 = vmatprep.subr.bf16.mxu0 0
    %3864 = vmatpush2.bf16.msra.mxu0 0
    %3865 = vmatprep.subr.bf16.mxu0 0
    %3866 = vmatpush2.bf16.msra.mxu0 0
    %3867 = vmatprep.subr.bf16.mxu0 0
    %3868 = vmatpush2.bf16.msra.mxu0 0
    %3869 = vmatprep.subr.bf16.mxu0 0
    %3870 = vmatpush2.bf16.msra.mxu0 0
    %3871 = vmatprep.subr.bf16.mxu0 0
    %3872 = vmatpush2.bf16.msra.mxu0 0
    %3873 = vmatprep.subr.bf16.mxu0 0
    %3874 = vmatpush2.bf16.msra.mxu0 0
    %3875 = vmatprep.mubr.bf16.mxu0 0
    %3876 = vmatmul.mubr.bf16.gmra.mxu0 %v3771
    %v3877 = vpop.f32.mrf.mxu0
    %v3878 = vadd.f32 %v3793, %v3877
    %v3879 = vpop.f32.mrf.mxu0
    %v3880 = vpop.f32.mrf.mxu0
    %v3881 = vadd.f32 %v3793, %v3880
    %v3882 = vpop.f32.mrf.mxu0
    %3883 = vdwg.mxu0
    %v3884 = vadd.f32 %v1702, %v3878
    %v3885 = vadd.f32 %v1703, %v3881
    %s3886 = scalar_lea.vmem [#allocation16], 1
    %v3887 = vld [vmem:[%s3886] sm:$0x1]
    %s3888 = scalar_lea.vmem [#allocation17], 1
    %v3889 = vld [vmem:[%s3888] sm:$0x1]
    %v3890 = vsel %vm553, %v3884, 0.0
    %3891 = vadd.xlane.f32.xlu0 %v3890
    %v3892 = vpop.xlane.xlu0 %3891
    %v3893 = vsel %vm553, %v3885, 0.0
    %3894 = vadd.xlane.f32.xlu0 %v3893
    %v3895 = vpop.xlane.xlu0 %3894
    %v3896 = vmul.f32 %v3892, %v1723
    %v3897 = vmul.f32 %v3895, %v1723
    %v3898 = vsub.f32 %v3884, %v3896
    %v3899 = vsub.f32 %v3885, %v3897
    %v3900 = vmul.f32 %v3898, %v3898
    %v3901 = vmul.f32 %v3899, %v3899
    %v3902 = vsel %vm553, %v3900, 0.0
    %3903 = vadd.xlane.f32.xlu0 %v3902
    %v3904 = vpop.xlane.xlu0 %3903
    %v3905 = vsel %vm553, %v3901, 0.0
    %3906 = vadd.xlane.f32.xlu0 %v3905
    %v3907 = vpop.xlane.xlu0 %3906
    %v3908 = vmul.f32 %v3904, %v1723
    %v3909 = vmul.f32 %v3907, %v1723
    %v3910 = vadd.f32 %v3908, 1e-05
    %v3911 = vadd.f32 %v3909, 1e-05
    %v3912 = vrsqrt.pop %v3910
    %v3913 = vrsqrt.pop %v3911
    %v3914 = vmul.f32 %v3898, %v3912
    %v3915 = vmul.f32 %v3899, %v3913
    %v3917 = vlaneseq
    %v3918 = vshrl.u32 %v3917, 7
    %v3919 = vsub.s32 0, %v3918
    %v3920 = vrot.slane %v3887, %v3919
    %v3922 = vmul.f32 %v3914, %v3920
    %v3923 = vmul.f32 %v3915, %v3920
    %v3925 = vlaneseq
    %v3926 = vshrl.u32 %v3925, 7
    %v3927 = vsub.s32 0, %v3926
    %v3928 = vrot.slane %v3889, %v3927
    %v3930 = vadd.f32 %v3922, %v3928
    %v3931 = vadd.f32 %v3923, %v3928
    %v3932 = vpack.c.bf16 %v3931, %v3930
    %s3933 = scalar_lea.vmem %s14, 16
    %v3934 = vld [vmem:[%s3933] sm:$0xf]
    %v3935 = vld [vmem:[%s3933 + $0x4] sm:$0xf]
    %v3936 = vld [vmem:[%s3933 + $0x8] sm:$0xf]
    %v3937 = vld [vmem:[%s3933 + $0xc] sm:$0xf]
    %v3942 = vunpack.c.l.b16 %v3934
    %v3943 = vunpack.c.l.b16 %v3935
    %v3944 = vunpack.c.l.b16 %v3936
    %v3945 = vunpack.c.l.b16 %v3937
    %v3946 = vpack.c.b16 %v3943, %v3942
    %v3947 = vpack.c.b16 %v3945, %v3944
    %v3951 = vsel %vm553, %v3932, 0
    %3953 = vmatprep.subr.bf16.mxu0 0
    %3954 = vmatpush1.bf16.msra.mxu0 0
    %3955 = vmatprep.subr.bf16.mxu0 0
    %3956 = vmatpush1.bf16.msra.mxu0 0
    %3957 = vmatprep.subr.bf16.mxu0 0
    %3958 = vmatpush1.bf16.msra.mxu0 0
    %3959 = vmatprep.subr.bf16.mxu0 0
    %3960 = vmatpush1.bf16.msra.mxu0 0
    %3961 = vmatprep.subr.bf16.mxu0 0
    %3962 = vmatpush1.bf16.msra.mxu0 0
    %3963 = vmatprep.subr.bf16.mxu0 0
    %3964 = vmatpush1.bf16.msra.mxu0 0
    %3965 = vmatprep.subr.bf16.mxu0 0
    %3966 = vmatpush1.bf16.msra.mxu0 %v3947
    %3967 = vmatprep.subr.bf16.mxu0 0
    %3968 = vmatpush1.bf16.msra.mxu0 %v3946
    %3969 = vmatprep.subr.bf16.mxu0 0
    %3970 = vmatpush2.bf16.msra.mxu0 0
    %3971 = vmatprep.subr.bf16.mxu0 0
    %3972 = vmatpush2.bf16.msra.mxu0 0
    %3973 = vmatprep.subr.bf16.mxu0 0
    %3974 = vmatpush2.bf16.msra.mxu0 0
    %3975 = vmatprep.subr.bf16.mxu0 0
    %3976 = vmatpush2.bf16.msra.mxu0 0
    %3977 = vmatprep.subr.bf16.mxu0 0
    %3978 = vmatpush2.bf16.msra.mxu0 0
    %3979 = vmatprep.subr.bf16.mxu0 0
    %3980 = vmatpush2.bf16.msra.mxu0 0
    %3981 = vmatprep.subr.bf16.mxu0 0
    %3982 = vmatpush2.bf16.msra.mxu0 0
    %3983 = vmatprep.subr.bf16.mxu0 0
    %3984 = vmatpush2.bf16.msra.mxu0 0
    %3985 = vmatprep.mubr.bf16.mxu0 0
    %3986 = vmatmul.mubr.bf16.gmra.mxu0 %v3951
    %v3987 = vpop.f32.mrf.mxu0
    %v3988 = vadd.f32 0.0, %v3987
    %v3989 = vpop.f32.mrf.mxu0
    %v3990 = vpop.f32.mrf.mxu0
    %v3991 = vadd.f32 0.0, %v3990
    %v3992 = vpop.f32.mrf.mxu0
    %3993 = vdwg.mxu0
    %v3994 = vmul.f32 %v3988, %v3988
    %v3995 = vmul.f32 %v3991, %v3991
    %v3997 = vsel %vm553, %v3994, 0
    %v4000 = vsel %vm553, %v3995, 0
    %4002 = vmatprep.subr.mxu0 0.0
    %4003 = vmatpush1.msra.mxu0 0.0
    %4004 = vmatprep.subr.mxu0 0.0
    %4005 = vmatpush1.msra.mxu0 0.0
    %4006 = vmatprep.subr.mxu0 0.0
    %4007 = vmatpush1.msra.mxu0 0.0
    %4008 = vmatprep.subr.mxu0 0.0
    %4009 = vmatpush1.msra.mxu0 0.0
    %4010 = vmatprep.subr.mxu0 0.0
    %4011 = vmatpush1.msra.mxu0 0.0
    %4012 = vmatprep.subr.mxu0 0.0
    %4013 = vmatpush1.msra.mxu0 0.0
    %4014 = vmatprep.subr.mxu0 0.0
    %4015 = vmatpush1.msra.mxu0 0.0
    %4016 = vmatprep.subr.mxu0 0.0
    %4017 = vmatpush1.msra.mxu0 0.0
    %4018 = vmatprep.subr.mxu0 0.0
    %4019 = vmatpush1.msra.mxu0 0.0
    %4020 = vmatprep.subr.mxu0 0.0
    %4021 = vmatpush1.msra.mxu0 0.0
    %4022 = vmatprep.subr.mxu0 0.0
    %4023 = vmatpush1.msra.mxu0 0.0
    %4024 = vmatprep.subr.mxu0 0.0
    %4025 = vmatpush1.msra.mxu0 0.0
    %4026 = vmatprep.subr.mxu0 0.0
    %4027 = vmatpush1.msra.mxu0 %v1714
    %4028 = vmatprep.subr.mxu0 0.0
    %4029 = vmatpush1.msra.mxu0 %v1713
    %4030 = vmatprep.subr.mxu0 0.0
    %4031 = vmatpush1.msra.mxu0 %v1712
    %4032 = vmatprep.subr.mxu0 0.0
    %4033 = vmatpush1.msra.mxu0 %v1711
    %4034 = vmatprep.subr.mxu0 0.0
    %4035 = vmatpush2.msra.mxu0 0.0
    %4036 = vmatprep.subr.mxu0 0.0
    %4037 = vmatpush2.msra.mxu0 0.0
    %4038 = vmatprep.subr.mxu0 0.0
    %4039 = vmatpush2.msra.mxu0 0.0
    %4040 = vmatprep.subr.mxu0 0.0
    %4041 = vmatpush2.msra.mxu0 0.0
    %4042 = vmatprep.subr.mxu0 0.0
    %4043 = vmatpush2.msra.mxu0 0.0
    %4044 = vmatprep.subr.mxu0 0.0
    %4045 = vmatpush2.msra.mxu0 0.0
    %4046 = vmatprep.subr.mxu0 0.0
    %4047 = vmatpush2.msra.mxu0 0.0
    %4048 = vmatprep.subr.mxu0 0.0
    %4049 = vmatpush2.msra.mxu0 0.0
    %4050 = vmatprep.subr.mxu0 0.0
    %4051 = vmatpush2.msra.mxu0 0.0
    %4052 = vmatprep.subr.mxu0 0.0
    %4053 = vmatpush2.msra.mxu0 0.0
    %4054 = vmatprep.subr.mxu0 0.0
    %4055 = vmatpush2.msra.mxu0 0.0
    %4056 = vmatprep.subr.mxu0 0.0
    %4057 = vmatpush2.msra.mxu0 0.0
    %4058 = vmatprep.subr.mxu0 0.0
    %4059 = vmatpush2.msra.mxu0 0.0
    %4060 = vmatprep.subr.mxu0 0.0
    %4061 = vmatpush2.msra.mxu0 0.0
    %4062 = vmatprep.subr.mxu0 0.0
    %4063 = vmatpush2.msra.mxu0 0.0
    %4064 = vmatprep.subr.mxu0 0.0
    %4065 = vmatpush2.msra.mxu0 0.0
    %4066 = vmatprep.mubr.f32.mxu0 0.0
    %4067 = vmatmul.mubr.f32.gmra.mxu0 %v3997
    %v4068 = vpop.f32.mrf.mxu0
    %v4069 = vadd.f32 1e-12, %v4068
    %v4070 = vpop.f32.mrf.mxu0
    %4071 = vmatprep.mubr.f32.mxu0 0.0
    %4072 = vmatmul.mubr.f32.gmra.mxu0 %v4000
    %v4073 = vpop.f32.mrf.mxu0
    %v4074 = vadd.f32 1e-12, %v4073
    %v4075 = vpop.f32.mrf.mxu0
    %4076 = vdwg.mxu0
    %v4077 = vrsqrt.pop %v4069
    %v4078 = vrsqrt.pop %v4074
    %v4079 = vmul.f32 %v3988, %v4077
    %v4080 = vmul.f32 %v3991, %v4078
    %s4081 = scalar_lea.vmem [#allocation19], 16
    %v4082 = vld [vmem:[%s4081] sm:$0xf]
    %v4083 = vld [vmem:[%s4081 + $0x4] sm:$0xf]
    %v4084 = vld [vmem:[%s4081 + $0x8] sm:$0xf]
    %v4085 = vld [vmem:[%s4081 + $0xc] sm:$0xf]
    %v4087 = vsel %vm1912, %v3988, 0
    %v4090 = vsel %vm1912, %v4079, 0
    %4092 = vmatprep.subr.mxu0 0.0
    %4093 = vmatpush1.xpose.msra.mxu0 0.0
    %4094 = vmatprep.subr.mxu0 0.0
    %4095 = vmatpush1.xpose.msra.mxu0 0.0
    %4096 = vmatprep.subr.mxu0 0.0
    %4097 = vmatpush1.xpose.msra.mxu0 0.0
    %4098 = vmatprep.subr.mxu0 0.0
    %4099 = vmatpush1.xpose.msra.mxu0 0.0
    %4100 = vmatprep.subr.mxu0 0.0
    %4101 = vmatpush1.xpose.msra.mxu0 0.0
    %4102 = vmatprep.subr.mxu0 0.0
    %4103 = vmatpush1.xpose.msra.mxu0 0.0
    %4104 = vmatprep.subr.mxu0 0.0
    %4105 = vmatpush1.xpose.msra.mxu0 0.0
    %4106 = vmatprep.subr.mxu0 0.0
    %4107 = vmatpush1.xpose.msra.mxu0 0.0
    %4108 = vmatprep.subr.mxu0 0.0
    %4109 = vmatpush1.xpose.msra.mxu0 0.0
    %4110 = vmatprep.subr.mxu0 0.0
    %4111 = vmatpush1.xpose.msra.mxu0 0.0
    %4112 = vmatprep.subr.mxu0 0.0
    %4113 = vmatpush1.xpose.msra.mxu0 0.0
    %4114 = vmatprep.subr.mxu0 0.0
    %4115 = vmatpush1.xpose.msra.mxu0 0.0
    %4116 = vmatprep.subr.mxu0 0.0
    %4117 = vmatpush1.xpose.msra.mxu0 0.0
    %4118 = vmatprep.subr.mxu0 0.0
    %4119 = vmatpush1.xpose.msra.mxu0 0.0
    %4120 = vmatprep.subr.mxu0 0.0
    %4121 = vmatpush1.xpose.msra.mxu0 0.0
    %4122 = vmatprep.subr.mxu0 0.0
    %4123 = vmatpush1.xpose.msra.mxu0 %v4090
    %4124 = vmatprep.subr.mxu0 0.0
    %4125 = vmatpush2.xpose.msra.mxu0 0.0
    %4126 = vmatprep.subr.mxu0 0.0
    %4127 = vmatpush2.xpose.msra.mxu0 0.0
    %4128 = vmatprep.subr.mxu0 0.0
    %4129 = vmatpush2.xpose.msra.mxu0 0.0
    %4130 = vmatprep.subr.mxu0 0.0
    %4131 = vmatpush2.xpose.msra.mxu0 0.0
    %4132 = vmatprep.subr.mxu0 0.0
    %4133 = vmatpush2.xpose.msra.mxu0 0.0
    %4134 = vmatprep.subr.mxu0 0.0
    %4135 = vmatpush2.xpose.msra.mxu0 0.0
    %4136 = vmatprep.subr.mxu0 0.0
    %4137 = vmatpush2.xpose.msra.mxu0 0.0
    %4138 = vmatprep.subr.mxu0 0.0
    %4139 = vmatpush2.xpose.msra.mxu0 0.0
    %4140 = vmatprep.subr.mxu0 0.0
    %4141 = vmatpush2.xpose.msra.mxu0 0.0
    %4142 = vmatprep.subr.mxu0 0.0
    %4143 = vmatpush2.xpose.msra.mxu0 0.0
    %4144 = vmatprep.subr.mxu0 0.0
    %4145 = vmatpush2.xpose.msra.mxu0 0.0
    %4146 = vmatprep.subr.mxu0 0.0
    %4147 = vmatpush2.xpose.msra.mxu0 0.0
    %4148 = vmatprep.subr.mxu0 0.0
    %4149 = vmatpush2.xpose.msra.mxu0 0.0
    %4150 = vmatprep.subr.mxu0 0.0
    %4151 = vmatpush2.xpose.msra.mxu0 0.0
    %4152 = vmatprep.subr.mxu0 0.0
    %4153 = vmatpush2.xpose.msra.mxu0 0.0
    %4154 = vmatprep.subr.mxu0 0.0
    %4155 = vmatpush2.xpose.msra.mxu0 0.0
    %4156 = vmatprep.mubr.f32.mxu0 0.0
    %4157 = vmatmul.mubr.f32.gmra.mxu0 %v4087
    %v4158 = vpop.f32.mrf.mxu0
    %v4159 = vadd.f32 0.0, %v4158
    %v4160 = vpop.f32.mrf.mxu0
    %4161 = vdwg.mxu0
    %v4162 = vmul.f32 %v4159, 0.35355338
    %v4163 = vadd.f32 %v4162, %v1707
    %v4164 = vadd.f32 %v4163, %v1994
    %v4165 = vsel %vm1912, %v4164, -inf
    %4166 = vmax.xlane.f32.xlu0 %v4165
    %v4167 = vpop.xlane.xlu0 %4166
    %v4168 = vsub.f32 %v4164, %v4167
    %v4169 = vmul.f32 %v4168, 1.442695
    %v4170 = vpow.pop %v4169
    %v4171 = vsel %vm1912, %v4170, 0.0
    %4172 = vadd.xlane.f32.xlu0 %v4171
    %v4173 = vpop.xlane.xlu0 %4172
    %v4174 = vrcp.pop %v4173
    %v4175 = vmul.f32 %v4170, %v4174
    %4176 = vrot.lane.b32.xlu0 %v3988, 96
    %v4177 = vpop.permute.xlu0 %4176
    %v4180 = vsel %vm1912, %v4175, 0
    %4182 = vmatprep.subr.mxu0 0.0
    %4183 = vmatpush1.msra.mxu0 0.0
    %4184 = vmatprep.subr.mxu0 0.0
    %4185 = vmatpush1.msra.mxu0 0.0
    %4186 = vmatprep.subr.mxu0 0.0
    %4187 = vmatpush1.msra.mxu0 0.0
    %4188 = vmatprep.subr.mxu0 0.0
    %4189 = vmatpush1.msra.mxu0 0.0
    %4190 = vmatprep.subr.mxu0 0.0
    %4191 = vmatpush1.msra.mxu0 0.0
    %4192 = vmatprep.subr.mxu0 0.0
    %4193 = vmatpush1.msra.mxu0 0.0
    %4194 = vmatprep.subr.mxu0 0.0
    %4195 = vmatpush1.msra.mxu0 0.0
    %4196 = vmatprep.subr.mxu0 0.0
    %4197 = vmatpush1.msra.mxu0 0.0
    %4198 = vmatprep.subr.mxu0 0.0
    %4199 = vmatpush1.msra.mxu0 0.0
    %4200 = vmatprep.subr.mxu0 0.0
    %4201 = vmatpush1.msra.mxu0 0.0
    %4202 = vmatprep.subr.mxu0 0.0
    %4203 = vmatpush1.msra.mxu0 0.0
    %4204 = vmatprep.subr.mxu0 0.0
    %4205 = vmatpush1.msra.mxu0 0.0
    %4206 = vmatprep.subr.mxu0 0.0
    %4207 = vmatpush1.msra.mxu0 0.0
    %4208 = vmatprep.subr.mxu0 0.0
    %4209 = vmatpush1.msra.mxu0 0.0
    %4210 = vmatprep.subr.mxu0 0.0
    %4211 = vmatpush1.msra.mxu0 0.0
    %4212 = vmatprep.subr.mxu0 0.0
    %4213 = vmatpush1.msra.mxu0 %v4177
    %4214 = vmatprep.subr.mxu0 0.0
    %4215 = vmatpush2.msra.mxu0 0.0
    %4216 = vmatprep.subr.mxu0 0.0
    %4217 = vmatpush2.msra.mxu0 0.0
    %4218 = vmatprep.subr.mxu0 0.0
    %4219 = vmatpush2.msra.mxu0 0.0
    %4220 = vmatprep.subr.mxu0 0.0
    %4221 = vmatpush2.msra.mxu0 0.0
    %4222 = vmatprep.subr.mxu0 0.0
    %4223 = vmatpush2.msra.mxu0 0.0
    %4224 = vmatprep.subr.mxu0 0.0
    %4225 = vmatpush2.msra.mxu0 0.0
    %4226 = vmatprep.subr.mxu0 0.0
    %4227 = vmatpush2.msra.mxu0 0.0
    %4228 = vmatprep.subr.mxu0 0.0
    %4229 = vmatpush2.msra.mxu0 0.0
    %4230 = vmatprep.subr.mxu0 0.0
    %4231 = vmatpush2.msra.mxu0 0.0
    %4232 = vmatprep.subr.mxu0 0.0
    %4233 = vmatpush2.msra.mxu0 0.0
    %4234 = vmatprep.subr.mxu0 0.0
    %4235 = vmatpush2.msra.mxu0 0.0
    %4236 = vmatprep.subr.mxu0 0.0
    %4237 = vmatpush2.msra.mxu0 0.0
    %4238 = vmatprep.subr.mxu0 0.0
    %4239 = vmatpush2.msra.mxu0 0.0
    %4240 = vmatprep.subr.mxu0 0.0
    %4241 = vmatpush2.msra.mxu0 0.0
    %4242 = vmatprep.subr.mxu0 0.0
    %4243 = vmatpush2.msra.mxu0 0.0
    %4244 = vmatprep.subr.mxu0 0.0
    %4245 = vmatpush2.msra.mxu0 0.0
    %4246 = vmatprep.mubr.f32.mxu0 0.0
    %4247 = vmatmul.mubr.f32.gmra.mxu0 %v4180
    %v4248 = vpop.f32.mrf.mxu0
    %v4249 = vadd.f32 0.0, %v4248
    %v4250 = vpop.f32.mrf.mxu0
    %4251 = vdwg.mxu0
    %v4252 = vpack.c.bf16 %v4249, %v4249
    %4253 = vrot.lane.b32.xlu0 %v3988, 120
    %v4254 = vpop.permute.xlu0 %4253
    %4255 = vrot.lane.b32.xlu0 %v4079, 120
    %v4256 = vpop.permute.xlu0 %4255
    %v4257 = vsel %vm1912, %v4254, 0
    %v4259 = vsel %vm1912, %v4256, 0
    %4261 = vmatprep.subr.mxu0 0.0
    %4262 = vmatpush1.xpose.msra.mxu0 0.0
    %4263 = vmatprep.subr.mxu0 0.0
    %4264 = vmatpush1.xpose.msra.mxu0 0.0
    %4265 = vmatprep.subr.mxu0 0.0
    %4266 = vmatpush1.xpose.msra.mxu0 0.0
    %4267 = vmatprep.subr.mxu0 0.0
    %4268 = vmatpush1.xpose.msra.mxu0 0.0
    %4269 = vmatprep.subr.mxu0 0.0
    %4270 = vmatpush1.xpose.msra.mxu0 0.0
    %4271 = vmatprep.subr.mxu0 0.0
    %4272 = vmatpush1.xpose.msra.mxu0 0.0
    %4273 = vmatprep.subr.mxu0 0.0
    %4274 = vmatpush1.xpose.msra.mxu0 0.0
    %4275 = vmatprep.subr.mxu0 0.0
    %4276 = vmatpush1.xpose.msra.mxu0 0.0
    %4277 = vmatprep.subr.mxu0 0.0
    %4278 = vmatpush1.xpose.msra.mxu0 0.0
    %4279 = vmatprep.subr.mxu0 0.0
    %4280 = vmatpush1.xpose.msra.mxu0 0.0
    %4281 = vmatprep.subr.mxu0 0.0
    %4282 = vmatpush1.xpose.msra.mxu0 0.0
    %4283 = vmatprep.subr.mxu0 0.0
    %4284 = vmatpush1.xpose.msra.mxu0 0.0
    %4285 = vmatprep.subr.mxu0 0.0
    %4286 = vmatpush1.xpose.msra.mxu0 0.0
    %4287 = vmatprep.subr.mxu0 0.0
    %4288 = vmatpush1.xpose.msra.mxu0 0.0
    %4289 = vmatprep.subr.mxu0 0.0
    %4290 = vmatpush1.xpose.msra.mxu0 0.0
    %4291 = vmatprep.subr.mxu0 0.0
    %4292 = vmatpush1.xpose.msra.mxu0 %v4259
    %4293 = vmatprep.subr.mxu0 0.0
    %4294 = vmatpush2.xpose.msra.mxu0 0.0
    %4295 = vmatprep.subr.mxu0 0.0
    %4296 = vmatpush2.xpose.msra.mxu0 0.0
    %4297 = vmatprep.subr.mxu0 0.0
    %4298 = vmatpush2.xpose.msra.mxu0 0.0
    %4299 = vmatprep.subr.mxu0 0.0
    %4300 = vmatpush2.xpose.msra.mxu0 0.0
    %4301 = vmatprep.subr.mxu0 0.0
    %4302 = vmatpush2.xpose.msra.mxu0 0.0
    %4303 = vmatprep.subr.mxu0 0.0
    %4304 = vmatpush2.xpose.msra.mxu0 0.0
    %4305 = vmatprep.subr.mxu0 0.0
    %4306 = vmatpush2.xpose.msra.mxu0 0.0
    %4307 = vmatprep.subr.mxu0 0.0
    %4308 = vmatpush2.xpose.msra.mxu0 0.0
    %4309 = vmatprep.subr.mxu0 0.0
    %4310 = vmatpush2.xpose.msra.mxu0 0.0
    %4311 = vmatprep.subr.mxu0 0.0
    %4312 = vmatpush2.xpose.msra.mxu0 0.0
    %4313 = vmatprep.subr.mxu0 0.0
    %4314 = vmatpush2.xpose.msra.mxu0 0.0
    %4315 = vmatprep.subr.mxu0 0.0
    %4316 = vmatpush2.xpose.msra.mxu0 0.0
    %4317 = vmatprep.subr.mxu0 0.0
    %4318 = vmatpush2.xpose.msra.mxu0 0.0
    %4319 = vmatprep.subr.mxu0 0.0
    %4320 = vmatpush2.xpose.msra.mxu0 0.0
    %4321 = vmatprep.subr.mxu0 0.0
    %4322 = vmatpush2.xpose.msra.mxu0 0.0
    %4323 = vmatprep.subr.mxu0 0.0
    %4324 = vmatpush2.xpose.msra.mxu0 0.0
    %4325 = vmatprep.mubr.f32.mxu0 0.0
    %4326 = vmatmul.mubr.f32.gmra.mxu0 %v4257
    %v4327 = vpop.f32.mrf.mxu0
    %v4328 = vadd.f32 0.0, %v4327
    %v4329 = vpop.f32.mrf.mxu0
    %4330 = vdwg.mxu0
    %v4331 = vmul.f32 %v4328, 0.35355338
    %v4332 = vadd.f32 %v4331, %v1707
    %v4333 = vadd.f32 %v4332, %v1994
    %v4334 = vsel %vm1912, %v4333, -inf
    %4335 = vmax.xlane.f32.xlu0 %v4334
    %v4336 = vpop.xlane.xlu0 %4335
    %v4337 = vsub.f32 %v4333, %v4336
    %v4338 = vmul.f32 %v4337, 1.442695
    %v4339 = vpow.pop %v4338
    %v4340 = vsel %vm1912, %v4339, 0.0
    %4341 = vadd.xlane.f32.xlu0 %v4340
    %v4342 = vpop.xlane.xlu0 %4341
    %v4343 = vrcp.pop %v4342
    %v4344 = vmul.f32 %v4339, %v4343
    %4345 = vrot.lane.b32.xlu0 %v3988, 88
    %v4346 = vpop.permute.xlu0 %4345
    %v4349 = vsel %vm1912, %v4344, 0
    %4351 = vmatprep.subr.mxu0 0.0
    %4352 = vmatpush1.msra.mxu0 0.0
    %4353 = vmatprep.subr.mxu0 0.0
    %4354 = vmatpush1.msra.mxu0 0.0
    %4355 = vmatprep.subr.mxu0 0.0
    %4356 = vmatpush1.msra.mxu0 0.0
    %4357 = vmatprep.subr.mxu0 0.0
    %4358 = vmatpush1.msra.mxu0 0.0
    %4359 = vmatprep.subr.mxu0 0.0
    %4360 = vmatpush1.msra.mxu0 0.0
    %4361 = vmatprep.subr.mxu0 0.0
    %4362 = vmatpush1.msra.mxu0 0.0
    %4363 = vmatprep.subr.mxu0 0.0
    %4364 = vmatpush1.msra.mxu0 0.0
    %4365 = vmatprep.subr.mxu0 0.0
    %4366 = vmatpush1.msra.mxu0 0.0
    %4367 = vmatprep.subr.mxu0 0.0
    %4368 = vmatpush1.msra.mxu0 0.0
    %4369 = vmatprep.subr.mxu0 0.0
    %4370 = vmatpush1.msra.mxu0 0.0
    %4371 = vmatprep.subr.mxu0 0.0
    %4372 = vmatpush1.msra.mxu0 0.0
    %4373 = vmatprep.subr.mxu0 0.0
    %4374 = vmatpush1.msra.mxu0 0.0
    %4375 = vmatprep.subr.mxu0 0.0
    %4376 = vmatpush1.msra.mxu0 0.0
    %4377 = vmatprep.subr.mxu0 0.0
    %4378 = vmatpush1.msra.mxu0 0.0
    %4379 = vmatprep.subr.mxu0 0.0
    %4380 = vmatpush1.msra.mxu0 0.0
    %4381 = vmatprep.subr.mxu0 0.0
    %4382 = vmatpush1.msra.mxu0 %v4346
    %4383 = vmatprep.subr.mxu0 0.0
    %4384 = vmatpush2.msra.mxu0 0.0
    %4385 = vmatprep.subr.mxu0 0.0
    %4386 = vmatpush2.msra.mxu0 0.0
    %4387 = vmatprep.subr.mxu0 0.0
    %4388 = vmatpush2.msra.mxu0 0.0
    %4389 = vmatprep.subr.mxu0 0.0
    %4390 = vmatpush2.msra.mxu0 0.0
    %4391 = vmatprep.subr.mxu0 0.0
    %4392 = vmatpush2.msra.mxu0 0.0
    %4393 = vmatprep.subr.mxu0 0.0
    %4394 = vmatpush2.msra.mxu0 0.0
    %4395 = vmatprep.subr.mxu0 0.0
    %4396 = vmatpush2.msra.mxu0 0.0
    %4397 = vmatprep.subr.mxu0 0.0
    %4398 = vmatpush2.msra.mxu0 0.0
    %4399 = vmatprep.subr.mxu0 0.0
    %4400 = vmatpush2.msra.mxu0 0.0
    %4401 = vmatprep.subr.mxu0 0.0
    %4402 = vmatpush2.msra.mxu0 0.0
    %4403 = vmatprep.subr.mxu0 0.0
    %4404 = vmatpush2.msra.mxu0 0.0
    %4405 = vmatprep.subr.mxu0 0.0
    %4406 = vmatpush2.msra.mxu0 0.0
    %4407 = vmatprep.subr.mxu0 0.0
    %4408 = vmatpush2.msra.mxu0 0.0
    %4409 = vmatprep.subr.mxu0 0.0
    %4410 = vmatpush2.msra.mxu0 0.0
    %4411 = vmatprep.subr.mxu0 0.0
    %4412 = vmatpush2.msra.mxu0 0.0
    %4413 = vmatprep.subr.mxu0 0.0
    %4414 = vmatpush2.msra.mxu0 0.0
    %4415 = vmatprep.mubr.f32.mxu0 0.0
    %4416 = vmatmul.mubr.f32.gmra.mxu0 %v4349
    %v4417 = vpop.f32.mrf.mxu0
    %v4418 = vadd.f32 0.0, %v4417
    %v4419 = vpop.f32.mrf.mxu0
    %4420 = vdwg.mxu0
    %v4421 = vpack.c.bf16 %v4418, %v4418
    %v4423 = vsel %vm1912, %v4421, 0
    %v4426 = vsel %vm2256, %v4083, 0
    %4428 = vmatprep.subr.bf16.mxu0 0
    %4429 = vmatpush1.bf16.msra.mxu0 0
    %4430 = vmatprep.subr.bf16.mxu0 0
    %4431 = vmatpush1.bf16.msra.mxu0 0
    %4432 = vmatprep.subr.bf16.mxu0 0
    %4433 = vmatpush1.bf16.msra.mxu0 0
    %4434 = vmatprep.subr.bf16.mxu0 0
    %4435 = vmatpush1.bf16.msra.mxu0 0
    %4436 = vmatprep.subr.bf16.mxu0 0
    %4437 = vmatpush1.bf16.msra.mxu0 0
    %4438 = vmatprep.subr.bf16.mxu0 0
    %4439 = vmatpush1.bf16.msra.mxu0 0
    %4440 = vmatprep.subr.bf16.mxu0 0
    %4441 = vmatpush1.bf16.msra.mxu0 0
    %4442 = vmatprep.subr.bf16.mxu0 0
    %4443 = vmatpush1.bf16.msra.mxu0 %v4426
    %4444 = vmatprep.subr.bf16.mxu0 0
    %4445 = vmatpush2.bf16.msra.mxu0 0
    %4446 = vmatprep.subr.bf16.mxu0 0
    %4447 = vmatpush2.bf16.msra.mxu0 0
    %4448 = vmatprep.subr.bf16.mxu0 0
    %4449 = vmatpush2.bf16.msra.mxu0 0
    %4450 = vmatprep.subr.bf16.mxu0 0
    %4451 = vmatpush2.bf16.msra.mxu0 0
    %4452 = vmatprep.subr.bf16.mxu0 0
    %4453 = vmatpush2.bf16.msra.mxu0 0
    %4454 = vmatprep.subr.bf16.mxu0 0
    %4455 = vmatpush2.bf16.msra.mxu0 0
    %4456 = vmatprep.subr.bf16.mxu0 0
    %4457 = vmatpush2.bf16.msra.mxu0 0
    %4458 = vmatprep.subr.bf16.mxu0 0
    %4459 = vmatpush2.bf16.msra.mxu0 0
    %4460 = vmatprep.mubr.bf16.mxu0 0
    %4461 = vmatmul.mubr.bf16.gmra.mxu0 %v4423
    %v4462 = vpop.f32.mrf.mxu0
    %v4463 = vadd.f32 0.0, %v4462
    %v4464 = vpop.f32.mrf.mxu0
    %v4465 = vpop.f32.mrf.mxu0
    %v4466 = vpop.f32.mrf.mxu0
    %4467 = vdwg.mxu0
    %v4469 = vsel %vm1912, %v4252, 0
    %v4472 = vsel %vm2256, %v4082, 0
    %4474 = vmatprep.subr.bf16.mxu0 0
    %4475 = vmatpush1.bf16.msra.mxu0 0
    %4476 = vmatprep.subr.bf16.mxu0 0
    %4477 = vmatpush1.bf16.msra.mxu0 0
    %4478 = vmatprep.subr.bf16.mxu0 0
    %4479 = vmatpush1.bf16.msra.mxu0 0
    %4480 = vmatprep.subr.bf16.mxu0 0
    %4481 = vmatpush1.bf16.msra.mxu0 0
    %4482 = vmatprep.subr.bf16.mxu0 0
    %4483 = vmatpush1.bf16.msra.mxu0 0
    %4484 = vmatprep.subr.bf16.mxu0 0
    %4485 = vmatpush1.bf16.msra.mxu0 0
    %4486 = vmatprep.subr.bf16.mxu0 0
    %4487 = vmatpush1.bf16.msra.mxu0 0
    %4488 = vmatprep.subr.bf16.mxu0 0
    %4489 = vmatpush1.bf16.msra.mxu0 %v4472
    %4490 = vmatprep.subr.bf16.mxu0 0
    %4491 = vmatpush2.bf16.msra.mxu0 0
    %4492 = vmatprep.subr.bf16.mxu0 0
    %4493 = vmatpush2.bf16.msra.mxu0 0
    %4494 = vmatprep.subr.bf16.mxu0 0
    %4495 = vmatpush2.bf16.msra.mxu0 0
    %4496 = vmatprep.subr.bf16.mxu0 0
    %4497 = vmatpush2.bf16.msra.mxu0 0
    %4498 = vmatprep.subr.bf16.mxu0 0
    %4499 = vmatpush2.bf16.msra.mxu0 0
    %4500 = vmatprep.subr.bf16.mxu0 0
    %4501 = vmatpush2.bf16.msra.mxu0 0
    %4502 = vmatprep.subr.bf16.mxu0 0
    %4503 = vmatpush2.bf16.msra.mxu0 0
    %4504 = vmatprep.subr.bf16.mxu0 0
    %4505 = vmatpush2.bf16.msra.mxu0 0
    %4506 = vmatprep.mubr.bf16.mxu0 0
    %4507 = vmatmul.mubr.bf16.gmra.mxu0 %v4469
    %v4508 = vpop.f32.mrf.mxu0
    %v4509 = vadd.f32 %v4463, %v4508
    %v4510 = vpop.f32.mrf.mxu0
    %v4511 = vpop.f32.mrf.mxu0
    %v4512 = vpop.f32.mrf.mxu0
    %4513 = vdwg.mxu0
    %4514 = vrot.lane.b32.xlu0 %v3988, 112
    %v4515 = vpop.permute.xlu0 %4514
    %4516 = vrot.lane.b32.xlu0 %v4079, 112
    %v4517 = vpop.permute.xlu0 %4516
    %v4518 = vsel %vm1912, %v4515, 0
    %v4520 = vsel %vm1912, %v4517, 0
    %4522 = vmatprep.subr.mxu0 0.0
    %4523 = vmatpush1.xpose.msra.mxu0 0.0
    %4524 = vmatprep.subr.mxu0 0.0
    %4525 = vmatpush1.xpose.msra.mxu0 0.0
    %4526 = vmatprep.subr.mxu0 0.0
    %4527 = vmatpush1.xpose.msra.mxu0 0.0
    %4528 = vmatprep.subr.mxu0 0.0
    %4529 = vmatpush1.xpose.msra.mxu0 0.0
    %4530 = vmatprep.subr.mxu0 0.0
    %4531 = vmatpush1.xpose.msra.mxu0 0.0
    %4532 = vmatprep.subr.mxu0 0.0
    %4533 = vmatpush1.xpose.msra.mxu0 0.0
    %4534 = vmatprep.subr.mxu0 0.0
    %4535 = vmatpush1.xpose.msra.mxu0 0.0
    %4536 = vmatprep.subr.mxu0 0.0
    %4537 = vmatpush1.xpose.msra.mxu0 0.0
    %4538 = vmatprep.subr.mxu0 0.0
    %4539 = vmatpush1.xpose.msra.mxu0 0.0
    %4540 = vmatprep.subr.mxu0 0.0
    %4541 = vmatpush1.xpose.msra.mxu0 0.0
    %4542 = vmatprep.subr.mxu0 0.0
    %4543 = vmatpush1.xpose.msra.mxu0 0.0
    %4544 = vmatprep.subr.mxu0 0.0
    %4545 = vmatpush1.xpose.msra.mxu0 0.0
    %4546 = vmatprep.subr.mxu0 0.0
    %4547 = vmatpush1.xpose.msra.mxu0 0.0
    %4548 = vmatprep.subr.mxu0 0.0
    %4549 = vmatpush1.xpose.msra.mxu0 0.0
    %4550 = vmatprep.subr.mxu0 0.0
    %4551 = vmatpush1.xpose.msra.mxu0 0.0
    %4552 = vmatprep.subr.mxu0 0.0
    %4553 = vmatpush1.xpose.msra.mxu0 %v4520
    %4554 = vmatprep.subr.mxu0 0.0
    %4555 = vmatpush2.xpose.msra.mxu0 0.0
    %4556 = vmatprep.subr.mxu0 0.0
    %4557 = vmatpush2.xpose.msra.mxu0 0.0
    %4558 = vmatprep.subr.mxu0 0.0
    %4559 = vmatpush2.xpose.msra.mxu0 0.0
    %4560 = vmatprep.subr.mxu0 0.0
    %4561 = vmatpush2.xpose.msra.mxu0 0.0
    %4562 = vmatprep.subr.mxu0 0.0
    %4563 = vmatpush2.xpose.msra.mxu0 0.0
    %4564 = vmatprep.subr.mxu0 0.0
    %4565 = vmatpush2.xpose.msra.mxu0 0.0
    %4566 = vmatprep.subr.mxu0 0.0
    %4567 = vmatpush2.xpose.msra.mxu0 0.0
    %4568 = vmatprep.subr.mxu0 0.0
    %4569 = vmatpush2.xpose.msra.mxu0 0.0
    %4570 = vmatprep.subr.mxu0 0.0
    %4571 = vmatpush2.xpose.msra.mxu0 0.0
    %4572 = vmatprep.subr.mxu0 0.0
    %4573 = vmatpush2.xpose.msra.mxu0 0.0
    %4574 = vmatprep.subr.mxu0 0.0
    %4575 = vmatpush2.xpose.msra.mxu0 0.0
    %4576 = vmatprep.subr.mxu0 0.0
    %4577 = vmatpush2.xpose.msra.mxu0 0.0
    %4578 = vmatprep.subr.mxu0 0.0
    %4579 = vmatpush2.xpose.msra.mxu0 0.0
    %4580 = vmatprep.subr.mxu0 0.0
    %4581 = vmatpush2.xpose.msra.mxu0 0.0
    %4582 = vmatprep.subr.mxu0 0.0
    %4583 = vmatpush2.xpose.msra.mxu0 0.0
    %4584 = vmatprep.subr.mxu0 0.0
    %4585 = vmatpush2.xpose.msra.mxu0 0.0
    %4586 = vmatprep.mubr.f32.mxu0 0.0
    %4587 = vmatmul.mubr.f32.gmra.mxu0 %v4518
    %v4588 = vpop.f32.mrf.mxu0
    %v4589 = vadd.f32 0.0, %v4588
    %v4590 = vpop.f32.mrf.mxu0
    %4591 = vdwg.mxu0
    %v4592 = vmul.f32 %v4589, 0.35355338
    %v4593 = vadd.f32 %v4592, %v1707
    %v4594 = vadd.f32 %v4593, %v1994
    %v4595 = vsel %vm1912, %v4594, -inf
    %4596 = vmax.xlane.f32.xlu0 %v4595
    %v4597 = vpop.xlane.xlu0 %4596
    %v4598 = vsub.f32 %v4594, %v4597
    %v4599 = vmul.f32 %v4598, 1.442695
    %v4600 = vpow.pop %v4599
    %v4601 = vsel %vm1912, %v4600, 0.0
    %4602 = vadd.xlane.f32.xlu0 %v4601
    %v4603 = vpop.xlane.xlu0 %4602
    %v4604 = vrcp.pop %v4603
    %v4605 = vmul.f32 %v4600, %v4604
    %4606 = vrot.lane.b32.xlu0 %v3988, 80
    %v4607 = vpop.permute.xlu0 %4606
    %v4610 = vsel %vm1912, %v4605, 0
    %4612 = vmatprep.subr.mxu0 0.0
    %4613 = vmatpush1.msra.mxu0 0.0
    %4614 = vmatprep.subr.mxu0 0.0
    %4615 = vmatpush1.msra.mxu0 0.0
    %4616 = vmatprep.subr.mxu0 0.0
    %4617 = vmatpush1.msra.mxu0 0.0
    %4618 = vmatprep.subr.mxu0 0.0
    %4619 = vmatpush1.msra.mxu0 0.0
    %4620 = vmatprep.subr.mxu0 0.0
    %4621 = vmatpush1.msra.mxu0 0.0
    %4622 = vmatprep.subr.mxu0 0.0
    %4623 = vmatpush1.msra.mxu0 0.0
    %4624 = vmatprep.subr.mxu0 0.0
    %4625 = vmatpush1.msra.mxu0 0.0
    %4626 = vmatprep.subr.mxu0 0.0
    %4627 = vmatpush1.msra.mxu0 0.0
    %4628 = vmatprep.subr.mxu0 0.0
    %4629 = vmatpush1.msra.mxu0 0.0
    %4630 = vmatprep.subr.mxu0 0.0
    %4631 = vmatpush1.msra.mxu0 0.0
    %4632 = vmatprep.subr.mxu0 0.0
    %4633 = vmatpush1.msra.mxu0 0.0
    %4634 = vmatprep.subr.mxu0 0.0
    %4635 = vmatpush1.msra.mxu0 0.0
    %4636 = vmatprep.subr.mxu0 0.0
    %4637 = vmatpush1.msra.mxu0 0.0
    %4638 = vmatprep.subr.mxu0 0.0
    %4639 = vmatpush1.msra.mxu0 0.0
    %4640 = vmatprep.subr.mxu0 0.0
    %4641 = vmatpush1.msra.mxu0 0.0
    %4642 = vmatprep.subr.mxu0 0.0
    %4643 = vmatpush1.msra.mxu0 %v4607
    %4644 = vmatprep.subr.mxu0 0.0
    %4645 = vmatpush2.msra.mxu0 0.0
    %4646 = vmatprep.subr.mxu0 0.0
    %4647 = vmatpush2.msra.mxu0 0.0
    %4648 = vmatprep.subr.mxu0 0.0
    %4649 = vmatpush2.msra.mxu0 0.0
    %4650 = vmatprep.subr.mxu0 0.0
    %4651 = vmatpush2.msra.mxu0 0.0
    %4652 = vmatprep.subr.mxu0 0.0
    %4653 = vmatpush2.msra.mxu0 0.0
    %4654 = vmatprep.subr.mxu0 0.0
    %4655 = vmatpush2.msra.mxu0 0.0
    %4656 = vmatprep.subr.mxu0 0.0
    %4657 = vmatpush2.msra.mxu0 0.0
    %4658 = vmatprep.subr.mxu0 0.0
    %4659 = vmatpush2.msra.mxu0 0.0
    %4660 = vmatprep.subr.mxu0 0.0
    %4661 = vmatpush2.msra.mxu0 0.0
    %4662 = vmatprep.subr.mxu0 0.0
    %4663 = vmatpush2.msra.mxu0 0.0
    %4664 = vmatprep.subr.mxu0 0.0
    %4665 = vmatpush2.msra.mxu0 0.0
    %4666 = vmatprep.subr.mxu0 0.0
    %4667 = vmatpush2.msra.mxu0 0.0
    %4668 = vmatprep.subr.mxu0 0.0
    %4669 = vmatpush2.msra.mxu0 0.0
    %4670 = vmatprep.subr.mxu0 0.0
    %4671 = vmatpush2.msra.mxu0 0.0
    %4672 = vmatprep.subr.mxu0 0.0
    %4673 = vmatpush2.msra.mxu0 0.0
    %4674 = vmatprep.subr.mxu0 0.0
    %4675 = vmatpush2.msra.mxu0 0.0
    %4676 = vmatprep.mubr.f32.mxu0 0.0
    %4677 = vmatmul.mubr.f32.gmra.mxu0 %v4610
    %v4678 = vpop.f32.mrf.mxu0
    %v4679 = vadd.f32 0.0, %v4678
    %v4680 = vpop.f32.mrf.mxu0
    %4681 = vdwg.mxu0
    %v4682 = vpack.c.bf16 %v4679, %v4679
    %v4684 = vsel %vm1912, %v4682, 0
    %v4687 = vsel %vm2256, %v4084, 0
    %4689 = vmatprep.subr.bf16.mxu0 0
    %4690 = vmatpush1.bf16.msra.mxu0 0
    %4691 = vmatprep.subr.bf16.mxu0 0
    %4692 = vmatpush1.bf16.msra.mxu0 0
    %4693 = vmatprep.subr.bf16.mxu0 0
    %4694 = vmatpush1.bf16.msra.mxu0 0
    %4695 = vmatprep.subr.bf16.mxu0 0
    %4696 = vmatpush1.bf16.msra.mxu0 0
    %4697 = vmatprep.subr.bf16.mxu0 0
    %4698 = vmatpush1.bf16.msra.mxu0 0
    %4699 = vmatprep.subr.bf16.mxu0 0
    %4700 = vmatpush1.bf16.msra.mxu0 0
    %4701 = vmatprep.subr.bf16.mxu0 0
    %4702 = vmatpush1.bf16.msra.mxu0 0
    %4703 = vmatprep.subr.bf16.mxu0 0
    %4704 = vmatpush1.bf16.msra.mxu0 %v4687
    %4705 = vmatprep.subr.bf16.mxu0 0
    %4706 = vmatpush2.bf16.msra.mxu0 0
    %4707 = vmatprep.subr.bf16.mxu0 0
    %4708 = vmatpush2.bf16.msra.mxu0 0
    %4709 = vmatprep.subr.bf16.mxu0 0
    %4710 = vmatpush2.bf16.msra.mxu0 0
    %4711 = vmatprep.subr.bf16.mxu0 0
    %4712 = vmatpush2.bf16.msra.mxu0 0
    %4713 = vmatprep.subr.bf16.mxu0 0
    %4714 = vmatpush2.bf16.msra.mxu0 0
    %4715 = vmatprep.subr.bf16.mxu0 0
    %4716 = vmatpush2.bf16.msra.mxu0 0
    %4717 = vmatprep.subr.bf16.mxu0 0
    %4718 = vmatpush2.bf16.msra.mxu0 0
    %4719 = vmatprep.subr.bf16.mxu0 0
    %4720 = vmatpush2.bf16.msra.mxu0 0
    %4721 = vmatprep.mubr.bf16.mxu0 0
    %4722 = vmatmul.mubr.bf16.gmra.mxu0 %v4684
    %v4723 = vpop.f32.mrf.mxu0
    %v4724 = vadd.f32 0.0, %v4723
    %v4725 = vpop.f32.mrf.mxu0
    %v4726 = vpop.f32.mrf.mxu0
    %v4727 = vpop.f32.mrf.mxu0
    %4728 = vdwg.mxu0
    %v4729 = vadd.f32 %v4509, %v4724
    %4730 = vrot.lane.b32.xlu0 %v3988, 104
    %v4731 = vpop.permute.xlu0 %4730
    %4732 = vrot.lane.b32.xlu0 %v4079, 104
    %v4733 = vpop.permute.xlu0 %4732
    %v4734 = vsel %vm1912, %v4731, 0
    %v4736 = vsel %vm1912, %v4733, 0
    %4738 = vmatprep.subr.mxu0 0.0
    %4739 = vmatpush1.xpose.msra.mxu0 0.0
    %4740 = vmatprep.subr.mxu0 0.0
    %4741 = vmatpush1.xpose.msra.mxu0 0.0
    %4742 = vmatprep.subr.mxu0 0.0
    %4743 = vmatpush1.xpose.msra.mxu0 0.0
    %4744 = vmatprep.subr.mxu0 0.0
    %4745 = vmatpush1.xpose.msra.mxu0 0.0
    %4746 = vmatprep.subr.mxu0 0.0
    %4747 = vmatpush1.xpose.msra.mxu0 0.0
    %4748 = vmatprep.subr.mxu0 0.0
    %4749 = vmatpush1.xpose.msra.mxu0 0.0
    %4750 = vmatprep.subr.mxu0 0.0
    %4751 = vmatpush1.xpose.msra.mxu0 0.0
    %4752 = vmatprep.subr.mxu0 0.0
    %4753 = vmatpush1.xpose.msra.mxu0 0.0
    %4754 = vmatprep.subr.mxu0 0.0
    %4755 = vmatpush1.xpose.msra.mxu0 0.0
    %4756 = vmatprep.subr.mxu0 0.0
    %4757 = vmatpush1.xpose.msra.mxu0 0.0
    %4758 = vmatprep.subr.mxu0 0.0
    %4759 = vmatpush1.xpose.msra.mxu0 0.0
    %4760 = vmatprep.subr.mxu0 0.0
    %4761 = vmatpush1.xpose.msra.mxu0 0.0
    %4762 = vmatprep.subr.mxu0 0.0
    %4763 = vmatpush1.xpose.msra.mxu0 0.0
    %4764 = vmatprep.subr.mxu0 0.0
    %4765 = vmatpush1.xpose.msra.mxu0 0.0
    %4766 = vmatprep.subr.mxu0 0.0
    %4767 = vmatpush1.xpose.msra.mxu0 0.0
    %4768 = vmatprep.subr.mxu0 0.0
    %4769 = vmatpush1.xpose.msra.mxu0 %v4736
    %4770 = vmatprep.subr.mxu0 0.0
    %4771 = vmatpush2.xpose.msra.mxu0 0.0
    %4772 = vmatprep.subr.mxu0 0.0
    %4773 = vmatpush2.xpose.msra.mxu0 0.0
    %4774 = vmatprep.subr.mxu0 0.0
    %4775 = vmatpush2.xpose.msra.mxu0 0.0
    %4776 = vmatprep.subr.mxu0 0.0
    %4777 = vmatpush2.xpose.msra.mxu0 0.0
    %4778 = vmatprep.subr.mxu0 0.0
    %4779 = vmatpush2.xpose.msra.mxu0 0.0
    %4780 = vmatprep.subr.mxu0 0.0
    %4781 = vmatpush2.xpose.msra.mxu0 0.0
    %4782 = vmatprep.subr.mxu0 0.0
    %4783 = vmatpush2.xpose.msra.mxu0 0.0
    %4784 = vmatprep.subr.mxu0 0.0
    %4785 = vmatpush2.xpose.msra.mxu0 0.0
    %4786 = vmatprep.subr.mxu0 0.0
    %4787 = vmatpush2.xpose.msra.mxu0 0.0
    %4788 = vmatprep.subr.mxu0 0.0
    %4789 = vmatpush2.xpose.msra.mxu0 0.0
    %4790 = vmatprep.subr.mxu0 0.0
    %4791 = vmatpush2.xpose.msra.mxu0 0.0
    %4792 = vmatprep.subr.mxu0 0.0
    %4793 = vmatpush2.xpose.msra.mxu0 0.0
    %4794 = vmatprep.subr.mxu0 0.0
    %4795 = vmatpush2.xpose.msra.mxu0 0.0
    %4796 = vmatprep.subr.mxu0 0.0
    %4797 = vmatpush2.xpose.msra.mxu0 0.0
    %4798 = vmatprep.subr.mxu0 0.0
    %4799 = vmatpush2.xpose.msra.mxu0 0.0
    %4800 = vmatprep.subr.mxu0 0.0
    %4801 = vmatpush2.xpose.msra.mxu0 0.0
    %4802 = vmatprep.mubr.f32.mxu0 0.0
    %4803 = vmatmul.mubr.f32.gmra.mxu0 %v4734
    %v4804 = vpop.f32.mrf.mxu0
    %v4805 = vadd.f32 0.0, %v4804
    %v4806 = vpop.f32.mrf.mxu0
    %4807 = vdwg.mxu0
    %v4808 = vmul.f32 %v4805, 0.35355338
    %v4809 = vadd.f32 %v4808, %v1707
    %v4810 = vadd.f32 %v4809, %v1994
    %v4811 = vsel %vm1912, %v4810, -inf
    %4812 = vmax.xlane.f32.xlu0 %v4811
    %v4813 = vpop.xlane.xlu0 %4812
    %v4814 = vsub.f32 %v4810, %v4813
    %v4815 = vmul.f32 %v4814, 1.442695
    %v4816 = vpow.pop %v4815
    %v4817 = vsel %vm1912, %v4816, 0.0
    %4818 = vadd.xlane.f32.xlu0 %v4817
    %v4819 = vpop.xlane.xlu0 %4818
    %v4820 = vrcp.pop %v4819
    %v4821 = vmul.f32 %v4816, %v4820
    %4822 = vrot.lane.b32.xlu0 %v3988, 72
    %v4823 = vpop.permute.xlu0 %4822
    %v4826 = vsel %vm1912, %v4821, 0
    %4828 = vmatprep.subr.mxu0 0.0
    %4829 = vmatpush1.msra.mxu0 0.0
    %4830 = vmatprep.subr.mxu0 0.0
    %4831 = vmatpush1.msra.mxu0 0.0
    %4832 = vmatprep.subr.mxu0 0.0
    %4833 = vmatpush1.msra.mxu0 0.0
    %4834 = vmatprep.subr.mxu0 0.0
    %4835 = vmatpush1.msra.mxu0 0.0
    %4836 = vmatprep.subr.mxu0 0.0
    %4837 = vmatpush1.msra.mxu0 0.0
    %4838 = vmatprep.subr.mxu0 0.0
    %4839 = vmatpush1.msra.mxu0 0.0
    %4840 = vmatprep.subr.mxu0 0.0
    %4841 = vmatpush1.msra.mxu0 0.0
    %4842 = vmatprep.subr.mxu0 0.0
    %4843 = vmatpush1.msra.mxu0 0.0
    %4844 = vmatprep.subr.mxu0 0.0
    %4845 = vmatpush1.msra.mxu0 0.0
    %4846 = vmatprep.subr.mxu0 0.0
    %4847 = vmatpush1.msra.mxu0 0.0
    %4848 = vmatprep.subr.mxu0 0.0
    %4849 = vmatpush1.msra.mxu0 0.0
    %4850 = vmatprep.subr.mxu0 0.0
    %4851 = vmatpush1.msra.mxu0 0.0
    %4852 = vmatprep.subr.mxu0 0.0
    %4853 = vmatpush1.msra.mxu0 0.0
    %4854 = vmatprep.subr.mxu0 0.0
    %4855 = vmatpush1.msra.mxu0 0.0
    %4856 = vmatprep.subr.mxu0 0.0
    %4857 = vmatpush1.msra.mxu0 0.0
    %4858 = vmatprep.subr.mxu0 0.0
    %4859 = vmatpush1.msra.mxu0 %v4823
    %4860 = vmatprep.subr.mxu0 0.0
    %4861 = vmatpush2.msra.mxu0 0.0
    %4862 = vmatprep.subr.mxu0 0.0
    %4863 = vmatpush2.msra.mxu0 0.0
    %4864 = vmatprep.subr.mxu0 0.0
    %4865 = vmatpush2.msra.mxu0 0.0
    %4866 = vmatprep.subr.mxu0 0.0
    %4867 = vmatpush2.msra.mxu0 0.0
    %4868 = vmatprep.subr.mxu0 0.0
    %4869 = vmatpush2.msra.mxu0 0.0
    %4870 = vmatprep.subr.mxu0 0.0
    %4871 = vmatpush2.msra.mxu0 0.0
    %4872 = vmatprep.subr.mxu0 0.0
    %4873 = vmatpush2.msra.mxu0 0.0
    %4874 = vmatprep.subr.mxu0 0.0
    %4875 = vmatpush2.msra.mxu0 0.0
    %4876 = vmatprep.subr.mxu0 0.0
    %4877 = vmatpush2.msra.mxu0 0.0
    %4878 = vmatprep.subr.mxu0 0.0
    %4879 = vmatpush2.msra.mxu0 0.0
    %4880 = vmatprep.subr.mxu0 0.0
    %4881 = vmatpush2.msra.mxu0 0.0
    %4882 = vmatprep.subr.mxu0 0.0
    %4883 = vmatpush2.msra.mxu0 0.0
    %4884 = vmatprep.subr.mxu0 0.0
    %4885 = vmatpush2.msra.mxu0 0.0
    %4886 = vmatprep.subr.mxu0 0.0
    %4887 = vmatpush2.msra.mxu0 0.0
    %4888 = vmatprep.subr.mxu0 0.0
    %4889 = vmatpush2.msra.mxu0 0.0
    %4890 = vmatprep.subr.mxu0 0.0
    %4891 = vmatpush2.msra.mxu0 0.0
    %4892 = vmatprep.mubr.f32.mxu0 0.0
    %4893 = vmatmul.mubr.f32.gmra.mxu0 %v4826
    %v4894 = vpop.f32.mrf.mxu0
    %v4895 = vadd.f32 0.0, %v4894
    %v4896 = vpop.f32.mrf.mxu0
    %4897 = vdwg.mxu0
    %v4898 = vpack.c.bf16 %v4895, %v4895
    %v4900 = vsel %vm1912, %v4898, 0
    %v4903 = vsel %vm2256, %v4085, 0
    %4905 = vmatprep.subr.bf16.mxu0 0
    %4906 = vmatpush1.bf16.msra.mxu0 0
    %4907 = vmatprep.subr.bf16.mxu0 0
    %4908 = vmatpush1.bf16.msra.mxu0 0
    %4909 = vmatprep.subr.bf16.mxu0 0
    %4910 = vmatpush1.bf16.msra.mxu0 0
    %4911 = vmatprep.subr.bf16.mxu0 0
    %4912 = vmatpush1.bf16.msra.mxu0 0
    %4913 = vmatprep.subr.bf16.mxu0 0
    %4914 = vmatpush1.bf16.msra.mxu0 0
    %4915 = vmatprep.subr.bf16.mxu0 0
    %4916 = vmatpush1.bf16.msra.mxu0 0
    %4917 = vmatprep.subr.bf16.mxu0 0
    %4918 = vmatpush1.bf16.msra.mxu0 0
    %4919 = vmatprep.subr.bf16.mxu0 0
    %4920 = vmatpush1.bf16.msra.mxu0 %v4903
    %4921 = vmatprep.subr.bf16.mxu0 0
    %4922 = vmatpush2.bf16.msra.mxu0 0
    %4923 = vmatprep.subr.bf16.mxu0 0
    %4924 = vmatpush2.bf16.msra.mxu0 0
    %4925 = vmatprep.subr.bf16.mxu0 0
    %4926 = vmatpush2.bf16.msra.mxu0 0
    %4927 = vmatprep.subr.bf16.mxu0 0
    %4928 = vmatpush2.bf16.msra.mxu0 0
    %4929 = vmatprep.subr.bf16.mxu0 0
    %4930 = vmatpush2.bf16.msra.mxu0 0
    %4931 = vmatprep.subr.bf16.mxu0 0
    %4932 = vmatpush2.bf16.msra.mxu0 0
    %4933 = vmatprep.subr.bf16.mxu0 0
    %4934 = vmatpush2.bf16.msra.mxu0 0
    %4935 = vmatprep.subr.bf16.mxu0 0
    %4936 = vmatpush2.bf16.msra.mxu0 0
    %4937 = vmatprep.mubr.bf16.mxu0 0
    %4938 = vmatmul.mubr.bf16.gmra.mxu0 %v4900
    %v4939 = vpop.f32.mrf.mxu0
    %v4940 = vadd.f32 0.0, %v4939
    %v4941 = vpop.f32.mrf.mxu0
    %v4942 = vpop.f32.mrf.mxu0
    %v4943 = vpop.f32.mrf.mxu0
    %4944 = vdwg.mxu0
    %v4945 = vadd.f32 %v4729, %v4940
    %v4947 = vsel %vm1912, %v3991, 0
    %v4950 = vsel %vm1912, %v4080, 0
    %4952 = vmatprep.subr.mxu0 0.0
    %4953 = vmatpush1.xpose.msra.mxu0 0.0
    %4954 = vmatprep.subr.mxu0 0.0
    %4955 = vmatpush1.xpose.msra.mxu0 0.0
    %4956 = vmatprep.subr.mxu0 0.0
    %4957 = vmatpush1.xpose.msra.mxu0 0.0
    %4958 = vmatprep.subr.mxu0 0.0
    %4959 = vmatpush1.xpose.msra.mxu0 0.0
    %4960 = vmatprep.subr.mxu0 0.0
    %4961 = vmatpush1.xpose.msra.mxu0 0.0
    %4962 = vmatprep.subr.mxu0 0.0
    %4963 = vmatpush1.xpose.msra.mxu0 0.0
    %4964 = vmatprep.subr.mxu0 0.0
    %4965 = vmatpush1.xpose.msra.mxu0 0.0
    %4966 = vmatprep.subr.mxu0 0.0
    %4967 = vmatpush1.xpose.msra.mxu0 0.0
    %4968 = vmatprep.subr.mxu0 0.0
    %4969 = vmatpush1.xpose.msra.mxu0 0.0
    %4970 = vmatprep.subr.mxu0 0.0
    %4971 = vmatpush1.xpose.msra.mxu0 0.0
    %4972 = vmatprep.subr.mxu0 0.0
    %4973 = vmatpush1.xpose.msra.mxu0 0.0
    %4974 = vmatprep.subr.mxu0 0.0
    %4975 = vmatpush1.xpose.msra.mxu0 0.0
    %4976 = vmatprep.subr.mxu0 0.0
    %4977 = vmatpush1.xpose.msra.mxu0 0.0
    %4978 = vmatprep.subr.mxu0 0.0
    %4979 = vmatpush1.xpose.msra.mxu0 0.0
    %4980 = vmatprep.subr.mxu0 0.0
    %4981 = vmatpush1.xpose.msra.mxu0 0.0
    %4982 = vmatprep.subr.mxu0 0.0
    %4983 = vmatpush1.xpose.msra.mxu0 %v4950
    %4984 = vmatprep.subr.mxu0 0.0
    %4985 = vmatpush2.xpose.msra.mxu0 0.0
    %4986 = vmatprep.subr.mxu0 0.0
    %4987 = vmatpush2.xpose.msra.mxu0 0.0
    %4988 = vmatprep.subr.mxu0 0.0
    %4989 = vmatpush2.xpose.msra.mxu0 0.0
    %4990 = vmatprep.subr.mxu0 0.0
    %4991 = vmatpush2.xpose.msra.mxu0 0.0
    %4992 = vmatprep.subr.mxu0 0.0
    %4993 = vmatpush2.xpose.msra.mxu0 0.0
    %4994 = vmatprep.subr.mxu0 0.0
    %4995 = vmatpush2.xpose.msra.mxu0 0.0
    %4996 = vmatprep.subr.mxu0 0.0
    %4997 = vmatpush2.xpose.msra.mxu0 0.0
    %4998 = vmatprep.subr.mxu0 0.0
    %4999 = vmatpush2.xpose.msra.mxu0 0.0
    %5000 = vmatprep.subr.mxu0 0.0
    %5001 = vmatpush2.xpose.msra.mxu0 0.0
    %5002 = vmatprep.subr.mxu0 0.0
    %5003 = vmatpush2.xpose.msra.mxu0 0.0
    %5004 = vmatprep.subr.mxu0 0.0
    %5005 = vmatpush2.xpose.msra.mxu0 0.0
    %5006 = vmatprep.subr.mxu0 0.0
    %5007 = vmatpush2.xpose.msra.mxu0 0.0
    %5008 = vmatprep.subr.mxu0 0.0
    %5009 = vmatpush2.xpose.msra.mxu0 0.0
    %5010 = vmatprep.subr.mxu0 0.0
    %5011 = vmatpush2.xpose.msra.mxu0 0.0
    %5012 = vmatprep.subr.mxu0 0.0
    %5013 = vmatpush2.xpose.msra.mxu0 0.0
    %5014 = vmatprep.subr.mxu0 0.0
    %5015 = vmatpush2.xpose.msra.mxu0 0.0
    %5016 = vmatprep.mubr.f32.mxu0 0.0
    %5017 = vmatmul.mubr.f32.gmra.mxu0 %v4947
    %v5018 = vpop.f32.mrf.mxu0
    %v5019 = vadd.f32 0.0, %v5018
    %v5020 = vpop.f32.mrf.mxu0
    %5021 = vdwg.mxu0
    %v5022 = vmul.f32 %v5019, 0.35355338
    %v5023 = vadd.f32 %v5022, %v1707
    %v5024 = vadd.f32 %v5023, %v2859
    %v5025 = vsel %vm1912, %v5024, -inf
    %5026 = vmax.xlane.f32.xlu0 %v5025
    %v5027 = vpop.xlane.xlu0 %5026
    %v5028 = vsub.f32 %v5024, %v5027
    %v5029 = vmul.f32 %v5028, 1.442695
    %v5030 = vpow.pop %v5029
    %v5031 = vsel %vm1912, %v5030, 0.0
    %5032 = vadd.xlane.f32.xlu0 %v5031
    %v5033 = vpop.xlane.xlu0 %5032
    %v5034 = vrcp.pop %v5033
    %v5035 = vmul.f32 %v5030, %v5034
    %5036 = vrot.lane.b32.xlu0 %v3991, 96
    %v5037 = vpop.permute.xlu0 %5036
    %v5040 = vsel %vm1912, %v5035, 0
    %5042 = vmatprep.subr.mxu0 0.0
    %5043 = vmatpush1.msra.mxu0 0.0
    %5044 = vmatprep.subr.mxu0 0.0
    %5045 = vmatpush1.msra.mxu0 0.0
    %5046 = vmatprep.subr.mxu0 0.0
    %5047 = vmatpush1.msra.mxu0 0.0
    %5048 = vmatprep.subr.mxu0 0.0
    %5049 = vmatpush1.msra.mxu0 0.0
    %5050 = vmatprep.subr.mxu0 0.0
    %5051 = vmatpush1.msra.mxu0 0.0
    %5052 = vmatprep.subr.mxu0 0.0
    %5053 = vmatpush1.msra.mxu0 0.0
    %5054 = vmatprep.subr.mxu0 0.0
    %5055 = vmatpush1.msra.mxu0 0.0
    %5056 = vmatprep.subr.mxu0 0.0
    %5057 = vmatpush1.msra.mxu0 0.0
    %5058 = vmatprep.subr.mxu0 0.0
    %5059 = vmatpush1.msra.mxu0 0.0
    %5060 = vmatprep.subr.mxu0 0.0
    %5061 = vmatpush1.msra.mxu0 0.0
    %5062 = vmatprep.subr.mxu0 0.0
    %5063 = vmatpush1.msra.mxu0 0.0
    %5064 = vmatprep.subr.mxu0 0.0
    %5065 = vmatpush1.msra.mxu0 0.0
    %5066 = vmatprep.subr.mxu0 0.0
    %5067 = vmatpush1.msra.mxu0 0.0
    %5068 = vmatprep.subr.mxu0 0.0
    %5069 = vmatpush1.msra.mxu0 0.0
    %5070 = vmatprep.subr.mxu0 0.0
    %5071 = vmatpush1.msra.mxu0 0.0
    %5072 = vmatprep.subr.mxu0 0.0
    %5073 = vmatpush1.msra.mxu0 %v5037
    %5074 = vmatprep.subr.mxu0 0.0
    %5075 = vmatpush2.msra.mxu0 0.0
    %5076 = vmatprep.subr.mxu0 0.0
    %5077 = vmatpush2.msra.mxu0 0.0
    %5078 = vmatprep.subr.mxu0 0.0
    %5079 = vmatpush2.msra.mxu0 0.0
    %5080 = vmatprep.subr.mxu0 0.0
    %5081 = vmatpush2.msra.mxu0 0.0
    %5082 = vmatprep.subr.mxu0 0.0
    %5083 = vmatpush2.msra.mxu0 0.0
    %5084 = vmatprep.subr.mxu0 0.0
    %5085 = vmatpush2.msra.mxu0 0.0
    %5086 = vmatprep.subr.mxu0 0.0
    %5087 = vmatpush2.msra.mxu0 0.0
    %5088 = vmatprep.subr.mxu0 0.0
    %5089 = vmatpush2.msra.mxu0 0.0
    %5090 = vmatprep.subr.mxu0 0.0
    %5091 = vmatpush2.msra.mxu0 0.0
    %5092 = vmatprep.subr.mxu0 0.0
    %5093 = vmatpush2.msra.mxu0 0.0
    %5094 = vmatprep.subr.mxu0 0.0
    %5095 = vmatpush2.msra.mxu0 0.0
    %5096 = vmatprep.subr.mxu0 0.0
    %5097 = vmatpush2.msra.mxu0 0.0
    %5098 = vmatprep.subr.mxu0 0.0
    %5099 = vmatpush2.msra.mxu0 0.0
    %5100 = vmatprep.subr.mxu0 0.0
    %5101 = vmatpush2.msra.mxu0 0.0
    %5102 = vmatprep.subr.mxu0 0.0
    %5103 = vmatpush2.msra.mxu0 0.0
    %5104 = vmatprep.subr.mxu0 0.0
    %5105 = vmatpush2.msra.mxu0 0.0
    %5106 = vmatprep.mubr.f32.mxu0 0.0
    %5107 = vmatmul.mubr.f32.gmra.mxu0 %v5040
    %v5108 = vpop.f32.mrf.mxu0
    %v5109 = vadd.f32 0.0, %v5108
    %v5110 = vpop.f32.mrf.mxu0
    %5111 = vdwg.mxu0
    %v5112 = vpack.c.bf16 %v5109, %v5109
    %5113 = vrot.lane.b32.xlu0 %v3991, 120
    %v5114 = vpop.permute.xlu0 %5113
    %5115 = vrot.lane.b32.xlu0 %v4080, 120
    %v5116 = vpop.permute.xlu0 %5115
    %v5117 = vsel %vm1912, %v5114, 0
    %v5119 = vsel %vm1912, %v5116, 0
    %5121 = vmatprep.subr.mxu0 0.0
    %5122 = vmatpush1.xpose.msra.mxu0 0.0
    %5123 = vmatprep.subr.mxu0 0.0
    %5124 = vmatpush1.xpose.msra.mxu0 0.0
    %5125 = vmatprep.subr.mxu0 0.0
    %5126 = vmatpush1.xpose.msra.mxu0 0.0
    %5127 = vmatprep.subr.mxu0 0.0
    %5128 = vmatpush1.xpose.msra.mxu0 0.0
    %5129 = vmatprep.subr.mxu0 0.0
    %5130 = vmatpush1.xpose.msra.mxu0 0.0
    %5131 = vmatprep.subr.mxu0 0.0
    %5132 = vmatpush1.xpose.msra.mxu0 0.0
    %5133 = vmatprep.subr.mxu0 0.0
    %5134 = vmatpush1.xpose.msra.mxu0 0.0
    %5135 = vmatprep.subr.mxu0 0.0
    %5136 = vmatpush1.xpose.msra.mxu0 0.0
    %5137 = vmatprep.subr.mxu0 0.0
    %5138 = vmatpush1.xpose.msra.mxu0 0.0
    %5139 = vmatprep.subr.mxu0 0.0
    %5140 = vmatpush1.xpose.msra.mxu0 0.0
    %5141 = vmatprep.subr.mxu0 0.0
    %5142 = vmatpush1.xpose.msra.mxu0 0.0
    %5143 = vmatprep.subr.mxu0 0.0
    %5144 = vmatpush1.xpose.msra.mxu0 0.0
    %5145 = vmatprep.subr.mxu0 0.0
    %5146 = vmatpush1.xpose.msra.mxu0 0.0
    %5147 = vmatprep.subr.mxu0 0.0
    %5148 = vmatpush1.xpose.msra.mxu0 0.0
    %5149 = vmatprep.subr.mxu0 0.0
    %5150 = vmatpush1.xpose.msra.mxu0 0.0
    %5151 = vmatprep.subr.mxu0 0.0
    %5152 = vmatpush1.xpose.msra.mxu0 %v5119
    %5153 = vmatprep.subr.mxu0 0.0
    %5154 = vmatpush2.xpose.msra.mxu0 0.0
    %5155 = vmatprep.subr.mxu0 0.0
    %5156 = vmatpush2.xpose.msra.mxu0 0.0
    %5157 = vmatprep.subr.mxu0 0.0
    %5158 = vmatpush2.xpose.msra.mxu0 0.0
    %5159 = vmatprep.subr.mxu0 0.0
    %5160 = vmatpush2.xpose.msra.mxu0 0.0
    %5161 = vmatprep.subr.mxu0 0.0
    %5162 = vmatpush2.xpose.msra.mxu0 0.0
    %5163 = vmatprep.subr.mxu0 0.0
    %5164 = vmatpush2.xpose.msra.mxu0 0.0
    %5165 = vmatprep.subr.mxu0 0.0
    %5166 = vmatpush2.xpose.msra.mxu0 0.0
    %5167 = vmatprep.subr.mxu0 0.0
    %5168 = vmatpush2.xpose.msra.mxu0 0.0
    %5169 = vmatprep.subr.mxu0 0.0
    %5170 = vmatpush2.xpose.msra.mxu0 0.0
    %5171 = vmatprep.subr.mxu0 0.0
    %5172 = vmatpush2.xpose.msra.mxu0 0.0
    %5173 = vmatprep.subr.mxu0 0.0
    %5174 = vmatpush2.xpose.msra.mxu0 0.0
    %5175 = vmatprep.subr.mxu0 0.0
    %5176 = vmatpush2.xpose.msra.mxu0 0.0
    %5177 = vmatprep.subr.mxu0 0.0
    %5178 = vmatpush2.xpose.msra.mxu0 0.0
    %5179 = vmatprep.subr.mxu0 0.0
    %5180 = vmatpush2.xpose.msra.mxu0 0.0
    %5181 = vmatprep.subr.mxu0 0.0
    %5182 = vmatpush2.xpose.msra.mxu0 0.0
    %5183 = vmatprep.subr.mxu0 0.0
    %5184 = vmatpush2.xpose.msra.mxu0 0.0
    %5185 = vmatprep.mubr.f32.mxu0 0.0
    %5186 = vmatmul.mubr.f32.gmra.mxu0 %v5117
    %v5187 = vpop.f32.mrf.mxu0
    %v5188 = vadd.f32 0.0, %v5187
    %v5189 = vpop.f32.mrf.mxu0
    %5190 = vdwg.mxu0
    %v5191 = vmul.f32 %v5188, 0.35355338
    %v5192 = vadd.f32 %v5191, %v1707
    %v5193 = vadd.f32 %v5192, %v2859
    %v5194 = vsel %vm1912, %v5193, -inf
    %5195 = vmax.xlane.f32.xlu0 %v5194
    %v5196 = vpop.xlane.xlu0 %5195
    %v5197 = vsub.f32 %v5193, %v5196
    %v5198 = vmul.f32 %v5197, 1.442695
    %v5199 = vpow.pop %v5198
    %v5200 = vsel %vm1912, %v5199, 0.0
    %5201 = vadd.xlane.f32.xlu0 %v5200
    %v5202 = vpop.xlane.xlu0 %5201
    %v5203 = vrcp.pop %v5202
    %v5204 = vmul.f32 %v5199, %v5203
    %5205 = vrot.lane.b32.xlu0 %v3991, 88
    %v5206 = vpop.permute.xlu0 %5205
    %v5209 = vsel %vm1912, %v5204, 0
    %5211 = vmatprep.subr.mxu0 0.0
    %5212 = vmatpush1.msra.mxu0 0.0
    %5213 = vmatprep.subr.mxu0 0.0
    %5214 = vmatpush1.msra.mxu0 0.0
    %5215 = vmatprep.subr.mxu0 0.0
    %5216 = vmatpush1.msra.mxu0 0.0
    %5217 = vmatprep.subr.mxu0 0.0
    %5218 = vmatpush1.msra.mxu0 0.0
    %5219 = vmatprep.subr.mxu0 0.0
    %5220 = vmatpush1.msra.mxu0 0.0
    %5221 = vmatprep.subr.mxu0 0.0
    %5222 = vmatpush1.msra.mxu0 0.0
    %5223 = vmatprep.subr.mxu0 0.0
    %5224 = vmatpush1.msra.mxu0 0.0
    %5225 = vmatprep.subr.mxu0 0.0
    %5226 = vmatpush1.msra.mxu0 0.0
    %5227 = vmatprep.subr.mxu0 0.0
    %5228 = vmatpush1.msra.mxu0 0.0
    %5229 = vmatprep.subr.mxu0 0.0
    %5230 = vmatpush1.msra.mxu0 0.0
    %5231 = vmatprep.subr.mxu0 0.0
    %5232 = vmatpush1.msra.mxu0 0.0
    %5233 = vmatprep.subr.mxu0 0.0
    %5234 = vmatpush1.msra.mxu0 0.0
    %5235 = vmatprep.subr.mxu0 0.0
    %5236 = vmatpush1.msra.mxu0 0.0
    %5237 = vmatprep.subr.mxu0 0.0
    %5238 = vmatpush1.msra.mxu0 0.0
    %5239 = vmatprep.subr.mxu0 0.0
    %5240 = vmatpush1.msra.mxu0 0.0
    %5241 = vmatprep.subr.mxu0 0.0
    %5242 = vmatpush1.msra.mxu0 %v5206
    %5243 = vmatprep.subr.mxu0 0.0
    %5244 = vmatpush2.msra.mxu0 0.0
    %5245 = vmatprep.subr.mxu0 0.0
    %5246 = vmatpush2.msra.mxu0 0.0
    %5247 = vmatprep.subr.mxu0 0.0
    %5248 = vmatpush2.msra.mxu0 0.0
    %5249 = vmatprep.subr.mxu0 0.0
    %5250 = vmatpush2.msra.mxu0 0.0
    %5251 = vmatprep.subr.mxu0 0.0
    %5252 = vmatpush2.msra.mxu0 0.0
    %5253 = vmatprep.subr.mxu0 0.0
    %5254 = vmatpush2.msra.mxu0 0.0
    %5255 = vmatprep.subr.mxu0 0.0
    %5256 = vmatpush2.msra.mxu0 0.0
    %5257 = vmatprep.subr.mxu0 0.0
    %5258 = vmatpush2.msra.mxu0 0.0
    %5259 = vmatprep.subr.mxu0 0.0
    %5260 = vmatpush2.msra.mxu0 0.0
    %5261 = vmatprep.subr.mxu0 0.0
    %5262 = vmatpush2.msra.mxu0 0.0
    %5263 = vmatprep.subr.mxu0 0.0
    %5264 = vmatpush2.msra.mxu0 0.0
    %5265 = vmatprep.subr.mxu0 0.0
    %5266 = vmatpush2.msra.mxu0 0.0
    %5267 = vmatprep.subr.mxu0 0.0
    %5268 = vmatpush2.msra.mxu0 0.0
    %5269 = vmatprep.subr.mxu0 0.0
    %5270 = vmatpush2.msra.mxu0 0.0
    %5271 = vmatprep.subr.mxu0 0.0
    %5272 = vmatpush2.msra.mxu0 0.0
    %5273 = vmatprep.subr.mxu0 0.0
    %5274 = vmatpush2.msra.mxu0 0.0
    %5275 = vmatprep.mubr.f32.mxu0 0.0
    %5276 = vmatmul.mubr.f32.gmra.mxu0 %v5209
    %v5277 = vpop.f32.mrf.mxu0
    %v5278 = vadd.f32 0.0, %v5277
    %v5279 = vpop.f32.mrf.mxu0
    %5280 = vdwg.mxu0
    %v5281 = vpack.c.bf16 %v5278, %v5278
    %v5283 = vsel %vm1912, %v5281, 0
    %5285 = vmatprep.subr.bf16.mxu0 0
    %5286 = vmatpush1.bf16.msra.mxu0 0
    %5287 = vmatprep.subr.bf16.mxu0 0
    %5288 = vmatpush1.bf16.msra.mxu0 0
    %5289 = vmatprep.subr.bf16.mxu0 0
    %5290 = vmatpush1.bf16.msra.mxu0 0
    %5291 = vmatprep.subr.bf16.mxu0 0
    %5292 = vmatpush1.bf16.msra.mxu0 0
    %5293 = vmatprep.subr.bf16.mxu0 0
    %5294 = vmatpush1.bf16.msra.mxu0 0
    %5295 = vmatprep.subr.bf16.mxu0 0
    %5296 = vmatpush1.bf16.msra.mxu0 0
    %5297 = vmatprep.subr.bf16.mxu0 0
    %5298 = vmatpush1.bf16.msra.mxu0 0
    %5299 = vmatprep.subr.bf16.mxu0 0
    %5300 = vmatpush1.bf16.msra.mxu0 %v4426
    %5301 = vmatprep.subr.bf16.mxu0 0
    %5302 = vmatpush2.bf16.msra.mxu0 0
    %5303 = vmatprep.subr.bf16.mxu0 0
    %5304 = vmatpush2.bf16.msra.mxu0 0
    %5305 = vmatprep.subr.bf16.mxu0 0
    %5306 = vmatpush2.bf16.msra.mxu0 0
    %5307 = vmatprep.subr.bf16.mxu0 0
    %5308 = vmatpush2.bf16.msra.mxu0 0
    %5309 = vmatprep.subr.bf16.mxu0 0
    %5310 = vmatpush2.bf16.msra.mxu0 0
    %5311 = vmatprep.subr.bf16.mxu0 0
    %5312 = vmatpush2.bf16.msra.mxu0 0
    %5313 = vmatprep.subr.bf16.mxu0 0
    %5314 = vmatpush2.bf16.msra.mxu0 0
    %5315 = vmatprep.subr.bf16.mxu0 0
    %5316 = vmatpush2.bf16.msra.mxu0 0
    %5317 = vmatprep.mubr.bf16.mxu0 0
    %5318 = vmatmul.mubr.bf16.gmra.mxu0 %v5283
    %v5319 = vpop.f32.mrf.mxu0
    %v5320 = vadd.f32 0.0, %v5319
    %v5321 = vpop.f32.mrf.mxu0
    %v5322 = vpop.f32.mrf.mxu0
    %v5323 = vpop.f32.mrf.mxu0
    %5324 = vdwg.mxu0
    %v5326 = vsel %vm1912, %v5112, 0
    %5328 = vmatprep.subr.bf16.mxu0 0
    %5329 = vmatpush1.bf16.msra.mxu0 0
    %5330 = vmatprep.subr.bf16.mxu0 0
    %5331 = vmatpush1.bf16.msra.mxu0 0
    %5332 = vmatprep.subr.bf16.mxu0 0
    %5333 = vmatpush1.bf16.msra.mxu0 0
    %5334 = vmatprep.subr.bf16.mxu0 0
    %5335 = vmatpush1.bf16.msra.mxu0 0
    %5336 = vmatprep.subr.bf16.mxu0 0
    %5337 = vmatpush1.bf16.msra.mxu0 0
    %5338 = vmatprep.subr.bf16.mxu0 0
    %5339 = vmatpush1.bf16.msra.mxu0 0
    %5340 = vmatprep.subr.bf16.mxu0 0
    %5341 = vmatpush1.bf16.msra.mxu0 0
    %5342 = vmatprep.subr.bf16.mxu0 0
    %5343 = vmatpush1.bf16.msra.mxu0 %v4472
    %5344 = vmatprep.subr.bf16.mxu0 0
    %5345 = vmatpush2.bf16.msra.mxu0 0
    %5346 = vmatprep.subr.bf16.mxu0 0
    %5347 = vmatpush2.bf16.msra.mxu0 0
    %5348 = vmatprep.subr.bf16.mxu0 0
    %5349 = vmatpush2.bf16.msra.mxu0 0
    %5350 = vmatprep.subr.bf16.mxu0 0
    %5351 = vmatpush2.bf16.msra.mxu0 0
    %5352 = vmatprep.subr.bf16.mxu0 0
    %5353 = vmatpush2.bf16.msra.mxu0 0
    %5354 = vmatprep.subr.bf16.mxu0 0
    %5355 = vmatpush2.bf16.msra.mxu0 0
    %5356 = vmatprep.subr.bf16.mxu0 0
    %5357 = vmatpush2.bf16.msra.mxu0 0
    %5358 = vmatprep.subr.bf16.mxu0 0
    %5359 = vmatpush2.bf16.msra.mxu0 0
    %5360 = vmatprep.mubr.bf16.mxu0 0
    %5361 = vmatmul.mubr.bf16.gmra.mxu0 %v5326
    %v5362 = vpop.f32.mrf.mxu0
    %v5363 = vadd.f32 %v5320, %v5362
    %v5364 = vpop.f32.mrf.mxu0
    %v5365 = vpop.f32.mrf.mxu0
    %v5366 = vpop.f32.mrf.mxu0
    %5367 = vdwg.mxu0
    %5368 = vrot.lane.b32.xlu0 %v3991, 112
    %v5369 = vpop.permute.xlu0 %5368
    %5370 = vrot.lane.b32.xlu0 %v4080, 112
    %v5371 = vpop.permute.xlu0 %5370
    %v5372 = vsel %vm1912, %v5369, 0
    %v5374 = vsel %vm1912, %v5371, 0
    %5376 = vmatprep.subr.mxu0 0.0
    %5377 = vmatpush1.xpose.msra.mxu0 0.0
    %5378 = vmatprep.subr.mxu0 0.0
    %5379 = vmatpush1.xpose.msra.mxu0 0.0
    %5380 = vmatprep.subr.mxu0 0.0
    %5381 = vmatpush1.xpose.msra.mxu0 0.0
    %5382 = vmatprep.subr.mxu0 0.0
    %5383 = vmatpush1.xpose.msra.mxu0 0.0
    %5384 = vmatprep.subr.mxu0 0.0
    %5385 = vmatpush1.xpose.msra.mxu0 0.0
    %5386 = vmatprep.subr.mxu0 0.0
    %5387 = vmatpush1.xpose.msra.mxu0 0.0
    %5388 = vmatprep.subr.mxu0 0.0
    %5389 = vmatpush1.xpose.msra.mxu0 0.0
    %5390 = vmatprep.subr.mxu0 0.0
    %5391 = vmatpush1.xpose.msra.mxu0 0.0
    %5392 = vmatprep.subr.mxu0 0.0
    %5393 = vmatpush1.xpose.msra.mxu0 0.0
    %5394 = vmatprep.subr.mxu0 0.0
    %5395 = vmatpush1.xpose.msra.mxu0 0.0
    %5396 = vmatprep.subr.mxu0 0.0
    %5397 = vmatpush1.xpose.msra.mxu0 0.0
    %5398 = vmatprep.subr.mxu0 0.0
    %5399 = vmatpush1.xpose.msra.mxu0 0.0
    %5400 = vmatprep.subr.mxu0 0.0
    %5401 = vmatpush1.xpose.msra.mxu0 0.0
    %5402 = vmatprep.subr.mxu0 0.0
    %5403 = vmatpush1.xpose.msra.mxu0 0.0
    %5404 = vmatprep.subr.mxu0 0.0
    %5405 = vmatpush1.xpose.msra.mxu0 0.0
    %5406 = vmatprep.subr.mxu0 0.0
    %5407 = vmatpush1.xpose.msra.mxu0 %v5374
    %5408 = vmatprep.subr.mxu0 0.0
    %5409 = vmatpush2.xpose.msra.mxu0 0.0
    %5410 = vmatprep.subr.mxu0 0.0
    %5411 = vmatpush2.xpose.msra.mxu0 0.0
    %5412 = vmatprep.subr.mxu0 0.0
    %5413 = vmatpush2.xpose.msra.mxu0 0.0
    %5414 = vmatprep.subr.mxu0 0.0
    %5415 = vmatpush2.xpose.msra.mxu0 0.0
    %5416 = vmatprep.subr.mxu0 0.0
    %5417 = vmatpush2.xpose.msra.mxu0 0.0
    %5418 = vmatprep.subr.mxu0 0.0
    %5419 = vmatpush2.xpose.msra.mxu0 0.0
    %5420 = vmatprep.subr.mxu0 0.0
    %5421 = vmatpush2.xpose.msra.mxu0 0.0
    %5422 = vmatprep.subr.mxu0 0.0
    %5423 = vmatpush2.xpose.msra.mxu0 0.0
    %5424 = vmatprep.subr.mxu0 0.0
    %5425 = vmatpush2.xpose.msra.mxu0 0.0
    %5426 = vmatprep.subr.mxu0 0.0
    %5427 = vmatpush2.xpose.msra.mxu0 0.0
    %5428 = vmatprep.subr.mxu0 0.0
    %5429 = vmatpush2.xpose.msra.mxu0 0.0
    %5430 = vmatprep.subr.mxu0 0.0
    %5431 = vmatpush2.xpose.msra.mxu0 0.0
    %5432 = vmatprep.subr.mxu0 0.0
    %5433 = vmatpush2.xpose.msra.mxu0 0.0
    %5434 = vmatprep.subr.mxu0 0.0
    %5435 = vmatpush2.xpose.msra.mxu0 0.0
    %5436 = vmatprep.subr.mxu0 0.0
    %5437 = vmatpush2.xpose.msra.mxu0 0.0
    %5438 = vmatprep.subr.mxu0 0.0
    %5439 = vmatpush2.xpose.msra.mxu0 0.0
    %5440 = vmatprep.mubr.f32.mxu0 0.0
    %5441 = vmatmul.mubr.f32.gmra.mxu0 %v5372
    %v5442 = vpop.f32.mrf.mxu0
    %v5443 = vadd.f32 0.0, %v5442
    %v5444 = vpop.f32.mrf.mxu0
    %5445 = vdwg.mxu0
    %v5446 = vmul.f32 %v5443, 0.35355338
    %v5447 = vadd.f32 %v5446, %v1707
    %v5448 = vadd.f32 %v5447, %v2859
    %v5449 = vsel %vm1912, %v5448, -inf
    %5450 = vmax.xlane.f32.xlu0 %v5449
    %v5451 = vpop.xlane.xlu0 %5450
    %v5452 = vsub.f32 %v5448, %v5451
    %v5453 = vmul.f32 %v5452, 1.442695
    %v5454 = vpow.pop %v5453
    %v5455 = vsel %vm1912, %v5454, 0.0
    %5456 = vadd.xlane.f32.xlu0 %v5455
    %v5457 = vpop.xlane.xlu0 %5456
    %v5458 = vrcp.pop %v5457
    %v5459 = vmul.f32 %v5454, %v5458
    %5460 = vrot.lane.b32.xlu0 %v3991, 80
    %v5461 = vpop.permute.xlu0 %5460
    %v5464 = vsel %vm1912, %v5459, 0
    %5466 = vmatprep.subr.mxu0 0.0
    %5467 = vmatpush1.msra.mxu0 0.0
    %5468 = vmatprep.subr.mxu0 0.0
    %5469 = vmatpush1.msra.mxu0 0.0
    %5470 = vmatprep.subr.mxu0 0.0
    %5471 = vmatpush1.msra.mxu0 0.0
    %5472 = vmatprep.subr.mxu0 0.0
    %5473 = vmatpush1.msra.mxu0 0.0
    %5474 = vmatprep.subr.mxu0 0.0
    %5475 = vmatpush1.msra.mxu0 0.0
    %5476 = vmatprep.subr.mxu0 0.0
    %5477 = vmatpush1.msra.mxu0 0.0
    %5478 = vmatprep.subr.mxu0 0.0
    %5479 = vmatpush1.msra.mxu0 0.0
    %5480 = vmatprep.subr.mxu0 0.0
    %5481 = vmatpush1.msra.mxu0 0.0
    %5482 = vmatprep.subr.mxu0 0.0
    %5483 = vmatpush1.msra.mxu0 0.0
    %5484 = vmatprep.subr.mxu0 0.0
    %5485 = vmatpush1.msra.mxu0 0.0
    %5486 = vmatprep.subr.mxu0 0.0
    %5487 = vmatpush1.msra.mxu0 0.0
    %5488 = vmatprep.subr.mxu0 0.0
    %5489 = vmatpush1.msra.mxu0 0.0
    %5490 = vmatprep.subr.mxu0 0.0
    %5491 = vmatpush1.msra.mxu0 0.0
    %5492 = vmatprep.subr.mxu0 0.0
    %5493 = vmatpush1.msra.mxu0 0.0
    %5494 = vmatprep.subr.mxu0 0.0
    %5495 = vmatpush1.msra.mxu0 0.0
    %5496 = vmatprep.subr.mxu0 0.0
    %5497 = vmatpush1.msra.mxu0 %v5461
    %5498 = vmatprep.subr.mxu0 0.0
    %5499 = vmatpush2.msra.mxu0 0.0
    %5500 = vmatprep.subr.mxu0 0.0
    %5501 = vmatpush2.msra.mxu0 0.0
    %5502 = vmatprep.subr.mxu0 0.0
    %5503 = vmatpush2.msra.mxu0 0.0
    %5504 = vmatprep.subr.mxu0 0.0
    %5505 = vmatpush2.msra.mxu0 0.0
    %5506 = vmatprep.subr.mxu0 0.0
    %5507 = vmatpush2.msra.mxu0 0.0
    %5508 = vmatprep.subr.mxu0 0.0
    %5509 = vmatpush2.msra.mxu0 0.0
    %5510 = vmatprep.subr.mxu0 0.0
    %5511 = vmatpush2.msra.mxu0 0.0
    %5512 = vmatprep.subr.mxu0 0.0
    %5513 = vmatpush2.msra.mxu0 0.0
    %5514 = vmatprep.subr.mxu0 0.0
    %5515 = vmatpush2.msra.mxu0 0.0
    %5516 = vmatprep.subr.mxu0 0.0
    %5517 = vmatpush2.msra.mxu0 0.0
    %5518 = vmatprep.subr.mxu0 0.0
    %5519 = vmatpush2.msra.mxu0 0.0
    %5520 = vmatprep.subr.mxu0 0.0
    %5521 = vmatpush2.msra.mxu0 0.0
    %5522 = vmatprep.subr.mxu0 0.0
    %5523 = vmatpush2.msra.mxu0 0.0
    %5524 = vmatprep.subr.mxu0 0.0
    %5525 = vmatpush2.msra.mxu0 0.0
    %5526 = vmatprep.subr.mxu0 0.0
    %5527 = vmatpush2.msra.mxu0 0.0
    %5528 = vmatprep.subr.mxu0 0.0
    %5529 = vmatpush2.msra.mxu0 0.0
    %5530 = vmatprep.mubr.f32.mxu0 0.0
    %5531 = vmatmul.mubr.f32.gmra.mxu0 %v5464
    %v5532 = vpop.f32.mrf.mxu0
    %v5533 = vadd.f32 0.0, %v5532
    %v5534 = vpop.f32.mrf.mxu0
    %5535 = vdwg.mxu0
    %v5536 = vpack.c.bf16 %v5533, %v5533
    %v5538 = vsel %vm1912, %v5536, 0
    %5540 = vmatprep.subr.bf16.mxu0 0
    %5541 = vmatpush1.bf16.msra.mxu0 0
    %5542 = vmatprep.subr.bf16.mxu0 0
    %5543 = vmatpush1.bf16.msra.mxu0 0
    %5544 = vmatprep.subr.bf16.mxu0 0
    %5545 = vmatpush1.bf16.msra.mxu0 0
    %5546 = vmatprep.subr.bf16.mxu0 0
    %5547 = vmatpush1.bf16.msra.mxu0 0
    %5548 = vmatprep.subr.bf16.mxu0 0
    %5549 = vmatpush1.bf16.msra.mxu0 0
    %5550 = vmatprep.subr.bf16.mxu0 0
    %5551 = vmatpush1.bf16.msra.mxu0 0
    %5552 = vmatprep.subr.bf16.mxu0 0
    %5553 = vmatpush1.bf16.msra.mxu0 0
    %5554 = vmatprep.subr.bf16.mxu0 0
    %5555 = vmatpush1.bf16.msra.mxu0 %v4687
    %5556 = vmatprep.subr.bf16.mxu0 0
    %5557 = vmatpush2.bf16.msra.mxu0 0
    %5558 = vmatprep.subr.bf16.mxu0 0
    %5559 = vmatpush2.bf16.msra.mxu0 0
    %5560 = vmatprep.subr.bf16.mxu0 0
    %5561 = vmatpush2.bf16.msra.mxu0 0
    %5562 = vmatprep.subr.bf16.mxu0 0
    %5563 = vmatpush2.bf16.msra.mxu0 0
    %5564 = vmatprep.subr.bf16.mxu0 0
    %5565 = vmatpush2.bf16.msra.mxu0 0
    %5566 = vmatprep.subr.bf16.mxu0 0
    %5567 = vmatpush2.bf16.msra.mxu0 0
    %5568 = vmatprep.subr.bf16.mxu0 0
    %5569 = vmatpush2.bf16.msra.mxu0 0
    %5570 = vmatprep.subr.bf16.mxu0 0
    %5571 = vmatpush2.bf16.msra.mxu0 0
    %5572 = vmatprep.mubr.bf16.mxu0 0
    %5573 = vmatmul.mubr.bf16.gmra.mxu0 %v5538
    %v5574 = vpop.f32.mrf.mxu0
    %v5575 = vadd.f32 0.0, %v5574
    %v5576 = vpop.f32.mrf.mxu0
    %v5577 = vpop.f32.mrf.mxu0
    %v5578 = vpop.f32.mrf.mxu0
    %5579 = vdwg.mxu0
    %v5580 = vadd.f32 %v5363, %v5575
    %5581 = vrot.lane.b32.xlu0 %v3991, 104
    %v5582 = vpop.permute.xlu0 %5581
    %5583 = vrot.lane.b32.xlu0 %v4080, 104
    %v5584 = vpop.permute.xlu0 %5583
    %v5585 = vsel %vm1912, %v5582, 0
    %v5587 = vsel %vm1912, %v5584, 0
    %5589 = vmatprep.subr.mxu0 0.0
    %5590 = vmatpush1.xpose.msra.mxu0 0.0
    %5591 = vmatprep.subr.mxu0 0.0
    %5592 = vmatpush1.xpose.msra.mxu0 0.0
    %5593 = vmatprep.subr.mxu0 0.0
    %5594 = vmatpush1.xpose.msra.mxu0 0.0
    %5595 = vmatprep.subr.mxu0 0.0
    %5596 = vmatpush1.xpose.msra.mxu0 0.0
    %5597 = vmatprep.subr.mxu0 0.0
    %5598 = vmatpush1.xpose.msra.mxu0 0.0
    %5599 = vmatprep.subr.mxu0 0.0
    %5600 = vmatpush1.xpose.msra.mxu0 0.0
    %5601 = vmatprep.subr.mxu0 0.0
    %5602 = vmatpush1.xpose.msra.mxu0 0.0
    %5603 = vmatprep.subr.mxu0 0.0
    %5604 = vmatpush1.xpose.msra.mxu0 0.0
    %5605 = vmatprep.subr.mxu0 0.0
    %5606 = vmatpush1.xpose.msra.mxu0 0.0
    %5607 = vmatprep.subr.mxu0 0.0
    %5608 = vmatpush1.xpose.msra.mxu0 0.0
    %5609 = vmatprep.subr.mxu0 0.0
    %5610 = vmatpush1.xpose.msra.mxu0 0.0
    %5611 = vmatprep.subr.mxu0 0.0
    %5612 = vmatpush1.xpose.msra.mxu0 0.0
    %5613 = vmatprep.subr.mxu0 0.0
    %5614 = vmatpush1.xpose.msra.mxu0 0.0
    %5615 = vmatprep.subr.mxu0 0.0
    %5616 = vmatpush1.xpose.msra.mxu0 0.0
    %5617 = vmatprep.subr.mxu0 0.0
    %5618 = vmatpush1.xpose.msra.mxu0 0.0
    %5619 = vmatprep.subr.mxu0 0.0
    %5620 = vmatpush1.xpose.msra.mxu0 %v5587
    %5621 = vmatprep.subr.mxu0 0.0
    %5622 = vmatpush2.xpose.msra.mxu0 0.0
    %5623 = vmatprep.subr.mxu0 0.0
    %5624 = vmatpush2.xpose.msra.mxu0 0.0
    %5625 = vmatprep.subr.mxu0 0.0
    %5626 = vmatpush2.xpose.msra.mxu0 0.0
    %5627 = vmatprep.subr.mxu0 0.0
    %5628 = vmatpush2.xpose.msra.mxu0 0.0
    %5629 = vmatprep.subr.mxu0 0.0
    %5630 = vmatpush2.xpose.msra.mxu0 0.0
    %5631 = vmatprep.subr.mxu0 0.0
    %5632 = vmatpush2.xpose.msra.mxu0 0.0
    %5633 = vmatprep.subr.mxu0 0.0
    %5634 = vmatpush2.xpose.msra.mxu0 0.0
    %5635 = vmatprep.subr.mxu0 0.0
    %5636 = vmatpush2.xpose.msra.mxu0 0.0
    %5637 = vmatprep.subr.mxu0 0.0
    %5638 = vmatpush2.xpose.msra.mxu0 0.0
    %5639 = vmatprep.subr.mxu0 0.0
    %5640 = vmatpush2.xpose.msra.mxu0 0.0
    %5641 = vmatprep.subr.mxu0 0.0
    %5642 = vmatpush2.xpose.msra.mxu0 0.0
    %5643 = vmatprep.subr.mxu0 0.0
    %5644 = vmatpush2.xpose.msra.mxu0 0.0
    %5645 = vmatprep.subr.mxu0 0.0
    %5646 = vmatpush2.xpose.msra.mxu0 0.0
    %5647 = vmatprep.subr.mxu0 0.0
    %5648 = vmatpush2.xpose.msra.mxu0 0.0
    %5649 = vmatprep.subr.mxu0 0.0
    %5650 = vmatpush2.xpose.msra.mxu0 0.0
    %5651 = vmatprep.subr.mxu0 0.0
    %5652 = vmatpush2.xpose.msra.mxu0 0.0
    %5653 = vmatprep.mubr.f32.mxu0 0.0
    %5654 = vmatmul.mubr.f32.gmra.mxu0 %v5585
    %v5655 = vpop.f32.mrf.mxu0
    %v5656 = vadd.f32 0.0, %v5655
    %v5657 = vpop.f32.mrf.mxu0
    %5658 = vdwg.mxu0
    %v5659 = vmul.f32 %v5656, 0.35355338
    %v5660 = vadd.f32 %v5659, %v1707
    %v5661 = vadd.f32 %v5660, %v2859
    %v5662 = vsel %vm1912, %v5661, -inf
    %5663 = vmax.xlane.f32.xlu0 %v5662
    %v5664 = vpop.xlane.xlu0 %5663
    %v5665 = vsub.f32 %v5661, %v5664
    %v5666 = vmul.f32 %v5665, 1.442695
    %v5667 = vpow.pop %v5666
    %v5668 = vsel %vm1912, %v5667, 0.0
    %5669 = vadd.xlane.f32.xlu0 %v5668
    %v5670 = vpop.xlane.xlu0 %5669
    %v5671 = vrcp.pop %v5670
    %v5672 = vmul.f32 %v5667, %v5671
    %5673 = vrot.lane.b32.xlu0 %v3991, 72
    %v5674 = vpop.permute.xlu0 %5673
    %v5677 = vsel %vm1912, %v5672, 0
    %5679 = vmatprep.subr.mxu0 0.0
    %5680 = vmatpush1.msra.mxu0 0.0
    %5681 = vmatprep.subr.mxu0 0.0
    %5682 = vmatpush1.msra.mxu0 0.0
    %5683 = vmatprep.subr.mxu0 0.0
    %5684 = vmatpush1.msra.mxu0 0.0
    %5685 = vmatprep.subr.mxu0 0.0
    %5686 = vmatpush1.msra.mxu0 0.0
    %5687 = vmatprep.subr.mxu0 0.0
    %5688 = vmatpush1.msra.mxu0 0.0
    %5689 = vmatprep.subr.mxu0 0.0
    %5690 = vmatpush1.msra.mxu0 0.0
    %5691 = vmatprep.subr.mxu0 0.0
    %5692 = vmatpush1.msra.mxu0 0.0
    %5693 = vmatprep.subr.mxu0 0.0
    %5694 = vmatpush1.msra.mxu0 0.0
    %5695 = vmatprep.subr.mxu0 0.0
    %5696 = vmatpush1.msra.mxu0 0.0
    %5697 = vmatprep.subr.mxu0 0.0
    %5698 = vmatpush1.msra.mxu0 0.0
    %5699 = vmatprep.subr.mxu0 0.0
    %5700 = vmatpush1.msra.mxu0 0.0
    %5701 = vmatprep.subr.mxu0 0.0
    %5702 = vmatpush1.msra.mxu0 0.0
    %5703 = vmatprep.subr.mxu0 0.0
    %5704 = vmatpush1.msra.mxu0 0.0
    %5705 = vmatprep.subr.mxu0 0.0
    %5706 = vmatpush1.msra.mxu0 0.0
    %5707 = vmatprep.subr.mxu0 0.0
    %5708 = vmatpush1.msra.mxu0 0.0
    %5709 = vmatprep.subr.mxu0 0.0
    %5710 = vmatpush1.msra.mxu0 %v5674
    %5711 = vmatprep.subr.mxu0 0.0
    %5712 = vmatpush2.msra.mxu0 0.0
    %5713 = vmatprep.subr.mxu0 0.0
    %5714 = vmatpush2.msra.mxu0 0.0
    %5715 = vmatprep.subr.mxu0 0.0
    %5716 = vmatpush2.msra.mxu0 0.0
    %5717 = vmatprep.subr.mxu0 0.0
    %5718 = vmatpush2.msra.mxu0 0.0
    %5719 = vmatprep.subr.mxu0 0.0
    %5720 = vmatpush2.msra.mxu0 0.0
    %5721 = vmatprep.subr.mxu0 0.0
    %5722 = vmatpush2.msra.mxu0 0.0
    %5723 = vmatprep.subr.mxu0 0.0
    %5724 = vmatpush2.msra.mxu0 0.0
    %5725 = vmatprep.subr.mxu0 0.0
    %5726 = vmatpush2.msra.mxu0 0.0
    %5727 = vmatprep.subr.mxu0 0.0
    %5728 = vmatpush2.msra.mxu0 0.0
    %5729 = vmatprep.subr.mxu0 0.0
    %5730 = vmatpush2.msra.mxu0 0.0
    %5731 = vmatprep.subr.mxu0 0.0
    %5732 = vmatpush2.msra.mxu0 0.0
    %5733 = vmatprep.subr.mxu0 0.0
    %5734 = vmatpush2.msra.mxu0 0.0
    %5735 = vmatprep.subr.mxu0 0.0
    %5736 = vmatpush2.msra.mxu0 0.0
    %5737 = vmatprep.subr.mxu0 0.0
    %5738 = vmatpush2.msra.mxu0 0.0
    %5739 = vmatprep.subr.mxu0 0.0
    %5740 = vmatpush2.msra.mxu0 0.0
    %5741 = vmatprep.subr.mxu0 0.0
    %5742 = vmatpush2.msra.mxu0 0.0
    %5743 = vmatprep.mubr.f32.mxu0 0.0
    %5744 = vmatmul.mubr.f32.gmra.mxu0 %v5677
    %v5745 = vpop.f32.mrf.mxu0
    %v5746 = vadd.f32 0.0, %v5745
    %v5747 = vpop.f32.mrf.mxu0
    %5748 = vdwg.mxu0
    %v5749 = vpack.c.bf16 %v5746, %v5746
    %v5751 = vsel %vm1912, %v5749, 0
    %5753 = vmatprep.subr.bf16.mxu0 0
    %5754 = vmatpush1.bf16.msra.mxu0 0
    %5755 = vmatprep.subr.bf16.mxu0 0
    %5756 = vmatpush1.bf16.msra.mxu0 0
    %5757 = vmatprep.subr.bf16.mxu0 0
    %5758 = vmatpush1.bf16.msra.mxu0 0
    %5759 = vmatprep.subr.bf16.mxu0 0
    %5760 = vmatpush1.bf16.msra.mxu0 0
    %5761 = vmatprep.subr.bf16.mxu0 0
    %5762 = vmatpush1.bf16.msra.mxu0 0
    %5763 = vmatprep.subr.bf16.mxu0 0
    %5764 = vmatpush1.bf16.msra.mxu0 0
    %5765 = vmatprep.subr.bf16.mxu0 0
    %5766 = vmatpush1.bf16.msra.mxu0 0
    %5767 = vmatprep.subr.bf16.mxu0 0
    %5768 = vmatpush1.bf16.msra.mxu0 %v4903
    %5769 = vmatprep.subr.bf16.mxu0 0
    %5770 = vmatpush2.bf16.msra.mxu0 0
    %5771 = vmatprep.subr.bf16.mxu0 0
    %5772 = vmatpush2.bf16.msra.mxu0 0
    %5773 = vmatprep.subr.bf16.mxu0 0
    %5774 = vmatpush2.bf16.msra.mxu0 0
    %5775 = vmatprep.subr.bf16.mxu0 0
    %5776 = vmatpush2.bf16.msra.mxu0 0
    %5777 = vmatprep.subr.bf16.mxu0 0
    %5778 = vmatpush2.bf16.msra.mxu0 0
    %5779 = vmatprep.subr.bf16.mxu0 0
    %5780 = vmatpush2.bf16.msra.mxu0 0
    %5781 = vmatprep.subr.bf16.mxu0 0
    %5782 = vmatpush2.bf16.msra.mxu0 0
    %5783 = vmatprep.subr.bf16.mxu0 0
    %5784 = vmatpush2.bf16.msra.mxu0 0
    %5785 = vmatprep.mubr.bf16.mxu0 0
    %5786 = vmatmul.mubr.bf16.gmra.mxu0 %v5751
    %v5787 = vpop.f32.mrf.mxu0
    %v5788 = vadd.f32 0.0, %v5787
    %v5789 = vpop.f32.mrf.mxu0
    %v5790 = vpop.f32.mrf.mxu0
    %v5791 = vpop.f32.mrf.mxu0
    %5792 = vdwg.mxu0
    %v5793 = vadd.f32 %v5580, %v5788
    %s5794 = scalar_lea.vmem [#allocation20], 1
    %v5795 = vld [vmem:[%s5794] sm:$0x1]
    %v5797 = vlaneseq
    %v5798 = vshrl.u32 %v5797, 7
    %v5799 = vsub.s32 0, %v5798
    %v5800 = vrot.slane %v5795, %v5799
    %v5802 = vadd.f32 %v4945, %v5800
    %v5803 = vadd.f32 %v5793, %v5800
    %v5804 = vadd.f32 %v3639, %v5802
    %v5805 = vadd.f32 %v3640, %v5803
    %s5806 = scalar_lea.vmem %s17, 1
    %v5807 = vld [vmem:[%s5806] sm:$0x1]
    %s5808 = scalar_lea.vmem [#allocation22], 1
    %v5809 = vld [vmem:[%s5808] sm:$0x1]
    %v5810 = vsel %vm553, %v5804, 0.0
    %5811 = vadd.xlane.f32.xlu0 %v5810
    %v5812 = vpop.xlane.xlu0 %5811
    %v5813 = vsel %vm553, %v5805, 0.0
    %5814 = vadd.xlane.f32.xlu0 %v5813
    %v5815 = vpop.xlane.xlu0 %5814
    %v5816 = vmul.f32 %v5812, %v1723
    %v5817 = vmul.f32 %v5815, %v1723
    %v5818 = vsub.f32 %v5804, %v5816
    %v5819 = vsub.f32 %v5805, %v5817
    %v5820 = vmul.f32 %v5818, %v5818
    %v5821 = vmul.f32 %v5819, %v5819
    %v5822 = vsel %vm553, %v5820, 0.0
    %5823 = vadd.xlane.f32.xlu0 %v5822
    %v5824 = vpop.xlane.xlu0 %5823
    %v5825 = vsel %vm553, %v5821, 0.0
    %5826 = vadd.xlane.f32.xlu0 %v5825
    %v5827 = vpop.xlane.xlu0 %5826
    %v5828 = vmul.f32 %v5824, %v1723
    %v5829 = vmul.f32 %v5827, %v1723
    %v5830 = vadd.f32 %v5828, 1e-05
    %v5831 = vadd.f32 %v5829, 1e-05
    %v5832 = vrsqrt.pop %v5830
    %v5833 = vrsqrt.pop %v5831
    %v5834 = vmul.f32 %v5818, %v5832
    %v5835 = vmul.f32 %v5819, %v5833
    %v5837 = vlaneseq
    %v5838 = vshrl.u32 %v5837, 7
    %v5839 = vsub.s32 0, %v5838
    %v5840 = vrot.slane %v5807, %v5839
    %v5842 = vmul.f32 %v5834, %v5840
    %v5843 = vmul.f32 %v5835, %v5840
    %v5845 = vlaneseq
    %v5846 = vshrl.u32 %v5845, 7
    %v5847 = vsub.s32 0, %v5846
    %v5848 = vrot.slane %v5809, %v5847
    %v5850 = vadd.f32 %v5842, %v5848
    %v5851 = vadd.f32 %v5843, %v5848
    %v5852 = vpack.c.bf16 %v5851, %v5850
    %s5853 = scalar_lea.vmem [#allocation23], 16
    %v5854 = vld [vmem:[%s5853] sm:$0xf]
    %v5855 = vld [vmem:[%s5853 + $0x4] sm:$0xf]
    %v5856 = vld [vmem:[%s5853 + $0x8] sm:$0xf]
    %v5857 = vld [vmem:[%s5853 + $0xc] sm:$0xf]
    %s5858 = scalar_lea.vmem [#allocation25], 1
    %v5859 = vld [vmem:[%s5858] sm:$0x1]
    %v5861 = vlaneseq
    %v5862 = vshrl.u32 %v5861, 7
    %v5863 = vsub.s32 0, %v5862
    %v5864 = vrot.slane %v5859, %v5863
    %v5870 = vunpack.c.l.b16 %v5854
    %v5871 = vunpack.c.l.b16 %v5855
    %v5872 = vunpack.c.l.b16 %v5856
    %v5873 = vunpack.c.l.b16 %v5857
    %v5874 = vpack.c.b16 %v5871, %v5870
    %v5875 = vpack.c.b16 %v5873, %v5872
    %v5879 = vsel %vm553, %v5852, 0
    %5881 = vmatprep.subr.bf16.mxu0 0
    %5882 = vmatpush1.bf16.msra.mxu0 0
    %5883 = vmatprep.subr.bf16.mxu0 0
    %5884 = vmatpush1.bf16.msra.mxu0 0
    %5885 = vmatprep.subr.bf16.mxu0 0
    %5886 = vmatpush1.bf16.msra.mxu0 0
    %5887 = vmatprep.subr.bf16.mxu0 0
    %5888 = vmatpush1.bf16.msra.mxu0 0
    %5889 = vmatprep.subr.bf16.mxu0 0
    %5890 = vmatpush1.bf16.msra.mxu0 0
    %5891 = vmatprep.subr.bf16.mxu0 0
    %5892 = vmatpush1.bf16.msra.mxu0 0
    %5893 = vmatprep.subr.bf16.mxu0 0
    %5894 = vmatpush1.bf16.msra.mxu0 %v5875
    %5895 = vmatprep.subr.bf16.mxu0 0
    %5896 = vmatpush1.bf16.msra.mxu0 %v5874
    %5897 = vmatprep.subr.bf16.mxu0 0
    %5898 = vmatpush2.bf16.msra.mxu0 0
    %5899 = vmatprep.subr.bf16.mxu0 0
    %5900 = vmatpush2.bf16.msra.mxu0 0
    %5901 = vmatprep.subr.bf16.mxu0 0
    %5902 = vmatpush2.bf16.msra.mxu0 0
    %5903 = vmatprep.subr.bf16.mxu0 0
    %5904 = vmatpush2.bf16.msra.mxu0 0
    %5905 = vmatprep.subr.bf16.mxu0 0
    %5906 = vmatpush2.bf16.msra.mxu0 0
    %5907 = vmatprep.subr.bf16.mxu0 0
    %5908 = vmatpush2.bf16.msra.mxu0 0
    %5909 = vmatprep.subr.bf16.mxu0 0
    %5910 = vmatpush2.bf16.msra.mxu0 0
    %5911 = vmatprep.subr.bf16.mxu0 0
    %5912 = vmatpush2.bf16.msra.mxu0 0
    %5913 = vmatprep.mubr.bf16.mxu0 0
    %5914 = vmatmul.mubr.bf16.gmra.mxu0 %v5879
    %v5915 = vpop.f32.mrf.mxu0
    %v5916 = vadd.f32 %v5864, %v5915
    %v5917 = vpop.f32.mrf.mxu0
    %v5918 = vpop.f32.mrf.mxu0
    %v5919 = vadd.f32 %v5864, %v5918
    %v5920 = vpop.f32.mrf.mxu0
    %5921 = vdwg.mxu0
    %v5922 = vmul.f32 %v5916, %v5916
    %v5923 = vmul.f32 %v5919, %v5919
    %v5924 = vmul.f32 %v5916, %v5922
    %v5925 = vmul.f32 %v5919, %v5923
    %v5926 = vmul.f32 %v5924, 0.044715
    %v5927 = vmul.f32 %v5925, 0.044715
    %v5928 = vadd.f32 %v5916, %v5926
    %v5929 = vadd.f32 %v5919, %v5927
    %v5930 = vmul.f32 %v5928, 0.7978846
    %v5931 = vmul.f32 %v5929, 0.7978846
    %v5932 = vtanh.pop %v5930
    %v5933 = vtanh.pop %v5931
    %v5934 = vadd.f32 %v5932, 1.0
    %v5935 = vadd.f32 %v5933, 1.0
    %v5936 = vmul.f32 %v5934, 0.5
    %v5937 = vmul.f32 %v5935, 0.5
    %v5938 = vmul.f32 %v5916, %v5936
    %v5939 = vmul.f32 %v5919, %v5937
    %v5940 = vpack.c.bf16 %v5939, %v5938
    %s5941 = scalar_lea.vmem %s21, 64
    %v5942 = vld [vmem:[%s5941] sm:$0xf]
    %v5943 = vld [vmem:[%s5941 + $0x4] sm:$0xf]
    %v5944 = vld [vmem:[%s5941 + $0x8] sm:$0xf]
    %v5945 = vld [vmem:[%s5941 + $0xc] sm:$0xf]
    %v5946 = vld [vmem:[%s5941 + $0x10] sm:$0xf]
    %v5947 = vld [vmem:[%s5941 + $0x14] sm:$0xf]
    %v5948 = vld [vmem:[%s5941 + $0x18] sm:$0xf]
    %v5949 = vld [vmem:[%s5941 + $0x1c] sm:$0xf]
    %v5950 = vld [vmem:[%s5941 + $0x20] sm:$0xf]
    %v5951 = vld [vmem:[%s5941 + $0x24] sm:$0xf]
    %v5952 = vld [vmem:[%s5941 + $0x28] sm:$0xf]
    %v5953 = vld [vmem:[%s5941 + $0x2c] sm:$0xf]
    %v5954 = vld [vmem:[%s5941 + $0x30] sm:$0xf]
    %v5955 = vld [vmem:[%s5941 + $0x34] sm:$0xf]
    %v5956 = vld [vmem:[%s5941 + $0x38] sm:$0xf]
    %v5957 = vld [vmem:[%s5941 + $0x3c] sm:$0xf]
    %s5958 = scalar_lea.vmem [#allocation26], 1
    %v5959 = vld [vmem:[%s5958] sm:$0x1]
    %v5961 = vlaneseq
    %v5962 = vshrl.u32 %v5961, 7
    %v5963 = vsub.s32 0, %v5962
    %v5964 = vrot.slane %v5959, %v5963
    %v5982 = vunpack.c.l.b16 %v5942
    %v5983 = vunpack.c.l.b16 %v5943
    %v5984 = vunpack.c.l.b16 %v5944
    %v5985 = vunpack.c.l.b16 %v5945
    %v5986 = vunpack.c.l.b16 %v5946
    %v5987 = vunpack.c.l.b16 %v5947
    %v5988 = vunpack.c.l.b16 %v5948
    %v5989 = vunpack.c.l.b16 %v5949
    %v5990 = vunpack.c.l.b16 %v5950
    %v5991 = vunpack.c.l.b16 %v5951
    %v5992 = vunpack.c.l.b16 %v5952
    %v5993 = vunpack.c.l.b16 %v5953
    %v5994 = vunpack.c.l.b16 %v5954
    %v5995 = vunpack.c.l.b16 %v5955
    %v5996 = vunpack.c.l.b16 %v5956
    %v5997 = vunpack.c.l.b16 %v5957
    %v5998 = vpack.c.b16 %v5983, %v5982
    %v5999 = vpack.c.b16 %v5985, %v5984
    %v6000 = vpack.c.b16 %v5987, %v5986
    %v6001 = vpack.c.b16 %v5989, %v5988
    %v6002 = vpack.c.b16 %v5991, %v5990
    %v6003 = vpack.c.b16 %v5993, %v5992
    %v6004 = vpack.c.b16 %v5995, %v5994
    %v6005 = vpack.c.b16 %v5997, %v5996
    %6014 = vmatprep.subr.bf16.mxu0 0
    %6015 = vmatpush1.bf16.msra.mxu0 %v6005
    %6016 = vmatprep.subr.bf16.mxu0 0
    %6017 = vmatpush1.bf16.msra.mxu0 %v6004
    %6018 = vmatprep.subr.bf16.mxu0 0
    %6019 = vmatpush1.bf16.msra.mxu0 %v6003
    %6020 = vmatprep.subr.bf16.mxu0 0
    %6021 = vmatpush1.bf16.msra.mxu0 %v6002
    %6022 = vmatprep.subr.bf16.mxu0 0
    %6023 = vmatpush1.bf16.msra.mxu0 %v6001
    %6024 = vmatprep.subr.bf16.mxu0 0
    %6025 = vmatpush1.bf16.msra.mxu0 %v6000
    %6026 = vmatprep.subr.bf16.mxu0 0
    %6027 = vmatpush1.bf16.msra.mxu0 %v5999
    %6028 = vmatprep.subr.bf16.mxu0 0
    %6029 = vmatpush1.bf16.msra.mxu0 %v5998
    %6030 = vmatprep.subr.bf16.mxu0 0
    %6031 = vmatpush2.bf16.msra.mxu0 0
    %6032 = vmatprep.subr.bf16.mxu0 0
    %6033 = vmatpush2.bf16.msra.mxu0 0
    %6034 = vmatprep.subr.bf16.mxu0 0
    %6035 = vmatpush2.bf16.msra.mxu0 0
    %6036 = vmatprep.subr.bf16.mxu0 0
    %6037 = vmatpush2.bf16.msra.mxu0 0
    %6038 = vmatprep.subr.bf16.mxu0 0
    %6039 = vmatpush2.bf16.msra.mxu0 0
    %6040 = vmatprep.subr.bf16.mxu0 0
    %6041 = vmatpush2.bf16.msra.mxu0 0
    %6042 = vmatprep.subr.bf16.mxu0 0
    %6043 = vmatpush2.bf16.msra.mxu0 0
    %6044 = vmatprep.subr.bf16.mxu0 0
    %6045 = vmatpush2.bf16.msra.mxu0 0
    %6046 = vmatprep.mubr.bf16.mxu0 0
    %6047 = vmatmul.mubr.bf16.gmra.mxu0 %v5940
    %v6048 = vpop.f32.mrf.mxu0
    %v6049 = vadd.f32 %v5964, %v6048
    %v6050 = vpop.f32.mrf.mxu0
    %v6051 = vpop.f32.mrf.mxu0
    %v6052 = vadd.f32 %v5964, %v6051
    %v6053 = vpop.f32.mrf.mxu0
    %6054 = vdwg.mxu0
    %v6055 = vadd.f32 %v3884, %v6049
    %v6056 = vadd.f32 %v3885, %v6052
    %v6057 = vadd.f32 %v5804, %v6055
    %v6058 = vadd.f32 %v5805, %v6056
    %v6059 = vmul.f32 %v6057, 0.5
    %v6060 = vmul.f32 %v6058, 0.5
    %6061 = vst.msk [vmem:[#allocation28] sm:$0xff] %vm553, %v6059
    %6062 = vst.msk [vmem:[#allocation28 + $0x8] sm:$0xff] %vm553, %v6060
    // Predicated region
    $region154: #{encoder_forward.1} parent=1 // pred_check
      _
    $region155: #{encoder_forward.1} parent=1 // pred_check_branch
      %6064 = sbr.rel (0) target = $region157
    $region156: #{encoder_forward.1} parent=1 // pred_region
      %s6066 = ssub.s32 256, 256
      %6067 = vsyncadd [#allocation5], %s6066
      %s6068 = sshll.u32 [#allocation28], 4
      %s6069 = int_to_ptr.vmem [resolvable:$true] %s6068
      %6074 = dma.vmem_to_hbm [thread:$0]  %s6069, 256, %s23, [#allocation5], 128, 128, 8
    $region157: #{encoder_forward.1} parent=1 // pred_fallthru
      _
    // Predicated region
    $region158: #{encoder_forward.1} parent=1 // pred_check
      _
    $region159: #{encoder_forward.1} parent=1 // pred_check_branch
      %6076 = sbr.rel (0) target = $region161
    $region160: #{encoder_forward.1} parent=1 // pred_region
      %6077 = dma.done [#allocation5], 256
    $region161: #{encoder_forward.1} parent=1 // pred_fallthru
      _
    %6078 = vsyncpa [#allocation4], 1
    %6079 = vsyncpa [#allocation9], 1
    %6080 = vsyncpa [#allocation12], 1
    %6081 = vsyncpa [#allocation15], 1
    %6082 = vsyncpa [#allocation18], 1
    %6083 = vsyncpa [#allocation21], 1
    %6084 = vsyncpa [#allocation24], 1
    %6085 = vsyncpa [#allocation27], 1
    %6086 = vsyncpa [#allocation5], 1
    %6087 = vsyncpa [#allocation6], 1

</llo_original>
